<compile_context>
chip_gen: v5e
topology: v5e:2x2
jax: 0.10.0
libtpu: 0.0.40
codegen_flags: <defaults>
</compile_context>

<pallas_src>
import jax
import jax.numpy as jnp
from jax.experimental import pallas as pl
from jax.experimental.pallas import tpu as pltpu

# ----- module constants (from the PyTorch file) ------------------------------
n_azimuth = 16
n_eccentricity = 4
n_phase = 1
n_theta = 8
width = 32

IN_CHAN = n_eccentricity * n_azimuth * n_theta * n_phase   # 512
OUT_CHAN = width * width                                    # 1024


# ----- Pallas kernel: y = x @ W^T + b  (W kept in native (N, K) layout) ------
def _linear_kernel(x_ref, w_ref, b_ref, o_ref):
    # x_ref: (tm, K), w_ref: (tn, K), b_ref: (1, tn), o_ref: (tm, tn)
    acc = jax.lax.dot_general(
        x_ref[...], w_ref[...],
        dimension_numbers=(((1,), (1,)), ((), ())),   # contract over K
        preferred_element_type=jnp.float32,
        precision=jax.lax.Precision.HIGHEST)          # free: kernel is DMA-bound
    o_ref[...] = (acc + b_ref[...]).astype(o_ref.dtype)


def _n_tile(n):
    """Output-feature tile: split only on v7x (2 TensorCores per chip)."""
    try:
        kind = jax.devices()[0].device_kind.lower()
    except Exception:
        kind = ""
    if "v7" in kind and n % 256 == 0:
        return n // 2          # grid n-axis = 2 -> one weight slab per TC
    return n                   # single-TC chips: one grid step, no per-step overhead


def inverse_log_gabor_forward(x, params):
    """InverseLogGaborMapper.forward.

    x:      (B, IN_CHAN) float32
    params: {"weight": (OUT_CHAN, IN_CHAN),   # native PyTorch nn.Linear layout
             "bias":   (OUT_CHAN,)}
    returns (B, OUT_CHAN) float32
    """
    m, k = x.shape
    w = params["weight"]
    b = params["bias"]
    n = w.shape[0]
    assert w.shape == (n, k) and b.shape == (n,)

    b2 = b.reshape(1, n)                     # (1, N) — layout-only, negligible

    tn = _n_tile(n)
    assert n % tn == 0 and tn % 128 == 0, "output tile must be lane-aligned"

    # Tile the batch so large B never exceeds scoped VMEM; B=2 -> one block.
    tm = m if m <= 256 else 256
    grid = (pl.cdiv(m, tm), n // tn)

    cost = pl.CostEstimate(
        flops=2 * m * k * n,
        transcendentals=0,
        bytes_accessed=4 * (m * k + n * k + n + m * n))

    return pl.pallas_call(
        _linear_kernel,
        out_shape=jax.ShapeDtypeStruct((m, n), x.dtype),
        grid=grid,
        in_specs=[
            pl.BlockSpec((tm, k), lambda i, j: (i, 0)),   # x row tile, whole K
            pl.BlockSpec((tn, k), lambda i, j: (j, 0)),   # weight row slab (native layout)
            pl.BlockSpec((1, tn), lambda i, j: (0, j)),   # bias tile
        ],
        out_specs=pl.BlockSpec((tm, tn), lambda i, j: (i, j)),
        compiler_params=pltpu.CompilerParams(
            dimension_semantics=("parallel", "parallel")),
        cost_estimate=cost,
    )(x, w, b2)


# ----- pure-JAX reference (for correctness check) -----------------------------
def _ref_forward(x, params):
    y = jnp.dot(x, params["weight"].T,
                precision=jax.lax.Precision.HIGHEST,
                preferred_element_type=jnp.float32)
    return y + params["bias"][None, :]


if __name__ == "__main__":
    key = jax.random.PRNGKey(0)
    k_x, k_w, k_b = jax.random.split(key, 3)

    B = 2
    x = jax.random.normal(k_x, (B, IN_CHAN), jnp.float32)
    params = {
        "weight": 0.05 * jax.random.normal(k_w, (OUT_CHAN, IN_CHAN), jnp.float32),
        "bias": 0.05 * jax.random.normal(k_b, (OUT_CHAN,), jnp.float32),
    }

    out = jax.jit(inverse_log_gabor_forward)(x, params)
    out = jax.block_until_ready(out)
    assert out.shape == (B, OUT_CHAN)

    ref = _ref_forward(x, params)
    assert jnp.allclose(out, ref, atol=1e-4, rtol=1e-4), \
        "Pallas output mismatch vs reference"

    print("KERNEL_OK")
</pallas_src>

<mosaic_0001>
module attributes {stable_mosaic.version = 11 : i64} {
  func.func @_linear_kernel(%arg0: i32, %arg1: i32, %arg2: memref<2x512xf32, #tpu.memory_space<vmem>>, %arg3: memref<1024x512xf32, #tpu.memory_space<vmem>>, %arg4: memref<1x1024xf32, #tpu.memory_space<vmem>>, %arg5: memref<2x1024xf32, #tpu.memory_space<vmem>>) attributes {dimension_semantics = [#tpu.dimension_semantics<parallel>, #tpu.dimension_semantics<parallel>], iteration_bounds = array<i64: 1, 1>, scalar_prefetch = 0 : i64, scratch_operands = 0 : i64, tpu.core_type = #tpu.core_type<tc>, window_params = [{transform_indices = @transform_0, window_bounds = array<i64: 2, 512>}, {transform_indices = @transform_1, window_bounds = array<i64: 1024, 512>}, {transform_indices = @transform_2, window_bounds = array<i64: 1, 1024>}, {transform_indices = @transform_3, window_bounds = array<i64: 2, 1024>}]} {
    %c0 = arith.constant 0 : index
    %c0_0 = arith.constant 0 : index
    %0 = vector.load %arg2[%c0, %c0_0] : memref<2x512xf32, #tpu.memory_space<vmem>>, vector<2x512xf32>
    %c0_1 = arith.constant 0 : index
    %c0_2 = arith.constant 0 : index
    %1 = vector.load %arg3[%c0_1, %c0_2] : memref<1024x512xf32, #tpu.memory_space<vmem>>, vector<1024x512xf32>
    %cst = arith.constant dense<0.000000e+00> : vector<2x1024xf32>
    %2 = tpu.matmul %0, %1, %cst {dimension_numbers = #tpu.dot_dimension_numbers<[1], [1], [0], [0], [0, 0, 1, 0], [], []>, precision = #tpu.contract_precision<fp32>} : vector<2x512xf32>, vector<1024x512xf32>, vector<2x1024xf32> -> vector<2x1024xf32>
    %c0_3 = arith.constant 0 : index
    %c0_4 = arith.constant 0 : index
    %3 = vector.load %arg4[%c0_3, %c0_4] : memref<1x1024xf32, #tpu.memory_space<vmem>>, vector<1x1024xf32>
    %4 = vector.broadcast %3 : vector<1x1024xf32> to vector<2x1024xf32>
    %5 = arith.addf %2, %4 : vector<2x1024xf32>
    %c0_5 = arith.constant 0 : index
    %c0_6 = arith.constant 0 : index
    %6 = vector.load %arg5[%c0_5, %c0_6] : memref<2x1024xf32, #tpu.memory_space<vmem>>, vector<2x1024xf32>
    tpu.vector_store %arg5[%c0_5, %c0_6], %5 {strides = array<i32>} : memref<2x1024xf32, #tpu.memory_space<vmem>>, vector<2x1024xf32>,
    return
  }
  func.func @transform_0(%arg0: i32, %arg1: i32) -> (i32, i32) {
    %c0_i32 = arith.constant 0 : i32
    %c0_i32_0 = arith.constant 0 : i32
    return %arg0, %c0_i32 : i32, i32
  }
  func.func @transform_1(%arg0: i32, %arg1: i32) -> (i32, i32) {
    %c0_i32 = arith.constant 0 : i32
    %c0_i32_0 = arith.constant 0 : i32
    return %arg1, %c0_i32 : i32, i32
  }
  func.func @transform_2(%arg0: i32, %arg1: i32) -> (i32, i32) {
    %c0_i32 = arith.constant 0 : i32
    %c0_i32_0 = arith.constant 0 : i32
    return %c0_i32, %arg1 : i32, i32
  }
  func.func @transform_3(%arg0: i32, %arg1: i32) -> (i32, i32) {
    %c0_i32 = arith.constant 0 : i32
    return %arg0, %arg1 : i32, i32
  }
}

</mosaic_0001>

<llo_original>
// kernel: inverse_log_gabor_forward.1
$region0: #{inverse_log_gabor_forward.1}
  #allocation0 [shape = 'u32[]', space=smem, size = 0x4, offset = 0x4, fixed_abs, tag = 'smem constant byte address 0x4 - core index']
  #allocation1 [shape = 'u32[72,128]{1,0:T(1,128)}', space=vmem, size = 0x9000, scoped, tag = 'internal scratch']
  %s0 = inlined_call_operand.hbm [shape: f32[2,512], index: 0, kind: input, shape index: {}]
  %s1 = inlined_call_operand.hbm [shape: f32[1024,512], index: 1, kind: input, shape index: {}]
  %s2 = inlined_call_operand.hbm [shape: f32[1,1024], index: 2, kind: input, shape index: {}]
  %s3 = inlined_call_operand.hbm [shape: f32[2,1024], index: 3, kind: output, shape index: {}]
  %s4 = sld [smem:[#allocation0]]
  $region34: #{inverse_log_gabor_forward.1} parent=0
    _
  %s6 = ssub.s32 1, %s4
  %s7 = scalar_select 0, %s6, %s4
  $region1: #{inverse_log_gabor_forward.1} parent=0
    #allocation2 [shape = 'u8[4096]{0}', space=vmem, size = 0x1000, scoped, tag = 'input window, operand 0, single buffered']
    #allocation3 [shape = 's32[1]{0}', space=sflag, size = 0x4, scoped, tag = 'scoped memory for inverse_log_gabor_forward.1']
    #allocation4 [shape = 's32[1]{0}', space=sflag, size = 0x4, scoped, tag = 'scoped memory for inverse_log_gabor_forward.1']
    #allocation5 [shape = 'u8[2097152]{0}', space=vmem, size = 0x200000, scoped, tag = 'input window, operand 1, single buffered']
    #allocation6 [shape = 's32[1]{0}', space=sflag, size = 0x4, scoped, tag = 'scoped memory for inverse_log_gabor_forward.1']
    #allocation7 [shape = 'u8[4096]{0}', space=vmem, size = 0x1000, scoped, tag = 'input window, operand 2, single buffered']
    #allocation8 [shape = 'u8[8192]{0}', space=vmem, size = 0x2000, scoped, tag = 'output window, operand 0, single buffered']
    %8 = vsyncpa [#allocation3], 0
    %9 = vsyncpa [#allocation6], 0
    %10 = vsyncpa [#allocation4], 0
    // Predicated region
    $region2: #{inverse_log_gabor_forward.1} parent=1 // pred_check
      _
    $region3: #{inverse_log_gabor_forward.1} parent=1 // pred_check_branch
      %12 = sbr.rel (0) target = $region5
    $region4: #{inverse_log_gabor_forward.1} parent=1 // pred_region
      %14 = vsyncadd [#allocation3], 0
      %s16 = sshll.u32 %s0, 4
      %s17 = int_to_ptr.hbm [resolvable:$true] %s16
      %s18 = sshll.u32 [#allocation2], 4
      %s19 = int_to_ptr.vmem [resolvable:$true] %s18
      %21 = dma.hbm_to_vmem [thread:$0]  %s17, 128, %s19, [#allocation3]
    $region5: #{inverse_log_gabor_forward.1} parent=1 // pred_fallthru
      _
    // Predicated region
    $region6: #{inverse_log_gabor_forward.1} parent=1 // pred_check
      _
    $region7: #{inverse_log_gabor_forward.1} parent=1 // pred_check_branch
      %23 = sbr.rel (0) target = $region9
    $region8: #{inverse_log_gabor_forward.1} parent=1 // pred_region
      %25 = vsyncadd [#allocation6], 0
      %s26 = sshll.u32 %s1, 4
      %s27 = int_to_ptr.hbm [resolvable:$true] %s26
      %s28 = sshll.u32 [#allocation5], 4
      %s29 = int_to_ptr.vmem [resolvable:$true] %s28
      %34 = dma.hbm_to_vmem [thread:$0]  %s27, 65536, %s29, [#allocation6], 512, 512, 32
    $region9: #{inverse_log_gabor_forward.1} parent=1 // pred_fallthru
      _
    // Predicated region
    $region10: #{inverse_log_gabor_forward.1} parent=1 // pred_check
      _
    $region11: #{inverse_log_gabor_forward.1} parent=1 // pred_check_branch
      %36 = sbr.rel (0) target = $region13
    $region12: #{inverse_log_gabor_forward.1} parent=1 // pred_region
      %38 = vsyncadd [#allocation6], 0
      %s40 = sshll.u32 %s2, 4
      %s41 = int_to_ptr.hbm [resolvable:$true] %s40
      %s42 = sshll.u32 [#allocation7], 4
      %s43 = int_to_ptr.vmem [resolvable:$true] %s42
      %45 = dma.hbm_to_vmem [thread:$0]  %s41, 128, %s43, [#allocation6]
    $region13: #{inverse_log_gabor_forward.1} parent=1 // pred_fallthru
      _
    // Predicated region
    $region14: #{inverse_log_gabor_forward.1} parent=1 // pred_check
      _
    $region15: #{inverse_log_gabor_forward.1} parent=1 // pred_check_branch
      %47 = sbr.rel (0) target = $region17
    $region16: #{inverse_log_gabor_forward.1} parent=1 // pred_region
      %49 = dma.done [#allocation3], 128
    $region17: #{inverse_log_gabor_forward.1} parent=1 // pred_fallthru
      _
    // Predicated region
    $region18: #{inverse_log_gabor_forward.1} parent=1 // pred_check
      _
    $region19: #{inverse_log_gabor_forward.1} parent=1 // pred_check_branch
      %51 = sbr.rel (0) target = $region21
    $region20: #{inverse_log_gabor_forward.1} parent=1 // pred_region
      %53 = dma.done [#allocation6], 65536
    $region21: #{inverse_log_gabor_forward.1} parent=1 // pred_fallthru
      _
    // Predicated region
    $region22: #{inverse_log_gabor_forward.1} parent=1 // pred_check
      _
    $region23: #{inverse_log_gabor_forward.1} parent=1 // pred_check_branch
      %55 = sbr.rel (0) target = $region25
    $region24: #{inverse_log_gabor_forward.1} parent=1 // pred_region
      %57 = dma.done [#allocation6], 128
    $region25: #{inverse_log_gabor_forward.1} parent=1 // pred_fallthru
      _
    %v58 = vld [vmem:[#allocation2] sm:$0xff]
    %v59 = vld [vmem:[#allocation5] sm:$0xff]
    %v60 = vld [vmem:[#allocation5 + $0x8] sm:$0xff]
    %v61 = vld [vmem:[#allocation5 + $0x10] sm:$0xff]
    %v62 = vld [vmem:[#allocation5 + $0x18] sm:$0xff]
    %v63 = vld [vmem:[#allocation5 + $0x20] sm:$0xff]
    %v64 = vld [vmem:[#allocation5 + $0x28] sm:$0xff]
    %v65 = vld [vmem:[#allocation5 + $0x30] sm:$0xff]
    %v66 = vld [vmem:[#allocation5 + $0x38] sm:$0xff]
    %v67 = vld [vmem:[#allocation5 + $0x40] sm:$0xff]
    %v68 = vld [vmem:[#allocation5 + $0x48] sm:$0xff]
    %v69 = vld [vmem:[#allocation5 + $0x50] sm:$0xff]
    %v70 = vld [vmem:[#allocation5 + $0x58] sm:$0xff]
    %v71 = vld [vmem:[#allocation5 + $0x60] sm:$0xff]
    %v72 = vld [vmem:[#allocation5 + $0x68] sm:$0xff]
    %v73 = vld [vmem:[#allocation5 + $0x70] sm:$0xff]
    %v74 = vld [vmem:[#allocation5 + $0x78] sm:$0xff]
    %v75 = vld [vmem:[#allocation5 + $0x80] sm:$0xff]
    %v76 = vld [vmem:[#allocation5 + $0x88] sm:$0xff]
    %v77 = vld [vmem:[#allocation5 + $0x90] sm:$0xff]
    %v78 = vld [vmem:[#allocation5 + $0x98] sm:$0xff]
    %v79 = vld [vmem:[#allocation5 + $0xa0] sm:$0xff]
    %v80 = vld [vmem:[#allocation5 + $0xa8] sm:$0xff]
    %v81 = vld [vmem:[#allocation5 + $0xb0] sm:$0xff]
    %v82 = vld [vmem:[#allocation5 + $0xb8] sm:$0xff]
    %v83 = vld [vmem:[#allocation5 + $0xc0] sm:$0xff]
    %v84 = vld [vmem:[#allocation5 + $0xc8] sm:$0xff]
    %v85 = vld [vmem:[#allocation5 + $0xd0] sm:$0xff]
    %v86 = vld [vmem:[#allocation5 + $0xd8] sm:$0xff]
    %v87 = vld [vmem:[#allocation5 + $0xe0] sm:$0xff]
    %v88 = vld [vmem:[#allocation5 + $0xe8] sm:$0xff]
    %v89 = vld [vmem:[#allocation5 + $0xf0] sm:$0xff]
    %v90 = vld [vmem:[#allocation5 + $0xf8] sm:$0xff]
    %v91 = vld [vmem:[#allocation5 + $0x100] sm:$0xff]
    %v92 = vld [vmem:[#allocation5 + $0x108] sm:$0xff]
    %v93 = vld [vmem:[#allocation5 + $0x110] sm:$0xff]
    %v94 = vld [vmem:[#allocation5 + $0x118] sm:$0xff]
    %v95 = vld [vmem:[#allocation5 + $0x120] sm:$0xff]
    %v96 = vld [vmem:[#allocation5 + $0x128] sm:$0xff]
    %v97 = vld [vmem:[#allocation5 + $0x130] sm:$0xff]
    %v98 = vld [vmem:[#allocation5 + $0x138] sm:$0xff]
    %v99 = vld [vmem:[#allocation5 + $0x140] sm:$0xff]
    %v100 = vld [vmem:[#allocation5 + $0x148] sm:$0xff]
    %v101 = vld [vmem:[#allocation5 + $0x150] sm:$0xff]
    %v102 = vld [vmem:[#allocation5 + $0x158] sm:$0xff]
    %v103 = vld [vmem:[#allocation5 + $0x160] sm:$0xff]
    %v104 = vld [vmem:[#allocation5 + $0x168] sm:$0xff]
    %v105 = vld [vmem:[#allocation5 + $0x170] sm:$0xff]
    %v106 = vld [vmem:[#allocation5 + $0x178] sm:$0xff]
    %v107 = vld [vmem:[#allocation5 + $0x180] sm:$0xff]
    %v108 = vld [vmem:[#allocation5 + $0x188] sm:$0xff]
    %v109 = vld [vmem:[#allocation5 + $0x190] sm:$0xff]
    %v110 = vld [vmem:[#allocation5 + $0x198] sm:$0xff]
    %v111 = vld [vmem:[#allocation5 + $0x1a0] sm:$0xff]
    %v112 = vld [vmem:[#allocation5 + $0x1a8] sm:$0xff]
    %v113 = vld [vmem:[#allocation5 + $0x1b0] sm:$0xff]
    %v114 = vld [vmem:[#allocation5 + $0x1b8] sm:$0xff]
    %v115 = vld [vmem:[#allocation5 + $0x1c0] sm:$0xff]
    %v116 = vld [vmem:[#allocation5 + $0x1c8] sm:$0xff]
    %v117 = vld [vmem:[#allocation5 + $0x1d0] sm:$0xff]
    %v118 = vld [vmem:[#allocation5 + $0x1d8] sm:$0xff]
    %v119 = vld [vmem:[#allocation5 + $0x1e0] sm:$0xff]
    %v120 = vld [vmem:[#allocation5 + $0x1e8] sm:$0xff]
    %v121 = vld [vmem:[#allocation5 + $0x1f0] sm:$0xff]
    %v122 = vld [vmem:[#allocation5 + $0x1f8] sm:$0xff]
    %v123 = vld [vmem:[#allocation5 + $0x200] sm:$0xff]
    %v124 = vld [vmem:[#allocation5 + $0x208] sm:$0xff]
    %v125 = vld [vmem:[#allocation5 + $0x210] sm:$0xff]
    %v126 = vld [vmem:[#allocation5 + $0x218] sm:$0xff]
    %v127 = vld [vmem:[#allocation5 + $0x220] sm:$0xff]
    %v128 = vld [vmem:[#allocation5 + $0x228] sm:$0xff]
    %v129 = vld [vmem:[#allocation5 + $0x230] sm:$0xff]
    %v130 = vld [vmem:[#allocation5 + $0x238] sm:$0xff]
    %v131 = vld [vmem:[#allocation5 + $0x240] sm:$0xff]
    %v132 = vld [vmem:[#allocation5 + $0x248] sm:$0xff]
    %v133 = vld [vmem:[#allocation5 + $0x250] sm:$0xff]
    %v134 = vld [vmem:[#allocation5 + $0x258] sm:$0xff]
    %v135 = vld [vmem:[#allocation5 + $0x260] sm:$0xff]
    %v136 = vld [vmem:[#allocation5 + $0x268] sm:$0xff]
    %v137 = vld [vmem:[#allocation5 + $0x270] sm:$0xff]
    %v138 = vld [vmem:[#allocation5 + $0x278] sm:$0xff]
    %v139 = vld [vmem:[#allocation5 + $0x280] sm:$0xff]
    %v140 = vld [vmem:[#allocation5 + $0x288] sm:$0xff]
    %v141 = vld [vmem:[#allocation5 + $0x290] sm:$0xff]
    %v142 = vld [vmem:[#allocation5 + $0x298] sm:$0xff]
    %v143 = vld [vmem:[#allocation5 + $0x2a0] sm:$0xff]
    %v144 = vld [vmem:[#allocation5 + $0x2a8] sm:$0xff]
    %v145 = vld [vmem:[#allocation5 + $0x2b0] sm:$0xff]
    %v146 = vld [vmem:[#allocation5 + $0x2b8] sm:$0xff]
    %v147 = vld [vmem:[#allocation5 + $0x2c0] sm:$0xff]
    %v148 = vld [vmem:[#allocation5 + $0x2c8] sm:$0xff]
    %v149 = vld [vmem:[#allocation5 + $0x2d0] sm:$0xff]
    %v150 = vld [vmem:[#allocation5 + $0x2d8] sm:$0xff]
    %v151 = vld [vmem:[#allocation5 + $0x2e0] sm:$0xff]
    %v152 = vld [vmem:[#allocation5 + $0x2e8] sm:$0xff]
    %v153 = vld [vmem:[#allocation5 + $0x2f0] sm:$0xff]
    %v154 = vld [vmem:[#allocation5 + $0x2f8] sm:$0xff]
    %v155 = vld [vmem:[#allocation5 + $0x300] sm:$0xff]
    %v156 = vld [vmem:[#allocation5 + $0x308] sm:$0xff]
    %v157 = vld [vmem:[#allocation5 + $0x310] sm:$0xff]
    %v158 = vld [vmem:[#allocation5 + $0x318] sm:$0xff]
    %v159 = vld [vmem:[#allocation5 + $0x320] sm:$0xff]
    %v160 = vld [vmem:[#allocation5 + $0x328] sm:$0xff]
    %v161 = vld [vmem:[#allocation5 + $0x330] sm:$0xff]
    %v162 = vld [vmem:[#allocation5 + $0x338] sm:$0xff]
    %v163 = vld [vmem:[#allocation5 + $0x340] sm:$0xff]
    %v164 = vld [vmem:[#allocation5 + $0x348] sm:$0xff]
    %v165 = vld [vmem:[#allocation5 + $0x350] sm:$0xff]
    %v166 = vld [vmem:[#allocation5 + $0x358] sm:$0xff]
    %v167 = vld [vmem:[#allocation5 + $0x360] sm:$0xff]
    %v168 = vld [vmem:[#allocation5 + $0x368] sm:$0xff]
    %v169 = vld [vmem:[#allocation5 + $0x370] sm:$0xff]
    %v170 = vld [vmem:[#allocation5 + $0x378] sm:$0xff]
    %v171 = vld [vmem:[#allocation5 + $0x380] sm:$0xff]
    %v172 = vld [vmem:[#allocation5 + $0x388] sm:$0xff]
    %v173 = vld [vmem:[#allocation5 + $0x390] sm:$0xff]
    %v174 = vld [vmem:[#allocation5 + $0x398] sm:$0xff]
    %v175 = vld [vmem:[#allocation5 + $0x3a0] sm:$0xff]
    %v176 = vld [vmem:[#allocation5 + $0x3a8] sm:$0xff]
    %v177 = vld [vmem:[#allocation5 + $0x3b0] sm:$0xff]
    %v178 = vld [vmem:[#allocation5 + $0x3b8] sm:$0xff]
    %v179 = vld [vmem:[#allocation5 + $0x3c0] sm:$0xff]
    %v180 = vld [vmem:[#allocation5 + $0x3c8] sm:$0xff]
    %v181 = vld [vmem:[#allocation5 + $0x3d0] sm:$0xff]
    %v182 = vld [vmem:[#allocation5 + $0x3d8] sm:$0xff]
    %v183 = vld [vmem:[#allocation5 + $0x3e0] sm:$0xff]
    %v184 = vld [vmem:[#allocation5 + $0x3e8] sm:$0xff]
    %v185 = vld [vmem:[#allocation5 + $0x3f0] sm:$0xff]
    %v186 = vld [vmem:[#allocation5 + $0x3f8] sm:$0xff]
    %v187 = vld [vmem:[#allocation5 + $0x400] sm:$0xff]
    %v188 = vld [vmem:[#allocation5 + $0x408] sm:$0xff]
    %v189 = vld [vmem:[#allocation5 + $0x410] sm:$0xff]
    %v190 = vld [vmem:[#allocation5 + $0x418] sm:$0xff]
    %v191 = vld [vmem:[#allocation5 + $0x420] sm:$0xff]
    %v192 = vld [vmem:[#allocation5 + $0x428] sm:$0xff]
    %v193 = vld [vmem:[#allocation5 + $0x430] sm:$0xff]
    %v194 = vld [vmem:[#allocation5 + $0x438] sm:$0xff]
    %v195 = vld [vmem:[#allocation5 + $0x440] sm:$0xff]
    %v196 = vld [vmem:[#allocation5 + $0x448] sm:$0xff]
    %v197 = vld [vmem:[#allocation5 + $0x450] sm:$0xff]
    %v198 = vld [vmem:[#allocation5 + $0x458] sm:$0xff]
    %v199 = vld [vmem:[#allocation5 + $0x460] sm:$0xff]
    %v200 = vld [vmem:[#allocation5 + $0x468] sm:$0xff]
    %v201 = vld [vmem:[#allocation5 + $0x470] sm:$0xff]
    %v202 = vld [vmem:[#allocation5 + $0x478] sm:$0xff]
    %v203 = vld [vmem:[#allocation5 + $0x480] sm:$0xff]
    %v204 = vld [vmem:[#allocation5 + $0x488] sm:$0xff]
    %v205 = vld [vmem:[#allocation5 + $0x490] sm:$0xff]
    %v206 = vld [vmem:[#allocation5 + $0x498] sm:$0xff]
    %v207 = vld [vmem:[#allocation5 + $0x4a0] sm:$0xff]
    %v208 = vld [vmem:[#allocation5 + $0x4a8] sm:$0xff]
    %v209 = vld [vmem:[#allocation5 + $0x4b0] sm:$0xff]
    %v210 = vld [vmem:[#allocation5 + $0x4b8] sm:$0xff]
    %v211 = vld [vmem:[#allocation5 + $0x4c0] sm:$0xff]
    %v212 = vld [vmem:[#allocation5 + $0x4c8] sm:$0xff]
    %v213 = vld [vmem:[#allocation5 + $0x4d0] sm:$0xff]
    %v214 = vld [vmem:[#allocation5 + $0x4d8] sm:$0xff]
    %v215 = vld [vmem:[#allocation5 + $0x4e0] sm:$0xff]
    %v216 = vld [vmem:[#allocation5 + $0x4e8] sm:$0xff]
    %v217 = vld [vmem:[#allocation5 + $0x4f0] sm:$0xff]
    %v218 = vld [vmem:[#allocation5 + $0x4f8] sm:$0xff]
    %v219 = vld [vmem:[#allocation5 + $0x500] sm:$0xff]
    %v220 = vld [vmem:[#allocation5 + $0x508] sm:$0xff]
    %v221 = vld [vmem:[#allocation5 + $0x510] sm:$0xff]
    %v222 = vld [vmem:[#allocation5 + $0x518] sm:$0xff]
    %v223 = vld [vmem:[#allocation5 + $0x520] sm:$0xff]
    %v224 = vld [vmem:[#allocation5 + $0x528] sm:$0xff]
    %v225 = vld [vmem:[#allocation5 + $0x530] sm:$0xff]
    %v226 = vld [vmem:[#allocation5 + $0x538] sm:$0xff]
    %v227 = vld [vmem:[#allocation5 + $0x540] sm:$0xff]
    %v228 = vld [vmem:[#allocation5 + $0x548] sm:$0xff]
    %v229 = vld [vmem:[#allocation5 + $0x550] sm:$0xff]
    %v230 = vld [vmem:[#allocation5 + $0x558] sm:$0xff]
    %v231 = vld [vmem:[#allocation5 + $0x560] sm:$0xff]
    %v232 = vld [vmem:[#allocation5 + $0x568] sm:$0xff]
    %v233 = vld [vmem:[#allocation5 + $0x570] sm:$0xff]
    %v234 = vld [vmem:[#allocation5 + $0x578] sm:$0xff]
    %v235 = vld [vmem:[#allocation5 + $0x580] sm:$0xff]
    %v236 = vld [vmem:[#allocation5 + $0x588] sm:$0xff]
    %v237 = vld [vmem:[#allocation5 + $0x590] sm:$0xff]
    %v238 = vld [vmem:[#allocation5 + $0x598] sm:$0xff]
    %v239 = vld [vmem:[#allocation5 + $0x5a0] sm:$0xff]
    %v240 = vld [vmem:[#allocation5 + $0x5a8] sm:$0xff]
    %v241 = vld [vmem:[#allocation5 + $0x5b0] sm:$0xff]
    %v242 = vld [vmem:[#allocation5 + $0x5b8] sm:$0xff]
    %v243 = vld [vmem:[#allocation5 + $0x5c0] sm:$0xff]
    %v244 = vld [vmem:[#allocation5 + $0x5c8] sm:$0xff]
    %v245 = vld [vmem:[#allocation5 + $0x5d0] sm:$0xff]
    %v246 = vld [vmem:[#allocation5 + $0x5d8] sm:$0xff]
    %v247 = vld [vmem:[#allocation5 + $0x5e0] sm:$0xff]
    %v248 = vld [vmem:[#allocation5 + $0x5e8] sm:$0xff]
    %v249 = vld [vmem:[#allocation5 + $0x5f0] sm:$0xff]
    %v250 = vld [vmem:[#allocation5 + $0x5f8] sm:$0xff]
    %v251 = vld [vmem:[#allocation5 + $0x600] sm:$0xff]
    %v252 = vld [vmem:[#allocation5 + $0x608] sm:$0xff]
    %v253 = vld [vmem:[#allocation5 + $0x610] sm:$0xff]
    %v254 = vld [vmem:[#allocation5 + $0x618] sm:$0xff]
    %v255 = vld [vmem:[#allocation5 + $0x620] sm:$0xff]
    %v256 = vld [vmem:[#allocation5 + $0x628] sm:$0xff]
    %v257 = vld [vmem:[#allocation5 + $0x630] sm:$0xff]
    %v258 = vld [vmem:[#allocation5 + $0x638] sm:$0xff]
    %v259 = vld [vmem:[#allocation5 + $0x640] sm:$0xff]
    %v260 = vld [vmem:[#allocation5 + $0x648] sm:$0xff]
    %v261 = vld [vmem:[#allocation5 + $0x650] sm:$0xff]
    %v262 = vld [vmem:[#allocation5 + $0x658] sm:$0xff]
    %v263 = vld [vmem:[#allocation5 + $0x660] sm:$0xff]
    %v264 = vld [vmem:[#allocation5 + $0x668] sm:$0xff]
    %v265 = vld [vmem:[#allocation5 + $0x670] sm:$0xff]
    %v266 = vld [vmem:[#allocation5 + $0x678] sm:$0xff]
    %v267 = vld [vmem:[#allocation5 + $0x680] sm:$0xff]
    %v268 = vld [vmem:[#allocation5 + $0x688] sm:$0xff]
    %v269 = vld [vmem:[#allocation5 + $0x690] sm:$0xff]
    %v270 = vld [vmem:[#allocation5 + $0x698] sm:$0xff]
    %v271 = vld [vmem:[#allocation5 + $0x6a0] sm:$0xff]
    %v272 = vld [vmem:[#allocation5 + $0x6a8] sm:$0xff]
    %v273 = vld [vmem:[#allocation5 + $0x6b0] sm:$0xff]
    %v274 = vld [vmem:[#allocation5 + $0x6b8] sm:$0xff]
    %v275 = vld [vmem:[#allocation5 + $0x6c0] sm:$0xff]
    %v276 = vld [vmem:[#allocation5 + $0x6c8] sm:$0xff]
    %v277 = vld [vmem:[#allocation5 + $0x6d0] sm:$0xff]
    %v278 = vld [vmem:[#allocation5 + $0x6d8] sm:$0xff]
    %v279 = vld [vmem:[#allocation5 + $0x6e0] sm:$0xff]
    %v280 = vld [vmem:[#allocation5 + $0x6e8] sm:$0xff]
    %v281 = vld [vmem:[#allocation5 + $0x6f0] sm:$0xff]
    %v282 = vld [vmem:[#allocation5 + $0x6f8] sm:$0xff]
    %v283 = vld [vmem:[#allocation5 + $0x700] sm:$0xff]
    %v284 = vld [vmem:[#allocation5 + $0x708] sm:$0xff]
    %v285 = vld [vmem:[#allocation5 + $0x710] sm:$0xff]
    %v286 = vld [vmem:[#allocation5 + $0x718] sm:$0xff]
    %v287 = vld [vmem:[#allocation5 + $0x720] sm:$0xff]
    %v288 = vld [vmem:[#allocation5 + $0x728] sm:$0xff]
    %v289 = vld [vmem:[#allocation5 + $0x730] sm:$0xff]
    %v290 = vld [vmem:[#allocation5 + $0x738] sm:$0xff]
    %v291 = vld [vmem:[#allocation5 + $0x740] sm:$0xff]
    %v292 = vld [vmem:[#allocation5 + $0x748] sm:$0xff]
    %v293 = vld [vmem:[#allocation5 + $0x750] sm:$0xff]
    %v294 = vld [vmem:[#allocation5 + $0x758] sm:$0xff]
    %v295 = vld [vmem:[#allocation5 + $0x760] sm:$0xff]
    %v296 = vld [vmem:[#allocation5 + $0x768] sm:$0xff]
    %v297 = vld [vmem:[#allocation5 + $0x770] sm:$0xff]
    %v298 = vld [vmem:[#allocation5 + $0x778] sm:$0xff]
    %v299 = vld [vmem:[#allocation5 + $0x780] sm:$0xff]
    %v300 = vld [vmem:[#allocation5 + $0x788] sm:$0xff]
    %v301 = vld [vmem:[#allocation5 + $0x790] sm:$0xff]
    %v302 = vld [vmem:[#allocation5 + $0x798] sm:$0xff]
    %v303 = vld [vmem:[#allocation5 + $0x7a0] sm:$0xff]
    %v304 = vld [vmem:[#allocation5 + $0x7a8] sm:$0xff]
    %v305 = vld [vmem:[#allocation5 + $0x7b0] sm:$0xff]
    %v306 = vld [vmem:[#allocation5 + $0x7b8] sm:$0xff]
    %v307 = vld [vmem:[#allocation5 + $0x7c0] sm:$0xff]
    %v308 = vld [vmem:[#allocation5 + $0x7c8] sm:$0xff]
    %v309 = vld [vmem:[#allocation5 + $0x7d0] sm:$0xff]
    %v310 = vld [vmem:[#allocation5 + $0x7d8] sm:$0xff]
    %v311 = vld [vmem:[#allocation5 + $0x7e0] sm:$0xff]
    %v312 = vld [vmem:[#allocation5 + $0x7e8] sm:$0xff]
    %v313 = vld [vmem:[#allocation5 + $0x7f0] sm:$0xff]
    %v314 = vld [vmem:[#allocation5 + $0x7f8] sm:$0xff]
    %v315 = vld [vmem:[#allocation5 + $0x800] sm:$0xff]
    %v316 = vld [vmem:[#allocation5 + $0x808] sm:$0xff]
    %v317 = vld [vmem:[#allocation5 + $0x810] sm:$0xff]
    %v318 = vld [vmem:[#allocation5 + $0x818] sm:$0xff]
    %v319 = vld [vmem:[#allocation5 + $0x820] sm:$0xff]
    %v320 = vld [vmem:[#allocation5 + $0x828] sm:$0xff]
    %v321 = vld [vmem:[#allocation5 + $0x830] sm:$0xff]
    %v322 = vld [vmem:[#allocation5 + $0x838] sm:$0xff]
    %v323 = vld [vmem:[#allocation5 + $0x840] sm:$0xff]
    %v324 = vld [vmem:[#allocation5 + $0x848] sm:$0xff]
    %v325 = vld [vmem:[#allocation5 + $0x850] sm:$0xff]
    %v326 = vld [vmem:[#allocation5 + $0x858] sm:$0xff]
    %v327 = vld [vmem:[#allocation5 + $0x860] sm:$0xff]
    %v328 = vld [vmem:[#allocation5 + $0x868] sm:$0xff]
    %v329 = vld [vmem:[#allocation5 + $0x870] sm:$0xff]
    %v330 = vld [vmem:[#allocation5 + $0x878] sm:$0xff]
    %v331 = vld [vmem:[#allocation5 + $0x880] sm:$0xff]
    %v332 = vld [vmem:[#allocation5 + $0x888] sm:$0xff]
    %v333 = vld [vmem:[#allocation5 + $0x890] sm:$0xff]
    %v334 = vld [vmem:[#allocation5 + $0x898] sm:$0xff]
    %v335 = vld [vmem:[#allocation5 + $0x8a0] sm:$0xff]
    %v336 = vld [vmem:[#allocation5 + $0x8a8] sm:$0xff]
    %v337 = vld [vmem:[#allocation5 + $0x8b0] sm:$0xff]
    %v338 = vld [vmem:[#allocation5 + $0x8b8] sm:$0xff]
    %v339 = vld [vmem:[#allocation5 + $0x8c0] sm:$0xff]
    %v340 = vld [vmem:[#allocation5 + $0x8c8] sm:$0xff]
    %v341 = vld [vmem:[#allocation5 + $0x8d0] sm:$0xff]
    %v342 = vld [vmem:[#allocation5 + $0x8d8] sm:$0xff]
    %v343 = vld [vmem:[#allocation5 + $0x8e0] sm:$0xff]
    %v344 = vld [vmem:[#allocation5 + $0x8e8] sm:$0xff]
    %v345 = vld [vmem:[#allocation5 + $0x8f0] sm:$0xff]
    %v346 = vld [vmem:[#allocation5 + $0x8f8] sm:$0xff]
    %v347 = vld [vmem:[#allocation5 + $0x900] sm:$0xff]
    %v348 = vld [vmem:[#allocation5 + $0x908] sm:$0xff]
    %v349 = vld [vmem:[#allocation5 + $0x910] sm:$0xff]
    %v350 = vld [vmem:[#allocation5 + $0x918] sm:$0xff]
    %v351 = vld [vmem:[#allocation5 + $0x920] sm:$0xff]
    %v352 = vld [vmem:[#allocation5 + $0x928] sm:$0xff]
    %v353 = vld [vmem:[#allocation5 + $0x930] sm:$0xff]
    %v354 = vld [vmem:[#allocation5 + $0x938] sm:$0xff]
    %v355 = vld [vmem:[#allocation5 + $0x940] sm:$0xff]
    %v356 = vld [vmem:[#allocation5 + $0x948] sm:$0xff]
    %v357 = vld [vmem:[#allocation5 + $0x950] sm:$0xff]
    %v358 = vld [vmem:[#allocation5 + $0x958] sm:$0xff]
    %v359 = vld [vmem:[#allocation5 + $0x960] sm:$0xff]
    %v360 = vld [vmem:[#allocation5 + $0x968] sm:$0xff]
    %v361 = vld [vmem:[#allocation5 + $0x970] sm:$0xff]
    %v362 = vld [vmem:[#allocation5 + $0x978] sm:$0xff]
    %v363 = vld [vmem:[#allocation5 + $0x980] sm:$0xff]
    %v364 = vld [vmem:[#allocation5 + $0x988] sm:$0xff]
    %v365 = vld [vmem:[#allocation5 + $0x990] sm:$0xff]
    %v366 = vld [vmem:[#allocation5 + $0x998] sm:$0xff]
    %v367 = vld [vmem:[#allocation5 + $0x9a0] sm:$0xff]
    %v368 = vld [vmem:[#allocation5 + $0x9a8] sm:$0xff]
    %v369 = vld [vmem:[#allocation5 + $0x9b0] sm:$0xff]
    %v370 = vld [vmem:[#allocation5 + $0x9b8] sm:$0xff]
    %v371 = vld [vmem:[#allocation5 + $0x9c0] sm:$0xff]
    %v372 = vld [vmem:[#allocation5 + $0x9c8] sm:$0xff]
    %v373 = vld [vmem:[#allocation5 + $0x9d0] sm:$0xff]
    %v374 = vld [vmem:[#allocation5 + $0x9d8] sm:$0xff]
    %v375 = vld [vmem:[#allocation5 + $0x9e0] sm:$0xff]
    %v376 = vld [vmem:[#allocation5 + $0x9e8] sm:$0xff]
    %v377 = vld [vmem:[#allocation5 + $0x9f0] sm:$0xff]
    %v378 = vld [vmem:[#allocation5 + $0x9f8] sm:$0xff]
    %v379 = vld [vmem:[#allocation5 + $0xa00] sm:$0xff]
    %v380 = vld [vmem:[#allocation5 + $0xa08] sm:$0xff]
    %v381 = vld [vmem:[#allocation5 + $0xa10] sm:$0xff]
    %v382 = vld [vmem:[#allocation5 + $0xa18] sm:$0xff]
    %v383 = vld [vmem:[#allocation5 + $0xa20] sm:$0xff]
    %v384 = vld [vmem:[#allocation5 + $0xa28] sm:$0xff]
    %v385 = vld [vmem:[#allocation5 + $0xa30] sm:$0xff]
    %v386 = vld [vmem:[#allocation5 + $0xa38] sm:$0xff]
    %v387 = vld [vmem:[#allocation5 + $0xa40] sm:$0xff]
    %v388 = vld [vmem:[#allocation5 + $0xa48] sm:$0xff]
    %v389 = vld [vmem:[#allocation5 + $0xa50] sm:$0xff]
    %v390 = vld [vmem:[#allocation5 + $0xa58] sm:$0xff]
    %v391 = vld [vmem:[#allocation5 + $0xa60] sm:$0xff]
    %v392 = vld [vmem:[#allocation5 + $0xa68] sm:$0xff]
    %v393 = vld [vmem:[#allocation5 + $0xa70] sm:$0xff]
    %v394 = vld [vmem:[#allocation5 + $0xa78] sm:$0xff]
    %v395 = vld [vmem:[#allocation5 + $0xa80] sm:$0xff]
    %v396 = vld [vmem:[#allocation5 + $0xa88] sm:$0xff]
    %v397 = vld [vmem:[#allocation5 + $0xa90] sm:$0xff]
    %v398 = vld [vmem:[#allocation5 + $0xa98] sm:$0xff]
    %v399 = vld [vmem:[#allocation5 + $0xaa0] sm:$0xff]
    %v400 = vld [vmem:[#allocation5 + $0xaa8] sm:$0xff]
    %v401 = vld [vmem:[#allocation5 + $0xab0] sm:$0xff]
    %v402 = vld [vmem:[#allocation5 + $0xab8] sm:$0xff]
    %v403 = vld [vmem:[#allocation5 + $0xac0] sm:$0xff]
    %v404 = vld [vmem:[#allocation5 + $0xac8] sm:$0xff]
    %v405 = vld [vmem:[#allocation5 + $0xad0] sm:$0xff]
    %v406 = vld [vmem:[#allocation5 + $0xad8] sm:$0xff]
    %v407 = vld [vmem:[#allocation5 + $0xae0] sm:$0xff]
    %v408 = vld [vmem:[#allocation5 + $0xae8] sm:$0xff]
    %v409 = vld [vmem:[#allocation5 + $0xaf0] sm:$0xff]
    %v410 = vld [vmem:[#allocation5 + $0xaf8] sm:$0xff]
    %v411 = vld [vmem:[#allocation5 + $0xb00] sm:$0xff]
    %v412 = vld [vmem:[#allocation5 + $0xb08] sm:$0xff]
    %v413 = vld [vmem:[#allocation5 + $0xb10] sm:$0xff]
    %v414 = vld [vmem:[#allocation5 + $0xb18] sm:$0xff]
    %v415 = vld [vmem:[#allocation5 + $0xb20] sm:$0xff]
    %v416 = vld [vmem:[#allocation5 + $0xb28] sm:$0xff]
    %v417 = vld [vmem:[#allocation5 + $0xb30] sm:$0xff]
    %v418 = vld [vmem:[#allocation5 + $0xb38] sm:$0xff]
    %v419 = vld [vmem:[#allocation5 + $0xb40] sm:$0xff]
    %v420 = vld [vmem:[#allocation5 + $0xb48] sm:$0xff]
    %v421 = vld [vmem:[#allocation5 + $0xb50] sm:$0xff]
    %v422 = vld [vmem:[#allocation5 + $0xb58] sm:$0xff]
    %v423 = vld [vmem:[#allocation5 + $0xb60] sm:$0xff]
    %v424 = vld [vmem:[#allocation5 + $0xb68] sm:$0xff]
    %v425 = vld [vmem:[#allocation5 + $0xb70] sm:$0xff]
    %v426 = vld [vmem:[#allocation5 + $0xb78] sm:$0xff]
    %v427 = vld [vmem:[#allocation5 + $0xb80] sm:$0xff]
    %v428 = vld [vmem:[#allocation5 + $0xb88] sm:$0xff]
    %v429 = vld [vmem:[#allocation5 + $0xb90] sm:$0xff]
    %v430 = vld [vmem:[#allocation5 + $0xb98] sm:$0xff]
    %v431 = vld [vmem:[#allocation5 + $0xba0] sm:$0xff]
    %v432 = vld [vmem:[#allocation5 + $0xba8] sm:$0xff]
    %v433 = vld [vmem:[#allocation5 + $0xbb0] sm:$0xff]
    %v434 = vld [vmem:[#allocation5 + $0xbb8] sm:$0xff]
    %v435 = vld [vmem:[#allocation5 + $0xbc0] sm:$0xff]
    %v436 = vld [vmem:[#allocation5 + $0xbc8] sm:$0xff]
    %v437 = vld [vmem:[#allocation5 + $0xbd0] sm:$0xff]
    %v438 = vld [vmem:[#allocation5 + $0xbd8] sm:$0xff]
    %v439 = vld [vmem:[#allocation5 + $0xbe0] sm:$0xff]
    %v440 = vld [vmem:[#allocation5 + $0xbe8] sm:$0xff]
    %v441 = vld [vmem:[#allocation5 + $0xbf0] sm:$0xff]
    %v442 = vld [vmem:[#allocation5 + $0xbf8] sm:$0xff]
    %v443 = vld [vmem:[#allocation5 + $0xc00] sm:$0xff]
    %v444 = vld [vmem:[#allocation5 + $0xc08] sm:$0xff]
    %v445 = vld [vmem:[#allocation5 + $0xc10] sm:$0xff]
    %v446 = vld [vmem:[#allocation5 + $0xc18] sm:$0xff]
    %v447 = vld [vmem:[#allocation5 + $0xc20] sm:$0xff]
    %v448 = vld [vmem:[#allocation5 + $0xc28] sm:$0xff]
    %v449 = vld [vmem:[#allocation5 + $0xc30] sm:$0xff]
    %v450 = vld [vmem:[#allocation5 + $0xc38] sm:$0xff]
    %v451 = vld [vmem:[#allocation5 + $0xc40] sm:$0xff]
    %v452 = vld [vmem:[#allocation5 + $0xc48] sm:$0xff]
    %v453 = vld [vmem:[#allocation5 + $0xc50] sm:$0xff]
    %v454 = vld [vmem:[#allocation5 + $0xc58] sm:$0xff]
    %v455 = vld [vmem:[#allocation5 + $0xc60] sm:$0xff]
    %v456 = vld [vmem:[#allocation5 + $0xc68] sm:$0xff]
    %v457 = vld [vmem:[#allocation5 + $0xc70] sm:$0xff]
    %v458 = vld [vmem:[#allocation5 + $0xc78] sm:$0xff]
    %v459 = vld [vmem:[#allocation5 + $0xc80] sm:$0xff]
    %v460 = vld [vmem:[#allocation5 + $0xc88] sm:$0xff]
    %v461 = vld [vmem:[#allocation5 + $0xc90] sm:$0xff]
    %v462 = vld [vmem:[#allocation5 + $0xc98] sm:$0xff]
    %v463 = vld [vmem:[#allocation5 + $0xca0] sm:$0xff]
    %v464 = vld [vmem:[#allocation5 + $0xca8] sm:$0xff]
    %v465 = vld [vmem:[#allocation5 + $0xcb0] sm:$0xff]
    %v466 = vld [vmem:[#allocation5 + $0xcb8] sm:$0xff]
    %v467 = vld [vmem:[#allocation5 + $0xcc0] sm:$0xff]
    %v468 = vld [vmem:[#allocation5 + $0xcc8] sm:$0xff]
    %v469 = vld [vmem:[#allocation5 + $0xcd0] sm:$0xff]
    %v470 = vld [vmem:[#allocation5 + $0xcd8] sm:$0xff]
    %v471 = vld [vmem:[#allocation5 + $0xce0] sm:$0xff]
    %v472 = vld [vmem:[#allocation5 + $0xce8] sm:$0xff]
    %v473 = vld [vmem:[#allocation5 + $0xcf0] sm:$0xff]
    %v474 = vld [vmem:[#allocation5 + $0xcf8] sm:$0xff]
    %v475 = vld [vmem:[#allocation5 + $0xd00] sm:$0xff]
    %v476 = vld [vmem:[#allocation5 + $0xd08] sm:$0xff]
    %v477 = vld [vmem:[#allocation5 + $0xd10] sm:$0xff]
    %v478 = vld [vmem:[#allocation5 + $0xd18] sm:$0xff]
    %v479 = vld [vmem:[#allocation5 + $0xd20] sm:$0xff]
    %v480 = vld [vmem:[#allocation5 + $0xd28] sm:$0xff]
    %v481 = vld [vmem:[#allocation5 + $0xd30] sm:$0xff]
    %v482 = vld [vmem:[#allocation5 + $0xd38] sm:$0xff]
    %v483 = vld [vmem:[#allocation5 + $0xd40] sm:$0xff]
    %v484 = vld [vmem:[#allocation5 + $0xd48] sm:$0xff]
    %v485 = vld [vmem:[#allocation5 + $0xd50] sm:$0xff]
    %v486 = vld [vmem:[#allocation5 + $0xd58] sm:$0xff]
    %v487 = vld [vmem:[#allocation5 + $0xd60] sm:$0xff]
    %v488 = vld [vmem:[#allocation5 + $0xd68] sm:$0xff]
    %v489 = vld [vmem:[#allocation5 + $0xd70] sm:$0xff]
    %v490 = vld [vmem:[#allocation5 + $0xd78] sm:$0xff]
    %v491 = vld [vmem:[#allocation5 + $0xd80] sm:$0xff]
    %v492 = vld [vmem:[#allocation5 + $0xd88] sm:$0xff]
    %v493 = vld [vmem:[#allocation5 + $0xd90] sm:$0xff]
    %v494 = vld [vmem:[#allocation5 + $0xd98] sm:$0xff]
    %v495 = vld [vmem:[#allocation5 + $0xda0] sm:$0xff]
    %v496 = vld [vmem:[#allocation5 + $0xda8] sm:$0xff]
    %v497 = vld [vmem:[#allocation5 + $0xdb0] sm:$0xff]
    %v498 = vld [vmem:[#allocation5 + $0xdb8] sm:$0xff]
    %v499 = vld [vmem:[#allocation5 + $0xdc0] sm:$0xff]
    %v500 = vld [vmem:[#allocation5 + $0xdc8] sm:$0xff]
    %v501 = vld [vmem:[#allocation5 + $0xdd0] sm:$0xff]
    %v502 = vld [vmem:[#allocation5 + $0xdd8] sm:$0xff]
    %v503 = vld [vmem:[#allocation5 + $0xde0] sm:$0xff]
    %v504 = vld [vmem:[#allocation5 + $0xde8] sm:$0xff]
    %v505 = vld [vmem:[#allocation5 + $0xdf0] sm:$0xff]
    %v506 = vld [vmem:[#allocation5 + $0xdf8] sm:$0xff]
    %v507 = vld [vmem:[#allocation5 + $0xe00] sm:$0xff]
    %v508 = vld [vmem:[#allocation5 + $0xe08] sm:$0xff]
    %v509 = vld [vmem:[#allocation5 + $0xe10] sm:$0xff]
    %v510 = vld [vmem:[#allocation5 + $0xe18] sm:$0xff]
    %v511 = vld [vmem:[#allocation5 + $0xe20] sm:$0xff]
    %v512 = vld [vmem:[#allocation5 + $0xe28] sm:$0xff]
    %v513 = vld [vmem:[#allocation5 + $0xe30] sm:$0xff]
    %v514 = vld [vmem:[#allocation5 + $0xe38] sm:$0xff]
    %v515 = vld [vmem:[#allocation5 + $0xe40] sm:$0xff]
    %v516 = vld [vmem:[#allocation5 + $0xe48] sm:$0xff]
    %v517 = vld [vmem:[#allocation5 + $0xe50] sm:$0xff]
    %v518 = vld [vmem:[#allocation5 + $0xe58] sm:$0xff]
    %v519 = vld [vmem:[#allocation5 + $0xe60] sm:$0xff]
    %v520 = vld [vmem:[#allocation5 + $0xe68] sm:$0xff]
    %v521 = vld [vmem:[#allocation5 + $0xe70] sm:$0xff]
    %v522 = vld [vmem:[#allocation5 + $0xe78] sm:$0xff]
    %v523 = vld [vmem:[#allocation5 + $0xe80] sm:$0xff]
    %v524 = vld [vmem:[#allocation5 + $0xe88] sm:$0xff]
    %v525 = vld [vmem:[#allocation5 + $0xe90] sm:$0xff]
    %v526 = vld [vmem:[#allocation5 + $0xe98] sm:$0xff]
    %v527 = vld [vmem:[#allocation5 + $0xea0] sm:$0xff]
    %v528 = vld [vmem:[#allocation5 + $0xea8] sm:$0xff]
    %v529 = vld [vmem:[#allocation5 + $0xeb0] sm:$0xff]
    %v530 = vld [vmem:[#allocation5 + $0xeb8] sm:$0xff]
    %v531 = vld [vmem:[#allocation5 + $0xec0] sm:$0xff]
    %v532 = vld [vmem:[#allocation5 + $0xec8] sm:$0xff]
    %v533 = vld [vmem:[#allocation5 + $0xed0] sm:$0xff]
    %v534 = vld [vmem:[#allocation5 + $0xed8] sm:$0xff]
    %v535 = vld [vmem:[#allocation5 + $0xee0] sm:$0xff]
    %v536 = vld [vmem:[#allocation5 + $0xee8] sm:$0xff]
    %v537 = vld [vmem:[#allocation5 + $0xef0] sm:$0xff]
    %v538 = vld [vmem:[#allocation5 + $0xef8] sm:$0xff]
    %v539 = vld [vmem:[#allocation5 + $0xf00] sm:$0xff]
    %v540 = vld [vmem:[#allocation5 + $0xf08] sm:$0xff]
    %v541 = vld [vmem:[#allocation5 + $0xf10] sm:$0xff]
    %v542 = vld [vmem:[#allocation5 + $0xf18] sm:$0xff]
    %v543 = vld [vmem:[#allocation5 + $0xf20] sm:$0xff]
    %v544 = vld [vmem:[#allocation5 + $0xf28] sm:$0xff]
    %v545 = vld [vmem:[#allocation5 + $0xf30] sm:$0xff]
    %v546 = vld [vmem:[#allocation5 + $0xf38] sm:$0xff]
    %v547 = vld [vmem:[#allocation5 + $0xf40] sm:$0xff]
    %v548 = vld [vmem:[#allocation5 + $0xf48] sm:$0xff]
    %v549 = vld [vmem:[#allocation5 + $0xf50] sm:$0xff]
    %v550 = vld [vmem:[#allocation5 + $0xf58] sm:$0xff]
    %v551 = vld [vmem:[#allocation5 + $0xf60] sm:$0xff]
    %v552 = vld [vmem:[#allocation5 + $0xf68] sm:$0xff]
    %v553 = vld [vmem:[#allocation5 + $0xf70] sm:$0xff]
    %v554 = vld [vmem:[#allocation5 + $0xf78] sm:$0xff]
    %v555 = vld [vmem:[#allocation5 + $0xf80] sm:$0xff]
    %v556 = vld [vmem:[#allocation5 + $0xf88] sm:$0xff]
    %v557 = vld [vmem:[#allocation5 + $0xf90] sm:$0xff]
    %v558 = vld [vmem:[#allocation5 + $0xf98] sm:$0xff]
    %v559 = vld [vmem:[#allocation5 + $0xfa0] sm:$0xff]
    %v560 = vld [vmem:[#allocation5 + $0xfa8] sm:$0xff]
    %v561 = vld [vmem:[#allocation5 + $0xfb0] sm:$0xff]
    %v562 = vld [vmem:[#allocation5 + $0xfb8] sm:$0xff]
    %v563 = vld [vmem:[#allocation5 + $0xfc0] sm:$0xff]
    %v564 = vld [vmem:[#allocation5 + $0xfc8] sm:$0xff]
    %v565 = vld [vmem:[#allocation5 + $0xfd0] sm:$0xff]
    %v566 = vld [vmem:[#allocation5 + $0xfd8] sm:$0xff]
    %v567 = vld [vmem:[#allocation5 + $0xfe0] sm:$0xff]
    %v568 = vld [vmem:[#allocation5 + $0xfe8] sm:$0xff]
    %v569 = vld [vmem:[#allocation5 + $0xff0] sm:$0xff]
    %v570 = vld [vmem:[#allocation5 + $0xff8] sm:$0xff]
    %v571 = vld [vmem:[#allocation7] sm:$0xff]
    %v573 = vperm.slane %v571, 0
    %v574 = vperm.slane %v571, 1
    %v575 = vperm.slane %v571, 2
    %v576 = vperm.slane %v571, 3
    %v577 = vperm.slane %v571, 4
    %v578 = vperm.slane %v571, 5
    %v579 = vperm.slane %v571, 6
    %v580 = vperm.slane %v571, 7
    %590 = vst [vmem:[#allocation1] ss:$4 sm:$0xff] %v58
    %v591 = vld.sshfl [vmem:[#allocation1] sm:$0xff pattern:$0x73625140]
    %v592 = vld.sshfl [vmem:[#allocation1 + $0x8] sm:$0xff pattern:$0x73625140]
    %v593 = vld.sshfl [vmem:[#allocation1 + $0x10] sm:$0xff pattern:$0x73625140]
    %v594 = vld.sshfl [vmem:[#allocation1 + $0x18] sm:$0xff pattern:$0x73625140]
    %v599 = vand.u32 %v119, 4294901760
    %600 = vmatpush.xpose.msra.mxu0 %v599
    %v601 = vand.u32 %v115, 4294901760
    %602 = vmatpush.xpose.msra.mxu0 %v601
    %v603 = vand.u32 %v111, 4294901760
    %604 = vmatpush.xpose.msra.mxu0 %v603
    %v605 = vand.u32 %v107, 4294901760
    %606 = vmatpush.xpose.msra.mxu0 %v605
    %v607 = vand.u32 %v103, 4294901760
    %608 = vmatpush.xpose.msra.mxu0 %v607
    %v609 = vand.u32 %v99, 4294901760
    %610 = vmatpush.xpose.msra.mxu0 %v609
    %v611 = vand.u32 %v95, 4294901760
    %612 = vmatpush.xpose.msra.mxu0 %v611
    %v613 = vand.u32 %v91, 4294901760
    %614 = vmatpush.xpose.msra.mxu0 %v613
    %v615 = vand.u32 %v87, 4294901760
    %616 = vmatpush.xpose.msra.mxu0 %v615
    %v617 = vand.u32 %v83, 4294901760
    %618 = vmatpush.xpose.msra.mxu0 %v617
    %v619 = vand.u32 %v79, 4294901760
    %620 = vmatpush.xpose.msra.mxu0 %v619
    %v621 = vand.u32 %v75, 4294901760
    %622 = vmatpush.xpose.msra.mxu0 %v621
    %v623 = vand.u32 %v71, 4294901760
    %624 = vmatpush.xpose.msra.mxu0 %v623
    %v625 = vand.u32 %v67, 4294901760
    %626 = vmatpush.xpose.msra.mxu0 %v625
    %v627 = vand.u32 %v63, 4294901760
    %628 = vmatpush.xpose.msra.mxu0 %v627
    %v629 = vand.u32 %v59, 4294901760
    %630 = vmatpush.xpose.msra.mxu0 %v629
    %v631 = vand.u32 %v591, 4294901760
    %v632 = vsub.f32 %v591, %v631
    %v633 = vand.u32 %v632, 4294901760
    %v634 = vsub.f32 %v632, %v633
    %v635 = vand.u32 %v634, 4294901760
    %636 = vmatmul.f32.gmra.mxu0 %v635
    %v637 = vpop.f32.mrf.mxu0
    %v638 = vadd.f32 %v573, %v637
    %639 = vdwg.mxu0
    %v640 = vand.u32 %v119, 4294901760
    %v641 = vsub.f32 %v119, %v640
    %v642 = vand.u32 %v641, 4294901760
    %v643 = vsub.f32 %v641, %v642
    %v644 = vand.u32 %v643, 4294901760
    %645 = vmatpush.xpose.msra.mxu0 %v644
    %v646 = vand.u32 %v115, 4294901760
    %v647 = vsub.f32 %v115, %v646
    %v648 = vand.u32 %v647, 4294901760
    %v649 = vsub.f32 %v647, %v648
    %v650 = vand.u32 %v649, 4294901760
    %651 = vmatpush.xpose.msra.mxu0 %v650
    %v652 = vand.u32 %v111, 4294901760
    %v653 = vsub.f32 %v111, %v652
    %v654 = vand.u32 %v653, 4294901760
    %v655 = vsub.f32 %v653, %v654
    %v656 = vand.u32 %v655, 4294901760
    %657 = vmatpush.xpose.msra.mxu0 %v656
    %v658 = vand.u32 %v107, 4294901760
    %v659 = vsub.f32 %v107, %v658
    %v660 = vand.u32 %v659, 4294901760
    %v661 = vsub.f32 %v659, %v660
    %v662 = vand.u32 %v661, 4294901760
    %663 = vmatpush.xpose.msra.mxu0 %v662
    %v664 = vand.u32 %v103, 4294901760
    %v665 = vsub.f32 %v103, %v664
    %v666 = vand.u32 %v665, 4294901760
    %v667 = vsub.f32 %v665, %v666
    %v668 = vand.u32 %v667, 4294901760
    %669 = vmatpush.xpose.msra.mxu0 %v668
    %v670 = vand.u32 %v99, 4294901760
    %v671 = vsub.f32 %v99, %v670
    %v672 = vand.u32 %v671, 4294901760
    %v673 = vsub.f32 %v671, %v672
    %v674 = vand.u32 %v673, 4294901760
    %675 = vmatpush.xpose.msra.mxu0 %v674
    %v676 = vand.u32 %v95, 4294901760
    %v677 = vsub.f32 %v95, %v676
    %v678 = vand.u32 %v677, 4294901760
    %v679 = vsub.f32 %v677, %v678
    %v680 = vand.u32 %v679, 4294901760
    %681 = vmatpush.xpose.msra.mxu0 %v680
    %v682 = vand.u32 %v91, 4294901760
    %v683 = vsub.f32 %v91, %v682
    %v684 = vand.u32 %v683, 4294901760
    %v685 = vsub.f32 %v683, %v684
    %v686 = vand.u32 %v685, 4294901760
    %687 = vmatpush.xpose.msra.mxu0 %v686
    %v688 = vand.u32 %v87, 4294901760
    %v689 = vsub.f32 %v87, %v688
    %v690 = vand.u32 %v689, 4294901760
    %v691 = vsub.f32 %v689, %v690
    %v692 = vand.u32 %v691, 4294901760
    %693 = vmatpush.xpose.msra.mxu0 %v692
    %v694 = vand.u32 %v83, 4294901760
    %v695 = vsub.f32 %v83, %v694
    %v696 = vand.u32 %v695, 4294901760
    %v697 = vsub.f32 %v695, %v696
    %v698 = vand.u32 %v697, 4294901760
    %699 = vmatpush.xpose.msra.mxu0 %v698
    %v700 = vand.u32 %v79, 4294901760
    %v701 = vsub.f32 %v79, %v700
    %v702 = vand.u32 %v701, 4294901760
    %v703 = vsub.f32 %v701, %v702
    %v704 = vand.u32 %v703, 4294901760
    %705 = vmatpush.xpose.msra.mxu0 %v704
    %v706 = vand.u32 %v75, 4294901760
    %v707 = vsub.f32 %v75, %v706
    %v708 = vand.u32 %v707, 4294901760
    %v709 = vsub.f32 %v707, %v708
    %v710 = vand.u32 %v709, 4294901760
    %711 = vmatpush.xpose.msra.mxu0 %v710
    %v712 = vand.u32 %v71, 4294901760
    %v713 = vsub.f32 %v71, %v712
    %v714 = vand.u32 %v713, 4294901760
    %v715 = vsub.f32 %v713, %v714
    %v716 = vand.u32 %v715, 4294901760
    %717 = vmatpush.xpose.msra.mxu0 %v716
    %v718 = vand.u32 %v67, 4294901760
    %v719 = vsub.f32 %v67, %v718
    %v720 = vand.u32 %v719, 4294901760
    %v721 = vsub.f32 %v719, %v720
    %v722 = vand.u32 %v721, 4294901760
    %723 = vmatpush.xpose.msra.mxu0 %v722
    %v724 = vand.u32 %v63, 4294901760
    %v725 = vsub.f32 %v63, %v724
    %v726 = vand.u32 %v725, 4294901760
    %v727 = vsub.f32 %v725, %v726
    %v728 = vand.u32 %v727, 4294901760
    %729 = vmatpush.xpose.msra.mxu0 %v728
    %v730 = vand.u32 %v59, 4294901760
    %v731 = vsub.f32 %v59, %v730
    %v732 = vand.u32 %v731, 4294901760
    %v733 = vsub.f32 %v731, %v732
    %v734 = vand.u32 %v733, 4294901760
    %735 = vmatpush.xpose.msra.mxu0 %v734
    %v736 = vand.u32 %v591, 4294901760
    %737 = vmatmul.f32.gmra.mxu0 %v736
    %v738 = vpop.f32.mrf.mxu0
    %v739 = vadd.f32 %v638, %v738
    %740 = vdwg.mxu0
    %v741 = vand.u32 %v119, 4294901760
    %v742 = vsub.f32 %v119, %v741
    %743 = vmatpush.xpose.msra.mxu0 %v742
    %v744 = vand.u32 %v115, 4294901760
    %v745 = vsub.f32 %v115, %v744
    %746 = vmatpush.xpose.msra.mxu0 %v745
    %v747 = vand.u32 %v111, 4294901760
    %v748 = vsub.f32 %v111, %v747
    %749 = vmatpush.xpose.msra.mxu0 %v748
    %v750 = vand.u32 %v107, 4294901760
    %v751 = vsub.f32 %v107, %v750
    %752 = vmatpush.xpose.msra.mxu0 %v751
    %v753 = vand.u32 %v103, 4294901760
    %v754 = vsub.f32 %v103, %v753
    %755 = vmatpush.xpose.msra.mxu0 %v754
    %v756 = vand.u32 %v99, 4294901760
    %v757 = vsub.f32 %v99, %v756
    %758 = vmatpush.xpose.msra.mxu0 %v757
    %v759 = vand.u32 %v95, 4294901760
    %v760 = vsub.f32 %v95, %v759
    %761 = vmatpush.xpose.msra.mxu0 %v760
    %v762 = vand.u32 %v91, 4294901760
    %v763 = vsub.f32 %v91, %v762
    %764 = vmatpush.xpose.msra.mxu0 %v763
    %v765 = vand.u32 %v87, 4294901760
    %v766 = vsub.f32 %v87, %v765
    %767 = vmatpush.xpose.msra.mxu0 %v766
    %v768 = vand.u32 %v83, 4294901760
    %v769 = vsub.f32 %v83, %v768
    %770 = vmatpush.xpose.msra.mxu0 %v769
    %v771 = vand.u32 %v79, 4294901760
    %v772 = vsub.f32 %v79, %v771
    %773 = vmatpush.xpose.msra.mxu0 %v772
    %v774 = vand.u32 %v75, 4294901760
    %v775 = vsub.f32 %v75, %v774
    %776 = vmatpush.xpose.msra.mxu0 %v775
    %v777 = vand.u32 %v71, 4294901760
    %v778 = vsub.f32 %v71, %v777
    %779 = vmatpush.xpose.msra.mxu0 %v778
    %v780 = vand.u32 %v67, 4294901760
    %v781 = vsub.f32 %v67, %v780
    %782 = vmatpush.xpose.msra.mxu0 %v781
    %v783 = vand.u32 %v63, 4294901760
    %v784 = vsub.f32 %v63, %v783
    %785 = vmatpush.xpose.msra.mxu0 %v784
    %v786 = vand.u32 %v59, 4294901760
    %v787 = vsub.f32 %v59, %v786
    %788 = vmatpush.xpose.msra.mxu0 %v787
    %v789 = vand.u32 %v591, 4294901760
    %v790 = vsub.f32 %v591, %v789
    %791 = vmatmul.f32.gmra.mxu0 %v790
    %v792 = vpop.f32.mrf.mxu0
    %v793 = vadd.f32 %v739, %v792
    %794 = vdwg.mxu0
    %v795 = vand.u32 %v119, 4294901760
    %796 = vmatpush.xpose.msra.mxu0 %v795
    %v797 = vand.u32 %v115, 4294901760
    %798 = vmatpush.xpose.msra.mxu0 %v797
    %v799 = vand.u32 %v111, 4294901760
    %800 = vmatpush.xpose.msra.mxu0 %v799
    %v801 = vand.u32 %v107, 4294901760
    %802 = vmatpush.xpose.msra.mxu0 %v801
    %v803 = vand.u32 %v103, 4294901760
    %804 = vmatpush.xpose.msra.mxu0 %v803
    %v805 = vand.u32 %v99, 4294901760
    %806 = vmatpush.xpose.msra.mxu0 %v805
    %v807 = vand.u32 %v95, 4294901760
    %808 = vmatpush.xpose.msra.mxu0 %v807
    %v809 = vand.u32 %v91, 4294901760
    %810 = vmatpush.xpose.msra.mxu0 %v809
    %v811 = vand.u32 %v87, 4294901760
    %812 = vmatpush.xpose.msra.mxu0 %v811
    %v813 = vand.u32 %v83, 4294901760
    %814 = vmatpush.xpose.msra.mxu0 %v813
    %v815 = vand.u32 %v79, 4294901760
    %816 = vmatpush.xpose.msra.mxu0 %v815
    %v817 = vand.u32 %v75, 4294901760
    %818 = vmatpush.xpose.msra.mxu0 %v817
    %v819 = vand.u32 %v71, 4294901760
    %820 = vmatpush.xpose.msra.mxu0 %v819
    %v821 = vand.u32 %v67, 4294901760
    %822 = vmatpush.xpose.msra.mxu0 %v821
    %v823 = vand.u32 %v63, 4294901760
    %824 = vmatpush.xpose.msra.mxu0 %v823
    %v825 = vand.u32 %v59, 4294901760
    %826 = vmatpush.xpose.msra.mxu0 %v825
    %v827 = vand.u32 %v591, 4294901760
    %v828 = vsub.f32 %v591, %v827
    %v829 = vand.u32 %v828, 4294901760
    %830 = vmatmul.f32.gmra.mxu0 %v829
    %v831 = vpop.f32.mrf.mxu0
    %v832 = vadd.f32 %v793, %v831
    %833 = vdwg.mxu0
    %v834 = vand.u32 %v119, 4294901760
    %v835 = vsub.f32 %v119, %v834
    %v836 = vand.u32 %v835, 4294901760
    %837 = vmatpush.xpose.msra.mxu0 %v836
    %v838 = vand.u32 %v115, 4294901760
    %v839 = vsub.f32 %v115, %v838
    %v840 = vand.u32 %v839, 4294901760
    %841 = vmatpush.xpose.msra.mxu0 %v840
    %v842 = vand.u32 %v111, 4294901760
    %v843 = vsub.f32 %v111, %v842
    %v844 = vand.u32 %v843, 4294901760
    %845 = vmatpush.xpose.msra.mxu0 %v844
    %v846 = vand.u32 %v107, 4294901760
    %v847 = vsub.f32 %v107, %v846
    %v848 = vand.u32 %v847, 4294901760
    %849 = vmatpush.xpose.msra.mxu0 %v848
    %v850 = vand.u32 %v103, 4294901760
    %v851 = vsub.f32 %v103, %v850
    %v852 = vand.u32 %v851, 4294901760
    %853 = vmatpush.xpose.msra.mxu0 %v852
    %v854 = vand.u32 %v99, 4294901760
    %v855 = vsub.f32 %v99, %v854
    %v856 = vand.u32 %v855, 4294901760
    %857 = vmatpush.xpose.msra.mxu0 %v856
    %v858 = vand.u32 %v95, 4294901760
    %v859 = vsub.f32 %v95, %v858
    %v860 = vand.u32 %v859, 4294901760
    %861 = vmatpush.xpose.msra.mxu0 %v860
    %v862 = vand.u32 %v91, 4294901760
    %v863 = vsub.f32 %v91, %v862
    %v864 = vand.u32 %v863, 4294901760
    %865 = vmatpush.xpose.msra.mxu0 %v864
    %v866 = vand.u32 %v87, 4294901760
    %v867 = vsub.f32 %v87, %v866
    %v868 = vand.u32 %v867, 4294901760
    %869 = vmatpush.xpose.msra.mxu0 %v868
    %v870 = vand.u32 %v83, 4294901760
    %v871 = vsub.f32 %v83, %v870
    %v872 = vand.u32 %v871, 4294901760
    %873 = vmatpush.xpose.msra.mxu0 %v872
    %v874 = vand.u32 %v79, 4294901760
    %v875 = vsub.f32 %v79, %v874
    %v876 = vand.u32 %v875, 4294901760
    %877 = vmatpush.xpose.msra.mxu0 %v876
    %v878 = vand.u32 %v75, 4294901760
    %v879 = vsub.f32 %v75, %v878
    %v880 = vand.u32 %v879, 4294901760
    %881 = vmatpush.xpose.msra.mxu0 %v880
    %v882 = vand.u32 %v71, 4294901760
    %v883 = vsub.f32 %v71, %v882
    %v884 = vand.u32 %v883, 4294901760
    %885 = vmatpush.xpose.msra.mxu0 %v884
    %v886 = vand.u32 %v67, 4294901760
    %v887 = vsub.f32 %v67, %v886
    %v888 = vand.u32 %v887, 4294901760
    %889 = vmatpush.xpose.msra.mxu0 %v888
    %v890 = vand.u32 %v63, 4294901760
    %v891 = vsub.f32 %v63, %v890
    %v892 = vand.u32 %v891, 4294901760
    %893 = vmatpush.xpose.msra.mxu0 %v892
    %v894 = vand.u32 %v59, 4294901760
    %v895 = vsub.f32 %v59, %v894
    %v896 = vand.u32 %v895, 4294901760
    %897 = vmatpush.xpose.msra.mxu0 %v896
    %v898 = vand.u32 %v591, 4294901760
    %899 = vmatmul.f32.gmra.mxu0 %v898
    %v900 = vpop.f32.mrf.mxu0
    %v901 = vadd.f32 %v832, %v900
    %902 = vdwg.mxu0
    %v903 = vand.u32 %v119, 4294901760
    %904 = vmatpush.xpose.msra.mxu0 %v903
    %v905 = vand.u32 %v115, 4294901760
    %906 = vmatpush.xpose.msra.mxu0 %v905
    %v907 = vand.u32 %v111, 4294901760
    %908 = vmatpush.xpose.msra.mxu0 %v907
    %v909 = vand.u32 %v107, 4294901760
    %910 = vmatpush.xpose.msra.mxu0 %v909
    %v911 = vand.u32 %v103, 4294901760
    %912 = vmatpush.xpose.msra.mxu0 %v911
    %v913 = vand.u32 %v99, 4294901760
    %914 = vmatpush.xpose.msra.mxu0 %v913
    %v915 = vand.u32 %v95, 4294901760
    %916 = vmatpush.xpose.msra.mxu0 %v915
    %v917 = vand.u32 %v91, 4294901760
    %918 = vmatpush.xpose.msra.mxu0 %v917
    %v919 = vand.u32 %v87, 4294901760
    %920 = vmatpush.xpose.msra.mxu0 %v919
    %v921 = vand.u32 %v83, 4294901760
    %922 = vmatpush.xpose.msra.mxu0 %v921
    %v923 = vand.u32 %v79, 4294901760
    %924 = vmatpush.xpose.msra.mxu0 %v923
    %v925 = vand.u32 %v75, 4294901760
    %926 = vmatpush.xpose.msra.mxu0 %v925
    %v927 = vand.u32 %v71, 4294901760
    %928 = vmatpush.xpose.msra.mxu0 %v927
    %v929 = vand.u32 %v67, 4294901760
    %930 = vmatpush.xpose.msra.mxu0 %v929
    %v931 = vand.u32 %v63, 4294901760
    %932 = vmatpush.xpose.msra.mxu0 %v931
    %v933 = vand.u32 %v59, 4294901760
    %934 = vmatpush.xpose.msra.mxu0 %v933
    %v935 = vand.u32 %v591, 4294901760
    %936 = vmatmul.f32.gmra.mxu0 %v935
    %v937 = vpop.f32.mrf.mxu0
    %v938 = vadd.f32 %v901, %v937
    %939 = vdwg.mxu0
    %v940 = vand.u32 %v120, 4294901760
    %941 = vmatpush.xpose.msra.mxu0 %v940
    %v942 = vand.u32 %v116, 4294901760
    %943 = vmatpush.xpose.msra.mxu0 %v942
    %v944 = vand.u32 %v112, 4294901760
    %945 = vmatpush.xpose.msra.mxu0 %v944
    %v946 = vand.u32 %v108, 4294901760
    %947 = vmatpush.xpose.msra.mxu0 %v946
    %v948 = vand.u32 %v104, 4294901760
    %949 = vmatpush.xpose.msra.mxu0 %v948
    %v950 = vand.u32 %v100, 4294901760
    %951 = vmatpush.xpose.msra.mxu0 %v950
    %v952 = vand.u32 %v96, 4294901760
    %953 = vmatpush.xpose.msra.mxu0 %v952
    %v954 = vand.u32 %v92, 4294901760
    %955 = vmatpush.xpose.msra.mxu0 %v954
    %v956 = vand.u32 %v88, 4294901760
    %957 = vmatpush.xpose.msra.mxu0 %v956
    %v958 = vand.u32 %v84, 4294901760
    %959 = vmatpush.xpose.msra.mxu0 %v958
    %v960 = vand.u32 %v80, 4294901760
    %961 = vmatpush.xpose.msra.mxu0 %v960
    %v962 = vand.u32 %v76, 4294901760
    %963 = vmatpush.xpose.msra.mxu0 %v962
    %v964 = vand.u32 %v72, 4294901760
    %965 = vmatpush.xpose.msra.mxu0 %v964
    %v966 = vand.u32 %v68, 4294901760
    %967 = vmatpush.xpose.msra.mxu0 %v966
    %v968 = vand.u32 %v64, 4294901760
    %969 = vmatpush.xpose.msra.mxu0 %v968
    %v970 = vand.u32 %v60, 4294901760
    %971 = vmatpush.xpose.msra.mxu0 %v970
    %v972 = vand.u32 %v592, 4294901760
    %v973 = vsub.f32 %v592, %v972
    %v974 = vand.u32 %v973, 4294901760
    %v975 = vsub.f32 %v973, %v974
    %v976 = vand.u32 %v975, 4294901760
    %977 = vmatmul.f32.gmra.mxu0 %v976
    %v978 = vpop.f32.mrf.mxu0
    %v979 = vadd.f32 %v938, %v978
    %980 = vdwg.mxu0
    %v981 = vand.u32 %v120, 4294901760
    %v982 = vsub.f32 %v120, %v981
    %v983 = vand.u32 %v982, 4294901760
    %v984 = vsub.f32 %v982, %v983
    %v985 = vand.u32 %v984, 4294901760
    %986 = vmatpush.xpose.msra.mxu0 %v985
    %v987 = vand.u32 %v116, 4294901760
    %v988 = vsub.f32 %v116, %v987
    %v989 = vand.u32 %v988, 4294901760
    %v990 = vsub.f32 %v988, %v989
    %v991 = vand.u32 %v990, 4294901760
    %992 = vmatpush.xpose.msra.mxu0 %v991
    %v993 = vand.u32 %v112, 4294901760
    %v994 = vsub.f32 %v112, %v993
    %v995 = vand.u32 %v994, 4294901760
    %v996 = vsub.f32 %v994, %v995
    %v997 = vand.u32 %v996, 4294901760
    %998 = vmatpush.xpose.msra.mxu0 %v997
    %v999 = vand.u32 %v108, 4294901760
    %v1000 = vsub.f32 %v108, %v999
    %v1001 = vand.u32 %v1000, 4294901760
    %v1002 = vsub.f32 %v1000, %v1001
    %v1003 = vand.u32 %v1002, 4294901760
    %1004 = vmatpush.xpose.msra.mxu0 %v1003
    %v1005 = vand.u32 %v104, 4294901760
    %v1006 = vsub.f32 %v104, %v1005
    %v1007 = vand.u32 %v1006, 4294901760
    %v1008 = vsub.f32 %v1006, %v1007
    %v1009 = vand.u32 %v1008, 4294901760
    %1010 = vmatpush.xpose.msra.mxu0 %v1009
    %v1011 = vand.u32 %v100, 4294901760
    %v1012 = vsub.f32 %v100, %v1011
    %v1013 = vand.u32 %v1012, 4294901760
    %v1014 = vsub.f32 %v1012, %v1013
    %v1015 = vand.u32 %v1014, 4294901760
    %1016 = vmatpush.xpose.msra.mxu0 %v1015
    %v1017 = vand.u32 %v96, 4294901760
    %v1018 = vsub.f32 %v96, %v1017
    %v1019 = vand.u32 %v1018, 4294901760
    %v1020 = vsub.f32 %v1018, %v1019
    %v1021 = vand.u32 %v1020, 4294901760
    %1022 = vmatpush.xpose.msra.mxu0 %v1021
    %v1023 = vand.u32 %v92, 4294901760
    %v1024 = vsub.f32 %v92, %v1023
    %v1025 = vand.u32 %v1024, 4294901760
    %v1026 = vsub.f32 %v1024, %v1025
    %v1027 = vand.u32 %v1026, 4294901760
    %1028 = vmatpush.xpose.msra.mxu0 %v1027
    %v1029 = vand.u32 %v88, 4294901760
    %v1030 = vsub.f32 %v88, %v1029
    %v1031 = vand.u32 %v1030, 4294901760
    %v1032 = vsub.f32 %v1030, %v1031
    %v1033 = vand.u32 %v1032, 4294901760
    %1034 = vmatpush.xpose.msra.mxu0 %v1033
    %v1035 = vand.u32 %v84, 4294901760
    %v1036 = vsub.f32 %v84, %v1035
    %v1037 = vand.u32 %v1036, 4294901760
    %v1038 = vsub.f32 %v1036, %v1037
    %v1039 = vand.u32 %v1038, 4294901760
    %1040 = vmatpush.xpose.msra.mxu0 %v1039
    %v1041 = vand.u32 %v80, 4294901760
    %v1042 = vsub.f32 %v80, %v1041
    %v1043 = vand.u32 %v1042, 4294901760
    %v1044 = vsub.f32 %v1042, %v1043
    %v1045 = vand.u32 %v1044, 4294901760
    %1046 = vmatpush.xpose.msra.mxu0 %v1045
    %v1047 = vand.u32 %v76, 4294901760
    %v1048 = vsub.f32 %v76, %v1047
    %v1049 = vand.u32 %v1048, 4294901760
    %v1050 = vsub.f32 %v1048, %v1049
    %v1051 = vand.u32 %v1050, 4294901760
    %1052 = vmatpush.xpose.msra.mxu0 %v1051
    %v1053 = vand.u32 %v72, 4294901760
    %v1054 = vsub.f32 %v72, %v1053
    %v1055 = vand.u32 %v1054, 4294901760
    %v1056 = vsub.f32 %v1054, %v1055
    %v1057 = vand.u32 %v1056, 4294901760
    %1058 = vmatpush.xpose.msra.mxu0 %v1057
    %v1059 = vand.u32 %v68, 4294901760
    %v1060 = vsub.f32 %v68, %v1059
    %v1061 = vand.u32 %v1060, 4294901760
    %v1062 = vsub.f32 %v1060, %v1061
    %v1063 = vand.u32 %v1062, 4294901760
    %1064 = vmatpush.xpose.msra.mxu0 %v1063
    %v1065 = vand.u32 %v64, 4294901760
    %v1066 = vsub.f32 %v64, %v1065
    %v1067 = vand.u32 %v1066, 4294901760
    %v1068 = vsub.f32 %v1066, %v1067
    %v1069 = vand.u32 %v1068, 4294901760
    %1070 = vmatpush.xpose.msra.mxu0 %v1069
    %v1071 = vand.u32 %v60, 4294901760
    %v1072 = vsub.f32 %v60, %v1071
    %v1073 = vand.u32 %v1072, 4294901760
    %v1074 = vsub.f32 %v1072, %v1073
    %v1075 = vand.u32 %v1074, 4294901760
    %1076 = vmatpush.xpose.msra.mxu0 %v1075
    %v1077 = vand.u32 %v592, 4294901760
    %1078 = vmatmul.f32.gmra.mxu0 %v1077
    %v1079 = vpop.f32.mrf.mxu0
    %v1080 = vadd.f32 %v979, %v1079
    %1081 = vdwg.mxu0
    %v1082 = vand.u32 %v120, 4294901760
    %v1083 = vsub.f32 %v120, %v1082
    %1084 = vmatpush.xpose.msra.mxu0 %v1083
    %v1085 = vand.u32 %v116, 4294901760
    %v1086 = vsub.f32 %v116, %v1085
    %1087 = vmatpush.xpose.msra.mxu0 %v1086
    %v1088 = vand.u32 %v112, 4294901760
    %v1089 = vsub.f32 %v112, %v1088
    %1090 = vmatpush.xpose.msra.mxu0 %v1089
    %v1091 = vand.u32 %v108, 4294901760
    %v1092 = vsub.f32 %v108, %v1091
    %1093 = vmatpush.xpose.msra.mxu0 %v1092
    %v1094 = vand.u32 %v104, 4294901760
    %v1095 = vsub.f32 %v104, %v1094
    %1096 = vmatpush.xpose.msra.mxu0 %v1095
    %v1097 = vand.u32 %v100, 4294901760
    %v1098 = vsub.f32 %v100, %v1097
    %1099 = vmatpush.xpose.msra.mxu0 %v1098
    %v1100 = vand.u32 %v96, 4294901760
    %v1101 = vsub.f32 %v96, %v1100
    %1102 = vmatpush.xpose.msra.mxu0 %v1101
    %v1103 = vand.u32 %v92, 4294901760
    %v1104 = vsub.f32 %v92, %v1103
    %1105 = vmatpush.xpose.msra.mxu0 %v1104
    %v1106 = vand.u32 %v88, 4294901760
    %v1107 = vsub.f32 %v88, %v1106
    %1108 = vmatpush.xpose.msra.mxu0 %v1107
    %v1109 = vand.u32 %v84, 4294901760
    %v1110 = vsub.f32 %v84, %v1109
    %1111 = vmatpush.xpose.msra.mxu0 %v1110
    %v1112 = vand.u32 %v80, 4294901760
    %v1113 = vsub.f32 %v80, %v1112
    %1114 = vmatpush.xpose.msra.mxu0 %v1113
    %v1115 = vand.u32 %v76, 4294901760
    %v1116 = vsub.f32 %v76, %v1115
    %1117 = vmatpush.xpose.msra.mxu0 %v1116
    %v1118 = vand.u32 %v72, 4294901760
    %v1119 = vsub.f32 %v72, %v1118
    %1120 = vmatpush.xpose.msra.mxu0 %v1119
    %v1121 = vand.u32 %v68, 4294901760
    %v1122 = vsub.f32 %v68, %v1121
    %1123 = vmatpush.xpose.msra.mxu0 %v1122
    %v1124 = vand.u32 %v64, 4294901760
    %v1125 = vsub.f32 %v64, %v1124
    %1126 = vmatpush.xpose.msra.mxu0 %v1125
    %v1127 = vand.u32 %v60, 4294901760
    %v1128 = vsub.f32 %v60, %v1127
    %1129 = vmatpush.xpose.msra.mxu0 %v1128
    %v1130 = vand.u32 %v592, 4294901760
    %v1131 = vsub.f32 %v592, %v1130
    %1132 = vmatmul.f32.gmra.mxu0 %v1131
    %v1133 = vpop.f32.mrf.mxu0
    %v1134 = vadd.f32 %v1080, %v1133
    %1135 = vdwg.mxu0
    %v1136 = vand.u32 %v120, 4294901760
    %1137 = vmatpush.xpose.msra.mxu0 %v1136
    %v1138 = vand.u32 %v116, 4294901760
    %1139 = vmatpush.xpose.msra.mxu0 %v1138
    %v1140 = vand.u32 %v112, 4294901760
    %1141 = vmatpush.xpose.msra.mxu0 %v1140
    %v1142 = vand.u32 %v108, 4294901760
    %1143 = vmatpush.xpose.msra.mxu0 %v1142
    %v1144 = vand.u32 %v104, 4294901760
    %1145 = vmatpush.xpose.msra.mxu0 %v1144
    %v1146 = vand.u32 %v100, 4294901760
    %1147 = vmatpush.xpose.msra.mxu0 %v1146
    %v1148 = vand.u32 %v96, 4294901760
    %1149 = vmatpush.xpose.msra.mxu0 %v1148
    %v1150 = vand.u32 %v92, 4294901760
    %1151 = vmatpush.xpose.msra.mxu0 %v1150
    %v1152 = vand.u32 %v88, 4294901760
    %1153 = vmatpush.xpose.msra.mxu0 %v1152
    %v1154 = vand.u32 %v84, 4294901760
    %1155 = vmatpush.xpose.msra.mxu0 %v1154
    %v1156 = vand.u32 %v80, 4294901760
    %1157 = vmatpush.xpose.msra.mxu0 %v1156
    %v1158 = vand.u32 %v76, 4294901760
    %1159 = vmatpush.xpose.msra.mxu0 %v1158
    %v1160 = vand.u32 %v72, 4294901760
    %1161 = vmatpush.xpose.msra.mxu0 %v1160
    %v1162 = vand.u32 %v68, 4294901760
    %1163 = vmatpush.xpose.msra.mxu0 %v1162
    %v1164 = vand.u32 %v64, 4294901760
    %1165 = vmatpush.xpose.msra.mxu0 %v1164
    %v1166 = vand.u32 %v60, 4294901760
    %1167 = vmatpush.xpose.msra.mxu0 %v1166
    %v1168 = vand.u32 %v592, 4294901760
    %v1169 = vsub.f32 %v592, %v1168
    %v1170 = vand.u32 %v1169, 4294901760
    %1171 = vmatmul.f32.gmra.mxu0 %v1170
    %v1172 = vpop.f32.mrf.mxu0
    %v1173 = vadd.f32 %v1134, %v1172
    %1174 = vdwg.mxu0
    %v1175 = vand.u32 %v120, 4294901760
    %v1176 = vsub.f32 %v120, %v1175
    %v1177 = vand.u32 %v1176, 4294901760
    %1178 = vmatpush.xpose.msra.mxu0 %v1177
    %v1179 = vand.u32 %v116, 4294901760
    %v1180 = vsub.f32 %v116, %v1179
    %v1181 = vand.u32 %v1180, 4294901760
    %1182 = vmatpush.xpose.msra.mxu0 %v1181
    %v1183 = vand.u32 %v112, 4294901760
    %v1184 = vsub.f32 %v112, %v1183
    %v1185 = vand.u32 %v1184, 4294901760
    %1186 = vmatpush.xpose.msra.mxu0 %v1185
    %v1187 = vand.u32 %v108, 4294901760
    %v1188 = vsub.f32 %v108, %v1187
    %v1189 = vand.u32 %v1188, 4294901760
    %1190 = vmatpush.xpose.msra.mxu0 %v1189
    %v1191 = vand.u32 %v104, 4294901760
    %v1192 = vsub.f32 %v104, %v1191
    %v1193 = vand.u32 %v1192, 4294901760
    %1194 = vmatpush.xpose.msra.mxu0 %v1193
    %v1195 = vand.u32 %v100, 4294901760
    %v1196 = vsub.f32 %v100, %v1195
    %v1197 = vand.u32 %v1196, 4294901760
    %1198 = vmatpush.xpose.msra.mxu0 %v1197
    %v1199 = vand.u32 %v96, 4294901760
    %v1200 = vsub.f32 %v96, %v1199
    %v1201 = vand.u32 %v1200, 4294901760
    %1202 = vmatpush.xpose.msra.mxu0 %v1201
    %v1203 = vand.u32 %v92, 4294901760
    %v1204 = vsub.f32 %v92, %v1203
    %v1205 = vand.u32 %v1204, 4294901760
    %1206 = vmatpush.xpose.msra.mxu0 %v1205
    %v1207 = vand.u32 %v88, 4294901760
    %v1208 = vsub.f32 %v88, %v1207
    %v1209 = vand.u32 %v1208, 4294901760
    %1210 = vmatpush.xpose.msra.mxu0 %v1209
    %v1211 = vand.u32 %v84, 4294901760
    %v1212 = vsub.f32 %v84, %v1211
    %v1213 = vand.u32 %v1212, 4294901760
    %1214 = vmatpush.xpose.msra.mxu0 %v1213
    %v1215 = vand.u32 %v80, 4294901760
    %v1216 = vsub.f32 %v80, %v1215
    %v1217 = vand.u32 %v1216, 4294901760
    %1218 = vmatpush.xpose.msra.mxu0 %v1217
    %v1219 = vand.u32 %v76, 4294901760
    %v1220 = vsub.f32 %v76, %v1219
    %v1221 = vand.u32 %v1220, 4294901760
    %1222 = vmatpush.xpose.msra.mxu0 %v1221
    %v1223 = vand.u32 %v72, 4294901760
    %v1224 = vsub.f32 %v72, %v1223
    %v1225 = vand.u32 %v1224, 4294901760
    %1226 = vmatpush.xpose.msra.mxu0 %v1225
    %v1227 = vand.u32 %v68, 4294901760
    %v1228 = vsub.f32 %v68, %v1227
    %v1229 = vand.u32 %v1228, 4294901760
    %1230 = vmatpush.xpose.msra.mxu0 %v1229
    %v1231 = vand.u32 %v64, 4294901760
    %v1232 = vsub.f32 %v64, %v1231
    %v1233 = vand.u32 %v1232, 4294901760
    %1234 = vmatpush.xpose.msra.mxu0 %v1233
    %v1235 = vand.u32 %v60, 4294901760
    %v1236 = vsub.f32 %v60, %v1235
    %v1237 = vand.u32 %v1236, 4294901760
    %1238 = vmatpush.xpose.msra.mxu0 %v1237
    %v1239 = vand.u32 %v592, 4294901760
    %1240 = vmatmul.f32.gmra.mxu0 %v1239
    %v1241 = vpop.f32.mrf.mxu0
    %v1242 = vadd.f32 %v1173, %v1241
    %1243 = vdwg.mxu0
    %v1244 = vand.u32 %v120, 4294901760
    %1245 = vmatpush.xpose.msra.mxu0 %v1244
    %v1246 = vand.u32 %v116, 4294901760
    %1247 = vmatpush.xpose.msra.mxu0 %v1246
    %v1248 = vand.u32 %v112, 4294901760
    %1249 = vmatpush.xpose.msra.mxu0 %v1248
    %v1250 = vand.u32 %v108, 4294901760
    %1251 = vmatpush.xpose.msra.mxu0 %v1250
    %v1252 = vand.u32 %v104, 4294901760
    %1253 = vmatpush.xpose.msra.mxu0 %v1252
    %v1254 = vand.u32 %v100, 4294901760
    %1255 = vmatpush.xpose.msra.mxu0 %v1254
    %v1256 = vand.u32 %v96, 4294901760
    %1257 = vmatpush.xpose.msra.mxu0 %v1256
    %v1258 = vand.u32 %v92, 4294901760
    %1259 = vmatpush.xpose.msra.mxu0 %v1258
    %v1260 = vand.u32 %v88, 4294901760
    %1261 = vmatpush.xpose.msra.mxu0 %v1260
    %v1262 = vand.u32 %v84, 4294901760
    %1263 = vmatpush.xpose.msra.mxu0 %v1262
    %v1264 = vand.u32 %v80, 4294901760
    %1265 = vmatpush.xpose.msra.mxu0 %v1264
    %v1266 = vand.u32 %v76, 4294901760
    %1267 = vmatpush.xpose.msra.mxu0 %v1266
    %v1268 = vand.u32 %v72, 4294901760
    %1269 = vmatpush.xpose.msra.mxu0 %v1268
    %v1270 = vand.u32 %v68, 4294901760
    %1271 = vmatpush.xpose.msra.mxu0 %v1270
    %v1272 = vand.u32 %v64, 4294901760
    %1273 = vmatpush.xpose.msra.mxu0 %v1272
    %v1274 = vand.u32 %v60, 4294901760
    %1275 = vmatpush.xpose.msra.mxu0 %v1274
    %v1276 = vand.u32 %v592, 4294901760
    %1277 = vmatmul.f32.gmra.mxu0 %v1276
    %v1278 = vpop.f32.mrf.mxu0
    %v1279 = vadd.f32 %v1242, %v1278
    %1280 = vdwg.mxu0
    %v1281 = vand.u32 %v121, 4294901760
    %1282 = vmatpush.xpose.msra.mxu0 %v1281
    %v1283 = vand.u32 %v117, 4294901760
    %1284 = vmatpush.xpose.msra.mxu0 %v1283
    %v1285 = vand.u32 %v113, 4294901760
    %1286 = vmatpush.xpose.msra.mxu0 %v1285
    %v1287 = vand.u32 %v109, 4294901760
    %1288 = vmatpush.xpose.msra.mxu0 %v1287
    %v1289 = vand.u32 %v105, 4294901760
    %1290 = vmatpush.xpose.msra.mxu0 %v1289
    %v1291 = vand.u32 %v101, 4294901760
    %1292 = vmatpush.xpose.msra.mxu0 %v1291
    %v1293 = vand.u32 %v97, 4294901760
    %1294 = vmatpush.xpose.msra.mxu0 %v1293
    %v1295 = vand.u32 %v93, 4294901760
    %1296 = vmatpush.xpose.msra.mxu0 %v1295
    %v1297 = vand.u32 %v89, 4294901760
    %1298 = vmatpush.xpose.msra.mxu0 %v1297
    %v1299 = vand.u32 %v85, 4294901760
    %1300 = vmatpush.xpose.msra.mxu0 %v1299
    %v1301 = vand.u32 %v81, 4294901760
    %1302 = vmatpush.xpose.msra.mxu0 %v1301
    %v1303 = vand.u32 %v77, 4294901760
    %1304 = vmatpush.xpose.msra.mxu0 %v1303
    %v1305 = vand.u32 %v73, 4294901760
    %1306 = vmatpush.xpose.msra.mxu0 %v1305
    %v1307 = vand.u32 %v69, 4294901760
    %1308 = vmatpush.xpose.msra.mxu0 %v1307
    %v1309 = vand.u32 %v65, 4294901760
    %1310 = vmatpush.xpose.msra.mxu0 %v1309
    %v1311 = vand.u32 %v61, 4294901760
    %1312 = vmatpush.xpose.msra.mxu0 %v1311
    %v1313 = vand.u32 %v593, 4294901760
    %v1314 = vsub.f32 %v593, %v1313
    %v1315 = vand.u32 %v1314, 4294901760
    %v1316 = vsub.f32 %v1314, %v1315
    %v1317 = vand.u32 %v1316, 4294901760
    %1318 = vmatmul.f32.gmra.mxu0 %v1317
    %v1319 = vpop.f32.mrf.mxu0
    %v1320 = vadd.f32 %v1279, %v1319
    %1321 = vdwg.mxu0
    %v1322 = vand.u32 %v121, 4294901760
    %v1323 = vsub.f32 %v121, %v1322
    %v1324 = vand.u32 %v1323, 4294901760
    %v1325 = vsub.f32 %v1323, %v1324
    %v1326 = vand.u32 %v1325, 4294901760
    %1327 = vmatpush.xpose.msra.mxu0 %v1326
    %v1328 = vand.u32 %v117, 4294901760
    %v1329 = vsub.f32 %v117, %v1328
    %v1330 = vand.u32 %v1329, 4294901760
    %v1331 = vsub.f32 %v1329, %v1330
    %v1332 = vand.u32 %v1331, 4294901760
    %1333 = vmatpush.xpose.msra.mxu0 %v1332
    %v1334 = vand.u32 %v113, 4294901760
    %v1335 = vsub.f32 %v113, %v1334
    %v1336 = vand.u32 %v1335, 4294901760
    %v1337 = vsub.f32 %v1335, %v1336
    %v1338 = vand.u32 %v1337, 4294901760
    %1339 = vmatpush.xpose.msra.mxu0 %v1338
    %v1340 = vand.u32 %v109, 4294901760
    %v1341 = vsub.f32 %v109, %v1340
    %v1342 = vand.u32 %v1341, 4294901760
    %v1343 = vsub.f32 %v1341, %v1342
    %v1344 = vand.u32 %v1343, 4294901760
    %1345 = vmatpush.xpose.msra.mxu0 %v1344
    %v1346 = vand.u32 %v105, 4294901760
    %v1347 = vsub.f32 %v105, %v1346
    %v1348 = vand.u32 %v1347, 4294901760
    %v1349 = vsub.f32 %v1347, %v1348
    %v1350 = vand.u32 %v1349, 4294901760
    %1351 = vmatpush.xpose.msra.mxu0 %v1350
    %v1352 = vand.u32 %v101, 4294901760
    %v1353 = vsub.f32 %v101, %v1352
    %v1354 = vand.u32 %v1353, 4294901760
    %v1355 = vsub.f32 %v1353, %v1354
    %v1356 = vand.u32 %v1355, 4294901760
    %1357 = vmatpush.xpose.msra.mxu0 %v1356
    %v1358 = vand.u32 %v97, 4294901760
    %v1359 = vsub.f32 %v97, %v1358
    %v1360 = vand.u32 %v1359, 4294901760
    %v1361 = vsub.f32 %v1359, %v1360
    %v1362 = vand.u32 %v1361, 4294901760
    %1363 = vmatpush.xpose.msra.mxu0 %v1362
    %v1364 = vand.u32 %v93, 4294901760
    %v1365 = vsub.f32 %v93, %v1364
    %v1366 = vand.u32 %v1365, 4294901760
    %v1367 = vsub.f32 %v1365, %v1366
    %v1368 = vand.u32 %v1367, 4294901760
    %1369 = vmatpush.xpose.msra.mxu0 %v1368
    %v1370 = vand.u32 %v89, 4294901760
    %v1371 = vsub.f32 %v89, %v1370
    %v1372 = vand.u32 %v1371, 4294901760
    %v1373 = vsub.f32 %v1371, %v1372
    %v1374 = vand.u32 %v1373, 4294901760
    %1375 = vmatpush.xpose.msra.mxu0 %v1374
    %v1376 = vand.u32 %v85, 4294901760
    %v1377 = vsub.f32 %v85, %v1376
    %v1378 = vand.u32 %v1377, 4294901760
    %v1379 = vsub.f32 %v1377, %v1378
    %v1380 = vand.u32 %v1379, 4294901760
    %1381 = vmatpush.xpose.msra.mxu0 %v1380
    %v1382 = vand.u32 %v81, 4294901760
    %v1383 = vsub.f32 %v81, %v1382
    %v1384 = vand.u32 %v1383, 4294901760
    %v1385 = vsub.f32 %v1383, %v1384
    %v1386 = vand.u32 %v1385, 4294901760
    %1387 = vmatpush.xpose.msra.mxu0 %v1386
    %v1388 = vand.u32 %v77, 4294901760
    %v1389 = vsub.f32 %v77, %v1388
    %v1390 = vand.u32 %v1389, 4294901760
    %v1391 = vsub.f32 %v1389, %v1390
    %v1392 = vand.u32 %v1391, 4294901760
    %1393 = vmatpush.xpose.msra.mxu0 %v1392
    %v1394 = vand.u32 %v73, 4294901760
    %v1395 = vsub.f32 %v73, %v1394
    %v1396 = vand.u32 %v1395, 4294901760
    %v1397 = vsub.f32 %v1395, %v1396
    %v1398 = vand.u32 %v1397, 4294901760
    %1399 = vmatpush.xpose.msra.mxu0 %v1398
    %v1400 = vand.u32 %v69, 4294901760
    %v1401 = vsub.f32 %v69, %v1400
    %v1402 = vand.u32 %v1401, 4294901760
    %v1403 = vsub.f32 %v1401, %v1402
    %v1404 = vand.u32 %v1403, 4294901760
    %1405 = vmatpush.xpose.msra.mxu0 %v1404
    %v1406 = vand.u32 %v65, 4294901760
    %v1407 = vsub.f32 %v65, %v1406
    %v1408 = vand.u32 %v1407, 4294901760
    %v1409 = vsub.f32 %v1407, %v1408
    %v1410 = vand.u32 %v1409, 4294901760
    %1411 = vmatpush.xpose.msra.mxu0 %v1410
    %v1412 = vand.u32 %v61, 4294901760
    %v1413 = vsub.f32 %v61, %v1412
    %v1414 = vand.u32 %v1413, 4294901760
    %v1415 = vsub.f32 %v1413, %v1414
    %v1416 = vand.u32 %v1415, 4294901760
    %1417 = vmatpush.xpose.msra.mxu0 %v1416
    %v1418 = vand.u32 %v593, 4294901760
    %1419 = vmatmul.f32.gmra.mxu0 %v1418
    %v1420 = vpop.f32.mrf.mxu0
    %v1421 = vadd.f32 %v1320, %v1420
    %1422 = vdwg.mxu0
    %v1423 = vand.u32 %v121, 4294901760
    %v1424 = vsub.f32 %v121, %v1423
    %1425 = vmatpush.xpose.msra.mxu0 %v1424
    %v1426 = vand.u32 %v117, 4294901760
    %v1427 = vsub.f32 %v117, %v1426
    %1428 = vmatpush.xpose.msra.mxu0 %v1427
    %v1429 = vand.u32 %v113, 4294901760
    %v1430 = vsub.f32 %v113, %v1429
    %1431 = vmatpush.xpose.msra.mxu0 %v1430
    %v1432 = vand.u32 %v109, 4294901760
    %v1433 = vsub.f32 %v109, %v1432
    %1434 = vmatpush.xpose.msra.mxu0 %v1433
    %v1435 = vand.u32 %v105, 4294901760
    %v1436 = vsub.f32 %v105, %v1435
    %1437 = vmatpush.xpose.msra.mxu0 %v1436
    %v1438 = vand.u32 %v101, 4294901760
    %v1439 = vsub.f32 %v101, %v1438
    %1440 = vmatpush.xpose.msra.mxu0 %v1439
    %v1441 = vand.u32 %v97, 4294901760
    %v1442 = vsub.f32 %v97, %v1441
    %1443 = vmatpush.xpose.msra.mxu0 %v1442
    %v1444 = vand.u32 %v93, 4294901760
    %v1445 = vsub.f32 %v93, %v1444
    %1446 = vmatpush.xpose.msra.mxu0 %v1445
    %v1447 = vand.u32 %v89, 4294901760
    %v1448 = vsub.f32 %v89, %v1447
    %1449 = vmatpush.xpose.msra.mxu0 %v1448
    %v1450 = vand.u32 %v85, 4294901760
    %v1451 = vsub.f32 %v85, %v1450
    %1452 = vmatpush.xpose.msra.mxu0 %v1451
    %v1453 = vand.u32 %v81, 4294901760
    %v1454 = vsub.f32 %v81, %v1453
    %1455 = vmatpush.xpose.msra.mxu0 %v1454
    %v1456 = vand.u32 %v77, 4294901760
    %v1457 = vsub.f32 %v77, %v1456
    %1458 = vmatpush.xpose.msra.mxu0 %v1457
    %v1459 = vand.u32 %v73, 4294901760
    %v1460 = vsub.f32 %v73, %v1459
    %1461 = vmatpush.xpose.msra.mxu0 %v1460
    %v1462 = vand.u32 %v69, 4294901760
    %v1463 = vsub.f32 %v69, %v1462
    %1464 = vmatpush.xpose.msra.mxu0 %v1463
    %v1465 = vand.u32 %v65, 4294901760
    %v1466 = vsub.f32 %v65, %v1465
    %1467 = vmatpush.xpose.msra.mxu0 %v1466
    %v1468 = vand.u32 %v61, 4294901760
    %v1469 = vsub.f32 %v61, %v1468
    %1470 = vmatpush.xpose.msra.mxu0 %v1469
    %v1471 = vand.u32 %v593, 4294901760
    %v1472 = vsub.f32 %v593, %v1471
    %1473 = vmatmul.f32.gmra.mxu0 %v1472
    %v1474 = vpop.f32.mrf.mxu0
    %v1475 = vadd.f32 %v1421, %v1474
    %1476 = vdwg.mxu0
    %v1477 = vand.u32 %v121, 4294901760
    %1478 = vmatpush.xpose.msra.mxu0 %v1477
    %v1479 = vand.u32 %v117, 4294901760
    %1480 = vmatpush.xpose.msra.mxu0 %v1479
    %v1481 = vand.u32 %v113, 4294901760
    %1482 = vmatpush.xpose.msra.mxu0 %v1481
    %v1483 = vand.u32 %v109, 4294901760
    %1484 = vmatpush.xpose.msra.mxu0 %v1483
    %v1485 = vand.u32 %v105, 4294901760
    %1486 = vmatpush.xpose.msra.mxu0 %v1485
    %v1487 = vand.u32 %v101, 4294901760
    %1488 = vmatpush.xpose.msra.mxu0 %v1487
    %v1489 = vand.u32 %v97, 4294901760
    %1490 = vmatpush.xpose.msra.mxu0 %v1489
    %v1491 = vand.u32 %v93, 4294901760
    %1492 = vmatpush.xpose.msra.mxu0 %v1491
    %v1493 = vand.u32 %v89, 4294901760
    %1494 = vmatpush.xpose.msra.mxu0 %v1493
    %v1495 = vand.u32 %v85, 4294901760
    %1496 = vmatpush.xpose.msra.mxu0 %v1495
    %v1497 = vand.u32 %v81, 4294901760
    %1498 = vmatpush.xpose.msra.mxu0 %v1497
    %v1499 = vand.u32 %v77, 4294901760
    %1500 = vmatpush.xpose.msra.mxu0 %v1499
    %v1501 = vand.u32 %v73, 4294901760
    %1502 = vmatpush.xpose.msra.mxu0 %v1501
    %v1503 = vand.u32 %v69, 4294901760
    %1504 = vmatpush.xpose.msra.mxu0 %v1503
    %v1505 = vand.u32 %v65, 4294901760
    %1506 = vmatpush.xpose.msra.mxu0 %v1505
    %v1507 = vand.u32 %v61, 4294901760
    %1508 = vmatpush.xpose.msra.mxu0 %v1507
    %v1509 = vand.u32 %v593, 4294901760
    %v1510 = vsub.f32 %v593, %v1509
    %v1511 = vand.u32 %v1510, 4294901760
    %1512 = vmatmul.f32.gmra.mxu0 %v1511
    %v1513 = vpop.f32.mrf.mxu0
    %v1514 = vadd.f32 %v1475, %v1513
    %1515 = vdwg.mxu0
    %v1516 = vand.u32 %v121, 4294901760
    %v1517 = vsub.f32 %v121, %v1516
    %v1518 = vand.u32 %v1517, 4294901760
    %1519 = vmatpush.xpose.msra.mxu0 %v1518
    %v1520 = vand.u32 %v117, 4294901760
    %v1521 = vsub.f32 %v117, %v1520
    %v1522 = vand.u32 %v1521, 4294901760
    %1523 = vmatpush.xpose.msra.mxu0 %v1522
    %v1524 = vand.u32 %v113, 4294901760
    %v1525 = vsub.f32 %v113, %v1524
    %v1526 = vand.u32 %v1525, 4294901760
    %1527 = vmatpush.xpose.msra.mxu0 %v1526
    %v1528 = vand.u32 %v109, 4294901760
    %v1529 = vsub.f32 %v109, %v1528
    %v1530 = vand.u32 %v1529, 4294901760
    %1531 = vmatpush.xpose.msra.mxu0 %v1530
    %v1532 = vand.u32 %v105, 4294901760
    %v1533 = vsub.f32 %v105, %v1532
    %v1534 = vand.u32 %v1533, 4294901760
    %1535 = vmatpush.xpose.msra.mxu0 %v1534
    %v1536 = vand.u32 %v101, 4294901760
    %v1537 = vsub.f32 %v101, %v1536
    %v1538 = vand.u32 %v1537, 4294901760
    %1539 = vmatpush.xpose.msra.mxu0 %v1538
    %v1540 = vand.u32 %v97, 4294901760
    %v1541 = vsub.f32 %v97, %v1540
    %v1542 = vand.u32 %v1541, 4294901760
    %1543 = vmatpush.xpose.msra.mxu0 %v1542
    %v1544 = vand.u32 %v93, 4294901760
    %v1545 = vsub.f32 %v93, %v1544
    %v1546 = vand.u32 %v1545, 4294901760
    %1547 = vmatpush.xpose.msra.mxu0 %v1546
    %v1548 = vand.u32 %v89, 4294901760
    %v1549 = vsub.f32 %v89, %v1548
    %v1550 = vand.u32 %v1549, 4294901760
    %1551 = vmatpush.xpose.msra.mxu0 %v1550
    %v1552 = vand.u32 %v85, 4294901760
    %v1553 = vsub.f32 %v85, %v1552
    %v1554 = vand.u32 %v1553, 4294901760
    %1555 = vmatpush.xpose.msra.mxu0 %v1554
    %v1556 = vand.u32 %v81, 4294901760
    %v1557 = vsub.f32 %v81, %v1556
    %v1558 = vand.u32 %v1557, 4294901760
    %1559 = vmatpush.xpose.msra.mxu0 %v1558
    %v1560 = vand.u32 %v77, 4294901760
    %v1561 = vsub.f32 %v77, %v1560
    %v1562 = vand.u32 %v1561, 4294901760
    %1563 = vmatpush.xpose.msra.mxu0 %v1562
    %v1564 = vand.u32 %v73, 4294901760
    %v1565 = vsub.f32 %v73, %v1564
    %v1566 = vand.u32 %v1565, 4294901760
    %1567 = vmatpush.xpose.msra.mxu0 %v1566
    %v1568 = vand.u32 %v69, 4294901760
    %v1569 = vsub.f32 %v69, %v1568
    %v1570 = vand.u32 %v1569, 4294901760
    %1571 = vmatpush.xpose.msra.mxu0 %v1570
    %v1572 = vand.u32 %v65, 4294901760
    %v1573 = vsub.f32 %v65, %v1572
    %v1574 = vand.u32 %v1573, 4294901760
    %1575 = vmatpush.xpose.msra.mxu0 %v1574
    %v1576 = vand.u32 %v61, 4294901760
    %v1577 = vsub.f32 %v61, %v1576
    %v1578 = vand.u32 %v1577, 4294901760
    %1579 = vmatpush.xpose.msra.mxu0 %v1578
    %v1580 = vand.u32 %v593, 4294901760
    %1581 = vmatmul.f32.gmra.mxu0 %v1580
    %v1582 = vpop.f32.mrf.mxu0
    %v1583 = vadd.f32 %v1514, %v1582
    %1584 = vdwg.mxu0
    %v1585 = vand.u32 %v121, 4294901760
    %1586 = vmatpush.xpose.msra.mxu0 %v1585
    %v1587 = vand.u32 %v117, 4294901760
    %1588 = vmatpush.xpose.msra.mxu0 %v1587
    %v1589 = vand.u32 %v113, 4294901760
    %1590 = vmatpush.xpose.msra.mxu0 %v1589
    %v1591 = vand.u32 %v109, 4294901760
    %1592 = vmatpush.xpose.msra.mxu0 %v1591
    %v1593 = vand.u32 %v105, 4294901760
    %1594 = vmatpush.xpose.msra.mxu0 %v1593
    %v1595 = vand.u32 %v101, 4294901760
    %1596 = vmatpush.xpose.msra.mxu0 %v1595
    %v1597 = vand.u32 %v97, 4294901760
    %1598 = vmatpush.xpose.msra.mxu0 %v1597
    %v1599 = vand.u32 %v93, 4294901760
    %1600 = vmatpush.xpose.msra.mxu0 %v1599
    %v1601 = vand.u32 %v89, 4294901760
    %1602 = vmatpush.xpose.msra.mxu0 %v1601
    %v1603 = vand.u32 %v85, 4294901760
    %1604 = vmatpush.xpose.msra.mxu0 %v1603
    %v1605 = vand.u32 %v81, 4294901760
    %1606 = vmatpush.xpose.msra.mxu0 %v1605
    %v1607 = vand.u32 %v77, 4294901760
    %1608 = vmatpush.xpose.msra.mxu0 %v1607
    %v1609 = vand.u32 %v73, 4294901760
    %1610 = vmatpush.xpose.msra.mxu0 %v1609
    %v1611 = vand.u32 %v69, 4294901760
    %1612 = vmatpush.xpose.msra.mxu0 %v1611
    %v1613 = vand.u32 %v65, 4294901760
    %1614 = vmatpush.xpose.msra.mxu0 %v1613
    %v1615 = vand.u32 %v61, 4294901760
    %1616 = vmatpush.xpose.msra.mxu0 %v1615
    %v1617 = vand.u32 %v593, 4294901760
    %1618 = vmatmul.f32.gmra.mxu0 %v1617
    %v1619 = vpop.f32.mrf.mxu0
    %v1620 = vadd.f32 %v1583, %v1619
    %1621 = vdwg.mxu0
    %v1622 = vand.u32 %v122, 4294901760
    %1623 = vmatpush.xpose.msra.mxu0 %v1622
    %v1624 = vand.u32 %v118, 4294901760
    %1625 = vmatpush.xpose.msra.mxu0 %v1624
    %v1626 = vand.u32 %v114, 4294901760
    %1627 = vmatpush.xpose.msra.mxu0 %v1626
    %v1628 = vand.u32 %v110, 4294901760
    %1629 = vmatpush.xpose.msra.mxu0 %v1628
    %v1630 = vand.u32 %v106, 4294901760
    %1631 = vmatpush.xpose.msra.mxu0 %v1630
    %v1632 = vand.u32 %v102, 4294901760
    %1633 = vmatpush.xpose.msra.mxu0 %v1632
    %v1634 = vand.u32 %v98, 4294901760
    %1635 = vmatpush.xpose.msra.mxu0 %v1634
    %v1636 = vand.u32 %v94, 4294901760
    %1637 = vmatpush.xpose.msra.mxu0 %v1636
    %v1638 = vand.u32 %v90, 4294901760
    %1639 = vmatpush.xpose.msra.mxu0 %v1638
    %v1640 = vand.u32 %v86, 4294901760
    %1641 = vmatpush.xpose.msra.mxu0 %v1640
    %v1642 = vand.u32 %v82, 4294901760
    %1643 = vmatpush.xpose.msra.mxu0 %v1642
    %v1644 = vand.u32 %v78, 4294901760
    %1645 = vmatpush.xpose.msra.mxu0 %v1644
    %v1646 = vand.u32 %v74, 4294901760
    %1647 = vmatpush.xpose.msra.mxu0 %v1646
    %v1648 = vand.u32 %v70, 4294901760
    %1649 = vmatpush.xpose.msra.mxu0 %v1648
    %v1650 = vand.u32 %v66, 4294901760
    %1651 = vmatpush.xpose.msra.mxu0 %v1650
    %v1652 = vand.u32 %v62, 4294901760
    %1653 = vmatpush.xpose.msra.mxu0 %v1652
    %v1654 = vand.u32 %v594, 4294901760
    %v1655 = vsub.f32 %v594, %v1654
    %v1656 = vand.u32 %v1655, 4294901760
    %v1657 = vsub.f32 %v1655, %v1656
    %v1658 = vand.u32 %v1657, 4294901760
    %1659 = vmatmul.f32.gmra.mxu0 %v1658
    %v1660 = vpop.f32.mrf.mxu0
    %v1661 = vadd.f32 %v1620, %v1660
    %1662 = vdwg.mxu0
    %v1663 = vand.u32 %v122, 4294901760
    %v1664 = vsub.f32 %v122, %v1663
    %v1665 = vand.u32 %v1664, 4294901760
    %v1666 = vsub.f32 %v1664, %v1665
    %v1667 = vand.u32 %v1666, 4294901760
    %1668 = vmatpush.xpose.msra.mxu0 %v1667
    %v1669 = vand.u32 %v118, 4294901760
    %v1670 = vsub.f32 %v118, %v1669
    %v1671 = vand.u32 %v1670, 4294901760
    %v1672 = vsub.f32 %v1670, %v1671
    %v1673 = vand.u32 %v1672, 4294901760
    %1674 = vmatpush.xpose.msra.mxu0 %v1673
    %v1675 = vand.u32 %v114, 4294901760
    %v1676 = vsub.f32 %v114, %v1675
    %v1677 = vand.u32 %v1676, 4294901760
    %v1678 = vsub.f32 %v1676, %v1677
    %v1679 = vand.u32 %v1678, 4294901760
    %1680 = vmatpush.xpose.msra.mxu0 %v1679
    %v1681 = vand.u32 %v110, 4294901760
    %v1682 = vsub.f32 %v110, %v1681
    %v1683 = vand.u32 %v1682, 4294901760
    %v1684 = vsub.f32 %v1682, %v1683
    %v1685 = vand.u32 %v1684, 4294901760
    %1686 = vmatpush.xpose.msra.mxu0 %v1685
    %v1687 = vand.u32 %v106, 4294901760
    %v1688 = vsub.f32 %v106, %v1687
    %v1689 = vand.u32 %v1688, 4294901760
    %v1690 = vsub.f32 %v1688, %v1689
    %v1691 = vand.u32 %v1690, 4294901760
    %1692 = vmatpush.xpose.msra.mxu0 %v1691
    %v1693 = vand.u32 %v102, 4294901760
    %v1694 = vsub.f32 %v102, %v1693
    %v1695 = vand.u32 %v1694, 4294901760
    %v1696 = vsub.f32 %v1694, %v1695
    %v1697 = vand.u32 %v1696, 4294901760
    %1698 = vmatpush.xpose.msra.mxu0 %v1697
    %v1699 = vand.u32 %v98, 4294901760
    %v1700 = vsub.f32 %v98, %v1699
    %v1701 = vand.u32 %v1700, 4294901760
    %v1702 = vsub.f32 %v1700, %v1701
    %v1703 = vand.u32 %v1702, 4294901760
    %1704 = vmatpush.xpose.msra.mxu0 %v1703
    %v1705 = vand.u32 %v94, 4294901760
    %v1706 = vsub.f32 %v94, %v1705
    %v1707 = vand.u32 %v1706, 4294901760
    %v1708 = vsub.f32 %v1706, %v1707
    %v1709 = vand.u32 %v1708, 4294901760
    %1710 = vmatpush.xpose.msra.mxu0 %v1709
    %v1711 = vand.u32 %v90, 4294901760
    %v1712 = vsub.f32 %v90, %v1711
    %v1713 = vand.u32 %v1712, 4294901760
    %v1714 = vsub.f32 %v1712, %v1713
    %v1715 = vand.u32 %v1714, 4294901760
    %1716 = vmatpush.xpose.msra.mxu0 %v1715
    %v1717 = vand.u32 %v86, 4294901760
    %v1718 = vsub.f32 %v86, %v1717
    %v1719 = vand.u32 %v1718, 4294901760
    %v1720 = vsub.f32 %v1718, %v1719
    %v1721 = vand.u32 %v1720, 4294901760
    %1722 = vmatpush.xpose.msra.mxu0 %v1721
    %v1723 = vand.u32 %v82, 4294901760
    %v1724 = vsub.f32 %v82, %v1723
    %v1725 = vand.u32 %v1724, 4294901760
    %v1726 = vsub.f32 %v1724, %v1725
    %v1727 = vand.u32 %v1726, 4294901760
    %1728 = vmatpush.xpose.msra.mxu0 %v1727
    %v1729 = vand.u32 %v78, 4294901760
    %v1730 = vsub.f32 %v78, %v1729
    %v1731 = vand.u32 %v1730, 4294901760
    %v1732 = vsub.f32 %v1730, %v1731
    %v1733 = vand.u32 %v1732, 4294901760
    %1734 = vmatpush.xpose.msra.mxu0 %v1733
    %v1735 = vand.u32 %v74, 4294901760
    %v1736 = vsub.f32 %v74, %v1735
    %v1737 = vand.u32 %v1736, 4294901760
    %v1738 = vsub.f32 %v1736, %v1737
    %v1739 = vand.u32 %v1738, 4294901760
    %1740 = vmatpush.xpose.msra.mxu0 %v1739
    %v1741 = vand.u32 %v70, 4294901760
    %v1742 = vsub.f32 %v70, %v1741
    %v1743 = vand.u32 %v1742, 4294901760
    %v1744 = vsub.f32 %v1742, %v1743
    %v1745 = vand.u32 %v1744, 4294901760
    %1746 = vmatpush.xpose.msra.mxu0 %v1745
    %v1747 = vand.u32 %v66, 4294901760
    %v1748 = vsub.f32 %v66, %v1747
    %v1749 = vand.u32 %v1748, 4294901760
    %v1750 = vsub.f32 %v1748, %v1749
    %v1751 = vand.u32 %v1750, 4294901760
    %1752 = vmatpush.xpose.msra.mxu0 %v1751
    %v1753 = vand.u32 %v62, 4294901760
    %v1754 = vsub.f32 %v62, %v1753
    %v1755 = vand.u32 %v1754, 4294901760
    %v1756 = vsub.f32 %v1754, %v1755
    %v1757 = vand.u32 %v1756, 4294901760
    %1758 = vmatpush.xpose.msra.mxu0 %v1757
    %v1759 = vand.u32 %v594, 4294901760
    %1760 = vmatmul.f32.gmra.mxu0 %v1759
    %v1761 = vpop.f32.mrf.mxu0
    %v1762 = vadd.f32 %v1661, %v1761
    %1763 = vdwg.mxu0
    %v1764 = vand.u32 %v122, 4294901760
    %v1765 = vsub.f32 %v122, %v1764
    %1766 = vmatpush.xpose.msra.mxu0 %v1765
    %v1767 = vand.u32 %v118, 4294901760
    %v1768 = vsub.f32 %v118, %v1767
    %1769 = vmatpush.xpose.msra.mxu0 %v1768
    %v1770 = vand.u32 %v114, 4294901760
    %v1771 = vsub.f32 %v114, %v1770
    %1772 = vmatpush.xpose.msra.mxu0 %v1771
    %v1773 = vand.u32 %v110, 4294901760
    %v1774 = vsub.f32 %v110, %v1773
    %1775 = vmatpush.xpose.msra.mxu0 %v1774
    %v1776 = vand.u32 %v106, 4294901760
    %v1777 = vsub.f32 %v106, %v1776
    %1778 = vmatpush.xpose.msra.mxu0 %v1777
    %v1779 = vand.u32 %v102, 4294901760
    %v1780 = vsub.f32 %v102, %v1779
    %1781 = vmatpush.xpose.msra.mxu0 %v1780
    %v1782 = vand.u32 %v98, 4294901760
    %v1783 = vsub.f32 %v98, %v1782
    %1784 = vmatpush.xpose.msra.mxu0 %v1783
    %v1785 = vand.u32 %v94, 4294901760
    %v1786 = vsub.f32 %v94, %v1785
    %1787 = vmatpush.xpose.msra.mxu0 %v1786
    %v1788 = vand.u32 %v90, 4294901760
    %v1789 = vsub.f32 %v90, %v1788
    %1790 = vmatpush.xpose.msra.mxu0 %v1789
    %v1791 = vand.u32 %v86, 4294901760
    %v1792 = vsub.f32 %v86, %v1791
    %1793 = vmatpush.xpose.msra.mxu0 %v1792
    %v1794 = vand.u32 %v82, 4294901760
    %v1795 = vsub.f32 %v82, %v1794
    %1796 = vmatpush.xpose.msra.mxu0 %v1795
    %v1797 = vand.u32 %v78, 4294901760
    %v1798 = vsub.f32 %v78, %v1797
    %1799 = vmatpush.xpose.msra.mxu0 %v1798
    %v1800 = vand.u32 %v74, 4294901760
    %v1801 = vsub.f32 %v74, %v1800
    %1802 = vmatpush.xpose.msra.mxu0 %v1801
    %v1803 = vand.u32 %v70, 4294901760
    %v1804 = vsub.f32 %v70, %v1803
    %1805 = vmatpush.xpose.msra.mxu0 %v1804
    %v1806 = vand.u32 %v66, 4294901760
    %v1807 = vsub.f32 %v66, %v1806
    %1808 = vmatpush.xpose.msra.mxu0 %v1807
    %v1809 = vand.u32 %v62, 4294901760
    %v1810 = vsub.f32 %v62, %v1809
    %1811 = vmatpush.xpose.msra.mxu0 %v1810
    %v1812 = vand.u32 %v594, 4294901760
    %v1813 = vsub.f32 %v594, %v1812
    %1814 = vmatmul.f32.gmra.mxu0 %v1813
    %v1815 = vpop.f32.mrf.mxu0
    %v1816 = vadd.f32 %v1762, %v1815
    %1817 = vdwg.mxu0
    %v1818 = vand.u32 %v122, 4294901760
    %1819 = vmatpush.xpose.msra.mxu0 %v1818
    %v1820 = vand.u32 %v118, 4294901760
    %1821 = vmatpush.xpose.msra.mxu0 %v1820
    %v1822 = vand.u32 %v114, 4294901760
    %1823 = vmatpush.xpose.msra.mxu0 %v1822
    %v1824 = vand.u32 %v110, 4294901760
    %1825 = vmatpush.xpose.msra.mxu0 %v1824
    %v1826 = vand.u32 %v106, 4294901760
    %1827 = vmatpush.xpose.msra.mxu0 %v1826
    %v1828 = vand.u32 %v102, 4294901760
    %1829 = vmatpush.xpose.msra.mxu0 %v1828
    %v1830 = vand.u32 %v98, 4294901760
    %1831 = vmatpush.xpose.msra.mxu0 %v1830
    %v1832 = vand.u32 %v94, 4294901760
    %1833 = vmatpush.xpose.msra.mxu0 %v1832
    %v1834 = vand.u32 %v90, 4294901760
    %1835 = vmatpush.xpose.msra.mxu0 %v1834
    %v1836 = vand.u32 %v86, 4294901760
    %1837 = vmatpush.xpose.msra.mxu0 %v1836
    %v1838 = vand.u32 %v82, 4294901760
    %1839 = vmatpush.xpose.msra.mxu0 %v1838
    %v1840 = vand.u32 %v78, 4294901760
    %1841 = vmatpush.xpose.msra.mxu0 %v1840
    %v1842 = vand.u32 %v74, 4294901760
    %1843 = vmatpush.xpose.msra.mxu0 %v1842
    %v1844 = vand.u32 %v70, 4294901760
    %1845 = vmatpush.xpose.msra.mxu0 %v1844
    %v1846 = vand.u32 %v66, 4294901760
    %1847 = vmatpush.xpose.msra.mxu0 %v1846
    %v1848 = vand.u32 %v62, 4294901760
    %1849 = vmatpush.xpose.msra.mxu0 %v1848
    %v1850 = vand.u32 %v594, 4294901760
    %v1851 = vsub.f32 %v594, %v1850
    %v1852 = vand.u32 %v1851, 4294901760
    %1853 = vmatmul.f32.gmra.mxu0 %v1852
    %v1854 = vpop.f32.mrf.mxu0
    %v1855 = vadd.f32 %v1816, %v1854
    %1856 = vdwg.mxu0
    %v1857 = vand.u32 %v122, 4294901760
    %v1858 = vsub.f32 %v122, %v1857
    %v1859 = vand.u32 %v1858, 4294901760
    %1860 = vmatpush.xpose.msra.mxu0 %v1859
    %v1861 = vand.u32 %v118, 4294901760
    %v1862 = vsub.f32 %v118, %v1861
    %v1863 = vand.u32 %v1862, 4294901760
    %1864 = vmatpush.xpose.msra.mxu0 %v1863
    %v1865 = vand.u32 %v114, 4294901760
    %v1866 = vsub.f32 %v114, %v1865
    %v1867 = vand.u32 %v1866, 4294901760
    %1868 = vmatpush.xpose.msra.mxu0 %v1867
    %v1869 = vand.u32 %v110, 4294901760
    %v1870 = vsub.f32 %v110, %v1869
    %v1871 = vand.u32 %v1870, 4294901760
    %1872 = vmatpush.xpose.msra.mxu0 %v1871
    %v1873 = vand.u32 %v106, 4294901760
    %v1874 = vsub.f32 %v106, %v1873
    %v1875 = vand.u32 %v1874, 4294901760
    %1876 = vmatpush.xpose.msra.mxu0 %v1875
    %v1877 = vand.u32 %v102, 4294901760
    %v1878 = vsub.f32 %v102, %v1877
    %v1879 = vand.u32 %v1878, 4294901760
    %1880 = vmatpush.xpose.msra.mxu0 %v1879
    %v1881 = vand.u32 %v98, 4294901760
    %v1882 = vsub.f32 %v98, %v1881
    %v1883 = vand.u32 %v1882, 4294901760
    %1884 = vmatpush.xpose.msra.mxu0 %v1883
    %v1885 = vand.u32 %v94, 4294901760
    %v1886 = vsub.f32 %v94, %v1885
    %v1887 = vand.u32 %v1886, 4294901760
    %1888 = vmatpush.xpose.msra.mxu0 %v1887
    %v1889 = vand.u32 %v90, 4294901760
    %v1890 = vsub.f32 %v90, %v1889
    %v1891 = vand.u32 %v1890, 4294901760
    %1892 = vmatpush.xpose.msra.mxu0 %v1891
    %v1893 = vand.u32 %v86, 4294901760
    %v1894 = vsub.f32 %v86, %v1893
    %v1895 = vand.u32 %v1894, 4294901760
    %1896 = vmatpush.xpose.msra.mxu0 %v1895
    %v1897 = vand.u32 %v82, 4294901760
    %v1898 = vsub.f32 %v82, %v1897
    %v1899 = vand.u32 %v1898, 4294901760
    %1900 = vmatpush.xpose.msra.mxu0 %v1899
    %v1901 = vand.u32 %v78, 4294901760
    %v1902 = vsub.f32 %v78, %v1901
    %v1903 = vand.u32 %v1902, 4294901760
    %1904 = vmatpush.xpose.msra.mxu0 %v1903
    %v1905 = vand.u32 %v74, 4294901760
    %v1906 = vsub.f32 %v74, %v1905
    %v1907 = vand.u32 %v1906, 4294901760
    %1908 = vmatpush.xpose.msra.mxu0 %v1907
    %v1909 = vand.u32 %v70, 4294901760
    %v1910 = vsub.f32 %v70, %v1909
    %v1911 = vand.u32 %v1910, 4294901760
    %1912 = vmatpush.xpose.msra.mxu0 %v1911
    %v1913 = vand.u32 %v66, 4294901760
    %v1914 = vsub.f32 %v66, %v1913
    %v1915 = vand.u32 %v1914, 4294901760
    %1916 = vmatpush.xpose.msra.mxu0 %v1915
    %v1917 = vand.u32 %v62, 4294901760
    %v1918 = vsub.f32 %v62, %v1917
    %v1919 = vand.u32 %v1918, 4294901760
    %1920 = vmatpush.xpose.msra.mxu0 %v1919
    %v1921 = vand.u32 %v594, 4294901760
    %1922 = vmatmul.f32.gmra.mxu0 %v1921
    %v1923 = vpop.f32.mrf.mxu0
    %v1924 = vadd.f32 %v1855, %v1923
    %1925 = vdwg.mxu0
    %v1926 = vand.u32 %v122, 4294901760
    %1927 = vmatpush.xpose.msra.mxu0 %v1926
    %v1928 = vand.u32 %v118, 4294901760
    %1929 = vmatpush.xpose.msra.mxu0 %v1928
    %v1930 = vand.u32 %v114, 4294901760
    %1931 = vmatpush.xpose.msra.mxu0 %v1930
    %v1932 = vand.u32 %v110, 4294901760
    %1933 = vmatpush.xpose.msra.mxu0 %v1932
    %v1934 = vand.u32 %v106, 4294901760
    %1935 = vmatpush.xpose.msra.mxu0 %v1934
    %v1936 = vand.u32 %v102, 4294901760
    %1937 = vmatpush.xpose.msra.mxu0 %v1936
    %v1938 = vand.u32 %v98, 4294901760
    %1939 = vmatpush.xpose.msra.mxu0 %v1938
    %v1940 = vand.u32 %v94, 4294901760
    %1941 = vmatpush.xpose.msra.mxu0 %v1940
    %v1942 = vand.u32 %v90, 4294901760
    %1943 = vmatpush.xpose.msra.mxu0 %v1942
    %v1944 = vand.u32 %v86, 4294901760
    %1945 = vmatpush.xpose.msra.mxu0 %v1944
    %v1946 = vand.u32 %v82, 4294901760
    %1947 = vmatpush.xpose.msra.mxu0 %v1946
    %v1948 = vand.u32 %v78, 4294901760
    %1949 = vmatpush.xpose.msra.mxu0 %v1948
    %v1950 = vand.u32 %v74, 4294901760
    %1951 = vmatpush.xpose.msra.mxu0 %v1950
    %v1952 = vand.u32 %v70, 4294901760
    %1953 = vmatpush.xpose.msra.mxu0 %v1952
    %v1954 = vand.u32 %v66, 4294901760
    %1955 = vmatpush.xpose.msra.mxu0 %v1954
    %v1956 = vand.u32 %v62, 4294901760
    %1957 = vmatpush.xpose.msra.mxu0 %v1956
    %v1958 = vand.u32 %v594, 4294901760
    %1959 = vmatmul.f32.gmra.mxu0 %v1958
    %v1960 = vpop.f32.mrf.mxu0
    %v1961 = vadd.f32 %v1924, %v1960
    %1962 = vdwg.mxu0
    %v1963 = vand.u32 %v183, 4294901760
    %1964 = vmatpush.xpose.msra.mxu0 %v1963
    %v1965 = vand.u32 %v179, 4294901760
    %1966 = vmatpush.xpose.msra.mxu0 %v1965
    %v1967 = vand.u32 %v175, 4294901760
    %1968 = vmatpush.xpose.msra.mxu0 %v1967
    %v1969 = vand.u32 %v171, 4294901760
    %1970 = vmatpush.xpose.msra.mxu0 %v1969
    %v1971 = vand.u32 %v167, 4294901760
    %1972 = vmatpush.xpose.msra.mxu0 %v1971
    %v1973 = vand.u32 %v163, 4294901760
    %1974 = vmatpush.xpose.msra.mxu0 %v1973
    %v1975 = vand.u32 %v159, 4294901760
    %1976 = vmatpush.xpose.msra.mxu0 %v1975
    %v1977 = vand.u32 %v155, 4294901760
    %1978 = vmatpush.xpose.msra.mxu0 %v1977
    %v1979 = vand.u32 %v151, 4294901760
    %1980 = vmatpush.xpose.msra.mxu0 %v1979
    %v1981 = vand.u32 %v147, 4294901760
    %1982 = vmatpush.xpose.msra.mxu0 %v1981
    %v1983 = vand.u32 %v143, 4294901760
    %1984 = vmatpush.xpose.msra.mxu0 %v1983
    %v1985 = vand.u32 %v139, 4294901760
    %1986 = vmatpush.xpose.msra.mxu0 %v1985
    %v1987 = vand.u32 %v135, 4294901760
    %1988 = vmatpush.xpose.msra.mxu0 %v1987
    %v1989 = vand.u32 %v131, 4294901760
    %1990 = vmatpush.xpose.msra.mxu0 %v1989
    %v1991 = vand.u32 %v127, 4294901760
    %1992 = vmatpush.xpose.msra.mxu0 %v1991
    %v1993 = vand.u32 %v123, 4294901760
    %1994 = vmatpush.xpose.msra.mxu0 %v1993
    %v1995 = vand.u32 %v591, 4294901760
    %v1996 = vsub.f32 %v591, %v1995
    %v1997 = vand.u32 %v1996, 4294901760
    %v1998 = vsub.f32 %v1996, %v1997
    %v1999 = vand.u32 %v1998, 4294901760
    %2000 = vmatmul.f32.gmra.mxu0 %v1999
    %v2001 = vpop.f32.mrf.mxu0
    %v2002 = vadd.f32 %v574, %v2001
    %2003 = vdwg.mxu0
    %v2004 = vand.u32 %v183, 4294901760
    %v2005 = vsub.f32 %v183, %v2004
    %v2006 = vand.u32 %v2005, 4294901760
    %v2007 = vsub.f32 %v2005, %v2006
    %v2008 = vand.u32 %v2007, 4294901760
    %2009 = vmatpush.xpose.msra.mxu0 %v2008
    %v2010 = vand.u32 %v179, 4294901760
    %v2011 = vsub.f32 %v179, %v2010
    %v2012 = vand.u32 %v2011, 4294901760
    %v2013 = vsub.f32 %v2011, %v2012
    %v2014 = vand.u32 %v2013, 4294901760
    %2015 = vmatpush.xpose.msra.mxu0 %v2014
    %v2016 = vand.u32 %v175, 4294901760
    %v2017 = vsub.f32 %v175, %v2016
    %v2018 = vand.u32 %v2017, 4294901760
    %v2019 = vsub.f32 %v2017, %v2018
    %v2020 = vand.u32 %v2019, 4294901760
    %2021 = vmatpush.xpose.msra.mxu0 %v2020
    %v2022 = vand.u32 %v171, 4294901760
    %v2023 = vsub.f32 %v171, %v2022
    %v2024 = vand.u32 %v2023, 4294901760
    %v2025 = vsub.f32 %v2023, %v2024
    %v2026 = vand.u32 %v2025, 4294901760
    %2027 = vmatpush.xpose.msra.mxu0 %v2026
    %v2028 = vand.u32 %v167, 4294901760
    %v2029 = vsub.f32 %v167, %v2028
    %v2030 = vand.u32 %v2029, 4294901760
    %v2031 = vsub.f32 %v2029, %v2030
    %v2032 = vand.u32 %v2031, 4294901760
    %2033 = vmatpush.xpose.msra.mxu0 %v2032
    %v2034 = vand.u32 %v163, 4294901760
    %v2035 = vsub.f32 %v163, %v2034
    %v2036 = vand.u32 %v2035, 4294901760
    %v2037 = vsub.f32 %v2035, %v2036
    %v2038 = vand.u32 %v2037, 4294901760
    %2039 = vmatpush.xpose.msra.mxu0 %v2038
    %v2040 = vand.u32 %v159, 4294901760
    %v2041 = vsub.f32 %v159, %v2040
    %v2042 = vand.u32 %v2041, 4294901760
    %v2043 = vsub.f32 %v2041, %v2042
    %v2044 = vand.u32 %v2043, 4294901760
    %2045 = vmatpush.xpose.msra.mxu0 %v2044
    %v2046 = vand.u32 %v155, 4294901760
    %v2047 = vsub.f32 %v155, %v2046
    %v2048 = vand.u32 %v2047, 4294901760
    %v2049 = vsub.f32 %v2047, %v2048
    %v2050 = vand.u32 %v2049, 4294901760
    %2051 = vmatpush.xpose.msra.mxu0 %v2050
    %v2052 = vand.u32 %v151, 4294901760
    %v2053 = vsub.f32 %v151, %v2052
    %v2054 = vand.u32 %v2053, 4294901760
    %v2055 = vsub.f32 %v2053, %v2054
    %v2056 = vand.u32 %v2055, 4294901760
    %2057 = vmatpush.xpose.msra.mxu0 %v2056
    %v2058 = vand.u32 %v147, 4294901760
    %v2059 = vsub.f32 %v147, %v2058
    %v2060 = vand.u32 %v2059, 4294901760
    %v2061 = vsub.f32 %v2059, %v2060
    %v2062 = vand.u32 %v2061, 4294901760
    %2063 = vmatpush.xpose.msra.mxu0 %v2062
    %v2064 = vand.u32 %v143, 4294901760
    %v2065 = vsub.f32 %v143, %v2064
    %v2066 = vand.u32 %v2065, 4294901760
    %v2067 = vsub.f32 %v2065, %v2066
    %v2068 = vand.u32 %v2067, 4294901760
    %2069 = vmatpush.xpose.msra.mxu0 %v2068
    %v2070 = vand.u32 %v139, 4294901760
    %v2071 = vsub.f32 %v139, %v2070
    %v2072 = vand.u32 %v2071, 4294901760
    %v2073 = vsub.f32 %v2071, %v2072
    %v2074 = vand.u32 %v2073, 4294901760
    %2075 = vmatpush.xpose.msra.mxu0 %v2074
    %v2076 = vand.u32 %v135, 4294901760
    %v2077 = vsub.f32 %v135, %v2076
    %v2078 = vand.u32 %v2077, 4294901760
    %v2079 = vsub.f32 %v2077, %v2078
    %v2080 = vand.u32 %v2079, 4294901760
    %2081 = vmatpush.xpose.msra.mxu0 %v2080
    %v2082 = vand.u32 %v131, 4294901760
    %v2083 = vsub.f32 %v131, %v2082
    %v2084 = vand.u32 %v2083, 4294901760
    %v2085 = vsub.f32 %v2083, %v2084
    %v2086 = vand.u32 %v2085, 4294901760
    %2087 = vmatpush.xpose.msra.mxu0 %v2086
    %v2088 = vand.u32 %v127, 4294901760
    %v2089 = vsub.f32 %v127, %v2088
    %v2090 = vand.u32 %v2089, 4294901760
    %v2091 = vsub.f32 %v2089, %v2090
    %v2092 = vand.u32 %v2091, 4294901760
    %2093 = vmatpush.xpose.msra.mxu0 %v2092
    %v2094 = vand.u32 %v123, 4294901760
    %v2095 = vsub.f32 %v123, %v2094
    %v2096 = vand.u32 %v2095, 4294901760
    %v2097 = vsub.f32 %v2095, %v2096
    %v2098 = vand.u32 %v2097, 4294901760
    %2099 = vmatpush.xpose.msra.mxu0 %v2098
    %v2100 = vand.u32 %v591, 4294901760
    %2101 = vmatmul.f32.gmra.mxu0 %v2100
    %v2102 = vpop.f32.mrf.mxu0
    %v2103 = vadd.f32 %v2002, %v2102
    %2104 = vdwg.mxu0
    %v2105 = vand.u32 %v183, 4294901760
    %v2106 = vsub.f32 %v183, %v2105
    %2107 = vmatpush.xpose.msra.mxu0 %v2106
    %v2108 = vand.u32 %v179, 4294901760
    %v2109 = vsub.f32 %v179, %v2108
    %2110 = vmatpush.xpose.msra.mxu0 %v2109
    %v2111 = vand.u32 %v175, 4294901760
    %v2112 = vsub.f32 %v175, %v2111
    %2113 = vmatpush.xpose.msra.mxu0 %v2112
    %v2114 = vand.u32 %v171, 4294901760
    %v2115 = vsub.f32 %v171, %v2114
    %2116 = vmatpush.xpose.msra.mxu0 %v2115
    %v2117 = vand.u32 %v167, 4294901760
    %v2118 = vsub.f32 %v167, %v2117
    %2119 = vmatpush.xpose.msra.mxu0 %v2118
    %v2120 = vand.u32 %v163, 4294901760
    %v2121 = vsub.f32 %v163, %v2120
    %2122 = vmatpush.xpose.msra.mxu0 %v2121
    %v2123 = vand.u32 %v159, 4294901760
    %v2124 = vsub.f32 %v159, %v2123
    %2125 = vmatpush.xpose.msra.mxu0 %v2124
    %v2126 = vand.u32 %v155, 4294901760
    %v2127 = vsub.f32 %v155, %v2126
    %2128 = vmatpush.xpose.msra.mxu0 %v2127
    %v2129 = vand.u32 %v151, 4294901760
    %v2130 = vsub.f32 %v151, %v2129
    %2131 = vmatpush.xpose.msra.mxu0 %v2130
    %v2132 = vand.u32 %v147, 4294901760
    %v2133 = vsub.f32 %v147, %v2132
    %2134 = vmatpush.xpose.msra.mxu0 %v2133
    %v2135 = vand.u32 %v143, 4294901760
    %v2136 = vsub.f32 %v143, %v2135
    %2137 = vmatpush.xpose.msra.mxu0 %v2136
    %v2138 = vand.u32 %v139, 4294901760
    %v2139 = vsub.f32 %v139, %v2138
    %2140 = vmatpush.xpose.msra.mxu0 %v2139
    %v2141 = vand.u32 %v135, 4294901760
    %v2142 = vsub.f32 %v135, %v2141
    %2143 = vmatpush.xpose.msra.mxu0 %v2142
    %v2144 = vand.u32 %v131, 4294901760
    %v2145 = vsub.f32 %v131, %v2144
    %2146 = vmatpush.xpose.msra.mxu0 %v2145
    %v2147 = vand.u32 %v127, 4294901760
    %v2148 = vsub.f32 %v127, %v2147
    %2149 = vmatpush.xpose.msra.mxu0 %v2148
    %v2150 = vand.u32 %v123, 4294901760
    %v2151 = vsub.f32 %v123, %v2150
    %2152 = vmatpush.xpose.msra.mxu0 %v2151
    %v2153 = vand.u32 %v591, 4294901760
    %v2154 = vsub.f32 %v591, %v2153
    %2155 = vmatmul.f32.gmra.mxu0 %v2154
    %v2156 = vpop.f32.mrf.mxu0
    %v2157 = vadd.f32 %v2103, %v2156
    %2158 = vdwg.mxu0
    %v2159 = vand.u32 %v183, 4294901760
    %2160 = vmatpush.xpose.msra.mxu0 %v2159
    %v2161 = vand.u32 %v179, 4294901760
    %2162 = vmatpush.xpose.msra.mxu0 %v2161
    %v2163 = vand.u32 %v175, 4294901760
    %2164 = vmatpush.xpose.msra.mxu0 %v2163
    %v2165 = vand.u32 %v171, 4294901760
    %2166 = vmatpush.xpose.msra.mxu0 %v2165
    %v2167 = vand.u32 %v167, 4294901760
    %2168 = vmatpush.xpose.msra.mxu0 %v2167
    %v2169 = vand.u32 %v163, 4294901760
    %2170 = vmatpush.xpose.msra.mxu0 %v2169
    %v2171 = vand.u32 %v159, 4294901760
    %2172 = vmatpush.xpose.msra.mxu0 %v2171
    %v2173 = vand.u32 %v155, 4294901760
    %2174 = vmatpush.xpose.msra.mxu0 %v2173
    %v2175 = vand.u32 %v151, 4294901760
    %2176 = vmatpush.xpose.msra.mxu0 %v2175
    %v2177 = vand.u32 %v147, 4294901760
    %2178 = vmatpush.xpose.msra.mxu0 %v2177
    %v2179 = vand.u32 %v143, 4294901760
    %2180 = vmatpush.xpose.msra.mxu0 %v2179
    %v2181 = vand.u32 %v139, 4294901760
    %2182 = vmatpush.xpose.msra.mxu0 %v2181
    %v2183 = vand.u32 %v135, 4294901760
    %2184 = vmatpush.xpose.msra.mxu0 %v2183
    %v2185 = vand.u32 %v131, 4294901760
    %2186 = vmatpush.xpose.msra.mxu0 %v2185
    %v2187 = vand.u32 %v127, 4294901760
    %2188 = vmatpush.xpose.msra.mxu0 %v2187
    %v2189 = vand.u32 %v123, 4294901760
    %2190 = vmatpush.xpose.msra.mxu0 %v2189
    %v2191 = vand.u32 %v591, 4294901760
    %v2192 = vsub.f32 %v591, %v2191
    %v2193 = vand.u32 %v2192, 4294901760
    %2194 = vmatmul.f32.gmra.mxu0 %v2193
    %v2195 = vpop.f32.mrf.mxu0
    %v2196 = vadd.f32 %v2157, %v2195
    %2197 = vdwg.mxu0
    %v2198 = vand.u32 %v183, 4294901760
    %v2199 = vsub.f32 %v183, %v2198
    %v2200 = vand.u32 %v2199, 4294901760
    %2201 = vmatpush.xpose.msra.mxu0 %v2200
    %v2202 = vand.u32 %v179, 4294901760
    %v2203 = vsub.f32 %v179, %v2202
    %v2204 = vand.u32 %v2203, 4294901760
    %2205 = vmatpush.xpose.msra.mxu0 %v2204
    %v2206 = vand.u32 %v175, 4294901760
    %v2207 = vsub.f32 %v175, %v2206
    %v2208 = vand.u32 %v2207, 4294901760
    %2209 = vmatpush.xpose.msra.mxu0 %v2208
    %v2210 = vand.u32 %v171, 4294901760
    %v2211 = vsub.f32 %v171, %v2210
    %v2212 = vand.u32 %v2211, 4294901760
    %2213 = vmatpush.xpose.msra.mxu0 %v2212
    %v2214 = vand.u32 %v167, 4294901760
    %v2215 = vsub.f32 %v167, %v2214
    %v2216 = vand.u32 %v2215, 4294901760
    %2217 = vmatpush.xpose.msra.mxu0 %v2216
    %v2218 = vand.u32 %v163, 4294901760
    %v2219 = vsub.f32 %v163, %v2218
    %v2220 = vand.u32 %v2219, 4294901760
    %2221 = vmatpush.xpose.msra.mxu0 %v2220
    %v2222 = vand.u32 %v159, 4294901760
    %v2223 = vsub.f32 %v159, %v2222
    %v2224 = vand.u32 %v2223, 4294901760
    %2225 = vmatpush.xpose.msra.mxu0 %v2224
    %v2226 = vand.u32 %v155, 4294901760
    %v2227 = vsub.f32 %v155, %v2226
    %v2228 = vand.u32 %v2227, 4294901760
    %2229 = vmatpush.xpose.msra.mxu0 %v2228
    %v2230 = vand.u32 %v151, 4294901760
    %v2231 = vsub.f32 %v151, %v2230
    %v2232 = vand.u32 %v2231, 4294901760
    %2233 = vmatpush.xpose.msra.mxu0 %v2232
    %v2234 = vand.u32 %v147, 4294901760
    %v2235 = vsub.f32 %v147, %v2234
    %v2236 = vand.u32 %v2235, 4294901760
    %2237 = vmatpush.xpose.msra.mxu0 %v2236
    %v2238 = vand.u32 %v143, 4294901760
    %v2239 = vsub.f32 %v143, %v2238
    %v2240 = vand.u32 %v2239, 4294901760
    %2241 = vmatpush.xpose.msra.mxu0 %v2240
    %v2242 = vand.u32 %v139, 4294901760
    %v2243 = vsub.f32 %v139, %v2242
    %v2244 = vand.u32 %v2243, 4294901760
    %2245 = vmatpush.xpose.msra.mxu0 %v2244
    %v2246 = vand.u32 %v135, 4294901760
    %v2247 = vsub.f32 %v135, %v2246
    %v2248 = vand.u32 %v2247, 4294901760
    %2249 = vmatpush.xpose.msra.mxu0 %v2248
    %v2250 = vand.u32 %v131, 4294901760
    %v2251 = vsub.f32 %v131, %v2250
    %v2252 = vand.u32 %v2251, 4294901760
    %2253 = vmatpush.xpose.msra.mxu0 %v2252
    %v2254 = vand.u32 %v127, 4294901760
    %v2255 = vsub.f32 %v127, %v2254
    %v2256 = vand.u32 %v2255, 4294901760
    %2257 = vmatpush.xpose.msra.mxu0 %v2256
    %v2258 = vand.u32 %v123, 4294901760
    %v2259 = vsub.f32 %v123, %v2258
    %v2260 = vand.u32 %v2259, 4294901760
    %2261 = vmatpush.xpose.msra.mxu0 %v2260
    %v2262 = vand.u32 %v591, 4294901760
    %2263 = vmatmul.f32.gmra.mxu0 %v2262
    %v2264 = vpop.f32.mrf.mxu0
    %v2265 = vadd.f32 %v2196, %v2264
    %2266 = vdwg.mxu0
    %v2267 = vand.u32 %v183, 4294901760
    %2268 = vmatpush.xpose.msra.mxu0 %v2267
    %v2269 = vand.u32 %v179, 4294901760
    %2270 = vmatpush.xpose.msra.mxu0 %v2269
    %v2271 = vand.u32 %v175, 4294901760
    %2272 = vmatpush.xpose.msra.mxu0 %v2271
    %v2273 = vand.u32 %v171, 4294901760
    %2274 = vmatpush.xpose.msra.mxu0 %v2273
    %v2275 = vand.u32 %v167, 4294901760
    %2276 = vmatpush.xpose.msra.mxu0 %v2275
    %v2277 = vand.u32 %v163, 4294901760
    %2278 = vmatpush.xpose.msra.mxu0 %v2277
    %v2279 = vand.u32 %v159, 4294901760
    %2280 = vmatpush.xpose.msra.mxu0 %v2279
    %v2281 = vand.u32 %v155, 4294901760
    %2282 = vmatpush.xpose.msra.mxu0 %v2281
    %v2283 = vand.u32 %v151, 4294901760
    %2284 = vmatpush.xpose.msra.mxu0 %v2283
    %v2285 = vand.u32 %v147, 4294901760
    %2286 = vmatpush.xpose.msra.mxu0 %v2285
    %v2287 = vand.u32 %v143, 4294901760
    %2288 = vmatpush.xpose.msra.mxu0 %v2287
    %v2289 = vand.u32 %v139, 4294901760
    %2290 = vmatpush.xpose.msra.mxu0 %v2289
    %v2291 = vand.u32 %v135, 4294901760
    %2292 = vmatpush.xpose.msra.mxu0 %v2291
    %v2293 = vand.u32 %v131, 4294901760
    %2294 = vmatpush.xpose.msra.mxu0 %v2293
    %v2295 = vand.u32 %v127, 4294901760
    %2296 = vmatpush.xpose.msra.mxu0 %v2295
    %v2297 = vand.u32 %v123, 4294901760
    %2298 = vmatpush.xpose.msra.mxu0 %v2297
    %v2299 = vand.u32 %v591, 4294901760
    %2300 = vmatmul.f32.gmra.mxu0 %v2299
    %v2301 = vpop.f32.mrf.mxu0
    %v2302 = vadd.f32 %v2265, %v2301
    %2303 = vdwg.mxu0
    %v2304 = vand.u32 %v184, 4294901760
    %2305 = vmatpush.xpose.msra.mxu0 %v2304
    %v2306 = vand.u32 %v180, 4294901760
    %2307 = vmatpush.xpose.msra.mxu0 %v2306
    %v2308 = vand.u32 %v176, 4294901760
    %2309 = vmatpush.xpose.msra.mxu0 %v2308
    %v2310 = vand.u32 %v172, 4294901760
    %2311 = vmatpush.xpose.msra.mxu0 %v2310
    %v2312 = vand.u32 %v168, 4294901760
    %2313 = vmatpush.xpose.msra.mxu0 %v2312
    %v2314 = vand.u32 %v164, 4294901760
    %2315 = vmatpush.xpose.msra.mxu0 %v2314
    %v2316 = vand.u32 %v160, 4294901760
    %2317 = vmatpush.xpose.msra.mxu0 %v2316
    %v2318 = vand.u32 %v156, 4294901760
    %2319 = vmatpush.xpose.msra.mxu0 %v2318
    %v2320 = vand.u32 %v152, 4294901760
    %2321 = vmatpush.xpose.msra.mxu0 %v2320
    %v2322 = vand.u32 %v148, 4294901760
    %2323 = vmatpush.xpose.msra.mxu0 %v2322
    %v2324 = vand.u32 %v144, 4294901760
    %2325 = vmatpush.xpose.msra.mxu0 %v2324
    %v2326 = vand.u32 %v140, 4294901760
    %2327 = vmatpush.xpose.msra.mxu0 %v2326
    %v2328 = vand.u32 %v136, 4294901760
    %2329 = vmatpush.xpose.msra.mxu0 %v2328
    %v2330 = vand.u32 %v132, 4294901760
    %2331 = vmatpush.xpose.msra.mxu0 %v2330
    %v2332 = vand.u32 %v128, 4294901760
    %2333 = vmatpush.xpose.msra.mxu0 %v2332
    %v2334 = vand.u32 %v124, 4294901760
    %2335 = vmatpush.xpose.msra.mxu0 %v2334
    %v2336 = vand.u32 %v592, 4294901760
    %v2337 = vsub.f32 %v592, %v2336
    %v2338 = vand.u32 %v2337, 4294901760
    %v2339 = vsub.f32 %v2337, %v2338
    %v2340 = vand.u32 %v2339, 4294901760
    %2341 = vmatmul.f32.gmra.mxu0 %v2340
    %v2342 = vpop.f32.mrf.mxu0
    %v2343 = vadd.f32 %v2302, %v2342
    %2344 = vdwg.mxu0
    %v2345 = vand.u32 %v184, 4294901760
    %v2346 = vsub.f32 %v184, %v2345
    %v2347 = vand.u32 %v2346, 4294901760
    %v2348 = vsub.f32 %v2346, %v2347
    %v2349 = vand.u32 %v2348, 4294901760
    %2350 = vmatpush.xpose.msra.mxu0 %v2349
    %v2351 = vand.u32 %v180, 4294901760
    %v2352 = vsub.f32 %v180, %v2351
    %v2353 = vand.u32 %v2352, 4294901760
    %v2354 = vsub.f32 %v2352, %v2353
    %v2355 = vand.u32 %v2354, 4294901760
    %2356 = vmatpush.xpose.msra.mxu0 %v2355
    %v2357 = vand.u32 %v176, 4294901760
    %v2358 = vsub.f32 %v176, %v2357
    %v2359 = vand.u32 %v2358, 4294901760
    %v2360 = vsub.f32 %v2358, %v2359
    %v2361 = vand.u32 %v2360, 4294901760
    %2362 = vmatpush.xpose.msra.mxu0 %v2361
    %v2363 = vand.u32 %v172, 4294901760
    %v2364 = vsub.f32 %v172, %v2363
    %v2365 = vand.u32 %v2364, 4294901760
    %v2366 = vsub.f32 %v2364, %v2365
    %v2367 = vand.u32 %v2366, 4294901760
    %2368 = vmatpush.xpose.msra.mxu0 %v2367
    %v2369 = vand.u32 %v168, 4294901760
    %v2370 = vsub.f32 %v168, %v2369
    %v2371 = vand.u32 %v2370, 4294901760
    %v2372 = vsub.f32 %v2370, %v2371
    %v2373 = vand.u32 %v2372, 4294901760
    %2374 = vmatpush.xpose.msra.mxu0 %v2373
    %v2375 = vand.u32 %v164, 4294901760
    %v2376 = vsub.f32 %v164, %v2375
    %v2377 = vand.u32 %v2376, 4294901760
    %v2378 = vsub.f32 %v2376, %v2377
    %v2379 = vand.u32 %v2378, 4294901760
    %2380 = vmatpush.xpose.msra.mxu0 %v2379
    %v2381 = vand.u32 %v160, 4294901760
    %v2382 = vsub.f32 %v160, %v2381
    %v2383 = vand.u32 %v2382, 4294901760
    %v2384 = vsub.f32 %v2382, %v2383
    %v2385 = vand.u32 %v2384, 4294901760
    %2386 = vmatpush.xpose.msra.mxu0 %v2385
    %v2387 = vand.u32 %v156, 4294901760
    %v2388 = vsub.f32 %v156, %v2387
    %v2389 = vand.u32 %v2388, 4294901760
    %v2390 = vsub.f32 %v2388, %v2389
    %v2391 = vand.u32 %v2390, 4294901760
    %2392 = vmatpush.xpose.msra.mxu0 %v2391
    %v2393 = vand.u32 %v152, 4294901760
    %v2394 = vsub.f32 %v152, %v2393
    %v2395 = vand.u32 %v2394, 4294901760
    %v2396 = vsub.f32 %v2394, %v2395
    %v2397 = vand.u32 %v2396, 4294901760
    %2398 = vmatpush.xpose.msra.mxu0 %v2397
    %v2399 = vand.u32 %v148, 4294901760
    %v2400 = vsub.f32 %v148, %v2399
    %v2401 = vand.u32 %v2400, 4294901760
    %v2402 = vsub.f32 %v2400, %v2401
    %v2403 = vand.u32 %v2402, 4294901760
    %2404 = vmatpush.xpose.msra.mxu0 %v2403
    %v2405 = vand.u32 %v144, 4294901760
    %v2406 = vsub.f32 %v144, %v2405
    %v2407 = vand.u32 %v2406, 4294901760
    %v2408 = vsub.f32 %v2406, %v2407
    %v2409 = vand.u32 %v2408, 4294901760
    %2410 = vmatpush.xpose.msra.mxu0 %v2409
    %v2411 = vand.u32 %v140, 4294901760
    %v2412 = vsub.f32 %v140, %v2411
    %v2413 = vand.u32 %v2412, 4294901760
    %v2414 = vsub.f32 %v2412, %v2413
    %v2415 = vand.u32 %v2414, 4294901760
    %2416 = vmatpush.xpose.msra.mxu0 %v2415
    %v2417 = vand.u32 %v136, 4294901760
    %v2418 = vsub.f32 %v136, %v2417
    %v2419 = vand.u32 %v2418, 4294901760
    %v2420 = vsub.f32 %v2418, %v2419
    %v2421 = vand.u32 %v2420, 4294901760
    %2422 = vmatpush.xpose.msra.mxu0 %v2421
    %v2423 = vand.u32 %v132, 4294901760
    %v2424 = vsub.f32 %v132, %v2423
    %v2425 = vand.u32 %v2424, 4294901760
    %v2426 = vsub.f32 %v2424, %v2425
    %v2427 = vand.u32 %v2426, 4294901760
    %2428 = vmatpush.xpose.msra.mxu0 %v2427
    %v2429 = vand.u32 %v128, 4294901760
    %v2430 = vsub.f32 %v128, %v2429
    %v2431 = vand.u32 %v2430, 4294901760
    %v2432 = vsub.f32 %v2430, %v2431
    %v2433 = vand.u32 %v2432, 4294901760
    %2434 = vmatpush.xpose.msra.mxu0 %v2433
    %v2435 = vand.u32 %v124, 4294901760
    %v2436 = vsub.f32 %v124, %v2435
    %v2437 = vand.u32 %v2436, 4294901760
    %v2438 = vsub.f32 %v2436, %v2437
    %v2439 = vand.u32 %v2438, 4294901760
    %2440 = vmatpush.xpose.msra.mxu0 %v2439
    %v2441 = vand.u32 %v592, 4294901760
    %2442 = vmatmul.f32.gmra.mxu0 %v2441
    %v2443 = vpop.f32.mrf.mxu0
    %v2444 = vadd.f32 %v2343, %v2443
    %2445 = vdwg.mxu0
    %v2446 = vand.u32 %v184, 4294901760
    %v2447 = vsub.f32 %v184, %v2446
    %2448 = vmatpush.xpose.msra.mxu0 %v2447
    %v2449 = vand.u32 %v180, 4294901760
    %v2450 = vsub.f32 %v180, %v2449
    %2451 = vmatpush.xpose.msra.mxu0 %v2450
    %v2452 = vand.u32 %v176, 4294901760
    %v2453 = vsub.f32 %v176, %v2452
    %2454 = vmatpush.xpose.msra.mxu0 %v2453
    %v2455 = vand.u32 %v172, 4294901760
    %v2456 = vsub.f32 %v172, %v2455
    %2457 = vmatpush.xpose.msra.mxu0 %v2456
    %v2458 = vand.u32 %v168, 4294901760
    %v2459 = vsub.f32 %v168, %v2458
    %2460 = vmatpush.xpose.msra.mxu0 %v2459
    %v2461 = vand.u32 %v164, 4294901760
    %v2462 = vsub.f32 %v164, %v2461
    %2463 = vmatpush.xpose.msra.mxu0 %v2462
    %v2464 = vand.u32 %v160, 4294901760
    %v2465 = vsub.f32 %v160, %v2464
    %2466 = vmatpush.xpose.msra.mxu0 %v2465
    %v2467 = vand.u32 %v156, 4294901760
    %v2468 = vsub.f32 %v156, %v2467
    %2469 = vmatpush.xpose.msra.mxu0 %v2468
    %v2470 = vand.u32 %v152, 4294901760
    %v2471 = vsub.f32 %v152, %v2470
    %2472 = vmatpush.xpose.msra.mxu0 %v2471
    %v2473 = vand.u32 %v148, 4294901760
    %v2474 = vsub.f32 %v148, %v2473
    %2475 = vmatpush.xpose.msra.mxu0 %v2474
    %v2476 = vand.u32 %v144, 4294901760
    %v2477 = vsub.f32 %v144, %v2476
    %2478 = vmatpush.xpose.msra.mxu0 %v2477
    %v2479 = vand.u32 %v140, 4294901760
    %v2480 = vsub.f32 %v140, %v2479
    %2481 = vmatpush.xpose.msra.mxu0 %v2480
    %v2482 = vand.u32 %v136, 4294901760
    %v2483 = vsub.f32 %v136, %v2482
    %2484 = vmatpush.xpose.msra.mxu0 %v2483
    %v2485 = vand.u32 %v132, 4294901760
    %v2486 = vsub.f32 %v132, %v2485
    %2487 = vmatpush.xpose.msra.mxu0 %v2486
    %v2488 = vand.u32 %v128, 4294901760
    %v2489 = vsub.f32 %v128, %v2488
    %2490 = vmatpush.xpose.msra.mxu0 %v2489
    %v2491 = vand.u32 %v124, 4294901760
    %v2492 = vsub.f32 %v124, %v2491
    %2493 = vmatpush.xpose.msra.mxu0 %v2492
    %v2494 = vand.u32 %v592, 4294901760
    %v2495 = vsub.f32 %v592, %v2494
    %2496 = vmatmul.f32.gmra.mxu0 %v2495
    %v2497 = vpop.f32.mrf.mxu0
    %v2498 = vadd.f32 %v2444, %v2497
    %2499 = vdwg.mxu0
    %v2500 = vand.u32 %v184, 4294901760
    %2501 = vmatpush.xpose.msra.mxu0 %v2500
    %v2502 = vand.u32 %v180, 4294901760
    %2503 = vmatpush.xpose.msra.mxu0 %v2502
    %v2504 = vand.u32 %v176, 4294901760
    %2505 = vmatpush.xpose.msra.mxu0 %v2504
    %v2506 = vand.u32 %v172, 4294901760
    %2507 = vmatpush.xpose.msra.mxu0 %v2506
    %v2508 = vand.u32 %v168, 4294901760
    %2509 = vmatpush.xpose.msra.mxu0 %v2508
    %v2510 = vand.u32 %v164, 4294901760
    %2511 = vmatpush.xpose.msra.mxu0 %v2510
    %v2512 = vand.u32 %v160, 4294901760
    %2513 = vmatpush.xpose.msra.mxu0 %v2512
    %v2514 = vand.u32 %v156, 4294901760
    %2515 = vmatpush.xpose.msra.mxu0 %v2514
    %v2516 = vand.u32 %v152, 4294901760
    %2517 = vmatpush.xpose.msra.mxu0 %v2516
    %v2518 = vand.u32 %v148, 4294901760
    %2519 = vmatpush.xpose.msra.mxu0 %v2518
    %v2520 = vand.u32 %v144, 4294901760
    %2521 = vmatpush.xpose.msra.mxu0 %v2520
    %v2522 = vand.u32 %v140, 4294901760
    %2523 = vmatpush.xpose.msra.mxu0 %v2522
    %v2524 = vand.u32 %v136, 4294901760
    %2525 = vmatpush.xpose.msra.mxu0 %v2524
    %v2526 = vand.u32 %v132, 4294901760
    %2527 = vmatpush.xpose.msra.mxu0 %v2526
    %v2528 = vand.u32 %v128, 4294901760
    %2529 = vmatpush.xpose.msra.mxu0 %v2528
    %v2530 = vand.u32 %v124, 4294901760
    %2531 = vmatpush.xpose.msra.mxu0 %v2530
    %v2532 = vand.u32 %v592, 4294901760
    %v2533 = vsub.f32 %v592, %v2532
    %v2534 = vand.u32 %v2533, 4294901760
    %2535 = vmatmul.f32.gmra.mxu0 %v2534
    %v2536 = vpop.f32.mrf.mxu0
    %v2537 = vadd.f32 %v2498, %v2536
    %2538 = vdwg.mxu0
    %v2539 = vand.u32 %v184, 4294901760
    %v2540 = vsub.f32 %v184, %v2539
    %v2541 = vand.u32 %v2540, 4294901760
    %2542 = vmatpush.xpose.msra.mxu0 %v2541
    %v2543 = vand.u32 %v180, 4294901760
    %v2544 = vsub.f32 %v180, %v2543
    %v2545 = vand.u32 %v2544, 4294901760
    %2546 = vmatpush.xpose.msra.mxu0 %v2545
    %v2547 = vand.u32 %v176, 4294901760
    %v2548 = vsub.f32 %v176, %v2547
    %v2549 = vand.u32 %v2548, 4294901760
    %2550 = vmatpush.xpose.msra.mxu0 %v2549
    %v2551 = vand.u32 %v172, 4294901760
    %v2552 = vsub.f32 %v172, %v2551
    %v2553 = vand.u32 %v2552, 4294901760
    %2554 = vmatpush.xpose.msra.mxu0 %v2553
    %v2555 = vand.u32 %v168, 4294901760
    %v2556 = vsub.f32 %v168, %v2555
    %v2557 = vand.u32 %v2556, 4294901760
    %2558 = vmatpush.xpose.msra.mxu0 %v2557
    %v2559 = vand.u32 %v164, 4294901760
    %v2560 = vsub.f32 %v164, %v2559
    %v2561 = vand.u32 %v2560, 4294901760
    %2562 = vmatpush.xpose.msra.mxu0 %v2561
    %v2563 = vand.u32 %v160, 4294901760
    %v2564 = vsub.f32 %v160, %v2563
    %v2565 = vand.u32 %v2564, 4294901760
    %2566 = vmatpush.xpose.msra.mxu0 %v2565
    %v2567 = vand.u32 %v156, 4294901760
    %v2568 = vsub.f32 %v156, %v2567
    %v2569 = vand.u32 %v2568, 4294901760
    %2570 = vmatpush.xpose.msra.mxu0 %v2569
    %v2571 = vand.u32 %v152, 4294901760
    %v2572 = vsub.f32 %v152, %v2571
    %v2573 = vand.u32 %v2572, 4294901760
    %2574 = vmatpush.xpose.msra.mxu0 %v2573
    %v2575 = vand.u32 %v148, 4294901760
    %v2576 = vsub.f32 %v148, %v2575
    %v2577 = vand.u32 %v2576, 4294901760
    %2578 = vmatpush.xpose.msra.mxu0 %v2577
    %v2579 = vand.u32 %v144, 4294901760
    %v2580 = vsub.f32 %v144, %v2579
    %v2581 = vand.u32 %v2580, 4294901760
    %2582 = vmatpush.xpose.msra.mxu0 %v2581
    %v2583 = vand.u32 %v140, 4294901760
    %v2584 = vsub.f32 %v140, %v2583
    %v2585 = vand.u32 %v2584, 4294901760
    %2586 = vmatpush.xpose.msra.mxu0 %v2585
    %v2587 = vand.u32 %v136, 4294901760
    %v2588 = vsub.f32 %v136, %v2587
    %v2589 = vand.u32 %v2588, 4294901760
    %2590 = vmatpush.xpose.msra.mxu0 %v2589
    %v2591 = vand.u32 %v132, 4294901760
    %v2592 = vsub.f32 %v132, %v2591
    %v2593 = vand.u32 %v2592, 4294901760
    %2594 = vmatpush.xpose.msra.mxu0 %v2593
    %v2595 = vand.u32 %v128, 4294901760
    %v2596 = vsub.f32 %v128, %v2595
    %v2597 = vand.u32 %v2596, 4294901760
    %2598 = vmatpush.xpose.msra.mxu0 %v2597
    %v2599 = vand.u32 %v124, 4294901760
    %v2600 = vsub.f32 %v124, %v2599
    %v2601 = vand.u32 %v2600, 4294901760
    %2602 = vmatpush.xpose.msra.mxu0 %v2601
    %v2603 = vand.u32 %v592, 4294901760
    %2604 = vmatmul.f32.gmra.mxu0 %v2603
    %v2605 = vpop.f32.mrf.mxu0
    %v2606 = vadd.f32 %v2537, %v2605
    %2607 = vdwg.mxu0
    %v2608 = vand.u32 %v184, 4294901760
    %2609 = vmatpush.xpose.msra.mxu0 %v2608
    %v2610 = vand.u32 %v180, 4294901760
    %2611 = vmatpush.xpose.msra.mxu0 %v2610
    %v2612 = vand.u32 %v176, 4294901760
    %2613 = vmatpush.xpose.msra.mxu0 %v2612
    %v2614 = vand.u32 %v172, 4294901760
    %2615 = vmatpush.xpose.msra.mxu0 %v2614
    %v2616 = vand.u32 %v168, 4294901760
    %2617 = vmatpush.xpose.msra.mxu0 %v2616
    %v2618 = vand.u32 %v164, 4294901760
    %2619 = vmatpush.xpose.msra.mxu0 %v2618
    %v2620 = vand.u32 %v160, 4294901760
    %2621 = vmatpush.xpose.msra.mxu0 %v2620
    %v2622 = vand.u32 %v156, 4294901760
    %2623 = vmatpush.xpose.msra.mxu0 %v2622
    %v2624 = vand.u32 %v152, 4294901760
    %2625 = vmatpush.xpose.msra.mxu0 %v2624
    %v2626 = vand.u32 %v148, 4294901760
    %2627 = vmatpush.xpose.msra.mxu0 %v2626
    %v2628 = vand.u32 %v144, 4294901760
    %2629 = vmatpush.xpose.msra.mxu0 %v2628
    %v2630 = vand.u32 %v140, 4294901760
    %2631 = vmatpush.xpose.msra.mxu0 %v2630
    %v2632 = vand.u32 %v136, 4294901760
    %2633 = vmatpush.xpose.msra.mxu0 %v2632
    %v2634 = vand.u32 %v132, 4294901760
    %2635 = vmatpush.xpose.msra.mxu0 %v2634
    %v2636 = vand.u32 %v128, 4294901760
    %2637 = vmatpush.xpose.msra.mxu0 %v2636
    %v2638 = vand.u32 %v124, 4294901760
    %2639 = vmatpush.xpose.msra.mxu0 %v2638
    %v2640 = vand.u32 %v592, 4294901760
    %2641 = vmatmul.f32.gmra.mxu0 %v2640
    %v2642 = vpop.f32.mrf.mxu0
    %v2643 = vadd.f32 %v2606, %v2642
    %2644 = vdwg.mxu0
    %v2645 = vand.u32 %v185, 4294901760
    %2646 = vmatpush.xpose.msra.mxu0 %v2645
    %v2647 = vand.u32 %v181, 4294901760
    %2648 = vmatpush.xpose.msra.mxu0 %v2647
    %v2649 = vand.u32 %v177, 4294901760
    %2650 = vmatpush.xpose.msra.mxu0 %v2649
    %v2651 = vand.u32 %v173, 4294901760
    %2652 = vmatpush.xpose.msra.mxu0 %v2651
    %v2653 = vand.u32 %v169, 4294901760
    %2654 = vmatpush.xpose.msra.mxu0 %v2653
    %v2655 = vand.u32 %v165, 4294901760
    %2656 = vmatpush.xpose.msra.mxu0 %v2655
    %v2657 = vand.u32 %v161, 4294901760
    %2658 = vmatpush.xpose.msra.mxu0 %v2657
    %v2659 = vand.u32 %v157, 4294901760
    %2660 = vmatpush.xpose.msra.mxu0 %v2659
    %v2661 = vand.u32 %v153, 4294901760
    %2662 = vmatpush.xpose.msra.mxu0 %v2661
    %v2663 = vand.u32 %v149, 4294901760
    %2664 = vmatpush.xpose.msra.mxu0 %v2663
    %v2665 = vand.u32 %v145, 4294901760
    %2666 = vmatpush.xpose.msra.mxu0 %v2665
    %v2667 = vand.u32 %v141, 4294901760
    %2668 = vmatpush.xpose.msra.mxu0 %v2667
    %v2669 = vand.u32 %v137, 4294901760
    %2670 = vmatpush.xpose.msra.mxu0 %v2669
    %v2671 = vand.u32 %v133, 4294901760
    %2672 = vmatpush.xpose.msra.mxu0 %v2671
    %v2673 = vand.u32 %v129, 4294901760
    %2674 = vmatpush.xpose.msra.mxu0 %v2673
    %v2675 = vand.u32 %v125, 4294901760
    %2676 = vmatpush.xpose.msra.mxu0 %v2675
    %v2677 = vand.u32 %v593, 4294901760
    %v2678 = vsub.f32 %v593, %v2677
    %v2679 = vand.u32 %v2678, 4294901760
    %v2680 = vsub.f32 %v2678, %v2679
    %v2681 = vand.u32 %v2680, 4294901760
    %2682 = vmatmul.f32.gmra.mxu0 %v2681
    %v2683 = vpop.f32.mrf.mxu0
    %v2684 = vadd.f32 %v2643, %v2683
    %2685 = vdwg.mxu0
    %v2686 = vand.u32 %v185, 4294901760
    %v2687 = vsub.f32 %v185, %v2686
    %v2688 = vand.u32 %v2687, 4294901760
    %v2689 = vsub.f32 %v2687, %v2688
    %v2690 = vand.u32 %v2689, 4294901760
    %2691 = vmatpush.xpose.msra.mxu0 %v2690
    %v2692 = vand.u32 %v181, 4294901760
    %v2693 = vsub.f32 %v181, %v2692
    %v2694 = vand.u32 %v2693, 4294901760
    %v2695 = vsub.f32 %v2693, %v2694
    %v2696 = vand.u32 %v2695, 4294901760
    %2697 = vmatpush.xpose.msra.mxu0 %v2696
    %v2698 = vand.u32 %v177, 4294901760
    %v2699 = vsub.f32 %v177, %v2698
    %v2700 = vand.u32 %v2699, 4294901760
    %v2701 = vsub.f32 %v2699, %v2700
    %v2702 = vand.u32 %v2701, 4294901760
    %2703 = vmatpush.xpose.msra.mxu0 %v2702
    %v2704 = vand.u32 %v173, 4294901760
    %v2705 = vsub.f32 %v173, %v2704
    %v2706 = vand.u32 %v2705, 4294901760
    %v2707 = vsub.f32 %v2705, %v2706
    %v2708 = vand.u32 %v2707, 4294901760
    %2709 = vmatpush.xpose.msra.mxu0 %v2708
    %v2710 = vand.u32 %v169, 4294901760
    %v2711 = vsub.f32 %v169, %v2710
    %v2712 = vand.u32 %v2711, 4294901760
    %v2713 = vsub.f32 %v2711, %v2712
    %v2714 = vand.u32 %v2713, 4294901760
    %2715 = vmatpush.xpose.msra.mxu0 %v2714
    %v2716 = vand.u32 %v165, 4294901760
    %v2717 = vsub.f32 %v165, %v2716
    %v2718 = vand.u32 %v2717, 4294901760
    %v2719 = vsub.f32 %v2717, %v2718
    %v2720 = vand.u32 %v2719, 4294901760
    %2721 = vmatpush.xpose.msra.mxu0 %v2720
    %v2722 = vand.u32 %v161, 4294901760
    %v2723 = vsub.f32 %v161, %v2722
    %v2724 = vand.u32 %v2723, 4294901760
    %v2725 = vsub.f32 %v2723, %v2724
    %v2726 = vand.u32 %v2725, 4294901760
    %2727 = vmatpush.xpose.msra.mxu0 %v2726
    %v2728 = vand.u32 %v157, 4294901760
    %v2729 = vsub.f32 %v157, %v2728
    %v2730 = vand.u32 %v2729, 4294901760
    %v2731 = vsub.f32 %v2729, %v2730
    %v2732 = vand.u32 %v2731, 4294901760
    %2733 = vmatpush.xpose.msra.mxu0 %v2732
    %v2734 = vand.u32 %v153, 4294901760
    %v2735 = vsub.f32 %v153, %v2734
    %v2736 = vand.u32 %v2735, 4294901760
    %v2737 = vsub.f32 %v2735, %v2736
    %v2738 = vand.u32 %v2737, 4294901760
    %2739 = vmatpush.xpose.msra.mxu0 %v2738
    %v2740 = vand.u32 %v149, 4294901760
    %v2741 = vsub.f32 %v149, %v2740
    %v2742 = vand.u32 %v2741, 4294901760
    %v2743 = vsub.f32 %v2741, %v2742
    %v2744 = vand.u32 %v2743, 4294901760
    %2745 = vmatpush.xpose.msra.mxu0 %v2744
    %v2746 = vand.u32 %v145, 4294901760
    %v2747 = vsub.f32 %v145, %v2746
    %v2748 = vand.u32 %v2747, 4294901760
    %v2749 = vsub.f32 %v2747, %v2748
    %v2750 = vand.u32 %v2749, 4294901760
    %2751 = vmatpush.xpose.msra.mxu0 %v2750
    %v2752 = vand.u32 %v141, 4294901760
    %v2753 = vsub.f32 %v141, %v2752
    %v2754 = vand.u32 %v2753, 4294901760
    %v2755 = vsub.f32 %v2753, %v2754
    %v2756 = vand.u32 %v2755, 4294901760
    %2757 = vmatpush.xpose.msra.mxu0 %v2756
    %v2758 = vand.u32 %v137, 4294901760
    %v2759 = vsub.f32 %v137, %v2758
    %v2760 = vand.u32 %v2759, 4294901760
    %v2761 = vsub.f32 %v2759, %v2760
    %v2762 = vand.u32 %v2761, 4294901760
    %2763 = vmatpush.xpose.msra.mxu0 %v2762
    %v2764 = vand.u32 %v133, 4294901760
    %v2765 = vsub.f32 %v133, %v2764
    %v2766 = vand.u32 %v2765, 4294901760
    %v2767 = vsub.f32 %v2765, %v2766
    %v2768 = vand.u32 %v2767, 4294901760
    %2769 = vmatpush.xpose.msra.mxu0 %v2768
    %v2770 = vand.u32 %v129, 4294901760
    %v2771 = vsub.f32 %v129, %v2770
    %v2772 = vand.u32 %v2771, 4294901760
    %v2773 = vsub.f32 %v2771, %v2772
    %v2774 = vand.u32 %v2773, 4294901760
    %2775 = vmatpush.xpose.msra.mxu0 %v2774
    %v2776 = vand.u32 %v125, 4294901760
    %v2777 = vsub.f32 %v125, %v2776
    %v2778 = vand.u32 %v2777, 4294901760
    %v2779 = vsub.f32 %v2777, %v2778
    %v2780 = vand.u32 %v2779, 4294901760
    %2781 = vmatpush.xpose.msra.mxu0 %v2780
    %v2782 = vand.u32 %v593, 4294901760
    %2783 = vmatmul.f32.gmra.mxu0 %v2782
    %v2784 = vpop.f32.mrf.mxu0
    %v2785 = vadd.f32 %v2684, %v2784
    %2786 = vdwg.mxu0
    %v2787 = vand.u32 %v185, 4294901760
    %v2788 = vsub.f32 %v185, %v2787
    %2789 = vmatpush.xpose.msra.mxu0 %v2788
    %v2790 = vand.u32 %v181, 4294901760
    %v2791 = vsub.f32 %v181, %v2790
    %2792 = vmatpush.xpose.msra.mxu0 %v2791
    %v2793 = vand.u32 %v177, 4294901760
    %v2794 = vsub.f32 %v177, %v2793
    %2795 = vmatpush.xpose.msra.mxu0 %v2794
    %v2796 = vand.u32 %v173, 4294901760
    %v2797 = vsub.f32 %v173, %v2796
    %2798 = vmatpush.xpose.msra.mxu0 %v2797
    %v2799 = vand.u32 %v169, 4294901760
    %v2800 = vsub.f32 %v169, %v2799
    %2801 = vmatpush.xpose.msra.mxu0 %v2800
    %v2802 = vand.u32 %v165, 4294901760
    %v2803 = vsub.f32 %v165, %v2802
    %2804 = vmatpush.xpose.msra.mxu0 %v2803
    %v2805 = vand.u32 %v161, 4294901760
    %v2806 = vsub.f32 %v161, %v2805
    %2807 = vmatpush.xpose.msra.mxu0 %v2806
    %v2808 = vand.u32 %v157, 4294901760
    %v2809 = vsub.f32 %v157, %v2808
    %2810 = vmatpush.xpose.msra.mxu0 %v2809
    %v2811 = vand.u32 %v153, 4294901760
    %v2812 = vsub.f32 %v153, %v2811
    %2813 = vmatpush.xpose.msra.mxu0 %v2812
    %v2814 = vand.u32 %v149, 4294901760
    %v2815 = vsub.f32 %v149, %v2814
    %2816 = vmatpush.xpose.msra.mxu0 %v2815
    %v2817 = vand.u32 %v145, 4294901760
    %v2818 = vsub.f32 %v145, %v2817
    %2819 = vmatpush.xpose.msra.mxu0 %v2818
    %v2820 = vand.u32 %v141, 4294901760
    %v2821 = vsub.f32 %v141, %v2820
    %2822 = vmatpush.xpose.msra.mxu0 %v2821
    %v2823 = vand.u32 %v137, 4294901760
    %v2824 = vsub.f32 %v137, %v2823
    %2825 = vmatpush.xpose.msra.mxu0 %v2824
    %v2826 = vand.u32 %v133, 4294901760
    %v2827 = vsub.f32 %v133, %v2826
    %2828 = vmatpush.xpose.msra.mxu0 %v2827
    %v2829 = vand.u32 %v129, 4294901760
    %v2830 = vsub.f32 %v129, %v2829
    %2831 = vmatpush.xpose.msra.mxu0 %v2830
    %v2832 = vand.u32 %v125, 4294901760
    %v2833 = vsub.f32 %v125, %v2832
    %2834 = vmatpush.xpose.msra.mxu0 %v2833
    %v2835 = vand.u32 %v593, 4294901760
    %v2836 = vsub.f32 %v593, %v2835
    %2837 = vmatmul.f32.gmra.mxu0 %v2836
    %v2838 = vpop.f32.mrf.mxu0
    %v2839 = vadd.f32 %v2785, %v2838
    %2840 = vdwg.mxu0
    %v2841 = vand.u32 %v185, 4294901760
    %2842 = vmatpush.xpose.msra.mxu0 %v2841
    %v2843 = vand.u32 %v181, 4294901760
    %2844 = vmatpush.xpose.msra.mxu0 %v2843
    %v2845 = vand.u32 %v177, 4294901760
    %2846 = vmatpush.xpose.msra.mxu0 %v2845
    %v2847 = vand.u32 %v173, 4294901760
    %2848 = vmatpush.xpose.msra.mxu0 %v2847
    %v2849 = vand.u32 %v169, 4294901760
    %2850 = vmatpush.xpose.msra.mxu0 %v2849
    %v2851 = vand.u32 %v165, 4294901760
    %2852 = vmatpush.xpose.msra.mxu0 %v2851
    %v2853 = vand.u32 %v161, 4294901760
    %2854 = vmatpush.xpose.msra.mxu0 %v2853
    %v2855 = vand.u32 %v157, 4294901760
    %2856 = vmatpush.xpose.msra.mxu0 %v2855
    %v2857 = vand.u32 %v153, 4294901760
    %2858 = vmatpush.xpose.msra.mxu0 %v2857
    %v2859 = vand.u32 %v149, 4294901760
    %2860 = vmatpush.xpose.msra.mxu0 %v2859
    %v2861 = vand.u32 %v145, 4294901760
    %2862 = vmatpush.xpose.msra.mxu0 %v2861
    %v2863 = vand.u32 %v141, 4294901760
    %2864 = vmatpush.xpose.msra.mxu0 %v2863
    %v2865 = vand.u32 %v137, 4294901760
    %2866 = vmatpush.xpose.msra.mxu0 %v2865
    %v2867 = vand.u32 %v133, 4294901760
    %2868 = vmatpush.xpose.msra.mxu0 %v2867
    %v2869 = vand.u32 %v129, 4294901760
    %2870 = vmatpush.xpose.msra.mxu0 %v2869
    %v2871 = vand.u32 %v125, 4294901760
    %2872 = vmatpush.xpose.msra.mxu0 %v2871
    %v2873 = vand.u32 %v593, 4294901760
    %v2874 = vsub.f32 %v593, %v2873
    %v2875 = vand.u32 %v2874, 4294901760
    %2876 = vmatmul.f32.gmra.mxu0 %v2875
    %v2877 = vpop.f32.mrf.mxu0
    %v2878 = vadd.f32 %v2839, %v2877
    %2879 = vdwg.mxu0
    %v2880 = vand.u32 %v185, 4294901760
    %v2881 = vsub.f32 %v185, %v2880
    %v2882 = vand.u32 %v2881, 4294901760
    %2883 = vmatpush.xpose.msra.mxu0 %v2882
    %v2884 = vand.u32 %v181, 4294901760
    %v2885 = vsub.f32 %v181, %v2884
    %v2886 = vand.u32 %v2885, 4294901760
    %2887 = vmatpush.xpose.msra.mxu0 %v2886
    %v2888 = vand.u32 %v177, 4294901760
    %v2889 = vsub.f32 %v177, %v2888
    %v2890 = vand.u32 %v2889, 4294901760
    %2891 = vmatpush.xpose.msra.mxu0 %v2890
    %v2892 = vand.u32 %v173, 4294901760
    %v2893 = vsub.f32 %v173, %v2892
    %v2894 = vand.u32 %v2893, 4294901760
    %2895 = vmatpush.xpose.msra.mxu0 %v2894
    %v2896 = vand.u32 %v169, 4294901760
    %v2897 = vsub.f32 %v169, %v2896
    %v2898 = vand.u32 %v2897, 4294901760
    %2899 = vmatpush.xpose.msra.mxu0 %v2898
    %v2900 = vand.u32 %v165, 4294901760
    %v2901 = vsub.f32 %v165, %v2900
    %v2902 = vand.u32 %v2901, 4294901760
    %2903 = vmatpush.xpose.msra.mxu0 %v2902
    %v2904 = vand.u32 %v161, 4294901760
    %v2905 = vsub.f32 %v161, %v2904
    %v2906 = vand.u32 %v2905, 4294901760
    %2907 = vmatpush.xpose.msra.mxu0 %v2906
    %v2908 = vand.u32 %v157, 4294901760
    %v2909 = vsub.f32 %v157, %v2908
    %v2910 = vand.u32 %v2909, 4294901760
    %2911 = vmatpush.xpose.msra.mxu0 %v2910
    %v2912 = vand.u32 %v153, 4294901760
    %v2913 = vsub.f32 %v153, %v2912
    %v2914 = vand.u32 %v2913, 4294901760
    %2915 = vmatpush.xpose.msra.mxu0 %v2914
    %v2916 = vand.u32 %v149, 4294901760
    %v2917 = vsub.f32 %v149, %v2916
    %v2918 = vand.u32 %v2917, 4294901760
    %2919 = vmatpush.xpose.msra.mxu0 %v2918
    %v2920 = vand.u32 %v145, 4294901760
    %v2921 = vsub.f32 %v145, %v2920
    %v2922 = vand.u32 %v2921, 4294901760
    %2923 = vmatpush.xpose.msra.mxu0 %v2922
    %v2924 = vand.u32 %v141, 4294901760
    %v2925 = vsub.f32 %v141, %v2924
    %v2926 = vand.u32 %v2925, 4294901760
    %2927 = vmatpush.xpose.msra.mxu0 %v2926
    %v2928 = vand.u32 %v137, 4294901760
    %v2929 = vsub.f32 %v137, %v2928
    %v2930 = vand.u32 %v2929, 4294901760
    %2931 = vmatpush.xpose.msra.mxu0 %v2930
    %v2932 = vand.u32 %v133, 4294901760
    %v2933 = vsub.f32 %v133, %v2932
    %v2934 = vand.u32 %v2933, 4294901760
    %2935 = vmatpush.xpose.msra.mxu0 %v2934
    %v2936 = vand.u32 %v129, 4294901760
    %v2937 = vsub.f32 %v129, %v2936
    %v2938 = vand.u32 %v2937, 4294901760
    %2939 = vmatpush.xpose.msra.mxu0 %v2938
    %v2940 = vand.u32 %v125, 4294901760
    %v2941 = vsub.f32 %v125, %v2940
    %v2942 = vand.u32 %v2941, 4294901760
    %2943 = vmatpush.xpose.msra.mxu0 %v2942
    %v2944 = vand.u32 %v593, 4294901760
    %2945 = vmatmul.f32.gmra.mxu0 %v2944
    %v2946 = vpop.f32.mrf.mxu0
    %v2947 = vadd.f32 %v2878, %v2946
    %2948 = vdwg.mxu0
    %v2949 = vand.u32 %v185, 4294901760
    %2950 = vmatpush.xpose.msra.mxu0 %v2949
    %v2951 = vand.u32 %v181, 4294901760
    %2952 = vmatpush.xpose.msra.mxu0 %v2951
    %v2953 = vand.u32 %v177, 4294901760
    %2954 = vmatpush.xpose.msra.mxu0 %v2953
    %v2955 = vand.u32 %v173, 4294901760
    %2956 = vmatpush.xpose.msra.mxu0 %v2955
    %v2957 = vand.u32 %v169, 4294901760
    %2958 = vmatpush.xpose.msra.mxu0 %v2957
    %v2959 = vand.u32 %v165, 4294901760
    %2960 = vmatpush.xpose.msra.mxu0 %v2959
    %v2961 = vand.u32 %v161, 4294901760
    %2962 = vmatpush.xpose.msra.mxu0 %v2961
    %v2963 = vand.u32 %v157, 4294901760
    %2964 = vmatpush.xpose.msra.mxu0 %v2963
    %v2965 = vand.u32 %v153, 4294901760
    %2966 = vmatpush.xpose.msra.mxu0 %v2965
    %v2967 = vand.u32 %v149, 4294901760
    %2968 = vmatpush.xpose.msra.mxu0 %v2967
    %v2969 = vand.u32 %v145, 4294901760
    %2970 = vmatpush.xpose.msra.mxu0 %v2969
    %v2971 = vand.u32 %v141, 4294901760
    %2972 = vmatpush.xpose.msra.mxu0 %v2971
    %v2973 = vand.u32 %v137, 4294901760
    %2974 = vmatpush.xpose.msra.mxu0 %v2973
    %v2975 = vand.u32 %v133, 4294901760
    %2976 = vmatpush.xpose.msra.mxu0 %v2975
    %v2977 = vand.u32 %v129, 4294901760
    %2978 = vmatpush.xpose.msra.mxu0 %v2977
    %v2979 = vand.u32 %v125, 4294901760
    %2980 = vmatpush.xpose.msra.mxu0 %v2979
    %v2981 = vand.u32 %v593, 4294901760
    %2982 = vmatmul.f32.gmra.mxu0 %v2981
    %v2983 = vpop.f32.mrf.mxu0
    %v2984 = vadd.f32 %v2947, %v2983
    %2985 = vdwg.mxu0
    %v2986 = vand.u32 %v186, 4294901760
    %2987 = vmatpush.xpose.msra.mxu0 %v2986
    %v2988 = vand.u32 %v182, 4294901760
    %2989 = vmatpush.xpose.msra.mxu0 %v2988
    %v2990 = vand.u32 %v178, 4294901760
    %2991 = vmatpush.xpose.msra.mxu0 %v2990
    %v2992 = vand.u32 %v174, 4294901760
    %2993 = vmatpush.xpose.msra.mxu0 %v2992
    %v2994 = vand.u32 %v170, 4294901760
    %2995 = vmatpush.xpose.msra.mxu0 %v2994
    %v2996 = vand.u32 %v166, 4294901760
    %2997 = vmatpush.xpose.msra.mxu0 %v2996
    %v2998 = vand.u32 %v162, 4294901760
    %2999 = vmatpush.xpose.msra.mxu0 %v2998
    %v3000 = vand.u32 %v158, 4294901760
    %3001 = vmatpush.xpose.msra.mxu0 %v3000
    %v3002 = vand.u32 %v154, 4294901760
    %3003 = vmatpush.xpose.msra.mxu0 %v3002
    %v3004 = vand.u32 %v150, 4294901760
    %3005 = vmatpush.xpose.msra.mxu0 %v3004
    %v3006 = vand.u32 %v146, 4294901760
    %3007 = vmatpush.xpose.msra.mxu0 %v3006
    %v3008 = vand.u32 %v142, 4294901760
    %3009 = vmatpush.xpose.msra.mxu0 %v3008
    %v3010 = vand.u32 %v138, 4294901760
    %3011 = vmatpush.xpose.msra.mxu0 %v3010
    %v3012 = vand.u32 %v134, 4294901760
    %3013 = vmatpush.xpose.msra.mxu0 %v3012
    %v3014 = vand.u32 %v130, 4294901760
    %3015 = vmatpush.xpose.msra.mxu0 %v3014
    %v3016 = vand.u32 %v126, 4294901760
    %3017 = vmatpush.xpose.msra.mxu0 %v3016
    %v3018 = vand.u32 %v594, 4294901760
    %v3019 = vsub.f32 %v594, %v3018
    %v3020 = vand.u32 %v3019, 4294901760
    %v3021 = vsub.f32 %v3019, %v3020
    %v3022 = vand.u32 %v3021, 4294901760
    %3023 = vmatmul.f32.gmra.mxu0 %v3022
    %v3024 = vpop.f32.mrf.mxu0
    %v3025 = vadd.f32 %v2984, %v3024
    %3026 = vdwg.mxu0
    %v3027 = vand.u32 %v186, 4294901760
    %v3028 = vsub.f32 %v186, %v3027
    %v3029 = vand.u32 %v3028, 4294901760
    %v3030 = vsub.f32 %v3028, %v3029
    %v3031 = vand.u32 %v3030, 4294901760
    %3032 = vmatpush.xpose.msra.mxu0 %v3031
    %v3033 = vand.u32 %v182, 4294901760
    %v3034 = vsub.f32 %v182, %v3033
    %v3035 = vand.u32 %v3034, 4294901760
    %v3036 = vsub.f32 %v3034, %v3035
    %v3037 = vand.u32 %v3036, 4294901760
    %3038 = vmatpush.xpose.msra.mxu0 %v3037
    %v3039 = vand.u32 %v178, 4294901760
    %v3040 = vsub.f32 %v178, %v3039
    %v3041 = vand.u32 %v3040, 4294901760
    %v3042 = vsub.f32 %v3040, %v3041
    %v3043 = vand.u32 %v3042, 4294901760
    %3044 = vmatpush.xpose.msra.mxu0 %v3043
    %v3045 = vand.u32 %v174, 4294901760
    %v3046 = vsub.f32 %v174, %v3045
    %v3047 = vand.u32 %v3046, 4294901760
    %v3048 = vsub.f32 %v3046, %v3047
    %v3049 = vand.u32 %v3048, 4294901760
    %3050 = vmatpush.xpose.msra.mxu0 %v3049
    %v3051 = vand.u32 %v170, 4294901760
    %v3052 = vsub.f32 %v170, %v3051
    %v3053 = vand.u32 %v3052, 4294901760
    %v3054 = vsub.f32 %v3052, %v3053
    %v3055 = vand.u32 %v3054, 4294901760
    %3056 = vmatpush.xpose.msra.mxu0 %v3055
    %v3057 = vand.u32 %v166, 4294901760
    %v3058 = vsub.f32 %v166, %v3057
    %v3059 = vand.u32 %v3058, 4294901760
    %v3060 = vsub.f32 %v3058, %v3059
    %v3061 = vand.u32 %v3060, 4294901760
    %3062 = vmatpush.xpose.msra.mxu0 %v3061
    %v3063 = vand.u32 %v162, 4294901760
    %v3064 = vsub.f32 %v162, %v3063
    %v3065 = vand.u32 %v3064, 4294901760
    %v3066 = vsub.f32 %v3064, %v3065
    %v3067 = vand.u32 %v3066, 4294901760
    %3068 = vmatpush.xpose.msra.mxu0 %v3067
    %v3069 = vand.u32 %v158, 4294901760
    %v3070 = vsub.f32 %v158, %v3069
    %v3071 = vand.u32 %v3070, 4294901760
    %v3072 = vsub.f32 %v3070, %v3071
    %v3073 = vand.u32 %v3072, 4294901760
    %3074 = vmatpush.xpose.msra.mxu0 %v3073
    %v3075 = vand.u32 %v154, 4294901760
    %v3076 = vsub.f32 %v154, %v3075
    %v3077 = vand.u32 %v3076, 4294901760
    %v3078 = vsub.f32 %v3076, %v3077
    %v3079 = vand.u32 %v3078, 4294901760
    %3080 = vmatpush.xpose.msra.mxu0 %v3079
    %v3081 = vand.u32 %v150, 4294901760
    %v3082 = vsub.f32 %v150, %v3081
    %v3083 = vand.u32 %v3082, 4294901760
    %v3084 = vsub.f32 %v3082, %v3083
    %v3085 = vand.u32 %v3084, 4294901760
    %3086 = vmatpush.xpose.msra.mxu0 %v3085
    %v3087 = vand.u32 %v146, 4294901760
    %v3088 = vsub.f32 %v146, %v3087
    %v3089 = vand.u32 %v3088, 4294901760
    %v3090 = vsub.f32 %v3088, %v3089
    %v3091 = vand.u32 %v3090, 4294901760
    %3092 = vmatpush.xpose.msra.mxu0 %v3091
    %v3093 = vand.u32 %v142, 4294901760
    %v3094 = vsub.f32 %v142, %v3093
    %v3095 = vand.u32 %v3094, 4294901760
    %v3096 = vsub.f32 %v3094, %v3095
    %v3097 = vand.u32 %v3096, 4294901760
    %3098 = vmatpush.xpose.msra.mxu0 %v3097
    %v3099 = vand.u32 %v138, 4294901760
    %v3100 = vsub.f32 %v138, %v3099
    %v3101 = vand.u32 %v3100, 4294901760
    %v3102 = vsub.f32 %v3100, %v3101
    %v3103 = vand.u32 %v3102, 4294901760
    %3104 = vmatpush.xpose.msra.mxu0 %v3103
    %v3105 = vand.u32 %v134, 4294901760
    %v3106 = vsub.f32 %v134, %v3105
    %v3107 = vand.u32 %v3106, 4294901760
    %v3108 = vsub.f32 %v3106, %v3107
    %v3109 = vand.u32 %v3108, 4294901760
    %3110 = vmatpush.xpose.msra.mxu0 %v3109
    %v3111 = vand.u32 %v130, 4294901760
    %v3112 = vsub.f32 %v130, %v3111
    %v3113 = vand.u32 %v3112, 4294901760
    %v3114 = vsub.f32 %v3112, %v3113
    %v3115 = vand.u32 %v3114, 4294901760
    %3116 = vmatpush.xpose.msra.mxu0 %v3115
    %v3117 = vand.u32 %v126, 4294901760
    %v3118 = vsub.f32 %v126, %v3117
    %v3119 = vand.u32 %v3118, 4294901760
    %v3120 = vsub.f32 %v3118, %v3119
    %v3121 = vand.u32 %v3120, 4294901760
    %3122 = vmatpush.xpose.msra.mxu0 %v3121
    %v3123 = vand.u32 %v594, 4294901760
    %3124 = vmatmul.f32.gmra.mxu0 %v3123
    %v3125 = vpop.f32.mrf.mxu0
    %v3126 = vadd.f32 %v3025, %v3125
    %3127 = vdwg.mxu0
    %v3128 = vand.u32 %v186, 4294901760
    %v3129 = vsub.f32 %v186, %v3128
    %3130 = vmatpush.xpose.msra.mxu0 %v3129
    %v3131 = vand.u32 %v182, 4294901760
    %v3132 = vsub.f32 %v182, %v3131
    %3133 = vmatpush.xpose.msra.mxu0 %v3132
    %v3134 = vand.u32 %v178, 4294901760
    %v3135 = vsub.f32 %v178, %v3134
    %3136 = vmatpush.xpose.msra.mxu0 %v3135
    %v3137 = vand.u32 %v174, 4294901760
    %v3138 = vsub.f32 %v174, %v3137
    %3139 = vmatpush.xpose.msra.mxu0 %v3138
    %v3140 = vand.u32 %v170, 4294901760
    %v3141 = vsub.f32 %v170, %v3140
    %3142 = vmatpush.xpose.msra.mxu0 %v3141
    %v3143 = vand.u32 %v166, 4294901760
    %v3144 = vsub.f32 %v166, %v3143
    %3145 = vmatpush.xpose.msra.mxu0 %v3144
    %v3146 = vand.u32 %v162, 4294901760
    %v3147 = vsub.f32 %v162, %v3146
    %3148 = vmatpush.xpose.msra.mxu0 %v3147
    %v3149 = vand.u32 %v158, 4294901760
    %v3150 = vsub.f32 %v158, %v3149
    %3151 = vmatpush.xpose.msra.mxu0 %v3150
    %v3152 = vand.u32 %v154, 4294901760
    %v3153 = vsub.f32 %v154, %v3152
    %3154 = vmatpush.xpose.msra.mxu0 %v3153
    %v3155 = vand.u32 %v150, 4294901760
    %v3156 = vsub.f32 %v150, %v3155
    %3157 = vmatpush.xpose.msra.mxu0 %v3156
    %v3158 = vand.u32 %v146, 4294901760
    %v3159 = vsub.f32 %v146, %v3158
    %3160 = vmatpush.xpose.msra.mxu0 %v3159
    %v3161 = vand.u32 %v142, 4294901760
    %v3162 = vsub.f32 %v142, %v3161
    %3163 = vmatpush.xpose.msra.mxu0 %v3162
    %v3164 = vand.u32 %v138, 4294901760
    %v3165 = vsub.f32 %v138, %v3164
    %3166 = vmatpush.xpose.msra.mxu0 %v3165
    %v3167 = vand.u32 %v134, 4294901760
    %v3168 = vsub.f32 %v134, %v3167
    %3169 = vmatpush.xpose.msra.mxu0 %v3168
    %v3170 = vand.u32 %v130, 4294901760
    %v3171 = vsub.f32 %v130, %v3170
    %3172 = vmatpush.xpose.msra.mxu0 %v3171
    %v3173 = vand.u32 %v126, 4294901760
    %v3174 = vsub.f32 %v126, %v3173
    %3175 = vmatpush.xpose.msra.mxu0 %v3174
    %v3176 = vand.u32 %v594, 4294901760
    %v3177 = vsub.f32 %v594, %v3176
    %3178 = vmatmul.f32.gmra.mxu0 %v3177
    %v3179 = vpop.f32.mrf.mxu0
    %v3180 = vadd.f32 %v3126, %v3179
    %3181 = vdwg.mxu0
    %v3182 = vand.u32 %v186, 4294901760
    %3183 = vmatpush.xpose.msra.mxu0 %v3182
    %v3184 = vand.u32 %v182, 4294901760
    %3185 = vmatpush.xpose.msra.mxu0 %v3184
    %v3186 = vand.u32 %v178, 4294901760
    %3187 = vmatpush.xpose.msra.mxu0 %v3186
    %v3188 = vand.u32 %v174, 4294901760
    %3189 = vmatpush.xpose.msra.mxu0 %v3188
    %v3190 = vand.u32 %v170, 4294901760
    %3191 = vmatpush.xpose.msra.mxu0 %v3190
    %v3192 = vand.u32 %v166, 4294901760
    %3193 = vmatpush.xpose.msra.mxu0 %v3192
    %v3194 = vand.u32 %v162, 4294901760
    %3195 = vmatpush.xpose.msra.mxu0 %v3194
    %v3196 = vand.u32 %v158, 4294901760
    %3197 = vmatpush.xpose.msra.mxu0 %v3196
    %v3198 = vand.u32 %v154, 4294901760
    %3199 = vmatpush.xpose.msra.mxu0 %v3198
    %v3200 = vand.u32 %v150, 4294901760
    %3201 = vmatpush.xpose.msra.mxu0 %v3200
    %v3202 = vand.u32 %v146, 4294901760
    %3203 = vmatpush.xpose.msra.mxu0 %v3202
    %v3204 = vand.u32 %v142, 4294901760
    %3205 = vmatpush.xpose.msra.mxu0 %v3204
    %v3206 = vand.u32 %v138, 4294901760
    %3207 = vmatpush.xpose.msra.mxu0 %v3206
    %v3208 = vand.u32 %v134, 4294901760
    %3209 = vmatpush.xpose.msra.mxu0 %v3208
    %v3210 = vand.u32 %v130, 4294901760
    %3211 = vmatpush.xpose.msra.mxu0 %v3210
    %v3212 = vand.u32 %v126, 4294901760
    %3213 = vmatpush.xpose.msra.mxu0 %v3212
    %v3214 = vand.u32 %v594, 4294901760
    %v3215 = vsub.f32 %v594, %v3214
    %v3216 = vand.u32 %v3215, 4294901760
    %3217 = vmatmul.f32.gmra.mxu0 %v3216
    %v3218 = vpop.f32.mrf.mxu0
    %v3219 = vadd.f32 %v3180, %v3218
    %3220 = vdwg.mxu0
    %v3221 = vand.u32 %v186, 4294901760
    %v3222 = vsub.f32 %v186, %v3221
    %v3223 = vand.u32 %v3222, 4294901760
    %3224 = vmatpush.xpose.msra.mxu0 %v3223
    %v3225 = vand.u32 %v182, 4294901760
    %v3226 = vsub.f32 %v182, %v3225
    %v3227 = vand.u32 %v3226, 4294901760
    %3228 = vmatpush.xpose.msra.mxu0 %v3227
    %v3229 = vand.u32 %v178, 4294901760
    %v3230 = vsub.f32 %v178, %v3229
    %v3231 = vand.u32 %v3230, 4294901760
    %3232 = vmatpush.xpose.msra.mxu0 %v3231
    %v3233 = vand.u32 %v174, 4294901760
    %v3234 = vsub.f32 %v174, %v3233
    %v3235 = vand.u32 %v3234, 4294901760
    %3236 = vmatpush.xpose.msra.mxu0 %v3235
    %v3237 = vand.u32 %v170, 4294901760
    %v3238 = vsub.f32 %v170, %v3237
    %v3239 = vand.u32 %v3238, 4294901760
    %3240 = vmatpush.xpose.msra.mxu0 %v3239
    %v3241 = vand.u32 %v166, 4294901760
    %v3242 = vsub.f32 %v166, %v3241
    %v3243 = vand.u32 %v3242, 4294901760
    %3244 = vmatpush.xpose.msra.mxu0 %v3243
    %v3245 = vand.u32 %v162, 4294901760
    %v3246 = vsub.f32 %v162, %v3245
    %v3247 = vand.u32 %v3246, 4294901760
    %3248 = vmatpush.xpose.msra.mxu0 %v3247
    %v3249 = vand.u32 %v158, 4294901760
    %v3250 = vsub.f32 %v158, %v3249
    %v3251 = vand.u32 %v3250, 4294901760
    %3252 = vmatpush.xpose.msra.mxu0 %v3251
    %v3253 = vand.u32 %v154, 4294901760
    %v3254 = vsub.f32 %v154, %v3253
    %v3255 = vand.u32 %v3254, 4294901760
    %3256 = vmatpush.xpose.msra.mxu0 %v3255
    %v3257 = vand.u32 %v150, 4294901760
    %v3258 = vsub.f32 %v150, %v3257
    %v3259 = vand.u32 %v3258, 4294901760
    %3260 = vmatpush.xpose.msra.mxu0 %v3259
    %v3261 = vand.u32 %v146, 4294901760
    %v3262 = vsub.f32 %v146, %v3261
    %v3263 = vand.u32 %v3262, 4294901760
    %3264 = vmatpush.xpose.msra.mxu0 %v3263
    %v3265 = vand.u32 %v142, 4294901760
    %v3266 = vsub.f32 %v142, %v3265
    %v3267 = vand.u32 %v3266, 4294901760
    %3268 = vmatpush.xpose.msra.mxu0 %v3267
    %v3269 = vand.u32 %v138, 4294901760
    %v3270 = vsub.f32 %v138, %v3269
    %v3271 = vand.u32 %v3270, 4294901760
    %3272 = vmatpush.xpose.msra.mxu0 %v3271
    %v3273 = vand.u32 %v134, 4294901760
    %v3274 = vsub.f32 %v134, %v3273
    %v3275 = vand.u32 %v3274, 4294901760
    %3276 = vmatpush.xpose.msra.mxu0 %v3275
    %v3277 = vand.u32 %v130, 4294901760
    %v3278 = vsub.f32 %v130, %v3277
    %v3279 = vand.u32 %v3278, 4294901760
    %3280 = vmatpush.xpose.msra.mxu0 %v3279
    %v3281 = vand.u32 %v126, 4294901760
    %v3282 = vsub.f32 %v126, %v3281
    %v3283 = vand.u32 %v3282, 4294901760
    %3284 = vmatpush.xpose.msra.mxu0 %v3283
    %v3285 = vand.u32 %v594, 4294901760
    %3286 = vmatmul.f32.gmra.mxu0 %v3285
    %v3287 = vpop.f32.mrf.mxu0
    %v3288 = vadd.f32 %v3219, %v3287
    %3289 = vdwg.mxu0
    %v3290 = vand.u32 %v186, 4294901760
    %3291 = vmatpush.xpose.msra.mxu0 %v3290
    %v3292 = vand.u32 %v182, 4294901760
    %3293 = vmatpush.xpose.msra.mxu0 %v3292
    %v3294 = vand.u32 %v178, 4294901760
    %3295 = vmatpush.xpose.msra.mxu0 %v3294
    %v3296 = vand.u32 %v174, 4294901760
    %3297 = vmatpush.xpose.msra.mxu0 %v3296
    %v3298 = vand.u32 %v170, 4294901760
    %3299 = vmatpush.xpose.msra.mxu0 %v3298
    %v3300 = vand.u32 %v166, 4294901760
    %3301 = vmatpush.xpose.msra.mxu0 %v3300
    %v3302 = vand.u32 %v162, 4294901760
    %3303 = vmatpush.xpose.msra.mxu0 %v3302
    %v3304 = vand.u32 %v158, 4294901760
    %3305 = vmatpush.xpose.msra.mxu0 %v3304
    %v3306 = vand.u32 %v154, 4294901760
    %3307 = vmatpush.xpose.msra.mxu0 %v3306
    %v3308 = vand.u32 %v150, 4294901760
    %3309 = vmatpush.xpose.msra.mxu0 %v3308
    %v3310 = vand.u32 %v146, 4294901760
    %3311 = vmatpush.xpose.msra.mxu0 %v3310
    %v3312 = vand.u32 %v142, 4294901760
    %3313 = vmatpush.xpose.msra.mxu0 %v3312
    %v3314 = vand.u32 %v138, 4294901760
    %3315 = vmatpush.xpose.msra.mxu0 %v3314
    %v3316 = vand.u32 %v134, 4294901760
    %3317 = vmatpush.xpose.msra.mxu0 %v3316
    %v3318 = vand.u32 %v130, 4294901760
    %3319 = vmatpush.xpose.msra.mxu0 %v3318
    %v3320 = vand.u32 %v126, 4294901760
    %3321 = vmatpush.xpose.msra.mxu0 %v3320
    %v3322 = vand.u32 %v594, 4294901760
    %3323 = vmatmul.f32.gmra.mxu0 %v3322
    %v3324 = vpop.f32.mrf.mxu0
    %v3325 = vadd.f32 %v3288, %v3324
    %3326 = vdwg.mxu0
    %v3327 = vand.u32 %v247, 4294901760
    %3328 = vmatpush.xpose.msra.mxu0 %v3327
    %v3329 = vand.u32 %v243, 4294901760
    %3330 = vmatpush.xpose.msra.mxu0 %v3329
    %v3331 = vand.u32 %v239, 4294901760
    %3332 = vmatpush.xpose.msra.mxu0 %v3331
    %v3333 = vand.u32 %v235, 4294901760
    %3334 = vmatpush.xpose.msra.mxu0 %v3333
    %v3335 = vand.u32 %v231, 4294901760
    %3336 = vmatpush.xpose.msra.mxu0 %v3335
    %v3337 = vand.u32 %v227, 4294901760
    %3338 = vmatpush.xpose.msra.mxu0 %v3337
    %v3339 = vand.u32 %v223, 4294901760
    %3340 = vmatpush.xpose.msra.mxu0 %v3339
    %v3341 = vand.u32 %v219, 4294901760
    %3342 = vmatpush.xpose.msra.mxu0 %v3341
    %v3343 = vand.u32 %v215, 4294901760
    %3344 = vmatpush.xpose.msra.mxu0 %v3343
    %v3345 = vand.u32 %v211, 4294901760
    %3346 = vmatpush.xpose.msra.mxu0 %v3345
    %v3347 = vand.u32 %v207, 4294901760
    %3348 = vmatpush.xpose.msra.mxu0 %v3347
    %v3349 = vand.u32 %v203, 4294901760
    %3350 = vmatpush.xpose.msra.mxu0 %v3349
    %v3351 = vand.u32 %v199, 4294901760
    %3352 = vmatpush.xpose.msra.mxu0 %v3351
    %v3353 = vand.u32 %v195, 4294901760
    %3354 = vmatpush.xpose.msra.mxu0 %v3353
    %v3355 = vand.u32 %v191, 4294901760
    %3356 = vmatpush.xpose.msra.mxu0 %v3355
    %v3357 = vand.u32 %v187, 4294901760
    %3358 = vmatpush.xpose.msra.mxu0 %v3357
    %v3359 = vand.u32 %v591, 4294901760
    %v3360 = vsub.f32 %v591, %v3359
    %v3361 = vand.u32 %v3360, 4294901760
    %v3362 = vsub.f32 %v3360, %v3361
    %v3363 = vand.u32 %v3362, 4294901760
    %3364 = vmatmul.f32.gmra.mxu0 %v3363
    %v3365 = vpop.f32.mrf.mxu0
    %v3366 = vadd.f32 %v575, %v3365
    %3367 = vdwg.mxu0
    %v3368 = vand.u32 %v247, 4294901760
    %v3369 = vsub.f32 %v247, %v3368
    %v3370 = vand.u32 %v3369, 4294901760
    %v3371 = vsub.f32 %v3369, %v3370
    %v3372 = vand.u32 %v3371, 4294901760
    %3373 = vmatpush.xpose.msra.mxu0 %v3372
    %v3374 = vand.u32 %v243, 4294901760
    %v3375 = vsub.f32 %v243, %v3374
    %v3376 = vand.u32 %v3375, 4294901760
    %v3377 = vsub.f32 %v3375, %v3376
    %v3378 = vand.u32 %v3377, 4294901760
    %3379 = vmatpush.xpose.msra.mxu0 %v3378
    %v3380 = vand.u32 %v239, 4294901760
    %v3381 = vsub.f32 %v239, %v3380
    %v3382 = vand.u32 %v3381, 4294901760
    %v3383 = vsub.f32 %v3381, %v3382
    %v3384 = vand.u32 %v3383, 4294901760
    %3385 = vmatpush.xpose.msra.mxu0 %v3384
    %v3386 = vand.u32 %v235, 4294901760
    %v3387 = vsub.f32 %v235, %v3386
    %v3388 = vand.u32 %v3387, 4294901760
    %v3389 = vsub.f32 %v3387, %v3388
    %v3390 = vand.u32 %v3389, 4294901760
    %3391 = vmatpush.xpose.msra.mxu0 %v3390
    %v3392 = vand.u32 %v231, 4294901760
    %v3393 = vsub.f32 %v231, %v3392
    %v3394 = vand.u32 %v3393, 4294901760
    %v3395 = vsub.f32 %v3393, %v3394
    %v3396 = vand.u32 %v3395, 4294901760
    %3397 = vmatpush.xpose.msra.mxu0 %v3396
    %v3398 = vand.u32 %v227, 4294901760
    %v3399 = vsub.f32 %v227, %v3398
    %v3400 = vand.u32 %v3399, 4294901760
    %v3401 = vsub.f32 %v3399, %v3400
    %v3402 = vand.u32 %v3401, 4294901760
    %3403 = vmatpush.xpose.msra.mxu0 %v3402
    %v3404 = vand.u32 %v223, 4294901760
    %v3405 = vsub.f32 %v223, %v3404
    %v3406 = vand.u32 %v3405, 4294901760
    %v3407 = vsub.f32 %v3405, %v3406
    %v3408 = vand.u32 %v3407, 4294901760
    %3409 = vmatpush.xpose.msra.mxu0 %v3408
    %v3410 = vand.u32 %v219, 4294901760
    %v3411 = vsub.f32 %v219, %v3410
    %v3412 = vand.u32 %v3411, 4294901760
    %v3413 = vsub.f32 %v3411, %v3412
    %v3414 = vand.u32 %v3413, 4294901760
    %3415 = vmatpush.xpose.msra.mxu0 %v3414
    %v3416 = vand.u32 %v215, 4294901760
    %v3417 = vsub.f32 %v215, %v3416
    %v3418 = vand.u32 %v3417, 4294901760
    %v3419 = vsub.f32 %v3417, %v3418
    %v3420 = vand.u32 %v3419, 4294901760
    %3421 = vmatpush.xpose.msra.mxu0 %v3420
    %v3422 = vand.u32 %v211, 4294901760
    %v3423 = vsub.f32 %v211, %v3422
    %v3424 = vand.u32 %v3423, 4294901760
    %v3425 = vsub.f32 %v3423, %v3424
    %v3426 = vand.u32 %v3425, 4294901760
    %3427 = vmatpush.xpose.msra.mxu0 %v3426
    %v3428 = vand.u32 %v207, 4294901760
    %v3429 = vsub.f32 %v207, %v3428
    %v3430 = vand.u32 %v3429, 4294901760
    %v3431 = vsub.f32 %v3429, %v3430
    %v3432 = vand.u32 %v3431, 4294901760
    %3433 = vmatpush.xpose.msra.mxu0 %v3432
    %v3434 = vand.u32 %v203, 4294901760
    %v3435 = vsub.f32 %v203, %v3434
    %v3436 = vand.u32 %v3435, 4294901760
    %v3437 = vsub.f32 %v3435, %v3436
    %v3438 = vand.u32 %v3437, 4294901760
    %3439 = vmatpush.xpose.msra.mxu0 %v3438
    %v3440 = vand.u32 %v199, 4294901760
    %v3441 = vsub.f32 %v199, %v3440
    %v3442 = vand.u32 %v3441, 4294901760
    %v3443 = vsub.f32 %v3441, %v3442
    %v3444 = vand.u32 %v3443, 4294901760
    %3445 = vmatpush.xpose.msra.mxu0 %v3444
    %v3446 = vand.u32 %v195, 4294901760
    %v3447 = vsub.f32 %v195, %v3446
    %v3448 = vand.u32 %v3447, 4294901760
    %v3449 = vsub.f32 %v3447, %v3448
    %v3450 = vand.u32 %v3449, 4294901760
    %3451 = vmatpush.xpose.msra.mxu0 %v3450
    %v3452 = vand.u32 %v191, 4294901760
    %v3453 = vsub.f32 %v191, %v3452
    %v3454 = vand.u32 %v3453, 4294901760
    %v3455 = vsub.f32 %v3453, %v3454
    %v3456 = vand.u32 %v3455, 4294901760
    %3457 = vmatpush.xpose.msra.mxu0 %v3456
    %v3458 = vand.u32 %v187, 4294901760
    %v3459 = vsub.f32 %v187, %v3458
    %v3460 = vand.u32 %v3459, 4294901760
    %v3461 = vsub.f32 %v3459, %v3460
    %v3462 = vand.u32 %v3461, 4294901760
    %3463 = vmatpush.xpose.msra.mxu0 %v3462
    %v3464 = vand.u32 %v591, 4294901760
    %3465 = vmatmul.f32.gmra.mxu0 %v3464
    %v3466 = vpop.f32.mrf.mxu0
    %v3467 = vadd.f32 %v3366, %v3466
    %3468 = vdwg.mxu0
    %v3469 = vand.u32 %v247, 4294901760
    %v3470 = vsub.f32 %v247, %v3469
    %3471 = vmatpush.xpose.msra.mxu0 %v3470
    %v3472 = vand.u32 %v243, 4294901760
    %v3473 = vsub.f32 %v243, %v3472
    %3474 = vmatpush.xpose.msra.mxu0 %v3473
    %v3475 = vand.u32 %v239, 4294901760
    %v3476 = vsub.f32 %v239, %v3475
    %3477 = vmatpush.xpose.msra.mxu0 %v3476
    %v3478 = vand.u32 %v235, 4294901760
    %v3479 = vsub.f32 %v235, %v3478
    %3480 = vmatpush.xpose.msra.mxu0 %v3479
    %v3481 = vand.u32 %v231, 4294901760
    %v3482 = vsub.f32 %v231, %v3481
    %3483 = vmatpush.xpose.msra.mxu0 %v3482
    %v3484 = vand.u32 %v227, 4294901760
    %v3485 = vsub.f32 %v227, %v3484
    %3486 = vmatpush.xpose.msra.mxu0 %v3485
    %v3487 = vand.u32 %v223, 4294901760
    %v3488 = vsub.f32 %v223, %v3487
    %3489 = vmatpush.xpose.msra.mxu0 %v3488
    %v3490 = vand.u32 %v219, 4294901760
    %v3491 = vsub.f32 %v219, %v3490
    %3492 = vmatpush.xpose.msra.mxu0 %v3491
    %v3493 = vand.u32 %v215, 4294901760
    %v3494 = vsub.f32 %v215, %v3493
    %3495 = vmatpush.xpose.msra.mxu0 %v3494
    %v3496 = vand.u32 %v211, 4294901760
    %v3497 = vsub.f32 %v211, %v3496
    %3498 = vmatpush.xpose.msra.mxu0 %v3497
    %v3499 = vand.u32 %v207, 4294901760
    %v3500 = vsub.f32 %v207, %v3499
    %3501 = vmatpush.xpose.msra.mxu0 %v3500
    %v3502 = vand.u32 %v203, 4294901760
    %v3503 = vsub.f32 %v203, %v3502
    %3504 = vmatpush.xpose.msra.mxu0 %v3503
    %v3505 = vand.u32 %v199, 4294901760
    %v3506 = vsub.f32 %v199, %v3505
    %3507 = vmatpush.xpose.msra.mxu0 %v3506
    %v3508 = vand.u32 %v195, 4294901760
    %v3509 = vsub.f32 %v195, %v3508
    %3510 = vmatpush.xpose.msra.mxu0 %v3509
    %v3511 = vand.u32 %v191, 4294901760
    %v3512 = vsub.f32 %v191, %v3511
    %3513 = vmatpush.xpose.msra.mxu0 %v3512
    %v3514 = vand.u32 %v187, 4294901760
    %v3515 = vsub.f32 %v187, %v3514
    %3516 = vmatpush.xpose.msra.mxu0 %v3515
    %v3517 = vand.u32 %v591, 4294901760
    %v3518 = vsub.f32 %v591, %v3517
    %3519 = vmatmul.f32.gmra.mxu0 %v3518
    %v3520 = vpop.f32.mrf.mxu0
    %v3521 = vadd.f32 %v3467, %v3520
    %3522 = vdwg.mxu0
    %v3523 = vand.u32 %v247, 4294901760
    %3524 = vmatpush.xpose.msra.mxu0 %v3523
    %v3525 = vand.u32 %v243, 4294901760
    %3526 = vmatpush.xpose.msra.mxu0 %v3525
    %v3527 = vand.u32 %v239, 4294901760
    %3528 = vmatpush.xpose.msra.mxu0 %v3527
    %v3529 = vand.u32 %v235, 4294901760
    %3530 = vmatpush.xpose.msra.mxu0 %v3529
    %v3531 = vand.u32 %v231, 4294901760
    %3532 = vmatpush.xpose.msra.mxu0 %v3531
    %v3533 = vand.u32 %v227, 4294901760
    %3534 = vmatpush.xpose.msra.mxu0 %v3533
    %v3535 = vand.u32 %v223, 4294901760
    %3536 = vmatpush.xpose.msra.mxu0 %v3535
    %v3537 = vand.u32 %v219, 4294901760
    %3538 = vmatpush.xpose.msra.mxu0 %v3537
    %v3539 = vand.u32 %v215, 4294901760
    %3540 = vmatpush.xpose.msra.mxu0 %v3539
    %v3541 = vand.u32 %v211, 4294901760
    %3542 = vmatpush.xpose.msra.mxu0 %v3541
    %v3543 = vand.u32 %v207, 4294901760
    %3544 = vmatpush.xpose.msra.mxu0 %v3543
    %v3545 = vand.u32 %v203, 4294901760
    %3546 = vmatpush.xpose.msra.mxu0 %v3545
    %v3547 = vand.u32 %v199, 4294901760
    %3548 = vmatpush.xpose.msra.mxu0 %v3547
    %v3549 = vand.u32 %v195, 4294901760
    %3550 = vmatpush.xpose.msra.mxu0 %v3549
    %v3551 = vand.u32 %v191, 4294901760
    %3552 = vmatpush.xpose.msra.mxu0 %v3551
    %v3553 = vand.u32 %v187, 4294901760
    %3554 = vmatpush.xpose.msra.mxu0 %v3553
    %v3555 = vand.u32 %v591, 4294901760
    %v3556 = vsub.f32 %v591, %v3555
    %v3557 = vand.u32 %v3556, 4294901760
    %3558 = vmatmul.f32.gmra.mxu0 %v3557
    %v3559 = vpop.f32.mrf.mxu0
    %v3560 = vadd.f32 %v3521, %v3559
    %3561 = vdwg.mxu0
    %v3562 = vand.u32 %v247, 4294901760
    %v3563 = vsub.f32 %v247, %v3562
    %v3564 = vand.u32 %v3563, 4294901760
    %3565 = vmatpush.xpose.msra.mxu0 %v3564
    %v3566 = vand.u32 %v243, 4294901760
    %v3567 = vsub.f32 %v243, %v3566
    %v3568 = vand.u32 %v3567, 4294901760
    %3569 = vmatpush.xpose.msra.mxu0 %v3568
    %v3570 = vand.u32 %v239, 4294901760
    %v3571 = vsub.f32 %v239, %v3570
    %v3572 = vand.u32 %v3571, 4294901760
    %3573 = vmatpush.xpose.msra.mxu0 %v3572
    %v3574 = vand.u32 %v235, 4294901760
    %v3575 = vsub.f32 %v235, %v3574
    %v3576 = vand.u32 %v3575, 4294901760
    %3577 = vmatpush.xpose.msra.mxu0 %v3576
    %v3578 = vand.u32 %v231, 4294901760
    %v3579 = vsub.f32 %v231, %v3578
    %v3580 = vand.u32 %v3579, 4294901760
    %3581 = vmatpush.xpose.msra.mxu0 %v3580
    %v3582 = vand.u32 %v227, 4294901760
    %v3583 = vsub.f32 %v227, %v3582
    %v3584 = vand.u32 %v3583, 4294901760
    %3585 = vmatpush.xpose.msra.mxu0 %v3584
    %v3586 = vand.u32 %v223, 4294901760
    %v3587 = vsub.f32 %v223, %v3586
    %v3588 = vand.u32 %v3587, 4294901760
    %3589 = vmatpush.xpose.msra.mxu0 %v3588
    %v3590 = vand.u32 %v219, 4294901760
    %v3591 = vsub.f32 %v219, %v3590
    %v3592 = vand.u32 %v3591, 4294901760
    %3593 = vmatpush.xpose.msra.mxu0 %v3592
    %v3594 = vand.u32 %v215, 4294901760
    %v3595 = vsub.f32 %v215, %v3594
    %v3596 = vand.u32 %v3595, 4294901760
    %3597 = vmatpush.xpose.msra.mxu0 %v3596
    %v3598 = vand.u32 %v211, 4294901760
    %v3599 = vsub.f32 %v211, %v3598
    %v3600 = vand.u32 %v3599, 4294901760
    %3601 = vmatpush.xpose.msra.mxu0 %v3600
    %v3602 = vand.u32 %v207, 4294901760
    %v3603 = vsub.f32 %v207, %v3602
    %v3604 = vand.u32 %v3603, 4294901760
    %3605 = vmatpush.xpose.msra.mxu0 %v3604
    %v3606 = vand.u32 %v203, 4294901760
    %v3607 = vsub.f32 %v203, %v3606
    %v3608 = vand.u32 %v3607, 4294901760
    %3609 = vmatpush.xpose.msra.mxu0 %v3608
    %v3610 = vand.u32 %v199, 4294901760
    %v3611 = vsub.f32 %v199, %v3610
    %v3612 = vand.u32 %v3611, 4294901760
    %3613 = vmatpush.xpose.msra.mxu0 %v3612
    %v3614 = vand.u32 %v195, 4294901760
    %v3615 = vsub.f32 %v195, %v3614
    %v3616 = vand.u32 %v3615, 4294901760
    %3617 = vmatpush.xpose.msra.mxu0 %v3616
    %v3618 = vand.u32 %v191, 4294901760
    %v3619 = vsub.f32 %v191, %v3618
    %v3620 = vand.u32 %v3619, 4294901760
    %3621 = vmatpush.xpose.msra.mxu0 %v3620
    %v3622 = vand.u32 %v187, 4294901760
    %v3623 = vsub.f32 %v187, %v3622
    %v3624 = vand.u32 %v3623, 4294901760
    %3625 = vmatpush.xpose.msra.mxu0 %v3624
    %v3626 = vand.u32 %v591, 4294901760
    %3627 = vmatmul.f32.gmra.mxu0 %v3626
    %v3628 = vpop.f32.mrf.mxu0
    %v3629 = vadd.f32 %v3560, %v3628
    %3630 = vdwg.mxu0
    %v3631 = vand.u32 %v247, 4294901760
    %3632 = vmatpush.xpose.msra.mxu0 %v3631
    %v3633 = vand.u32 %v243, 4294901760
    %3634 = vmatpush.xpose.msra.mxu0 %v3633
    %v3635 = vand.u32 %v239, 4294901760
    %3636 = vmatpush.xpose.msra.mxu0 %v3635
    %v3637 = vand.u32 %v235, 4294901760
    %3638 = vmatpush.xpose.msra.mxu0 %v3637
    %v3639 = vand.u32 %v231, 4294901760
    %3640 = vmatpush.xpose.msra.mxu0 %v3639
    %v3641 = vand.u32 %v227, 4294901760
    %3642 = vmatpush.xpose.msra.mxu0 %v3641
    %v3643 = vand.u32 %v223, 4294901760
    %3644 = vmatpush.xpose.msra.mxu0 %v3643
    %v3645 = vand.u32 %v219, 4294901760
    %3646 = vmatpush.xpose.msra.mxu0 %v3645
    %v3647 = vand.u32 %v215, 4294901760
    %3648 = vmatpush.xpose.msra.mxu0 %v3647
    %v3649 = vand.u32 %v211, 4294901760
    %3650 = vmatpush.xpose.msra.mxu0 %v3649
    %v3651 = vand.u32 %v207, 4294901760
    %3652 = vmatpush.xpose.msra.mxu0 %v3651
    %v3653 = vand.u32 %v203, 4294901760
    %3654 = vmatpush.xpose.msra.mxu0 %v3653
    %v3655 = vand.u32 %v199, 4294901760
    %3656 = vmatpush.xpose.msra.mxu0 %v3655
    %v3657 = vand.u32 %v195, 4294901760
    %3658 = vmatpush.xpose.msra.mxu0 %v3657
    %v3659 = vand.u32 %v191, 4294901760
    %3660 = vmatpush.xpose.msra.mxu0 %v3659
    %v3661 = vand.u32 %v187, 4294901760
    %3662 = vmatpush.xpose.msra.mxu0 %v3661
    %v3663 = vand.u32 %v591, 4294901760
    %3664 = vmatmul.f32.gmra.mxu0 %v3663
    %v3665 = vpop.f32.mrf.mxu0
    %v3666 = vadd.f32 %v3629, %v3665
    %3667 = vdwg.mxu0
    %v3668 = vand.u32 %v248, 4294901760
    %3669 = vmatpush.xpose.msra.mxu0 %v3668
    %v3670 = vand.u32 %v244, 4294901760
    %3671 = vmatpush.xpose.msra.mxu0 %v3670
    %v3672 = vand.u32 %v240, 4294901760
    %3673 = vmatpush.xpose.msra.mxu0 %v3672
    %v3674 = vand.u32 %v236, 4294901760
    %3675 = vmatpush.xpose.msra.mxu0 %v3674
    %v3676 = vand.u32 %v232, 4294901760
    %3677 = vmatpush.xpose.msra.mxu0 %v3676
    %v3678 = vand.u32 %v228, 4294901760
    %3679 = vmatpush.xpose.msra.mxu0 %v3678
    %v3680 = vand.u32 %v224, 4294901760
    %3681 = vmatpush.xpose.msra.mxu0 %v3680
    %v3682 = vand.u32 %v220, 4294901760
    %3683 = vmatpush.xpose.msra.mxu0 %v3682
    %v3684 = vand.u32 %v216, 4294901760
    %3685 = vmatpush.xpose.msra.mxu0 %v3684
    %v3686 = vand.u32 %v212, 4294901760
    %3687 = vmatpush.xpose.msra.mxu0 %v3686
    %v3688 = vand.u32 %v208, 4294901760
    %3689 = vmatpush.xpose.msra.mxu0 %v3688
    %v3690 = vand.u32 %v204, 4294901760
    %3691 = vmatpush.xpose.msra.mxu0 %v3690
    %v3692 = vand.u32 %v200, 4294901760
    %3693 = vmatpush.xpose.msra.mxu0 %v3692
    %v3694 = vand.u32 %v196, 4294901760
    %3695 = vmatpush.xpose.msra.mxu0 %v3694
    %v3696 = vand.u32 %v192, 4294901760
    %3697 = vmatpush.xpose.msra.mxu0 %v3696
    %v3698 = vand.u32 %v188, 4294901760
    %3699 = vmatpush.xpose.msra.mxu0 %v3698
    %v3700 = vand.u32 %v592, 4294901760
    %v3701 = vsub.f32 %v592, %v3700
    %v3702 = vand.u32 %v3701, 4294901760
    %v3703 = vsub.f32 %v3701, %v3702
    %v3704 = vand.u32 %v3703, 4294901760
    %3705 = vmatmul.f32.gmra.mxu0 %v3704
    %v3706 = vpop.f32.mrf.mxu0
    %v3707 = vadd.f32 %v3666, %v3706
    %3708 = vdwg.mxu0
    %v3709 = vand.u32 %v248, 4294901760
    %v3710 = vsub.f32 %v248, %v3709
    %v3711 = vand.u32 %v3710, 4294901760
    %v3712 = vsub.f32 %v3710, %v3711
    %v3713 = vand.u32 %v3712, 4294901760
    %3714 = vmatpush.xpose.msra.mxu0 %v3713
    %v3715 = vand.u32 %v244, 4294901760
    %v3716 = vsub.f32 %v244, %v3715
    %v3717 = vand.u32 %v3716, 4294901760
    %v3718 = vsub.f32 %v3716, %v3717
    %v3719 = vand.u32 %v3718, 4294901760
    %3720 = vmatpush.xpose.msra.mxu0 %v3719
    %v3721 = vand.u32 %v240, 4294901760
    %v3722 = vsub.f32 %v240, %v3721
    %v3723 = vand.u32 %v3722, 4294901760
    %v3724 = vsub.f32 %v3722, %v3723
    %v3725 = vand.u32 %v3724, 4294901760
    %3726 = vmatpush.xpose.msra.mxu0 %v3725
    %v3727 = vand.u32 %v236, 4294901760
    %v3728 = vsub.f32 %v236, %v3727
    %v3729 = vand.u32 %v3728, 4294901760
    %v3730 = vsub.f32 %v3728, %v3729
    %v3731 = vand.u32 %v3730, 4294901760
    %3732 = vmatpush.xpose.msra.mxu0 %v3731
    %v3733 = vand.u32 %v232, 4294901760
    %v3734 = vsub.f32 %v232, %v3733
    %v3735 = vand.u32 %v3734, 4294901760
    %v3736 = vsub.f32 %v3734, %v3735
    %v3737 = vand.u32 %v3736, 4294901760
    %3738 = vmatpush.xpose.msra.mxu0 %v3737
    %v3739 = vand.u32 %v228, 4294901760
    %v3740 = vsub.f32 %v228, %v3739
    %v3741 = vand.u32 %v3740, 4294901760
    %v3742 = vsub.f32 %v3740, %v3741
    %v3743 = vand.u32 %v3742, 4294901760
    %3744 = vmatpush.xpose.msra.mxu0 %v3743
    %v3745 = vand.u32 %v224, 4294901760
    %v3746 = vsub.f32 %v224, %v3745
    %v3747 = vand.u32 %v3746, 4294901760
    %v3748 = vsub.f32 %v3746, %v3747
    %v3749 = vand.u32 %v3748, 4294901760
    %3750 = vmatpush.xpose.msra.mxu0 %v3749
    %v3751 = vand.u32 %v220, 4294901760
    %v3752 = vsub.f32 %v220, %v3751
    %v3753 = vand.u32 %v3752, 4294901760
    %v3754 = vsub.f32 %v3752, %v3753
    %v3755 = vand.u32 %v3754, 4294901760
    %3756 = vmatpush.xpose.msra.mxu0 %v3755
    %v3757 = vand.u32 %v216, 4294901760
    %v3758 = vsub.f32 %v216, %v3757
    %v3759 = vand.u32 %v3758, 4294901760
    %v3760 = vsub.f32 %v3758, %v3759
    %v3761 = vand.u32 %v3760, 4294901760
    %3762 = vmatpush.xpose.msra.mxu0 %v3761
    %v3763 = vand.u32 %v212, 4294901760
    %v3764 = vsub.f32 %v212, %v3763
    %v3765 = vand.u32 %v3764, 4294901760
    %v3766 = vsub.f32 %v3764, %v3765
    %v3767 = vand.u32 %v3766, 4294901760
    %3768 = vmatpush.xpose.msra.mxu0 %v3767
    %v3769 = vand.u32 %v208, 4294901760
    %v3770 = vsub.f32 %v208, %v3769
    %v3771 = vand.u32 %v3770, 4294901760
    %v3772 = vsub.f32 %v3770, %v3771
    %v3773 = vand.u32 %v3772, 4294901760
    %3774 = vmatpush.xpose.msra.mxu0 %v3773
    %v3775 = vand.u32 %v204, 4294901760
    %v3776 = vsub.f32 %v204, %v3775
    %v3777 = vand.u32 %v3776, 4294901760
    %v3778 = vsub.f32 %v3776, %v3777
    %v3779 = vand.u32 %v3778, 4294901760
    %3780 = vmatpush.xpose.msra.mxu0 %v3779
    %v3781 = vand.u32 %v200, 4294901760
    %v3782 = vsub.f32 %v200, %v3781
    %v3783 = vand.u32 %v3782, 4294901760
    %v3784 = vsub.f32 %v3782, %v3783
    %v3785 = vand.u32 %v3784, 4294901760
    %3786 = vmatpush.xpose.msra.mxu0 %v3785
    %v3787 = vand.u32 %v196, 4294901760
    %v3788 = vsub.f32 %v196, %v3787
    %v3789 = vand.u32 %v3788, 4294901760
    %v3790 = vsub.f32 %v3788, %v3789
    %v3791 = vand.u32 %v3790, 4294901760
    %3792 = vmatpush.xpose.msra.mxu0 %v3791
    %v3793 = vand.u32 %v192, 4294901760
    %v3794 = vsub.f32 %v192, %v3793
    %v3795 = vand.u32 %v3794, 4294901760
    %v3796 = vsub.f32 %v3794, %v3795
    %v3797 = vand.u32 %v3796, 4294901760
    %3798 = vmatpush.xpose.msra.mxu0 %v3797
    %v3799 = vand.u32 %v188, 4294901760
    %v3800 = vsub.f32 %v188, %v3799
    %v3801 = vand.u32 %v3800, 4294901760
    %v3802 = vsub.f32 %v3800, %v3801
    %v3803 = vand.u32 %v3802, 4294901760
    %3804 = vmatpush.xpose.msra.mxu0 %v3803
    %v3805 = vand.u32 %v592, 4294901760
    %3806 = vmatmul.f32.gmra.mxu0 %v3805
    %v3807 = vpop.f32.mrf.mxu0
    %v3808 = vadd.f32 %v3707, %v3807
    %3809 = vdwg.mxu0
    %v3810 = vand.u32 %v248, 4294901760
    %v3811 = vsub.f32 %v248, %v3810
    %3812 = vmatpush.xpose.msra.mxu0 %v3811
    %v3813 = vand.u32 %v244, 4294901760
    %v3814 = vsub.f32 %v244, %v3813
    %3815 = vmatpush.xpose.msra.mxu0 %v3814
    %v3816 = vand.u32 %v240, 4294901760
    %v3817 = vsub.f32 %v240, %v3816
    %3818 = vmatpush.xpose.msra.mxu0 %v3817
    %v3819 = vand.u32 %v236, 4294901760
    %v3820 = vsub.f32 %v236, %v3819
    %3821 = vmatpush.xpose.msra.mxu0 %v3820
    %v3822 = vand.u32 %v232, 4294901760
    %v3823 = vsub.f32 %v232, %v3822
    %3824 = vmatpush.xpose.msra.mxu0 %v3823
    %v3825 = vand.u32 %v228, 4294901760
    %v3826 = vsub.f32 %v228, %v3825
    %3827 = vmatpush.xpose.msra.mxu0 %v3826
    %v3828 = vand.u32 %v224, 4294901760
    %v3829 = vsub.f32 %v224, %v3828
    %3830 = vmatpush.xpose.msra.mxu0 %v3829
    %v3831 = vand.u32 %v220, 4294901760
    %v3832 = vsub.f32 %v220, %v3831
    %3833 = vmatpush.xpose.msra.mxu0 %v3832
    %v3834 = vand.u32 %v216, 4294901760
    %v3835 = vsub.f32 %v216, %v3834
    %3836 = vmatpush.xpose.msra.mxu0 %v3835
    %v3837 = vand.u32 %v212, 4294901760
    %v3838 = vsub.f32 %v212, %v3837
    %3839 = vmatpush.xpose.msra.mxu0 %v3838
    %v3840 = vand.u32 %v208, 4294901760
    %v3841 = vsub.f32 %v208, %v3840
    %3842 = vmatpush.xpose.msra.mxu0 %v3841
    %v3843 = vand.u32 %v204, 4294901760
    %v3844 = vsub.f32 %v204, %v3843
    %3845 = vmatpush.xpose.msra.mxu0 %v3844
    %v3846 = vand.u32 %v200, 4294901760
    %v3847 = vsub.f32 %v200, %v3846
    %3848 = vmatpush.xpose.msra.mxu0 %v3847
    %v3849 = vand.u32 %v196, 4294901760
    %v3850 = vsub.f32 %v196, %v3849
    %3851 = vmatpush.xpose.msra.mxu0 %v3850
    %v3852 = vand.u32 %v192, 4294901760
    %v3853 = vsub.f32 %v192, %v3852
    %3854 = vmatpush.xpose.msra.mxu0 %v3853
    %v3855 = vand.u32 %v188, 4294901760
    %v3856 = vsub.f32 %v188, %v3855
    %3857 = vmatpush.xpose.msra.mxu0 %v3856
    %v3858 = vand.u32 %v592, 4294901760
    %v3859 = vsub.f32 %v592, %v3858
    %3860 = vmatmul.f32.gmra.mxu0 %v3859
    %v3861 = vpop.f32.mrf.mxu0
    %v3862 = vadd.f32 %v3808, %v3861
    %3863 = vdwg.mxu0
    %v3864 = vand.u32 %v248, 4294901760
    %3865 = vmatpush.xpose.msra.mxu0 %v3864
    %v3866 = vand.u32 %v244, 4294901760
    %3867 = vmatpush.xpose.msra.mxu0 %v3866
    %v3868 = vand.u32 %v240, 4294901760
    %3869 = vmatpush.xpose.msra.mxu0 %v3868
    %v3870 = vand.u32 %v236, 4294901760
    %3871 = vmatpush.xpose.msra.mxu0 %v3870
    %v3872 = vand.u32 %v232, 4294901760
    %3873 = vmatpush.xpose.msra.mxu0 %v3872
    %v3874 = vand.u32 %v228, 4294901760
    %3875 = vmatpush.xpose.msra.mxu0 %v3874
    %v3876 = vand.u32 %v224, 4294901760
    %3877 = vmatpush.xpose.msra.mxu0 %v3876
    %v3878 = vand.u32 %v220, 4294901760
    %3879 = vmatpush.xpose.msra.mxu0 %v3878
    %v3880 = vand.u32 %v216, 4294901760
    %3881 = vmatpush.xpose.msra.mxu0 %v3880
    %v3882 = vand.u32 %v212, 4294901760
    %3883 = vmatpush.xpose.msra.mxu0 %v3882
    %v3884 = vand.u32 %v208, 4294901760
    %3885 = vmatpush.xpose.msra.mxu0 %v3884
    %v3886 = vand.u32 %v204, 4294901760
    %3887 = vmatpush.xpose.msra.mxu0 %v3886
    %v3888 = vand.u32 %v200, 4294901760
    %3889 = vmatpush.xpose.msra.mxu0 %v3888
    %v3890 = vand.u32 %v196, 4294901760
    %3891 = vmatpush.xpose.msra.mxu0 %v3890
    %v3892 = vand.u32 %v192, 4294901760
    %3893 = vmatpush.xpose.msra.mxu0 %v3892
    %v3894 = vand.u32 %v188, 4294901760
    %3895 = vmatpush.xpose.msra.mxu0 %v3894
    %v3896 = vand.u32 %v592, 4294901760
    %v3897 = vsub.f32 %v592, %v3896
    %v3898 = vand.u32 %v3897, 4294901760
    %3899 = vmatmul.f32.gmra.mxu0 %v3898
    %v3900 = vpop.f32.mrf.mxu0
    %v3901 = vadd.f32 %v3862, %v3900
    %3902 = vdwg.mxu0
    %v3903 = vand.u32 %v248, 4294901760
    %v3904 = vsub.f32 %v248, %v3903
    %v3905 = vand.u32 %v3904, 4294901760
    %3906 = vmatpush.xpose.msra.mxu0 %v3905
    %v3907 = vand.u32 %v244, 4294901760
    %v3908 = vsub.f32 %v244, %v3907
    %v3909 = vand.u32 %v3908, 4294901760
    %3910 = vmatpush.xpose.msra.mxu0 %v3909
    %v3911 = vand.u32 %v240, 4294901760
    %v3912 = vsub.f32 %v240, %v3911
    %v3913 = vand.u32 %v3912, 4294901760
    %3914 = vmatpush.xpose.msra.mxu0 %v3913
    %v3915 = vand.u32 %v236, 4294901760
    %v3916 = vsub.f32 %v236, %v3915
    %v3917 = vand.u32 %v3916, 4294901760
    %3918 = vmatpush.xpose.msra.mxu0 %v3917
    %v3919 = vand.u32 %v232, 4294901760
    %v3920 = vsub.f32 %v232, %v3919
    %v3921 = vand.u32 %v3920, 4294901760
    %3922 = vmatpush.xpose.msra.mxu0 %v3921
    %v3923 = vand.u32 %v228, 4294901760
    %v3924 = vsub.f32 %v228, %v3923
    %v3925 = vand.u32 %v3924, 4294901760
    %3926 = vmatpush.xpose.msra.mxu0 %v3925
    %v3927 = vand.u32 %v224, 4294901760
    %v3928 = vsub.f32 %v224, %v3927
    %v3929 = vand.u32 %v3928, 4294901760
    %3930 = vmatpush.xpose.msra.mxu0 %v3929
    %v3931 = vand.u32 %v220, 4294901760
    %v3932 = vsub.f32 %v220, %v3931
    %v3933 = vand.u32 %v3932, 4294901760
    %3934 = vmatpush.xpose.msra.mxu0 %v3933
    %v3935 = vand.u32 %v216, 4294901760
    %v3936 = vsub.f32 %v216, %v3935
    %v3937 = vand.u32 %v3936, 4294901760
    %3938 = vmatpush.xpose.msra.mxu0 %v3937
    %v3939 = vand.u32 %v212, 4294901760
    %v3940 = vsub.f32 %v212, %v3939
    %v3941 = vand.u32 %v3940, 4294901760
    %3942 = vmatpush.xpose.msra.mxu0 %v3941
    %v3943 = vand.u32 %v208, 4294901760
    %v3944 = vsub.f32 %v208, %v3943
    %v3945 = vand.u32 %v3944, 4294901760
    %3946 = vmatpush.xpose.msra.mxu0 %v3945
    %v3947 = vand.u32 %v204, 4294901760
    %v3948 = vsub.f32 %v204, %v3947
    %v3949 = vand.u32 %v3948, 4294901760
    %3950 = vmatpush.xpose.msra.mxu0 %v3949
    %v3951 = vand.u32 %v200, 4294901760
    %v3952 = vsub.f32 %v200, %v3951
    %v3953 = vand.u32 %v3952, 4294901760
    %3954 = vmatpush.xpose.msra.mxu0 %v3953
    %v3955 = vand.u32 %v196, 4294901760
    %v3956 = vsub.f32 %v196, %v3955
    %v3957 = vand.u32 %v3956, 4294901760
    %3958 = vmatpush.xpose.msra.mxu0 %v3957
    %v3959 = vand.u32 %v192, 4294901760
    %v3960 = vsub.f32 %v192, %v3959
    %v3961 = vand.u32 %v3960, 4294901760
    %3962 = vmatpush.xpose.msra.mxu0 %v3961
    %v3963 = vand.u32 %v188, 4294901760
    %v3964 = vsub.f32 %v188, %v3963
    %v3965 = vand.u32 %v3964, 4294901760
    %3966 = vmatpush.xpose.msra.mxu0 %v3965
    %v3967 = vand.u32 %v592, 4294901760
    %3968 = vmatmul.f32.gmra.mxu0 %v3967
    %v3969 = vpop.f32.mrf.mxu0
    %v3970 = vadd.f32 %v3901, %v3969
    %3971 = vdwg.mxu0
    %v3972 = vand.u32 %v248, 4294901760
    %3973 = vmatpush.xpose.msra.mxu0 %v3972
    %v3974 = vand.u32 %v244, 4294901760
    %3975 = vmatpush.xpose.msra.mxu0 %v3974
    %v3976 = vand.u32 %v240, 4294901760
    %3977 = vmatpush.xpose.msra.mxu0 %v3976
    %v3978 = vand.u32 %v236, 4294901760
    %3979 = vmatpush.xpose.msra.mxu0 %v3978
    %v3980 = vand.u32 %v232, 4294901760
    %3981 = vmatpush.xpose.msra.mxu0 %v3980
    %v3982 = vand.u32 %v228, 4294901760
    %3983 = vmatpush.xpose.msra.mxu0 %v3982
    %v3984 = vand.u32 %v224, 4294901760
    %3985 = vmatpush.xpose.msra.mxu0 %v3984
    %v3986 = vand.u32 %v220, 4294901760
    %3987 = vmatpush.xpose.msra.mxu0 %v3986
    %v3988 = vand.u32 %v216, 4294901760
    %3989 = vmatpush.xpose.msra.mxu0 %v3988
    %v3990 = vand.u32 %v212, 4294901760
    %3991 = vmatpush.xpose.msra.mxu0 %v3990
    %v3992 = vand.u32 %v208, 4294901760
    %3993 = vmatpush.xpose.msra.mxu0 %v3992
    %v3994 = vand.u32 %v204, 4294901760
    %3995 = vmatpush.xpose.msra.mxu0 %v3994
    %v3996 = vand.u32 %v200, 4294901760
    %3997 = vmatpush.xpose.msra.mxu0 %v3996
    %v3998 = vand.u32 %v196, 4294901760
    %3999 = vmatpush.xpose.msra.mxu0 %v3998
    %v4000 = vand.u32 %v192, 4294901760
    %4001 = vmatpush.xpose.msra.mxu0 %v4000
    %v4002 = vand.u32 %v188, 4294901760
    %4003 = vmatpush.xpose.msra.mxu0 %v4002
    %v4004 = vand.u32 %v592, 4294901760
    %4005 = vmatmul.f32.gmra.mxu0 %v4004
    %v4006 = vpop.f32.mrf.mxu0
    %v4007 = vadd.f32 %v3970, %v4006
    %4008 = vdwg.mxu0
    %v4009 = vand.u32 %v249, 4294901760
    %4010 = vmatpush.xpose.msra.mxu0 %v4009
    %v4011 = vand.u32 %v245, 4294901760
    %4012 = vmatpush.xpose.msra.mxu0 %v4011
    %v4013 = vand.u32 %v241, 4294901760
    %4014 = vmatpush.xpose.msra.mxu0 %v4013
    %v4015 = vand.u32 %v237, 4294901760
    %4016 = vmatpush.xpose.msra.mxu0 %v4015
    %v4017 = vand.u32 %v233, 4294901760
    %4018 = vmatpush.xpose.msra.mxu0 %v4017
    %v4019 = vand.u32 %v229, 4294901760
    %4020 = vmatpush.xpose.msra.mxu0 %v4019
    %v4021 = vand.u32 %v225, 4294901760
    %4022 = vmatpush.xpose.msra.mxu0 %v4021
    %v4023 = vand.u32 %v221, 4294901760
    %4024 = vmatpush.xpose.msra.mxu0 %v4023
    %v4025 = vand.u32 %v217, 4294901760
    %4026 = vmatpush.xpose.msra.mxu0 %v4025
    %v4027 = vand.u32 %v213, 4294901760
    %4028 = vmatpush.xpose.msra.mxu0 %v4027
    %v4029 = vand.u32 %v209, 4294901760
    %4030 = vmatpush.xpose.msra.mxu0 %v4029
    %v4031 = vand.u32 %v205, 4294901760
    %4032 = vmatpush.xpose.msra.mxu0 %v4031
    %v4033 = vand.u32 %v201, 4294901760
    %4034 = vmatpush.xpose.msra.mxu0 %v4033
    %v4035 = vand.u32 %v197, 4294901760
    %4036 = vmatpush.xpose.msra.mxu0 %v4035
    %v4037 = vand.u32 %v193, 4294901760
    %4038 = vmatpush.xpose.msra.mxu0 %v4037
    %v4039 = vand.u32 %v189, 4294901760
    %4040 = vmatpush.xpose.msra.mxu0 %v4039
    %v4041 = vand.u32 %v593, 4294901760
    %v4042 = vsub.f32 %v593, %v4041
    %v4043 = vand.u32 %v4042, 4294901760
    %v4044 = vsub.f32 %v4042, %v4043
    %v4045 = vand.u32 %v4044, 4294901760
    %4046 = vmatmul.f32.gmra.mxu0 %v4045
    %v4047 = vpop.f32.mrf.mxu0
    %v4048 = vadd.f32 %v4007, %v4047
    %4049 = vdwg.mxu0
    %v4050 = vand.u32 %v249, 4294901760
    %v4051 = vsub.f32 %v249, %v4050
    %v4052 = vand.u32 %v4051, 4294901760
    %v4053 = vsub.f32 %v4051, %v4052
    %v4054 = vand.u32 %v4053, 4294901760
    %4055 = vmatpush.xpose.msra.mxu0 %v4054
    %v4056 = vand.u32 %v245, 4294901760
    %v4057 = vsub.f32 %v245, %v4056
    %v4058 = vand.u32 %v4057, 4294901760
    %v4059 = vsub.f32 %v4057, %v4058
    %v4060 = vand.u32 %v4059, 4294901760
    %4061 = vmatpush.xpose.msra.mxu0 %v4060
    %v4062 = vand.u32 %v241, 4294901760
    %v4063 = vsub.f32 %v241, %v4062
    %v4064 = vand.u32 %v4063, 4294901760
    %v4065 = vsub.f32 %v4063, %v4064
    %v4066 = vand.u32 %v4065, 4294901760
    %4067 = vmatpush.xpose.msra.mxu0 %v4066
    %v4068 = vand.u32 %v237, 4294901760
    %v4069 = vsub.f32 %v237, %v4068
    %v4070 = vand.u32 %v4069, 4294901760
    %v4071 = vsub.f32 %v4069, %v4070
    %v4072 = vand.u32 %v4071, 4294901760
    %4073 = vmatpush.xpose.msra.mxu0 %v4072
    %v4074 = vand.u32 %v233, 4294901760
    %v4075 = vsub.f32 %v233, %v4074
    %v4076 = vand.u32 %v4075, 4294901760
    %v4077 = vsub.f32 %v4075, %v4076
    %v4078 = vand.u32 %v4077, 4294901760
    %4079 = vmatpush.xpose.msra.mxu0 %v4078
    %v4080 = vand.u32 %v229, 4294901760
    %v4081 = vsub.f32 %v229, %v4080
    %v4082 = vand.u32 %v4081, 4294901760
    %v4083 = vsub.f32 %v4081, %v4082
    %v4084 = vand.u32 %v4083, 4294901760
    %4085 = vmatpush.xpose.msra.mxu0 %v4084
    %v4086 = vand.u32 %v225, 4294901760
    %v4087 = vsub.f32 %v225, %v4086
    %v4088 = vand.u32 %v4087, 4294901760
    %v4089 = vsub.f32 %v4087, %v4088
    %v4090 = vand.u32 %v4089, 4294901760
    %4091 = vmatpush.xpose.msra.mxu0 %v4090
    %v4092 = vand.u32 %v221, 4294901760
    %v4093 = vsub.f32 %v221, %v4092
    %v4094 = vand.u32 %v4093, 4294901760
    %v4095 = vsub.f32 %v4093, %v4094
    %v4096 = vand.u32 %v4095, 4294901760
    %4097 = vmatpush.xpose.msra.mxu0 %v4096
    %v4098 = vand.u32 %v217, 4294901760
    %v4099 = vsub.f32 %v217, %v4098
    %v4100 = vand.u32 %v4099, 4294901760
    %v4101 = vsub.f32 %v4099, %v4100
    %v4102 = vand.u32 %v4101, 4294901760
    %4103 = vmatpush.xpose.msra.mxu0 %v4102
    %v4104 = vand.u32 %v213, 4294901760
    %v4105 = vsub.f32 %v213, %v4104
    %v4106 = vand.u32 %v4105, 4294901760
    %v4107 = vsub.f32 %v4105, %v4106
    %v4108 = vand.u32 %v4107, 4294901760
    %4109 = vmatpush.xpose.msra.mxu0 %v4108
    %v4110 = vand.u32 %v209, 4294901760
    %v4111 = vsub.f32 %v209, %v4110
    %v4112 = vand.u32 %v4111, 4294901760
    %v4113 = vsub.f32 %v4111, %v4112
    %v4114 = vand.u32 %v4113, 4294901760
    %4115 = vmatpush.xpose.msra.mxu0 %v4114
    %v4116 = vand.u32 %v205, 4294901760
    %v4117 = vsub.f32 %v205, %v4116
    %v4118 = vand.u32 %v4117, 4294901760
    %v4119 = vsub.f32 %v4117, %v4118
    %v4120 = vand.u32 %v4119, 4294901760
    %4121 = vmatpush.xpose.msra.mxu0 %v4120
    %v4122 = vand.u32 %v201, 4294901760
    %v4123 = vsub.f32 %v201, %v4122
    %v4124 = vand.u32 %v4123, 4294901760
    %v4125 = vsub.f32 %v4123, %v4124
    %v4126 = vand.u32 %v4125, 4294901760
    %4127 = vmatpush.xpose.msra.mxu0 %v4126
    %v4128 = vand.u32 %v197, 4294901760
    %v4129 = vsub.f32 %v197, %v4128
    %v4130 = vand.u32 %v4129, 4294901760
    %v4131 = vsub.f32 %v4129, %v4130
    %v4132 = vand.u32 %v4131, 4294901760
    %4133 = vmatpush.xpose.msra.mxu0 %v4132
    %v4134 = vand.u32 %v193, 4294901760
    %v4135 = vsub.f32 %v193, %v4134
    %v4136 = vand.u32 %v4135, 4294901760
    %v4137 = vsub.f32 %v4135, %v4136
    %v4138 = vand.u32 %v4137, 4294901760
    %4139 = vmatpush.xpose.msra.mxu0 %v4138
    %v4140 = vand.u32 %v189, 4294901760
    %v4141 = vsub.f32 %v189, %v4140
    %v4142 = vand.u32 %v4141, 4294901760
    %v4143 = vsub.f32 %v4141, %v4142
    %v4144 = vand.u32 %v4143, 4294901760
    %4145 = vmatpush.xpose.msra.mxu0 %v4144
    %v4146 = vand.u32 %v593, 4294901760
    %4147 = vmatmul.f32.gmra.mxu0 %v4146
    %v4148 = vpop.f32.mrf.mxu0
    %v4149 = vadd.f32 %v4048, %v4148
    %4150 = vdwg.mxu0
    %v4151 = vand.u32 %v249, 4294901760
    %v4152 = vsub.f32 %v249, %v4151
    %4153 = vmatpush.xpose.msra.mxu0 %v4152
    %v4154 = vand.u32 %v245, 4294901760
    %v4155 = vsub.f32 %v245, %v4154
    %4156 = vmatpush.xpose.msra.mxu0 %v4155
    %v4157 = vand.u32 %v241, 4294901760
    %v4158 = vsub.f32 %v241, %v4157
    %4159 = vmatpush.xpose.msra.mxu0 %v4158
    %v4160 = vand.u32 %v237, 4294901760
    %v4161 = vsub.f32 %v237, %v4160
    %4162 = vmatpush.xpose.msra.mxu0 %v4161
    %v4163 = vand.u32 %v233, 4294901760
    %v4164 = vsub.f32 %v233, %v4163
    %4165 = vmatpush.xpose.msra.mxu0 %v4164
    %v4166 = vand.u32 %v229, 4294901760
    %v4167 = vsub.f32 %v229, %v4166
    %4168 = vmatpush.xpose.msra.mxu0 %v4167
    %v4169 = vand.u32 %v225, 4294901760
    %v4170 = vsub.f32 %v225, %v4169
    %4171 = vmatpush.xpose.msra.mxu0 %v4170
    %v4172 = vand.u32 %v221, 4294901760
    %v4173 = vsub.f32 %v221, %v4172
    %4174 = vmatpush.xpose.msra.mxu0 %v4173
    %v4175 = vand.u32 %v217, 4294901760
    %v4176 = vsub.f32 %v217, %v4175
    %4177 = vmatpush.xpose.msra.mxu0 %v4176
    %v4178 = vand.u32 %v213, 4294901760
    %v4179 = vsub.f32 %v213, %v4178
    %4180 = vmatpush.xpose.msra.mxu0 %v4179
    %v4181 = vand.u32 %v209, 4294901760
    %v4182 = vsub.f32 %v209, %v4181
    %4183 = vmatpush.xpose.msra.mxu0 %v4182
    %v4184 = vand.u32 %v205, 4294901760
    %v4185 = vsub.f32 %v205, %v4184
    %4186 = vmatpush.xpose.msra.mxu0 %v4185
    %v4187 = vand.u32 %v201, 4294901760
    %v4188 = vsub.f32 %v201, %v4187
    %4189 = vmatpush.xpose.msra.mxu0 %v4188
    %v4190 = vand.u32 %v197, 4294901760
    %v4191 = vsub.f32 %v197, %v4190
    %4192 = vmatpush.xpose.msra.mxu0 %v4191
    %v4193 = vand.u32 %v193, 4294901760
    %v4194 = vsub.f32 %v193, %v4193
    %4195 = vmatpush.xpose.msra.mxu0 %v4194
    %v4196 = vand.u32 %v189, 4294901760
    %v4197 = vsub.f32 %v189, %v4196
    %4198 = vmatpush.xpose.msra.mxu0 %v4197
    %v4199 = vand.u32 %v593, 4294901760
    %v4200 = vsub.f32 %v593, %v4199
    %4201 = vmatmul.f32.gmra.mxu0 %v4200
    %v4202 = vpop.f32.mrf.mxu0
    %v4203 = vadd.f32 %v4149, %v4202
    %4204 = vdwg.mxu0
    %v4205 = vand.u32 %v249, 4294901760
    %4206 = vmatpush.xpose.msra.mxu0 %v4205
    %v4207 = vand.u32 %v245, 4294901760
    %4208 = vmatpush.xpose.msra.mxu0 %v4207
    %v4209 = vand.u32 %v241, 4294901760
    %4210 = vmatpush.xpose.msra.mxu0 %v4209
    %v4211 = vand.u32 %v237, 4294901760
    %4212 = vmatpush.xpose.msra.mxu0 %v4211
    %v4213 = vand.u32 %v233, 4294901760
    %4214 = vmatpush.xpose.msra.mxu0 %v4213
    %v4215 = vand.u32 %v229, 4294901760
    %4216 = vmatpush.xpose.msra.mxu0 %v4215
    %v4217 = vand.u32 %v225, 4294901760
    %4218 = vmatpush.xpose.msra.mxu0 %v4217
    %v4219 = vand.u32 %v221, 4294901760
    %4220 = vmatpush.xpose.msra.mxu0 %v4219
    %v4221 = vand.u32 %v217, 4294901760
    %4222 = vmatpush.xpose.msra.mxu0 %v4221
    %v4223 = vand.u32 %v213, 4294901760
    %4224 = vmatpush.xpose.msra.mxu0 %v4223
    %v4225 = vand.u32 %v209, 4294901760
    %4226 = vmatpush.xpose.msra.mxu0 %v4225
    %v4227 = vand.u32 %v205, 4294901760
    %4228 = vmatpush.xpose.msra.mxu0 %v4227
    %v4229 = vand.u32 %v201, 4294901760
    %4230 = vmatpush.xpose.msra.mxu0 %v4229
    %v4231 = vand.u32 %v197, 4294901760
    %4232 = vmatpush.xpose.msra.mxu0 %v4231
    %v4233 = vand.u32 %v193, 4294901760
    %4234 = vmatpush.xpose.msra.mxu0 %v4233
    %v4235 = vand.u32 %v189, 4294901760
    %4236 = vmatpush.xpose.msra.mxu0 %v4235
    %v4237 = vand.u32 %v593, 4294901760
    %v4238 = vsub.f32 %v593, %v4237
    %v4239 = vand.u32 %v4238, 4294901760
    %4240 = vmatmul.f32.gmra.mxu0 %v4239
    %v4241 = vpop.f32.mrf.mxu0
    %v4242 = vadd.f32 %v4203, %v4241
    %4243 = vdwg.mxu0
    %v4244 = vand.u32 %v249, 4294901760
    %v4245 = vsub.f32 %v249, %v4244
    %v4246 = vand.u32 %v4245, 4294901760
    %4247 = vmatpush.xpose.msra.mxu0 %v4246
    %v4248 = vand.u32 %v245, 4294901760
    %v4249 = vsub.f32 %v245, %v4248
    %v4250 = vand.u32 %v4249, 4294901760
    %4251 = vmatpush.xpose.msra.mxu0 %v4250
    %v4252 = vand.u32 %v241, 4294901760
    %v4253 = vsub.f32 %v241, %v4252
    %v4254 = vand.u32 %v4253, 4294901760
    %4255 = vmatpush.xpose.msra.mxu0 %v4254
    %v4256 = vand.u32 %v237, 4294901760
    %v4257 = vsub.f32 %v237, %v4256
    %v4258 = vand.u32 %v4257, 4294901760
    %4259 = vmatpush.xpose.msra.mxu0 %v4258
    %v4260 = vand.u32 %v233, 4294901760
    %v4261 = vsub.f32 %v233, %v4260
    %v4262 = vand.u32 %v4261, 4294901760
    %4263 = vmatpush.xpose.msra.mxu0 %v4262
    %v4264 = vand.u32 %v229, 4294901760
    %v4265 = vsub.f32 %v229, %v4264
    %v4266 = vand.u32 %v4265, 4294901760
    %4267 = vmatpush.xpose.msra.mxu0 %v4266
    %v4268 = vand.u32 %v225, 4294901760
    %v4269 = vsub.f32 %v225, %v4268
    %v4270 = vand.u32 %v4269, 4294901760
    %4271 = vmatpush.xpose.msra.mxu0 %v4270
    %v4272 = vand.u32 %v221, 4294901760
    %v4273 = vsub.f32 %v221, %v4272
    %v4274 = vand.u32 %v4273, 4294901760
    %4275 = vmatpush.xpose.msra.mxu0 %v4274
    %v4276 = vand.u32 %v217, 4294901760
    %v4277 = vsub.f32 %v217, %v4276
    %v4278 = vand.u32 %v4277, 4294901760
    %4279 = vmatpush.xpose.msra.mxu0 %v4278
    %v4280 = vand.u32 %v213, 4294901760
    %v4281 = vsub.f32 %v213, %v4280
    %v4282 = vand.u32 %v4281, 4294901760
    %4283 = vmatpush.xpose.msra.mxu0 %v4282
    %v4284 = vand.u32 %v209, 4294901760
    %v4285 = vsub.f32 %v209, %v4284
    %v4286 = vand.u32 %v4285, 4294901760
    %4287 = vmatpush.xpose.msra.mxu0 %v4286
    %v4288 = vand.u32 %v205, 4294901760
    %v4289 = vsub.f32 %v205, %v4288
    %v4290 = vand.u32 %v4289, 4294901760
    %4291 = vmatpush.xpose.msra.mxu0 %v4290
    %v4292 = vand.u32 %v201, 4294901760
    %v4293 = vsub.f32 %v201, %v4292
    %v4294 = vand.u32 %v4293, 4294901760
    %4295 = vmatpush.xpose.msra.mxu0 %v4294
    %v4296 = vand.u32 %v197, 4294901760
    %v4297 = vsub.f32 %v197, %v4296
    %v4298 = vand.u32 %v4297, 4294901760
    %4299 = vmatpush.xpose.msra.mxu0 %v4298
    %v4300 = vand.u32 %v193, 4294901760
    %v4301 = vsub.f32 %v193, %v4300
    %v4302 = vand.u32 %v4301, 4294901760
    %4303 = vmatpush.xpose.msra.mxu0 %v4302
    %v4304 = vand.u32 %v189, 4294901760
    %v4305 = vsub.f32 %v189, %v4304
    %v4306 = vand.u32 %v4305, 4294901760
    %4307 = vmatpush.xpose.msra.mxu0 %v4306
    %v4308 = vand.u32 %v593, 4294901760
    %4309 = vmatmul.f32.gmra.mxu0 %v4308
    %v4310 = vpop.f32.mrf.mxu0
    %v4311 = vadd.f32 %v4242, %v4310
    %4312 = vdwg.mxu0
    %v4313 = vand.u32 %v249, 4294901760
    %4314 = vmatpush.xpose.msra.mxu0 %v4313
    %v4315 = vand.u32 %v245, 4294901760
    %4316 = vmatpush.xpose.msra.mxu0 %v4315
    %v4317 = vand.u32 %v241, 4294901760
    %4318 = vmatpush.xpose.msra.mxu0 %v4317
    %v4319 = vand.u32 %v237, 4294901760
    %4320 = vmatpush.xpose.msra.mxu0 %v4319
    %v4321 = vand.u32 %v233, 4294901760
    %4322 = vmatpush.xpose.msra.mxu0 %v4321
    %v4323 = vand.u32 %v229, 4294901760
    %4324 = vmatpush.xpose.msra.mxu0 %v4323
    %v4325 = vand.u32 %v225, 4294901760
    %4326 = vmatpush.xpose.msra.mxu0 %v4325
    %v4327 = vand.u32 %v221, 4294901760
    %4328 = vmatpush.xpose.msra.mxu0 %v4327
    %v4329 = vand.u32 %v217, 4294901760
    %4330 = vmatpush.xpose.msra.mxu0 %v4329
    %v4331 = vand.u32 %v213, 4294901760
    %4332 = vmatpush.xpose.msra.mxu0 %v4331
    %v4333 = vand.u32 %v209, 4294901760
    %4334 = vmatpush.xpose.msra.mxu0 %v4333
    %v4335 = vand.u32 %v205, 4294901760
    %4336 = vmatpush.xpose.msra.mxu0 %v4335
    %v4337 = vand.u32 %v201, 4294901760
    %4338 = vmatpush.xpose.msra.mxu0 %v4337
    %v4339 = vand.u32 %v197, 4294901760
    %4340 = vmatpush.xpose.msra.mxu0 %v4339
    %v4341 = vand.u32 %v193, 4294901760
    %4342 = vmatpush.xpose.msra.mxu0 %v4341
    %v4343 = vand.u32 %v189, 4294901760
    %4344 = vmatpush.xpose.msra.mxu0 %v4343
    %v4345 = vand.u32 %v593, 4294901760
    %4346 = vmatmul.f32.gmra.mxu0 %v4345
    %v4347 = vpop.f32.mrf.mxu0
    %v4348 = vadd.f32 %v4311, %v4347
    %4349 = vdwg.mxu0
    %v4350 = vand.u32 %v250, 4294901760
    %4351 = vmatpush.xpose.msra.mxu0 %v4350
    %v4352 = vand.u32 %v246, 4294901760
    %4353 = vmatpush.xpose.msra.mxu0 %v4352
    %v4354 = vand.u32 %v242, 4294901760
    %4355 = vmatpush.xpose.msra.mxu0 %v4354
    %v4356 = vand.u32 %v238, 4294901760
    %4357 = vmatpush.xpose.msra.mxu0 %v4356
    %v4358 = vand.u32 %v234, 4294901760
    %4359 = vmatpush.xpose.msra.mxu0 %v4358
    %v4360 = vand.u32 %v230, 4294901760
    %4361 = vmatpush.xpose.msra.mxu0 %v4360
    %v4362 = vand.u32 %v226, 4294901760
    %4363 = vmatpush.xpose.msra.mxu0 %v4362
    %v4364 = vand.u32 %v222, 4294901760
    %4365 = vmatpush.xpose.msra.mxu0 %v4364
    %v4366 = vand.u32 %v218, 4294901760
    %4367 = vmatpush.xpose.msra.mxu0 %v4366
    %v4368 = vand.u32 %v214, 4294901760
    %4369 = vmatpush.xpose.msra.mxu0 %v4368
    %v4370 = vand.u32 %v210, 4294901760
    %4371 = vmatpush.xpose.msra.mxu0 %v4370
    %v4372 = vand.u32 %v206, 4294901760
    %4373 = vmatpush.xpose.msra.mxu0 %v4372
    %v4374 = vand.u32 %v202, 4294901760
    %4375 = vmatpush.xpose.msra.mxu0 %v4374
    %v4376 = vand.u32 %v198, 4294901760
    %4377 = vmatpush.xpose.msra.mxu0 %v4376
    %v4378 = vand.u32 %v194, 4294901760
    %4379 = vmatpush.xpose.msra.mxu0 %v4378
    %v4380 = vand.u32 %v190, 4294901760
    %4381 = vmatpush.xpose.msra.mxu0 %v4380
    %v4382 = vand.u32 %v594, 4294901760
    %v4383 = vsub.f32 %v594, %v4382
    %v4384 = vand.u32 %v4383, 4294901760
    %v4385 = vsub.f32 %v4383, %v4384
    %v4386 = vand.u32 %v4385, 4294901760
    %4387 = vmatmul.f32.gmra.mxu0 %v4386
    %v4388 = vpop.f32.mrf.mxu0
    %v4389 = vadd.f32 %v4348, %v4388
    %4390 = vdwg.mxu0
    %v4391 = vand.u32 %v250, 4294901760
    %v4392 = vsub.f32 %v250, %v4391
    %v4393 = vand.u32 %v4392, 4294901760
    %v4394 = vsub.f32 %v4392, %v4393
    %v4395 = vand.u32 %v4394, 4294901760
    %4396 = vmatpush.xpose.msra.mxu0 %v4395
    %v4397 = vand.u32 %v246, 4294901760
    %v4398 = vsub.f32 %v246, %v4397
    %v4399 = vand.u32 %v4398, 4294901760
    %v4400 = vsub.f32 %v4398, %v4399
    %v4401 = vand.u32 %v4400, 4294901760
    %4402 = vmatpush.xpose.msra.mxu0 %v4401
    %v4403 = vand.u32 %v242, 4294901760
    %v4404 = vsub.f32 %v242, %v4403
    %v4405 = vand.u32 %v4404, 4294901760
    %v4406 = vsub.f32 %v4404, %v4405
    %v4407 = vand.u32 %v4406, 4294901760
    %4408 = vmatpush.xpose.msra.mxu0 %v4407
    %v4409 = vand.u32 %v238, 4294901760
    %v4410 = vsub.f32 %v238, %v4409
    %v4411 = vand.u32 %v4410, 4294901760
    %v4412 = vsub.f32 %v4410, %v4411
    %v4413 = vand.u32 %v4412, 4294901760
    %4414 = vmatpush.xpose.msra.mxu0 %v4413
    %v4415 = vand.u32 %v234, 4294901760
    %v4416 = vsub.f32 %v234, %v4415
    %v4417 = vand.u32 %v4416, 4294901760
    %v4418 = vsub.f32 %v4416, %v4417
    %v4419 = vand.u32 %v4418, 4294901760
    %4420 = vmatpush.xpose.msra.mxu0 %v4419
    %v4421 = vand.u32 %v230, 4294901760
    %v4422 = vsub.f32 %v230, %v4421
    %v4423 = vand.u32 %v4422, 4294901760
    %v4424 = vsub.f32 %v4422, %v4423
    %v4425 = vand.u32 %v4424, 4294901760
    %4426 = vmatpush.xpose.msra.mxu0 %v4425
    %v4427 = vand.u32 %v226, 4294901760
    %v4428 = vsub.f32 %v226, %v4427
    %v4429 = vand.u32 %v4428, 4294901760
    %v4430 = vsub.f32 %v4428, %v4429
    %v4431 = vand.u32 %v4430, 4294901760
    %4432 = vmatpush.xpose.msra.mxu0 %v4431
    %v4433 = vand.u32 %v222, 4294901760
    %v4434 = vsub.f32 %v222, %v4433
    %v4435 = vand.u32 %v4434, 4294901760
    %v4436 = vsub.f32 %v4434, %v4435
    %v4437 = vand.u32 %v4436, 4294901760
    %4438 = vmatpush.xpose.msra.mxu0 %v4437
    %v4439 = vand.u32 %v218, 4294901760
    %v4440 = vsub.f32 %v218, %v4439
    %v4441 = vand.u32 %v4440, 4294901760
    %v4442 = vsub.f32 %v4440, %v4441
    %v4443 = vand.u32 %v4442, 4294901760
    %4444 = vmatpush.xpose.msra.mxu0 %v4443
    %v4445 = vand.u32 %v214, 4294901760
    %v4446 = vsub.f32 %v214, %v4445
    %v4447 = vand.u32 %v4446, 4294901760
    %v4448 = vsub.f32 %v4446, %v4447
    %v4449 = vand.u32 %v4448, 4294901760
    %4450 = vmatpush.xpose.msra.mxu0 %v4449
    %v4451 = vand.u32 %v210, 4294901760
    %v4452 = vsub.f32 %v210, %v4451
    %v4453 = vand.u32 %v4452, 4294901760
    %v4454 = vsub.f32 %v4452, %v4453
    %v4455 = vand.u32 %v4454, 4294901760
    %4456 = vmatpush.xpose.msra.mxu0 %v4455
    %v4457 = vand.u32 %v206, 4294901760
    %v4458 = vsub.f32 %v206, %v4457
    %v4459 = vand.u32 %v4458, 4294901760
    %v4460 = vsub.f32 %v4458, %v4459
    %v4461 = vand.u32 %v4460, 4294901760
    %4462 = vmatpush.xpose.msra.mxu0 %v4461
    %v4463 = vand.u32 %v202, 4294901760
    %v4464 = vsub.f32 %v202, %v4463
    %v4465 = vand.u32 %v4464, 4294901760
    %v4466 = vsub.f32 %v4464, %v4465
    %v4467 = vand.u32 %v4466, 4294901760
    %4468 = vmatpush.xpose.msra.mxu0 %v4467
    %v4469 = vand.u32 %v198, 4294901760
    %v4470 = vsub.f32 %v198, %v4469
    %v4471 = vand.u32 %v4470, 4294901760
    %v4472 = vsub.f32 %v4470, %v4471
    %v4473 = vand.u32 %v4472, 4294901760
    %4474 = vmatpush.xpose.msra.mxu0 %v4473
    %v4475 = vand.u32 %v194, 4294901760
    %v4476 = vsub.f32 %v194, %v4475
    %v4477 = vand.u32 %v4476, 4294901760
    %v4478 = vsub.f32 %v4476, %v4477
    %v4479 = vand.u32 %v4478, 4294901760
    %4480 = vmatpush.xpose.msra.mxu0 %v4479
    %v4481 = vand.u32 %v190, 4294901760
    %v4482 = vsub.f32 %v190, %v4481
    %v4483 = vand.u32 %v4482, 4294901760
    %v4484 = vsub.f32 %v4482, %v4483
    %v4485 = vand.u32 %v4484, 4294901760
    %4486 = vmatpush.xpose.msra.mxu0 %v4485
    %v4487 = vand.u32 %v594, 4294901760
    %4488 = vmatmul.f32.gmra.mxu0 %v4487
    %v4489 = vpop.f32.mrf.mxu0
    %v4490 = vadd.f32 %v4389, %v4489
    %4491 = vdwg.mxu0
    %v4492 = vand.u32 %v250, 4294901760
    %v4493 = vsub.f32 %v250, %v4492
    %4494 = vmatpush.xpose.msra.mxu0 %v4493
    %v4495 = vand.u32 %v246, 4294901760
    %v4496 = vsub.f32 %v246, %v4495
    %4497 = vmatpush.xpose.msra.mxu0 %v4496
    %v4498 = vand.u32 %v242, 4294901760
    %v4499 = vsub.f32 %v242, %v4498
    %4500 = vmatpush.xpose.msra.mxu0 %v4499
    %v4501 = vand.u32 %v238, 4294901760
    %v4502 = vsub.f32 %v238, %v4501
    %4503 = vmatpush.xpose.msra.mxu0 %v4502
    %v4504 = vand.u32 %v234, 4294901760
    %v4505 = vsub.f32 %v234, %v4504
    %4506 = vmatpush.xpose.msra.mxu0 %v4505
    %v4507 = vand.u32 %v230, 4294901760
    %v4508 = vsub.f32 %v230, %v4507
    %4509 = vmatpush.xpose.msra.mxu0 %v4508
    %v4510 = vand.u32 %v226, 4294901760
    %v4511 = vsub.f32 %v226, %v4510
    %4512 = vmatpush.xpose.msra.mxu0 %v4511
    %v4513 = vand.u32 %v222, 4294901760
    %v4514 = vsub.f32 %v222, %v4513
    %4515 = vmatpush.xpose.msra.mxu0 %v4514
    %v4516 = vand.u32 %v218, 4294901760
    %v4517 = vsub.f32 %v218, %v4516
    %4518 = vmatpush.xpose.msra.mxu0 %v4517
    %v4519 = vand.u32 %v214, 4294901760
    %v4520 = vsub.f32 %v214, %v4519
    %4521 = vmatpush.xpose.msra.mxu0 %v4520
    %v4522 = vand.u32 %v210, 4294901760
    %v4523 = vsub.f32 %v210, %v4522
    %4524 = vmatpush.xpose.msra.mxu0 %v4523
    %v4525 = vand.u32 %v206, 4294901760
    %v4526 = vsub.f32 %v206, %v4525
    %4527 = vmatpush.xpose.msra.mxu0 %v4526
    %v4528 = vand.u32 %v202, 4294901760
    %v4529 = vsub.f32 %v202, %v4528
    %4530 = vmatpush.xpose.msra.mxu0 %v4529
    %v4531 = vand.u32 %v198, 4294901760
    %v4532 = vsub.f32 %v198, %v4531
    %4533 = vmatpush.xpose.msra.mxu0 %v4532
    %v4534 = vand.u32 %v194, 4294901760
    %v4535 = vsub.f32 %v194, %v4534
    %4536 = vmatpush.xpose.msra.mxu0 %v4535
    %v4537 = vand.u32 %v190, 4294901760
    %v4538 = vsub.f32 %v190, %v4537
    %4539 = vmatpush.xpose.msra.mxu0 %v4538
    %v4540 = vand.u32 %v594, 4294901760
    %v4541 = vsub.f32 %v594, %v4540
    %4542 = vmatmul.f32.gmra.mxu0 %v4541
    %v4543 = vpop.f32.mrf.mxu0
    %v4544 = vadd.f32 %v4490, %v4543
    %4545 = vdwg.mxu0
    %v4546 = vand.u32 %v250, 4294901760
    %4547 = vmatpush.xpose.msra.mxu0 %v4546
    %v4548 = vand.u32 %v246, 4294901760
    %4549 = vmatpush.xpose.msra.mxu0 %v4548
    %v4550 = vand.u32 %v242, 4294901760
    %4551 = vmatpush.xpose.msra.mxu0 %v4550
    %v4552 = vand.u32 %v238, 4294901760
    %4553 = vmatpush.xpose.msra.mxu0 %v4552
    %v4554 = vand.u32 %v234, 4294901760
    %4555 = vmatpush.xpose.msra.mxu0 %v4554
    %v4556 = vand.u32 %v230, 4294901760
    %4557 = vmatpush.xpose.msra.mxu0 %v4556
    %v4558 = vand.u32 %v226, 4294901760
    %4559 = vmatpush.xpose.msra.mxu0 %v4558
    %v4560 = vand.u32 %v222, 4294901760
    %4561 = vmatpush.xpose.msra.mxu0 %v4560
    %v4562 = vand.u32 %v218, 4294901760
    %4563 = vmatpush.xpose.msra.mxu0 %v4562
    %v4564 = vand.u32 %v214, 4294901760
    %4565 = vmatpush.xpose.msra.mxu0 %v4564
    %v4566 = vand.u32 %v210, 4294901760
    %4567 = vmatpush.xpose.msra.mxu0 %v4566
    %v4568 = vand.u32 %v206, 4294901760
    %4569 = vmatpush.xpose.msra.mxu0 %v4568
    %v4570 = vand.u32 %v202, 4294901760
    %4571 = vmatpush.xpose.msra.mxu0 %v4570
    %v4572 = vand.u32 %v198, 4294901760
    %4573 = vmatpush.xpose.msra.mxu0 %v4572
    %v4574 = vand.u32 %v194, 4294901760
    %4575 = vmatpush.xpose.msra.mxu0 %v4574
    %v4576 = vand.u32 %v190, 4294901760
    %4577 = vmatpush.xpose.msra.mxu0 %v4576
    %v4578 = vand.u32 %v594, 4294901760
    %v4579 = vsub.f32 %v594, %v4578
    %v4580 = vand.u32 %v4579, 4294901760
    %4581 = vmatmul.f32.gmra.mxu0 %v4580
    %v4582 = vpop.f32.mrf.mxu0
    %v4583 = vadd.f32 %v4544, %v4582
    %4584 = vdwg.mxu0
    %v4585 = vand.u32 %v250, 4294901760
    %v4586 = vsub.f32 %v250, %v4585
    %v4587 = vand.u32 %v4586, 4294901760
    %4588 = vmatpush.xpose.msra.mxu0 %v4587
    %v4589 = vand.u32 %v246, 4294901760
    %v4590 = vsub.f32 %v246, %v4589
    %v4591 = vand.u32 %v4590, 4294901760
    %4592 = vmatpush.xpose.msra.mxu0 %v4591
    %v4593 = vand.u32 %v242, 4294901760
    %v4594 = vsub.f32 %v242, %v4593
    %v4595 = vand.u32 %v4594, 4294901760
    %4596 = vmatpush.xpose.msra.mxu0 %v4595
    %v4597 = vand.u32 %v238, 4294901760
    %v4598 = vsub.f32 %v238, %v4597
    %v4599 = vand.u32 %v4598, 4294901760
    %4600 = vmatpush.xpose.msra.mxu0 %v4599
    %v4601 = vand.u32 %v234, 4294901760
    %v4602 = vsub.f32 %v234, %v4601
    %v4603 = vand.u32 %v4602, 4294901760
    %4604 = vmatpush.xpose.msra.mxu0 %v4603
    %v4605 = vand.u32 %v230, 4294901760
    %v4606 = vsub.f32 %v230, %v4605
    %v4607 = vand.u32 %v4606, 4294901760
    %4608 = vmatpush.xpose.msra.mxu0 %v4607
    %v4609 = vand.u32 %v226, 4294901760
    %v4610 = vsub.f32 %v226, %v4609
    %v4611 = vand.u32 %v4610, 4294901760
    %4612 = vmatpush.xpose.msra.mxu0 %v4611
    %v4613 = vand.u32 %v222, 4294901760
    %v4614 = vsub.f32 %v222, %v4613
    %v4615 = vand.u32 %v4614, 4294901760
    %4616 = vmatpush.xpose.msra.mxu0 %v4615
    %v4617 = vand.u32 %v218, 4294901760
    %v4618 = vsub.f32 %v218, %v4617
    %v4619 = vand.u32 %v4618, 4294901760
    %4620 = vmatpush.xpose.msra.mxu0 %v4619
    %v4621 = vand.u32 %v214, 4294901760
    %v4622 = vsub.f32 %v214, %v4621
    %v4623 = vand.u32 %v4622, 4294901760
    %4624 = vmatpush.xpose.msra.mxu0 %v4623
    %v4625 = vand.u32 %v210, 4294901760
    %v4626 = vsub.f32 %v210, %v4625
    %v4627 = vand.u32 %v4626, 4294901760
    %4628 = vmatpush.xpose.msra.mxu0 %v4627
    %v4629 = vand.u32 %v206, 4294901760
    %v4630 = vsub.f32 %v206, %v4629
    %v4631 = vand.u32 %v4630, 4294901760
    %4632 = vmatpush.xpose.msra.mxu0 %v4631
    %v4633 = vand.u32 %v202, 4294901760
    %v4634 = vsub.f32 %v202, %v4633
    %v4635 = vand.u32 %v4634, 4294901760
    %4636 = vmatpush.xpose.msra.mxu0 %v4635
    %v4637 = vand.u32 %v198, 4294901760
    %v4638 = vsub.f32 %v198, %v4637
    %v4639 = vand.u32 %v4638, 4294901760
    %4640 = vmatpush.xpose.msra.mxu0 %v4639
    %v4641 = vand.u32 %v194, 4294901760
    %v4642 = vsub.f32 %v194, %v4641
    %v4643 = vand.u32 %v4642, 4294901760
    %4644 = vmatpush.xpose.msra.mxu0 %v4643
    %v4645 = vand.u32 %v190, 4294901760
    %v4646 = vsub.f32 %v190, %v4645
    %v4647 = vand.u32 %v4646, 4294901760
    %4648 = vmatpush.xpose.msra.mxu0 %v4647
    %v4649 = vand.u32 %v594, 4294901760
    %4650 = vmatmul.f32.gmra.mxu0 %v4649
    %v4651 = vpop.f32.mrf.mxu0
    %v4652 = vadd.f32 %v4583, %v4651
    %4653 = vdwg.mxu0
    %v4654 = vand.u32 %v250, 4294901760
    %4655 = vmatpush.xpose.msra.mxu0 %v4654
    %v4656 = vand.u32 %v246, 4294901760
    %4657 = vmatpush.xpose.msra.mxu0 %v4656
    %v4658 = vand.u32 %v242, 4294901760
    %4659 = vmatpush.xpose.msra.mxu0 %v4658
    %v4660 = vand.u32 %v238, 4294901760
    %4661 = vmatpush.xpose.msra.mxu0 %v4660
    %v4662 = vand.u32 %v234, 4294901760
    %4663 = vmatpush.xpose.msra.mxu0 %v4662
    %v4664 = vand.u32 %v230, 4294901760
    %4665 = vmatpush.xpose.msra.mxu0 %v4664
    %v4666 = vand.u32 %v226, 4294901760
    %4667 = vmatpush.xpose.msra.mxu0 %v4666
    %v4668 = vand.u32 %v222, 4294901760
    %4669 = vmatpush.xpose.msra.mxu0 %v4668
    %v4670 = vand.u32 %v218, 4294901760
    %4671 = vmatpush.xpose.msra.mxu0 %v4670
    %v4672 = vand.u32 %v214, 4294901760
    %4673 = vmatpush.xpose.msra.mxu0 %v4672
    %v4674 = vand.u32 %v210, 4294901760
    %4675 = vmatpush.xpose.msra.mxu0 %v4674
    %v4676 = vand.u32 %v206, 4294901760
    %4677 = vmatpush.xpose.msra.mxu0 %v4676
    %v4678 = vand.u32 %v202, 4294901760
    %4679 = vmatpush.xpose.msra.mxu0 %v4678
    %v4680 = vand.u32 %v198, 4294901760
    %4681 = vmatpush.xpose.msra.mxu0 %v4680
    %v4682 = vand.u32 %v194, 4294901760
    %4683 = vmatpush.xpose.msra.mxu0 %v4682
    %v4684 = vand.u32 %v190, 4294901760
    %4685 = vmatpush.xpose.msra.mxu0 %v4684
    %v4686 = vand.u32 %v594, 4294901760
    %4687 = vmatmul.f32.gmra.mxu0 %v4686
    %v4688 = vpop.f32.mrf.mxu0
    %v4689 = vadd.f32 %v4652, %v4688
    %4690 = vdwg.mxu0
    %v4691 = vand.u32 %v311, 4294901760
    %4692 = vmatpush.xpose.msra.mxu0 %v4691
    %v4693 = vand.u32 %v307, 4294901760
    %4694 = vmatpush.xpose.msra.mxu0 %v4693
    %v4695 = vand.u32 %v303, 4294901760
    %4696 = vmatpush.xpose.msra.mxu0 %v4695
    %v4697 = vand.u32 %v299, 4294901760
    %4698 = vmatpush.xpose.msra.mxu0 %v4697
    %v4699 = vand.u32 %v295, 4294901760
    %4700 = vmatpush.xpose.msra.mxu0 %v4699
    %v4701 = vand.u32 %v291, 4294901760
    %4702 = vmatpush.xpose.msra.mxu0 %v4701
    %v4703 = vand.u32 %v287, 4294901760
    %4704 = vmatpush.xpose.msra.mxu0 %v4703
    %v4705 = vand.u32 %v283, 4294901760
    %4706 = vmatpush.xpose.msra.mxu0 %v4705
    %v4707 = vand.u32 %v279, 4294901760
    %4708 = vmatpush.xpose.msra.mxu0 %v4707
    %v4709 = vand.u32 %v275, 4294901760
    %4710 = vmatpush.xpose.msra.mxu0 %v4709
    %v4711 = vand.u32 %v271, 4294901760
    %4712 = vmatpush.xpose.msra.mxu0 %v4711
    %v4713 = vand.u32 %v267, 4294901760
    %4714 = vmatpush.xpose.msra.mxu0 %v4713
    %v4715 = vand.u32 %v263, 4294901760
    %4716 = vmatpush.xpose.msra.mxu0 %v4715
    %v4717 = vand.u32 %v259, 4294901760
    %4718 = vmatpush.xpose.msra.mxu0 %v4717
    %v4719 = vand.u32 %v255, 4294901760
    %4720 = vmatpush.xpose.msra.mxu0 %v4719
    %v4721 = vand.u32 %v251, 4294901760
    %4722 = vmatpush.xpose.msra.mxu0 %v4721
    %v4723 = vand.u32 %v591, 4294901760
    %v4724 = vsub.f32 %v591, %v4723
    %v4725 = vand.u32 %v4724, 4294901760
    %v4726 = vsub.f32 %v4724, %v4725
    %v4727 = vand.u32 %v4726, 4294901760
    %4728 = vmatmul.f32.gmra.mxu0 %v4727
    %v4729 = vpop.f32.mrf.mxu0
    %v4730 = vadd.f32 %v576, %v4729
    %4731 = vdwg.mxu0
    %v4732 = vand.u32 %v311, 4294901760
    %v4733 = vsub.f32 %v311, %v4732
    %v4734 = vand.u32 %v4733, 4294901760
    %v4735 = vsub.f32 %v4733, %v4734
    %v4736 = vand.u32 %v4735, 4294901760
    %4737 = vmatpush.xpose.msra.mxu0 %v4736
    %v4738 = vand.u32 %v307, 4294901760
    %v4739 = vsub.f32 %v307, %v4738
    %v4740 = vand.u32 %v4739, 4294901760
    %v4741 = vsub.f32 %v4739, %v4740
    %v4742 = vand.u32 %v4741, 4294901760
    %4743 = vmatpush.xpose.msra.mxu0 %v4742
    %v4744 = vand.u32 %v303, 4294901760
    %v4745 = vsub.f32 %v303, %v4744
    %v4746 = vand.u32 %v4745, 4294901760
    %v4747 = vsub.f32 %v4745, %v4746
    %v4748 = vand.u32 %v4747, 4294901760
    %4749 = vmatpush.xpose.msra.mxu0 %v4748
    %v4750 = vand.u32 %v299, 4294901760
    %v4751 = vsub.f32 %v299, %v4750
    %v4752 = vand.u32 %v4751, 4294901760
    %v4753 = vsub.f32 %v4751, %v4752
    %v4754 = vand.u32 %v4753, 4294901760
    %4755 = vmatpush.xpose.msra.mxu0 %v4754
    %v4756 = vand.u32 %v295, 4294901760
    %v4757 = vsub.f32 %v295, %v4756
    %v4758 = vand.u32 %v4757, 4294901760
    %v4759 = vsub.f32 %v4757, %v4758
    %v4760 = vand.u32 %v4759, 4294901760
    %4761 = vmatpush.xpose.msra.mxu0 %v4760
    %v4762 = vand.u32 %v291, 4294901760
    %v4763 = vsub.f32 %v291, %v4762
    %v4764 = vand.u32 %v4763, 4294901760
    %v4765 = vsub.f32 %v4763, %v4764
    %v4766 = vand.u32 %v4765, 4294901760
    %4767 = vmatpush.xpose.msra.mxu0 %v4766
    %v4768 = vand.u32 %v287, 4294901760
    %v4769 = vsub.f32 %v287, %v4768
    %v4770 = vand.u32 %v4769, 4294901760
    %v4771 = vsub.f32 %v4769, %v4770
    %v4772 = vand.u32 %v4771, 4294901760
    %4773 = vmatpush.xpose.msra.mxu0 %v4772
    %v4774 = vand.u32 %v283, 4294901760
    %v4775 = vsub.f32 %v283, %v4774
    %v4776 = vand.u32 %v4775, 4294901760
    %v4777 = vsub.f32 %v4775, %v4776
    %v4778 = vand.u32 %v4777, 4294901760
    %4779 = vmatpush.xpose.msra.mxu0 %v4778
    %v4780 = vand.u32 %v279, 4294901760
    %v4781 = vsub.f32 %v279, %v4780
    %v4782 = vand.u32 %v4781, 4294901760
    %v4783 = vsub.f32 %v4781, %v4782
    %v4784 = vand.u32 %v4783, 4294901760
    %4785 = vmatpush.xpose.msra.mxu0 %v4784
    %v4786 = vand.u32 %v275, 4294901760
    %v4787 = vsub.f32 %v275, %v4786
    %v4788 = vand.u32 %v4787, 4294901760
    %v4789 = vsub.f32 %v4787, %v4788
    %v4790 = vand.u32 %v4789, 4294901760
    %4791 = vmatpush.xpose.msra.mxu0 %v4790
    %v4792 = vand.u32 %v271, 4294901760
    %v4793 = vsub.f32 %v271, %v4792
    %v4794 = vand.u32 %v4793, 4294901760
    %v4795 = vsub.f32 %v4793, %v4794
    %v4796 = vand.u32 %v4795, 4294901760
    %4797 = vmatpush.xpose.msra.mxu0 %v4796
    %v4798 = vand.u32 %v267, 4294901760
    %v4799 = vsub.f32 %v267, %v4798
    %v4800 = vand.u32 %v4799, 4294901760
    %v4801 = vsub.f32 %v4799, %v4800
    %v4802 = vand.u32 %v4801, 4294901760
    %4803 = vmatpush.xpose.msra.mxu0 %v4802
    %v4804 = vand.u32 %v263, 4294901760
    %v4805 = vsub.f32 %v263, %v4804
    %v4806 = vand.u32 %v4805, 4294901760
    %v4807 = vsub.f32 %v4805, %v4806
    %v4808 = vand.u32 %v4807, 4294901760
    %4809 = vmatpush.xpose.msra.mxu0 %v4808
    %v4810 = vand.u32 %v259, 4294901760
    %v4811 = vsub.f32 %v259, %v4810
    %v4812 = vand.u32 %v4811, 4294901760
    %v4813 = vsub.f32 %v4811, %v4812
    %v4814 = vand.u32 %v4813, 4294901760
    %4815 = vmatpush.xpose.msra.mxu0 %v4814
    %v4816 = vand.u32 %v255, 4294901760
    %v4817 = vsub.f32 %v255, %v4816
    %v4818 = vand.u32 %v4817, 4294901760
    %v4819 = vsub.f32 %v4817, %v4818
    %v4820 = vand.u32 %v4819, 4294901760
    %4821 = vmatpush.xpose.msra.mxu0 %v4820
    %v4822 = vand.u32 %v251, 4294901760
    %v4823 = vsub.f32 %v251, %v4822
    %v4824 = vand.u32 %v4823, 4294901760
    %v4825 = vsub.f32 %v4823, %v4824
    %v4826 = vand.u32 %v4825, 4294901760
    %4827 = vmatpush.xpose.msra.mxu0 %v4826
    %v4828 = vand.u32 %v591, 4294901760
    %4829 = vmatmul.f32.gmra.mxu0 %v4828
    %v4830 = vpop.f32.mrf.mxu0
    %v4831 = vadd.f32 %v4730, %v4830
    %4832 = vdwg.mxu0
    %v4833 = vand.u32 %v311, 4294901760
    %v4834 = vsub.f32 %v311, %v4833
    %4835 = vmatpush.xpose.msra.mxu0 %v4834
    %v4836 = vand.u32 %v307, 4294901760
    %v4837 = vsub.f32 %v307, %v4836
    %4838 = vmatpush.xpose.msra.mxu0 %v4837
    %v4839 = vand.u32 %v303, 4294901760
    %v4840 = vsub.f32 %v303, %v4839
    %4841 = vmatpush.xpose.msra.mxu0 %v4840
    %v4842 = vand.u32 %v299, 4294901760
    %v4843 = vsub.f32 %v299, %v4842
    %4844 = vmatpush.xpose.msra.mxu0 %v4843
    %v4845 = vand.u32 %v295, 4294901760
    %v4846 = vsub.f32 %v295, %v4845
    %4847 = vmatpush.xpose.msra.mxu0 %v4846
    %v4848 = vand.u32 %v291, 4294901760
    %v4849 = vsub.f32 %v291, %v4848
    %4850 = vmatpush.xpose.msra.mxu0 %v4849
    %v4851 = vand.u32 %v287, 4294901760
    %v4852 = vsub.f32 %v287, %v4851
    %4853 = vmatpush.xpose.msra.mxu0 %v4852
    %v4854 = vand.u32 %v283, 4294901760
    %v4855 = vsub.f32 %v283, %v4854
    %4856 = vmatpush.xpose.msra.mxu0 %v4855
    %v4857 = vand.u32 %v279, 4294901760
    %v4858 = vsub.f32 %v279, %v4857
    %4859 = vmatpush.xpose.msra.mxu0 %v4858
    %v4860 = vand.u32 %v275, 4294901760
    %v4861 = vsub.f32 %v275, %v4860
    %4862 = vmatpush.xpose.msra.mxu0 %v4861
    %v4863 = vand.u32 %v271, 4294901760
    %v4864 = vsub.f32 %v271, %v4863
    %4865 = vmatpush.xpose.msra.mxu0 %v4864
    %v4866 = vand.u32 %v267, 4294901760
    %v4867 = vsub.f32 %v267, %v4866
    %4868 = vmatpush.xpose.msra.mxu0 %v4867
    %v4869 = vand.u32 %v263, 4294901760
    %v4870 = vsub.f32 %v263, %v4869
    %4871 = vmatpush.xpose.msra.mxu0 %v4870
    %v4872 = vand.u32 %v259, 4294901760
    %v4873 = vsub.f32 %v259, %v4872
    %4874 = vmatpush.xpose.msra.mxu0 %v4873
    %v4875 = vand.u32 %v255, 4294901760
    %v4876 = vsub.f32 %v255, %v4875
    %4877 = vmatpush.xpose.msra.mxu0 %v4876
    %v4878 = vand.u32 %v251, 4294901760
    %v4879 = vsub.f32 %v251, %v4878
    %4880 = vmatpush.xpose.msra.mxu0 %v4879
    %v4881 = vand.u32 %v591, 4294901760
    %v4882 = vsub.f32 %v591, %v4881
    %4883 = vmatmul.f32.gmra.mxu0 %v4882
    %v4884 = vpop.f32.mrf.mxu0
    %v4885 = vadd.f32 %v4831, %v4884
    %4886 = vdwg.mxu0
    %v4887 = vand.u32 %v311, 4294901760
    %4888 = vmatpush.xpose.msra.mxu0 %v4887
    %v4889 = vand.u32 %v307, 4294901760
    %4890 = vmatpush.xpose.msra.mxu0 %v4889
    %v4891 = vand.u32 %v303, 4294901760
    %4892 = vmatpush.xpose.msra.mxu0 %v4891
    %v4893 = vand.u32 %v299, 4294901760
    %4894 = vmatpush.xpose.msra.mxu0 %v4893
    %v4895 = vand.u32 %v295, 4294901760
    %4896 = vmatpush.xpose.msra.mxu0 %v4895
    %v4897 = vand.u32 %v291, 4294901760
    %4898 = vmatpush.xpose.msra.mxu0 %v4897
    %v4899 = vand.u32 %v287, 4294901760
    %4900 = vmatpush.xpose.msra.mxu0 %v4899
    %v4901 = vand.u32 %v283, 4294901760
    %4902 = vmatpush.xpose.msra.mxu0 %v4901
    %v4903 = vand.u32 %v279, 4294901760
    %4904 = vmatpush.xpose.msra.mxu0 %v4903
    %v4905 = vand.u32 %v275, 4294901760
    %4906 = vmatpush.xpose.msra.mxu0 %v4905
    %v4907 = vand.u32 %v271, 4294901760
    %4908 = vmatpush.xpose.msra.mxu0 %v4907
    %v4909 = vand.u32 %v267, 4294901760
    %4910 = vmatpush.xpose.msra.mxu0 %v4909
    %v4911 = vand.u32 %v263, 4294901760
    %4912 = vmatpush.xpose.msra.mxu0 %v4911
    %v4913 = vand.u32 %v259, 4294901760
    %4914 = vmatpush.xpose.msra.mxu0 %v4913
    %v4915 = vand.u32 %v255, 4294901760
    %4916 = vmatpush.xpose.msra.mxu0 %v4915
    %v4917 = vand.u32 %v251, 4294901760
    %4918 = vmatpush.xpose.msra.mxu0 %v4917
    %v4919 = vand.u32 %v591, 4294901760
    %v4920 = vsub.f32 %v591, %v4919
    %v4921 = vand.u32 %v4920, 4294901760
    %4922 = vmatmul.f32.gmra.mxu0 %v4921
    %v4923 = vpop.f32.mrf.mxu0
    %v4924 = vadd.f32 %v4885, %v4923
    %4925 = vdwg.mxu0
    %v4926 = vand.u32 %v311, 4294901760
    %v4927 = vsub.f32 %v311, %v4926
    %v4928 = vand.u32 %v4927, 4294901760
    %4929 = vmatpush.xpose.msra.mxu0 %v4928
    %v4930 = vand.u32 %v307, 4294901760
    %v4931 = vsub.f32 %v307, %v4930
    %v4932 = vand.u32 %v4931, 4294901760
    %4933 = vmatpush.xpose.msra.mxu0 %v4932
    %v4934 = vand.u32 %v303, 4294901760
    %v4935 = vsub.f32 %v303, %v4934
    %v4936 = vand.u32 %v4935, 4294901760
    %4937 = vmatpush.xpose.msra.mxu0 %v4936
    %v4938 = vand.u32 %v299, 4294901760
    %v4939 = vsub.f32 %v299, %v4938
    %v4940 = vand.u32 %v4939, 4294901760
    %4941 = vmatpush.xpose.msra.mxu0 %v4940
    %v4942 = vand.u32 %v295, 4294901760
    %v4943 = vsub.f32 %v295, %v4942
    %v4944 = vand.u32 %v4943, 4294901760
    %4945 = vmatpush.xpose.msra.mxu0 %v4944
    %v4946 = vand.u32 %v291, 4294901760
    %v4947 = vsub.f32 %v291, %v4946
    %v4948 = vand.u32 %v4947, 4294901760
    %4949 = vmatpush.xpose.msra.mxu0 %v4948
    %v4950 = vand.u32 %v287, 4294901760
    %v4951 = vsub.f32 %v287, %v4950
    %v4952 = vand.u32 %v4951, 4294901760
    %4953 = vmatpush.xpose.msra.mxu0 %v4952
    %v4954 = vand.u32 %v283, 4294901760
    %v4955 = vsub.f32 %v283, %v4954
    %v4956 = vand.u32 %v4955, 4294901760
    %4957 = vmatpush.xpose.msra.mxu0 %v4956
    %v4958 = vand.u32 %v279, 4294901760
    %v4959 = vsub.f32 %v279, %v4958
    %v4960 = vand.u32 %v4959, 4294901760
    %4961 = vmatpush.xpose.msra.mxu0 %v4960
    %v4962 = vand.u32 %v275, 4294901760
    %v4963 = vsub.f32 %v275, %v4962
    %v4964 = vand.u32 %v4963, 4294901760
    %4965 = vmatpush.xpose.msra.mxu0 %v4964
    %v4966 = vand.u32 %v271, 4294901760
    %v4967 = vsub.f32 %v271, %v4966
    %v4968 = vand.u32 %v4967, 4294901760
    %4969 = vmatpush.xpose.msra.mxu0 %v4968
    %v4970 = vand.u32 %v267, 4294901760
    %v4971 = vsub.f32 %v267, %v4970
    %v4972 = vand.u32 %v4971, 4294901760
    %4973 = vmatpush.xpose.msra.mxu0 %v4972
    %v4974 = vand.u32 %v263, 4294901760
    %v4975 = vsub.f32 %v263, %v4974
    %v4976 = vand.u32 %v4975, 4294901760
    %4977 = vmatpush.xpose.msra.mxu0 %v4976
    %v4978 = vand.u32 %v259, 4294901760
    %v4979 = vsub.f32 %v259, %v4978
    %v4980 = vand.u32 %v4979, 4294901760
    %4981 = vmatpush.xpose.msra.mxu0 %v4980
    %v4982 = vand.u32 %v255, 4294901760
    %v4983 = vsub.f32 %v255, %v4982
    %v4984 = vand.u32 %v4983, 4294901760
    %4985 = vmatpush.xpose.msra.mxu0 %v4984
    %v4986 = vand.u32 %v251, 4294901760
    %v4987 = vsub.f32 %v251, %v4986
    %v4988 = vand.u32 %v4987, 4294901760
    %4989 = vmatpush.xpose.msra.mxu0 %v4988
    %v4990 = vand.u32 %v591, 4294901760
    %4991 = vmatmul.f32.gmra.mxu0 %v4990
    %v4992 = vpop.f32.mrf.mxu0
    %v4993 = vadd.f32 %v4924, %v4992
    %4994 = vdwg.mxu0
    %v4995 = vand.u32 %v311, 4294901760
    %4996 = vmatpush.xpose.msra.mxu0 %v4995
    %v4997 = vand.u32 %v307, 4294901760
    %4998 = vmatpush.xpose.msra.mxu0 %v4997
    %v4999 = vand.u32 %v303, 4294901760
    %5000 = vmatpush.xpose.msra.mxu0 %v4999
    %v5001 = vand.u32 %v299, 4294901760
    %5002 = vmatpush.xpose.msra.mxu0 %v5001
    %v5003 = vand.u32 %v295, 4294901760
    %5004 = vmatpush.xpose.msra.mxu0 %v5003
    %v5005 = vand.u32 %v291, 4294901760
    %5006 = vmatpush.xpose.msra.mxu0 %v5005
    %v5007 = vand.u32 %v287, 4294901760
    %5008 = vmatpush.xpose.msra.mxu0 %v5007
    %v5009 = vand.u32 %v283, 4294901760
    %5010 = vmatpush.xpose.msra.mxu0 %v5009
    %v5011 = vand.u32 %v279, 4294901760
    %5012 = vmatpush.xpose.msra.mxu0 %v5011
    %v5013 = vand.u32 %v275, 4294901760
    %5014 = vmatpush.xpose.msra.mxu0 %v5013
    %v5015 = vand.u32 %v271, 4294901760
    %5016 = vmatpush.xpose.msra.mxu0 %v5015
    %v5017 = vand.u32 %v267, 4294901760
    %5018 = vmatpush.xpose.msra.mxu0 %v5017
    %v5019 = vand.u32 %v263, 4294901760
    %5020 = vmatpush.xpose.msra.mxu0 %v5019
    %v5021 = vand.u32 %v259, 4294901760
    %5022 = vmatpush.xpose.msra.mxu0 %v5021
    %v5023 = vand.u32 %v255, 4294901760
    %5024 = vmatpush.xpose.msra.mxu0 %v5023
    %v5025 = vand.u32 %v251, 4294901760
    %5026 = vmatpush.xpose.msra.mxu0 %v5025
    %v5027 = vand.u32 %v591, 4294901760
    %5028 = vmatmul.f32.gmra.mxu0 %v5027
    %v5029 = vpop.f32.mrf.mxu0
    %v5030 = vadd.f32 %v4993, %v5029
    %5031 = vdwg.mxu0
    %v5032 = vand.u32 %v312, 4294901760
    %5033 = vmatpush.xpose.msra.mxu0 %v5032
    %v5034 = vand.u32 %v308, 4294901760
    %5035 = vmatpush.xpose.msra.mxu0 %v5034
    %v5036 = vand.u32 %v304, 4294901760
    %5037 = vmatpush.xpose.msra.mxu0 %v5036
    %v5038 = vand.u32 %v300, 4294901760
    %5039 = vmatpush.xpose.msra.mxu0 %v5038
    %v5040 = vand.u32 %v296, 4294901760
    %5041 = vmatpush.xpose.msra.mxu0 %v5040
    %v5042 = vand.u32 %v292, 4294901760
    %5043 = vmatpush.xpose.msra.mxu0 %v5042
    %v5044 = vand.u32 %v288, 4294901760
    %5045 = vmatpush.xpose.msra.mxu0 %v5044
    %v5046 = vand.u32 %v284, 4294901760
    %5047 = vmatpush.xpose.msra.mxu0 %v5046
    %v5048 = vand.u32 %v280, 4294901760
    %5049 = vmatpush.xpose.msra.mxu0 %v5048
    %v5050 = vand.u32 %v276, 4294901760
    %5051 = vmatpush.xpose.msra.mxu0 %v5050
    %v5052 = vand.u32 %v272, 4294901760
    %5053 = vmatpush.xpose.msra.mxu0 %v5052
    %v5054 = vand.u32 %v268, 4294901760
    %5055 = vmatpush.xpose.msra.mxu0 %v5054
    %v5056 = vand.u32 %v264, 4294901760
    %5057 = vmatpush.xpose.msra.mxu0 %v5056
    %v5058 = vand.u32 %v260, 4294901760
    %5059 = vmatpush.xpose.msra.mxu0 %v5058
    %v5060 = vand.u32 %v256, 4294901760
    %5061 = vmatpush.xpose.msra.mxu0 %v5060
    %v5062 = vand.u32 %v252, 4294901760
    %5063 = vmatpush.xpose.msra.mxu0 %v5062
    %v5064 = vand.u32 %v592, 4294901760
    %v5065 = vsub.f32 %v592, %v5064
    %v5066 = vand.u32 %v5065, 4294901760
    %v5067 = vsub.f32 %v5065, %v5066
    %v5068 = vand.u32 %v5067, 4294901760
    %5069 = vmatmul.f32.gmra.mxu0 %v5068
    %v5070 = vpop.f32.mrf.mxu0
    %v5071 = vadd.f32 %v5030, %v5070
    %5072 = vdwg.mxu0
    %v5073 = vand.u32 %v312, 4294901760
    %v5074 = vsub.f32 %v312, %v5073
    %v5075 = vand.u32 %v5074, 4294901760
    %v5076 = vsub.f32 %v5074, %v5075
    %v5077 = vand.u32 %v5076, 4294901760
    %5078 = vmatpush.xpose.msra.mxu0 %v5077
    %v5079 = vand.u32 %v308, 4294901760
    %v5080 = vsub.f32 %v308, %v5079
    %v5081 = vand.u32 %v5080, 4294901760
    %v5082 = vsub.f32 %v5080, %v5081
    %v5083 = vand.u32 %v5082, 4294901760
    %5084 = vmatpush.xpose.msra.mxu0 %v5083
    %v5085 = vand.u32 %v304, 4294901760
    %v5086 = vsub.f32 %v304, %v5085
    %v5087 = vand.u32 %v5086, 4294901760
    %v5088 = vsub.f32 %v5086, %v5087
    %v5089 = vand.u32 %v5088, 4294901760
    %5090 = vmatpush.xpose.msra.mxu0 %v5089
    %v5091 = vand.u32 %v300, 4294901760
    %v5092 = vsub.f32 %v300, %v5091
    %v5093 = vand.u32 %v5092, 4294901760
    %v5094 = vsub.f32 %v5092, %v5093
    %v5095 = vand.u32 %v5094, 4294901760
    %5096 = vmatpush.xpose.msra.mxu0 %v5095
    %v5097 = vand.u32 %v296, 4294901760
    %v5098 = vsub.f32 %v296, %v5097
    %v5099 = vand.u32 %v5098, 4294901760
    %v5100 = vsub.f32 %v5098, %v5099
    %v5101 = vand.u32 %v5100, 4294901760
    %5102 = vmatpush.xpose.msra.mxu0 %v5101
    %v5103 = vand.u32 %v292, 4294901760
    %v5104 = vsub.f32 %v292, %v5103
    %v5105 = vand.u32 %v5104, 4294901760
    %v5106 = vsub.f32 %v5104, %v5105
    %v5107 = vand.u32 %v5106, 4294901760
    %5108 = vmatpush.xpose.msra.mxu0 %v5107
    %v5109 = vand.u32 %v288, 4294901760
    %v5110 = vsub.f32 %v288, %v5109
    %v5111 = vand.u32 %v5110, 4294901760
    %v5112 = vsub.f32 %v5110, %v5111
    %v5113 = vand.u32 %v5112, 4294901760
    %5114 = vmatpush.xpose.msra.mxu0 %v5113
    %v5115 = vand.u32 %v284, 4294901760
    %v5116 = vsub.f32 %v284, %v5115
    %v5117 = vand.u32 %v5116, 4294901760
    %v5118 = vsub.f32 %v5116, %v5117
    %v5119 = vand.u32 %v5118, 4294901760
    %5120 = vmatpush.xpose.msra.mxu0 %v5119
    %v5121 = vand.u32 %v280, 4294901760
    %v5122 = vsub.f32 %v280, %v5121
    %v5123 = vand.u32 %v5122, 4294901760
    %v5124 = vsub.f32 %v5122, %v5123
    %v5125 = vand.u32 %v5124, 4294901760
    %5126 = vmatpush.xpose.msra.mxu0 %v5125
    %v5127 = vand.u32 %v276, 4294901760
    %v5128 = vsub.f32 %v276, %v5127
    %v5129 = vand.u32 %v5128, 4294901760
    %v5130 = vsub.f32 %v5128, %v5129
    %v5131 = vand.u32 %v5130, 4294901760
    %5132 = vmatpush.xpose.msra.mxu0 %v5131
    %v5133 = vand.u32 %v272, 4294901760
    %v5134 = vsub.f32 %v272, %v5133
    %v5135 = vand.u32 %v5134, 4294901760
    %v5136 = vsub.f32 %v5134, %v5135
    %v5137 = vand.u32 %v5136, 4294901760
    %5138 = vmatpush.xpose.msra.mxu0 %v5137
    %v5139 = vand.u32 %v268, 4294901760
    %v5140 = vsub.f32 %v268, %v5139
    %v5141 = vand.u32 %v5140, 4294901760
    %v5142 = vsub.f32 %v5140, %v5141
    %v5143 = vand.u32 %v5142, 4294901760
    %5144 = vmatpush.xpose.msra.mxu0 %v5143
    %v5145 = vand.u32 %v264, 4294901760
    %v5146 = vsub.f32 %v264, %v5145
    %v5147 = vand.u32 %v5146, 4294901760
    %v5148 = vsub.f32 %v5146, %v5147
    %v5149 = vand.u32 %v5148, 4294901760
    %5150 = vmatpush.xpose.msra.mxu0 %v5149
    %v5151 = vand.u32 %v260, 4294901760
    %v5152 = vsub.f32 %v260, %v5151
    %v5153 = vand.u32 %v5152, 4294901760
    %v5154 = vsub.f32 %v5152, %v5153
    %v5155 = vand.u32 %v5154, 4294901760
    %5156 = vmatpush.xpose.msra.mxu0 %v5155
    %v5157 = vand.u32 %v256, 4294901760
    %v5158 = vsub.f32 %v256, %v5157
    %v5159 = vand.u32 %v5158, 4294901760
    %v5160 = vsub.f32 %v5158, %v5159
    %v5161 = vand.u32 %v5160, 4294901760
    %5162 = vmatpush.xpose.msra.mxu0 %v5161
    %v5163 = vand.u32 %v252, 4294901760
    %v5164 = vsub.f32 %v252, %v5163
    %v5165 = vand.u32 %v5164, 4294901760
    %v5166 = vsub.f32 %v5164, %v5165
    %v5167 = vand.u32 %v5166, 4294901760
    %5168 = vmatpush.xpose.msra.mxu0 %v5167
    %v5169 = vand.u32 %v592, 4294901760
    %5170 = vmatmul.f32.gmra.mxu0 %v5169
    %v5171 = vpop.f32.mrf.mxu0
    %v5172 = vadd.f32 %v5071, %v5171
    %5173 = vdwg.mxu0
    %v5174 = vand.u32 %v312, 4294901760
    %v5175 = vsub.f32 %v312, %v5174
    %5176 = vmatpush.xpose.msra.mxu0 %v5175
    %v5177 = vand.u32 %v308, 4294901760
    %v5178 = vsub.f32 %v308, %v5177
    %5179 = vmatpush.xpose.msra.mxu0 %v5178
    %v5180 = vand.u32 %v304, 4294901760
    %v5181 = vsub.f32 %v304, %v5180
    %5182 = vmatpush.xpose.msra.mxu0 %v5181
    %v5183 = vand.u32 %v300, 4294901760
    %v5184 = vsub.f32 %v300, %v5183
    %5185 = vmatpush.xpose.msra.mxu0 %v5184
    %v5186 = vand.u32 %v296, 4294901760
    %v5187 = vsub.f32 %v296, %v5186
    %5188 = vmatpush.xpose.msra.mxu0 %v5187
    %v5189 = vand.u32 %v292, 4294901760
    %v5190 = vsub.f32 %v292, %v5189
    %5191 = vmatpush.xpose.msra.mxu0 %v5190
    %v5192 = vand.u32 %v288, 4294901760
    %v5193 = vsub.f32 %v288, %v5192
    %5194 = vmatpush.xpose.msra.mxu0 %v5193
    %v5195 = vand.u32 %v284, 4294901760
    %v5196 = vsub.f32 %v284, %v5195
    %5197 = vmatpush.xpose.msra.mxu0 %v5196
    %v5198 = vand.u32 %v280, 4294901760
    %v5199 = vsub.f32 %v280, %v5198
    %5200 = vmatpush.xpose.msra.mxu0 %v5199
    %v5201 = vand.u32 %v276, 4294901760
    %v5202 = vsub.f32 %v276, %v5201
    %5203 = vmatpush.xpose.msra.mxu0 %v5202
    %v5204 = vand.u32 %v272, 4294901760
    %v5205 = vsub.f32 %v272, %v5204
    %5206 = vmatpush.xpose.msra.mxu0 %v5205
    %v5207 = vand.u32 %v268, 4294901760
    %v5208 = vsub.f32 %v268, %v5207
    %5209 = vmatpush.xpose.msra.mxu0 %v5208
    %v5210 = vand.u32 %v264, 4294901760
    %v5211 = vsub.f32 %v264, %v5210
    %5212 = vmatpush.xpose.msra.mxu0 %v5211
    %v5213 = vand.u32 %v260, 4294901760
    %v5214 = vsub.f32 %v260, %v5213
    %5215 = vmatpush.xpose.msra.mxu0 %v5214
    %v5216 = vand.u32 %v256, 4294901760
    %v5217 = vsub.f32 %v256, %v5216
    %5218 = vmatpush.xpose.msra.mxu0 %v5217
    %v5219 = vand.u32 %v252, 4294901760
    %v5220 = vsub.f32 %v252, %v5219
    %5221 = vmatpush.xpose.msra.mxu0 %v5220
    %v5222 = vand.u32 %v592, 4294901760
    %v5223 = vsub.f32 %v592, %v5222
    %5224 = vmatmul.f32.gmra.mxu0 %v5223
    %v5225 = vpop.f32.mrf.mxu0
    %v5226 = vadd.f32 %v5172, %v5225
    %5227 = vdwg.mxu0
    %v5228 = vand.u32 %v312, 4294901760
    %5229 = vmatpush.xpose.msra.mxu0 %v5228
    %v5230 = vand.u32 %v308, 4294901760
    %5231 = vmatpush.xpose.msra.mxu0 %v5230
    %v5232 = vand.u32 %v304, 4294901760
    %5233 = vmatpush.xpose.msra.mxu0 %v5232
    %v5234 = vand.u32 %v300, 4294901760
    %5235 = vmatpush.xpose.msra.mxu0 %v5234
    %v5236 = vand.u32 %v296, 4294901760
    %5237 = vmatpush.xpose.msra.mxu0 %v5236
    %v5238 = vand.u32 %v292, 4294901760
    %5239 = vmatpush.xpose.msra.mxu0 %v5238
    %v5240 = vand.u32 %v288, 4294901760
    %5241 = vmatpush.xpose.msra.mxu0 %v5240
    %v5242 = vand.u32 %v284, 4294901760
    %5243 = vmatpush.xpose.msra.mxu0 %v5242
    %v5244 = vand.u32 %v280, 4294901760
    %5245 = vmatpush.xpose.msra.mxu0 %v5244
    %v5246 = vand.u32 %v276, 4294901760
    %5247 = vmatpush.xpose.msra.mxu0 %v5246
    %v5248 = vand.u32 %v272, 4294901760
    %5249 = vmatpush.xpose.msra.mxu0 %v5248
    %v5250 = vand.u32 %v268, 4294901760
    %5251 = vmatpush.xpose.msra.mxu0 %v5250
    %v5252 = vand.u32 %v264, 4294901760
    %5253 = vmatpush.xpose.msra.mxu0 %v5252
    %v5254 = vand.u32 %v260, 4294901760
    %5255 = vmatpush.xpose.msra.mxu0 %v5254
    %v5256 = vand.u32 %v256, 4294901760
    %5257 = vmatpush.xpose.msra.mxu0 %v5256
    %v5258 = vand.u32 %v252, 4294901760
    %5259 = vmatpush.xpose.msra.mxu0 %v5258
    %v5260 = vand.u32 %v592, 4294901760
    %v5261 = vsub.f32 %v592, %v5260
    %v5262 = vand.u32 %v5261, 4294901760
    %5263 = vmatmul.f32.gmra.mxu0 %v5262
    %v5264 = vpop.f32.mrf.mxu0
    %v5265 = vadd.f32 %v5226, %v5264
    %5266 = vdwg.mxu0
    %v5267 = vand.u32 %v312, 4294901760
    %v5268 = vsub.f32 %v312, %v5267
    %v5269 = vand.u32 %v5268, 4294901760
    %5270 = vmatpush.xpose.msra.mxu0 %v5269
    %v5271 = vand.u32 %v308, 4294901760
    %v5272 = vsub.f32 %v308, %v5271
    %v5273 = vand.u32 %v5272, 4294901760
    %5274 = vmatpush.xpose.msra.mxu0 %v5273
    %v5275 = vand.u32 %v304, 4294901760
    %v5276 = vsub.f32 %v304, %v5275
    %v5277 = vand.u32 %v5276, 4294901760
    %5278 = vmatpush.xpose.msra.mxu0 %v5277
    %v5279 = vand.u32 %v300, 4294901760
    %v5280 = vsub.f32 %v300, %v5279
    %v5281 = vand.u32 %v5280, 4294901760
    %5282 = vmatpush.xpose.msra.mxu0 %v5281
    %v5283 = vand.u32 %v296, 4294901760
    %v5284 = vsub.f32 %v296, %v5283
    %v5285 = vand.u32 %v5284, 4294901760
    %5286 = vmatpush.xpose.msra.mxu0 %v5285
    %v5287 = vand.u32 %v292, 4294901760
    %v5288 = vsub.f32 %v292, %v5287
    %v5289 = vand.u32 %v5288, 4294901760
    %5290 = vmatpush.xpose.msra.mxu0 %v5289
    %v5291 = vand.u32 %v288, 4294901760
    %v5292 = vsub.f32 %v288, %v5291
    %v5293 = vand.u32 %v5292, 4294901760
    %5294 = vmatpush.xpose.msra.mxu0 %v5293
    %v5295 = vand.u32 %v284, 4294901760
    %v5296 = vsub.f32 %v284, %v5295
    %v5297 = vand.u32 %v5296, 4294901760
    %5298 = vmatpush.xpose.msra.mxu0 %v5297
    %v5299 = vand.u32 %v280, 4294901760
    %v5300 = vsub.f32 %v280, %v5299
    %v5301 = vand.u32 %v5300, 4294901760
    %5302 = vmatpush.xpose.msra.mxu0 %v5301
    %v5303 = vand.u32 %v276, 4294901760
    %v5304 = vsub.f32 %v276, %v5303
    %v5305 = vand.u32 %v5304, 4294901760
    %5306 = vmatpush.xpose.msra.mxu0 %v5305
    %v5307 = vand.u32 %v272, 4294901760
    %v5308 = vsub.f32 %v272, %v5307
    %v5309 = vand.u32 %v5308, 4294901760
    %5310 = vmatpush.xpose.msra.mxu0 %v5309
    %v5311 = vand.u32 %v268, 4294901760
    %v5312 = vsub.f32 %v268, %v5311
    %v5313 = vand.u32 %v5312, 4294901760
    %5314 = vmatpush.xpose.msra.mxu0 %v5313
    %v5315 = vand.u32 %v264, 4294901760
    %v5316 = vsub.f32 %v264, %v5315
    %v5317 = vand.u32 %v5316, 4294901760
    %5318 = vmatpush.xpose.msra.mxu0 %v5317
    %v5319 = vand.u32 %v260, 4294901760
    %v5320 = vsub.f32 %v260, %v5319
    %v5321 = vand.u32 %v5320, 4294901760
    %5322 = vmatpush.xpose.msra.mxu0 %v5321
    %v5323 = vand.u32 %v256, 4294901760
    %v5324 = vsub.f32 %v256, %v5323
    %v5325 = vand.u32 %v5324, 4294901760
    %5326 = vmatpush.xpose.msra.mxu0 %v5325
    %v5327 = vand.u32 %v252, 4294901760
    %v5328 = vsub.f32 %v252, %v5327
    %v5329 = vand.u32 %v5328, 4294901760
    %5330 = vmatpush.xpose.msra.mxu0 %v5329
    %v5331 = vand.u32 %v592, 4294901760
    %5332 = vmatmul.f32.gmra.mxu0 %v5331
    %v5333 = vpop.f32.mrf.mxu0
    %v5334 = vadd.f32 %v5265, %v5333
    %5335 = vdwg.mxu0
    %v5336 = vand.u32 %v312, 4294901760
    %5337 = vmatpush.xpose.msra.mxu0 %v5336
    %v5338 = vand.u32 %v308, 4294901760
    %5339 = vmatpush.xpose.msra.mxu0 %v5338
    %v5340 = vand.u32 %v304, 4294901760
    %5341 = vmatpush.xpose.msra.mxu0 %v5340
    %v5342 = vand.u32 %v300, 4294901760
    %5343 = vmatpush.xpose.msra.mxu0 %v5342
    %v5344 = vand.u32 %v296, 4294901760
    %5345 = vmatpush.xpose.msra.mxu0 %v5344
    %v5346 = vand.u32 %v292, 4294901760
    %5347 = vmatpush.xpose.msra.mxu0 %v5346
    %v5348 = vand.u32 %v288, 4294901760
    %5349 = vmatpush.xpose.msra.mxu0 %v5348
    %v5350 = vand.u32 %v284, 4294901760
    %5351 = vmatpush.xpose.msra.mxu0 %v5350
    %v5352 = vand.u32 %v280, 4294901760
    %5353 = vmatpush.xpose.msra.mxu0 %v5352
    %v5354 = vand.u32 %v276, 4294901760
    %5355 = vmatpush.xpose.msra.mxu0 %v5354
    %v5356 = vand.u32 %v272, 4294901760
    %5357 = vmatpush.xpose.msra.mxu0 %v5356
    %v5358 = vand.u32 %v268, 4294901760
    %5359 = vmatpush.xpose.msra.mxu0 %v5358
    %v5360 = vand.u32 %v264, 4294901760
    %5361 = vmatpush.xpose.msra.mxu0 %v5360
    %v5362 = vand.u32 %v260, 4294901760
    %5363 = vmatpush.xpose.msra.mxu0 %v5362
    %v5364 = vand.u32 %v256, 4294901760
    %5365 = vmatpush.xpose.msra.mxu0 %v5364
    %v5366 = vand.u32 %v252, 4294901760
    %5367 = vmatpush.xpose.msra.mxu0 %v5366
    %v5368 = vand.u32 %v592, 4294901760
    %5369 = vmatmul.f32.gmra.mxu0 %v5368
    %v5370 = vpop.f32.mrf.mxu0
    %v5371 = vadd.f32 %v5334, %v5370
    %5372 = vdwg.mxu0
    %v5373 = vand.u32 %v313, 4294901760
    %5374 = vmatpush.xpose.msra.mxu0 %v5373
    %v5375 = vand.u32 %v309, 4294901760
    %5376 = vmatpush.xpose.msra.mxu0 %v5375
    %v5377 = vand.u32 %v305, 4294901760
    %5378 = vmatpush.xpose.msra.mxu0 %v5377
    %v5379 = vand.u32 %v301, 4294901760
    %5380 = vmatpush.xpose.msra.mxu0 %v5379
    %v5381 = vand.u32 %v297, 4294901760
    %5382 = vmatpush.xpose.msra.mxu0 %v5381
    %v5383 = vand.u32 %v293, 4294901760
    %5384 = vmatpush.xpose.msra.mxu0 %v5383
    %v5385 = vand.u32 %v289, 4294901760
    %5386 = vmatpush.xpose.msra.mxu0 %v5385
    %v5387 = vand.u32 %v285, 4294901760
    %5388 = vmatpush.xpose.msra.mxu0 %v5387
    %v5389 = vand.u32 %v281, 4294901760
    %5390 = vmatpush.xpose.msra.mxu0 %v5389
    %v5391 = vand.u32 %v277, 4294901760
    %5392 = vmatpush.xpose.msra.mxu0 %v5391
    %v5393 = vand.u32 %v273, 4294901760
    %5394 = vmatpush.xpose.msra.mxu0 %v5393
    %v5395 = vand.u32 %v269, 4294901760
    %5396 = vmatpush.xpose.msra.mxu0 %v5395
    %v5397 = vand.u32 %v265, 4294901760
    %5398 = vmatpush.xpose.msra.mxu0 %v5397
    %v5399 = vand.u32 %v261, 4294901760
    %5400 = vmatpush.xpose.msra.mxu0 %v5399
    %v5401 = vand.u32 %v257, 4294901760
    %5402 = vmatpush.xpose.msra.mxu0 %v5401
    %v5403 = vand.u32 %v253, 4294901760
    %5404 = vmatpush.xpose.msra.mxu0 %v5403
    %v5405 = vand.u32 %v593, 4294901760
    %v5406 = vsub.f32 %v593, %v5405
    %v5407 = vand.u32 %v5406, 4294901760
    %v5408 = vsub.f32 %v5406, %v5407
    %v5409 = vand.u32 %v5408, 4294901760
    %5410 = vmatmul.f32.gmra.mxu0 %v5409
    %v5411 = vpop.f32.mrf.mxu0
    %v5412 = vadd.f32 %v5371, %v5411
    %5413 = vdwg.mxu0
    %v5414 = vand.u32 %v313, 4294901760
    %v5415 = vsub.f32 %v313, %v5414
    %v5416 = vand.u32 %v5415, 4294901760
    %v5417 = vsub.f32 %v5415, %v5416
    %v5418 = vand.u32 %v5417, 4294901760
    %5419 = vmatpush.xpose.msra.mxu0 %v5418
    %v5420 = vand.u32 %v309, 4294901760
    %v5421 = vsub.f32 %v309, %v5420
    %v5422 = vand.u32 %v5421, 4294901760
    %v5423 = vsub.f32 %v5421, %v5422
    %v5424 = vand.u32 %v5423, 4294901760
    %5425 = vmatpush.xpose.msra.mxu0 %v5424
    %v5426 = vand.u32 %v305, 4294901760
    %v5427 = vsub.f32 %v305, %v5426
    %v5428 = vand.u32 %v5427, 4294901760
    %v5429 = vsub.f32 %v5427, %v5428
    %v5430 = vand.u32 %v5429, 4294901760
    %5431 = vmatpush.xpose.msra.mxu0 %v5430
    %v5432 = vand.u32 %v301, 4294901760
    %v5433 = vsub.f32 %v301, %v5432
    %v5434 = vand.u32 %v5433, 4294901760
    %v5435 = vsub.f32 %v5433, %v5434
    %v5436 = vand.u32 %v5435, 4294901760
    %5437 = vmatpush.xpose.msra.mxu0 %v5436
    %v5438 = vand.u32 %v297, 4294901760
    %v5439 = vsub.f32 %v297, %v5438
    %v5440 = vand.u32 %v5439, 4294901760
    %v5441 = vsub.f32 %v5439, %v5440
    %v5442 = vand.u32 %v5441, 4294901760
    %5443 = vmatpush.xpose.msra.mxu0 %v5442
    %v5444 = vand.u32 %v293, 4294901760
    %v5445 = vsub.f32 %v293, %v5444
    %v5446 = vand.u32 %v5445, 4294901760
    %v5447 = vsub.f32 %v5445, %v5446
    %v5448 = vand.u32 %v5447, 4294901760
    %5449 = vmatpush.xpose.msra.mxu0 %v5448
    %v5450 = vand.u32 %v289, 4294901760
    %v5451 = vsub.f32 %v289, %v5450
    %v5452 = vand.u32 %v5451, 4294901760
    %v5453 = vsub.f32 %v5451, %v5452
    %v5454 = vand.u32 %v5453, 4294901760
    %5455 = vmatpush.xpose.msra.mxu0 %v5454
    %v5456 = vand.u32 %v285, 4294901760
    %v5457 = vsub.f32 %v285, %v5456
    %v5458 = vand.u32 %v5457, 4294901760
    %v5459 = vsub.f32 %v5457, %v5458
    %v5460 = vand.u32 %v5459, 4294901760
    %5461 = vmatpush.xpose.msra.mxu0 %v5460
    %v5462 = vand.u32 %v281, 4294901760
    %v5463 = vsub.f32 %v281, %v5462
    %v5464 = vand.u32 %v5463, 4294901760
    %v5465 = vsub.f32 %v5463, %v5464
    %v5466 = vand.u32 %v5465, 4294901760
    %5467 = vmatpush.xpose.msra.mxu0 %v5466
    %v5468 = vand.u32 %v277, 4294901760
    %v5469 = vsub.f32 %v277, %v5468
    %v5470 = vand.u32 %v5469, 4294901760
    %v5471 = vsub.f32 %v5469, %v5470
    %v5472 = vand.u32 %v5471, 4294901760
    %5473 = vmatpush.xpose.msra.mxu0 %v5472
    %v5474 = vand.u32 %v273, 4294901760
    %v5475 = vsub.f32 %v273, %v5474
    %v5476 = vand.u32 %v5475, 4294901760
    %v5477 = vsub.f32 %v5475, %v5476
    %v5478 = vand.u32 %v5477, 4294901760
    %5479 = vmatpush.xpose.msra.mxu0 %v5478
    %v5480 = vand.u32 %v269, 4294901760
    %v5481 = vsub.f32 %v269, %v5480
    %v5482 = vand.u32 %v5481, 4294901760
    %v5483 = vsub.f32 %v5481, %v5482
    %v5484 = vand.u32 %v5483, 4294901760
    %5485 = vmatpush.xpose.msra.mxu0 %v5484
    %v5486 = vand.u32 %v265, 4294901760
    %v5487 = vsub.f32 %v265, %v5486
    %v5488 = vand.u32 %v5487, 4294901760
    %v5489 = vsub.f32 %v5487, %v5488
    %v5490 = vand.u32 %v5489, 4294901760
    %5491 = vmatpush.xpose.msra.mxu0 %v5490
    %v5492 = vand.u32 %v261, 4294901760
    %v5493 = vsub.f32 %v261, %v5492
    %v5494 = vand.u32 %v5493, 4294901760
    %v5495 = vsub.f32 %v5493, %v5494
    %v5496 = vand.u32 %v5495, 4294901760
    %5497 = vmatpush.xpose.msra.mxu0 %v5496
    %v5498 = vand.u32 %v257, 4294901760
    %v5499 = vsub.f32 %v257, %v5498
    %v5500 = vand.u32 %v5499, 4294901760
    %v5501 = vsub.f32 %v5499, %v5500
    %v5502 = vand.u32 %v5501, 4294901760
    %5503 = vmatpush.xpose.msra.mxu0 %v5502
    %v5504 = vand.u32 %v253, 4294901760
    %v5505 = vsub.f32 %v253, %v5504
    %v5506 = vand.u32 %v5505, 4294901760
    %v5507 = vsub.f32 %v5505, %v5506
    %v5508 = vand.u32 %v5507, 4294901760
    %5509 = vmatpush.xpose.msra.mxu0 %v5508
    %v5510 = vand.u32 %v593, 4294901760
    %5511 = vmatmul.f32.gmra.mxu0 %v5510
    %v5512 = vpop.f32.mrf.mxu0
    %v5513 = vadd.f32 %v5412, %v5512
    %5514 = vdwg.mxu0
    %v5515 = vand.u32 %v313, 4294901760
    %v5516 = vsub.f32 %v313, %v5515
    %5517 = vmatpush.xpose.msra.mxu0 %v5516
    %v5518 = vand.u32 %v309, 4294901760
    %v5519 = vsub.f32 %v309, %v5518
    %5520 = vmatpush.xpose.msra.mxu0 %v5519
    %v5521 = vand.u32 %v305, 4294901760
    %v5522 = vsub.f32 %v305, %v5521
    %5523 = vmatpush.xpose.msra.mxu0 %v5522
    %v5524 = vand.u32 %v301, 4294901760
    %v5525 = vsub.f32 %v301, %v5524
    %5526 = vmatpush.xpose.msra.mxu0 %v5525
    %v5527 = vand.u32 %v297, 4294901760
    %v5528 = vsub.f32 %v297, %v5527
    %5529 = vmatpush.xpose.msra.mxu0 %v5528
    %v5530 = vand.u32 %v293, 4294901760
    %v5531 = vsub.f32 %v293, %v5530
    %5532 = vmatpush.xpose.msra.mxu0 %v5531
    %v5533 = vand.u32 %v289, 4294901760
    %v5534 = vsub.f32 %v289, %v5533
    %5535 = vmatpush.xpose.msra.mxu0 %v5534
    %v5536 = vand.u32 %v285, 4294901760
    %v5537 = vsub.f32 %v285, %v5536
    %5538 = vmatpush.xpose.msra.mxu0 %v5537
    %v5539 = vand.u32 %v281, 4294901760
    %v5540 = vsub.f32 %v281, %v5539
    %5541 = vmatpush.xpose.msra.mxu0 %v5540
    %v5542 = vand.u32 %v277, 4294901760
    %v5543 = vsub.f32 %v277, %v5542
    %5544 = vmatpush.xpose.msra.mxu0 %v5543
    %v5545 = vand.u32 %v273, 4294901760
    %v5546 = vsub.f32 %v273, %v5545
    %5547 = vmatpush.xpose.msra.mxu0 %v5546
    %v5548 = vand.u32 %v269, 4294901760
    %v5549 = vsub.f32 %v269, %v5548
    %5550 = vmatpush.xpose.msra.mxu0 %v5549
    %v5551 = vand.u32 %v265, 4294901760
    %v5552 = vsub.f32 %v265, %v5551
    %5553 = vmatpush.xpose.msra.mxu0 %v5552
    %v5554 = vand.u32 %v261, 4294901760
    %v5555 = vsub.f32 %v261, %v5554
    %5556 = vmatpush.xpose.msra.mxu0 %v5555
    %v5557 = vand.u32 %v257, 4294901760
    %v5558 = vsub.f32 %v257, %v5557
    %5559 = vmatpush.xpose.msra.mxu0 %v5558
    %v5560 = vand.u32 %v253, 4294901760
    %v5561 = vsub.f32 %v253, %v5560
    %5562 = vmatpush.xpose.msra.mxu0 %v5561
    %v5563 = vand.u32 %v593, 4294901760
    %v5564 = vsub.f32 %v593, %v5563
    %5565 = vmatmul.f32.gmra.mxu0 %v5564
    %v5566 = vpop.f32.mrf.mxu0
    %v5567 = vadd.f32 %v5513, %v5566
    %5568 = vdwg.mxu0
    %v5569 = vand.u32 %v313, 4294901760
    %5570 = vmatpush.xpose.msra.mxu0 %v5569
    %v5571 = vand.u32 %v309, 4294901760
    %5572 = vmatpush.xpose.msra.mxu0 %v5571
    %v5573 = vand.u32 %v305, 4294901760
    %5574 = vmatpush.xpose.msra.mxu0 %v5573
    %v5575 = vand.u32 %v301, 4294901760
    %5576 = vmatpush.xpose.msra.mxu0 %v5575
    %v5577 = vand.u32 %v297, 4294901760
    %5578 = vmatpush.xpose.msra.mxu0 %v5577
    %v5579 = vand.u32 %v293, 4294901760
    %5580 = vmatpush.xpose.msra.mxu0 %v5579
    %v5581 = vand.u32 %v289, 4294901760
    %5582 = vmatpush.xpose.msra.mxu0 %v5581
    %v5583 = vand.u32 %v285, 4294901760
    %5584 = vmatpush.xpose.msra.mxu0 %v5583
    %v5585 = vand.u32 %v281, 4294901760
    %5586 = vmatpush.xpose.msra.mxu0 %v5585
    %v5587 = vand.u32 %v277, 4294901760
    %5588 = vmatpush.xpose.msra.mxu0 %v5587
    %v5589 = vand.u32 %v273, 4294901760
    %5590 = vmatpush.xpose.msra.mxu0 %v5589
    %v5591 = vand.u32 %v269, 4294901760
    %5592 = vmatpush.xpose.msra.mxu0 %v5591
    %v5593 = vand.u32 %v265, 4294901760
    %5594 = vmatpush.xpose.msra.mxu0 %v5593
    %v5595 = vand.u32 %v261, 4294901760
    %5596 = vmatpush.xpose.msra.mxu0 %v5595
    %v5597 = vand.u32 %v257, 4294901760
    %5598 = vmatpush.xpose.msra.mxu0 %v5597
    %v5599 = vand.u32 %v253, 4294901760
    %5600 = vmatpush.xpose.msra.mxu0 %v5599
    %v5601 = vand.u32 %v593, 4294901760
    %v5602 = vsub.f32 %v593, %v5601
    %v5603 = vand.u32 %v5602, 4294901760
    %5604 = vmatmul.f32.gmra.mxu0 %v5603
    %v5605 = vpop.f32.mrf.mxu0
    %v5606 = vadd.f32 %v5567, %v5605
    %5607 = vdwg.mxu0
    %v5608 = vand.u32 %v313, 4294901760
    %v5609 = vsub.f32 %v313, %v5608
    %v5610 = vand.u32 %v5609, 4294901760
    %5611 = vmatpush.xpose.msra.mxu0 %v5610
    %v5612 = vand.u32 %v309, 4294901760
    %v5613 = vsub.f32 %v309, %v5612
    %v5614 = vand.u32 %v5613, 4294901760
    %5615 = vmatpush.xpose.msra.mxu0 %v5614
    %v5616 = vand.u32 %v305, 4294901760
    %v5617 = vsub.f32 %v305, %v5616
    %v5618 = vand.u32 %v5617, 4294901760
    %5619 = vmatpush.xpose.msra.mxu0 %v5618
    %v5620 = vand.u32 %v301, 4294901760
    %v5621 = vsub.f32 %v301, %v5620
    %v5622 = vand.u32 %v5621, 4294901760
    %5623 = vmatpush.xpose.msra.mxu0 %v5622
    %v5624 = vand.u32 %v297, 4294901760
    %v5625 = vsub.f32 %v297, %v5624
    %v5626 = vand.u32 %v5625, 4294901760
    %5627 = vmatpush.xpose.msra.mxu0 %v5626
    %v5628 = vand.u32 %v293, 4294901760
    %v5629 = vsub.f32 %v293, %v5628
    %v5630 = vand.u32 %v5629, 4294901760
    %5631 = vmatpush.xpose.msra.mxu0 %v5630
    %v5632 = vand.u32 %v289, 4294901760
    %v5633 = vsub.f32 %v289, %v5632
    %v5634 = vand.u32 %v5633, 4294901760
    %5635 = vmatpush.xpose.msra.mxu0 %v5634
    %v5636 = vand.u32 %v285, 4294901760
    %v5637 = vsub.f32 %v285, %v5636
    %v5638 = vand.u32 %v5637, 4294901760
    %5639 = vmatpush.xpose.msra.mxu0 %v5638
    %v5640 = vand.u32 %v281, 4294901760
    %v5641 = vsub.f32 %v281, %v5640
    %v5642 = vand.u32 %v5641, 4294901760
    %5643 = vmatpush.xpose.msra.mxu0 %v5642
    %v5644 = vand.u32 %v277, 4294901760
    %v5645 = vsub.f32 %v277, %v5644
    %v5646 = vand.u32 %v5645, 4294901760
    %5647 = vmatpush.xpose.msra.mxu0 %v5646
    %v5648 = vand.u32 %v273, 4294901760
    %v5649 = vsub.f32 %v273, %v5648
    %v5650 = vand.u32 %v5649, 4294901760
    %5651 = vmatpush.xpose.msra.mxu0 %v5650
    %v5652 = vand.u32 %v269, 4294901760
    %v5653 = vsub.f32 %v269, %v5652
    %v5654 = vand.u32 %v5653, 4294901760
    %5655 = vmatpush.xpose.msra.mxu0 %v5654
    %v5656 = vand.u32 %v265, 4294901760
    %v5657 = vsub.f32 %v265, %v5656
    %v5658 = vand.u32 %v5657, 4294901760
    %5659 = vmatpush.xpose.msra.mxu0 %v5658
    %v5660 = vand.u32 %v261, 4294901760
    %v5661 = vsub.f32 %v261, %v5660
    %v5662 = vand.u32 %v5661, 4294901760
    %5663 = vmatpush.xpose.msra.mxu0 %v5662
    %v5664 = vand.u32 %v257, 4294901760
    %v5665 = vsub.f32 %v257, %v5664
    %v5666 = vand.u32 %v5665, 4294901760
    %5667 = vmatpush.xpose.msra.mxu0 %v5666
    %v5668 = vand.u32 %v253, 4294901760
    %v5669 = vsub.f32 %v253, %v5668
    %v5670 = vand.u32 %v5669, 4294901760
    %5671 = vmatpush.xpose.msra.mxu0 %v5670
    %v5672 = vand.u32 %v593, 4294901760
    %5673 = vmatmul.f32.gmra.mxu0 %v5672
    %v5674 = vpop.f32.mrf.mxu0
    %v5675 = vadd.f32 %v5606, %v5674
    %5676 = vdwg.mxu0
    %v5677 = vand.u32 %v313, 4294901760
    %5678 = vmatpush.xpose.msra.mxu0 %v5677
    %v5679 = vand.u32 %v309, 4294901760
    %5680 = vmatpush.xpose.msra.mxu0 %v5679
    %v5681 = vand.u32 %v305, 4294901760
    %5682 = vmatpush.xpose.msra.mxu0 %v5681
    %v5683 = vand.u32 %v301, 4294901760
    %5684 = vmatpush.xpose.msra.mxu0 %v5683
    %v5685 = vand.u32 %v297, 4294901760
    %5686 = vmatpush.xpose.msra.mxu0 %v5685
    %v5687 = vand.u32 %v293, 4294901760
    %5688 = vmatpush.xpose.msra.mxu0 %v5687
    %v5689 = vand.u32 %v289, 4294901760
    %5690 = vmatpush.xpose.msra.mxu0 %v5689
    %v5691 = vand.u32 %v285, 4294901760
    %5692 = vmatpush.xpose.msra.mxu0 %v5691
    %v5693 = vand.u32 %v281, 4294901760
    %5694 = vmatpush.xpose.msra.mxu0 %v5693
    %v5695 = vand.u32 %v277, 4294901760
    %5696 = vmatpush.xpose.msra.mxu0 %v5695
    %v5697 = vand.u32 %v273, 4294901760
    %5698 = vmatpush.xpose.msra.mxu0 %v5697
    %v5699 = vand.u32 %v269, 4294901760
    %5700 = vmatpush.xpose.msra.mxu0 %v5699
    %v5701 = vand.u32 %v265, 4294901760
    %5702 = vmatpush.xpose.msra.mxu0 %v5701
    %v5703 = vand.u32 %v261, 4294901760
    %5704 = vmatpush.xpose.msra.mxu0 %v5703
    %v5705 = vand.u32 %v257, 4294901760
    %5706 = vmatpush.xpose.msra.mxu0 %v5705
    %v5707 = vand.u32 %v253, 4294901760
    %5708 = vmatpush.xpose.msra.mxu0 %v5707
    %v5709 = vand.u32 %v593, 4294901760
    %5710 = vmatmul.f32.gmra.mxu0 %v5709
    %v5711 = vpop.f32.mrf.mxu0
    %v5712 = vadd.f32 %v5675, %v5711
    %5713 = vdwg.mxu0
    %v5714 = vand.u32 %v314, 4294901760
    %5715 = vmatpush.xpose.msra.mxu0 %v5714
    %v5716 = vand.u32 %v310, 4294901760
    %5717 = vmatpush.xpose.msra.mxu0 %v5716
    %v5718 = vand.u32 %v306, 4294901760
    %5719 = vmatpush.xpose.msra.mxu0 %v5718
    %v5720 = vand.u32 %v302, 4294901760
    %5721 = vmatpush.xpose.msra.mxu0 %v5720
    %v5722 = vand.u32 %v298, 4294901760
    %5723 = vmatpush.xpose.msra.mxu0 %v5722
    %v5724 = vand.u32 %v294, 4294901760
    %5725 = vmatpush.xpose.msra.mxu0 %v5724
    %v5726 = vand.u32 %v290, 4294901760
    %5727 = vmatpush.xpose.msra.mxu0 %v5726
    %v5728 = vand.u32 %v286, 4294901760
    %5729 = vmatpush.xpose.msra.mxu0 %v5728
    %v5730 = vand.u32 %v282, 4294901760
    %5731 = vmatpush.xpose.msra.mxu0 %v5730
    %v5732 = vand.u32 %v278, 4294901760
    %5733 = vmatpush.xpose.msra.mxu0 %v5732
    %v5734 = vand.u32 %v274, 4294901760
    %5735 = vmatpush.xpose.msra.mxu0 %v5734
    %v5736 = vand.u32 %v270, 4294901760
    %5737 = vmatpush.xpose.msra.mxu0 %v5736
    %v5738 = vand.u32 %v266, 4294901760
    %5739 = vmatpush.xpose.msra.mxu0 %v5738
    %v5740 = vand.u32 %v262, 4294901760
    %5741 = vmatpush.xpose.msra.mxu0 %v5740
    %v5742 = vand.u32 %v258, 4294901760
    %5743 = vmatpush.xpose.msra.mxu0 %v5742
    %v5744 = vand.u32 %v254, 4294901760
    %5745 = vmatpush.xpose.msra.mxu0 %v5744
    %v5746 = vand.u32 %v594, 4294901760
    %v5747 = vsub.f32 %v594, %v5746
    %v5748 = vand.u32 %v5747, 4294901760
    %v5749 = vsub.f32 %v5747, %v5748
    %v5750 = vand.u32 %v5749, 4294901760
    %5751 = vmatmul.f32.gmra.mxu0 %v5750
    %v5752 = vpop.f32.mrf.mxu0
    %v5753 = vadd.f32 %v5712, %v5752
    %5754 = vdwg.mxu0
    %v5755 = vand.u32 %v314, 4294901760
    %v5756 = vsub.f32 %v314, %v5755
    %v5757 = vand.u32 %v5756, 4294901760
    %v5758 = vsub.f32 %v5756, %v5757
    %v5759 = vand.u32 %v5758, 4294901760
    %5760 = vmatpush.xpose.msra.mxu0 %v5759
    %v5761 = vand.u32 %v310, 4294901760
    %v5762 = vsub.f32 %v310, %v5761
    %v5763 = vand.u32 %v5762, 4294901760
    %v5764 = vsub.f32 %v5762, %v5763
    %v5765 = vand.u32 %v5764, 4294901760
    %5766 = vmatpush.xpose.msra.mxu0 %v5765
    %v5767 = vand.u32 %v306, 4294901760
    %v5768 = vsub.f32 %v306, %v5767
    %v5769 = vand.u32 %v5768, 4294901760
    %v5770 = vsub.f32 %v5768, %v5769
    %v5771 = vand.u32 %v5770, 4294901760
    %5772 = vmatpush.xpose.msra.mxu0 %v5771
    %v5773 = vand.u32 %v302, 4294901760
    %v5774 = vsub.f32 %v302, %v5773
    %v5775 = vand.u32 %v5774, 4294901760
    %v5776 = vsub.f32 %v5774, %v5775
    %v5777 = vand.u32 %v5776, 4294901760
    %5778 = vmatpush.xpose.msra.mxu0 %v5777
    %v5779 = vand.u32 %v298, 4294901760
    %v5780 = vsub.f32 %v298, %v5779
    %v5781 = vand.u32 %v5780, 4294901760
    %v5782 = vsub.f32 %v5780, %v5781
    %v5783 = vand.u32 %v5782, 4294901760
    %5784 = vmatpush.xpose.msra.mxu0 %v5783
    %v5785 = vand.u32 %v294, 4294901760
    %v5786 = vsub.f32 %v294, %v5785
    %v5787 = vand.u32 %v5786, 4294901760
    %v5788 = vsub.f32 %v5786, %v5787
    %v5789 = vand.u32 %v5788, 4294901760
    %5790 = vmatpush.xpose.msra.mxu0 %v5789
    %v5791 = vand.u32 %v290, 4294901760
    %v5792 = vsub.f32 %v290, %v5791
    %v5793 = vand.u32 %v5792, 4294901760
    %v5794 = vsub.f32 %v5792, %v5793
    %v5795 = vand.u32 %v5794, 4294901760
    %5796 = vmatpush.xpose.msra.mxu0 %v5795
    %v5797 = vand.u32 %v286, 4294901760
    %v5798 = vsub.f32 %v286, %v5797
    %v5799 = vand.u32 %v5798, 4294901760
    %v5800 = vsub.f32 %v5798, %v5799
    %v5801 = vand.u32 %v5800, 4294901760
    %5802 = vmatpush.xpose.msra.mxu0 %v5801
    %v5803 = vand.u32 %v282, 4294901760
    %v5804 = vsub.f32 %v282, %v5803
    %v5805 = vand.u32 %v5804, 4294901760
    %v5806 = vsub.f32 %v5804, %v5805
    %v5807 = vand.u32 %v5806, 4294901760
    %5808 = vmatpush.xpose.msra.mxu0 %v5807
    %v5809 = vand.u32 %v278, 4294901760
    %v5810 = vsub.f32 %v278, %v5809
    %v5811 = vand.u32 %v5810, 4294901760
    %v5812 = vsub.f32 %v5810, %v5811
    %v5813 = vand.u32 %v5812, 4294901760
    %5814 = vmatpush.xpose.msra.mxu0 %v5813
    %v5815 = vand.u32 %v274, 4294901760
    %v5816 = vsub.f32 %v274, %v5815
    %v5817 = vand.u32 %v5816, 4294901760
    %v5818 = vsub.f32 %v5816, %v5817
    %v5819 = vand.u32 %v5818, 4294901760
    %5820 = vmatpush.xpose.msra.mxu0 %v5819
    %v5821 = vand.u32 %v270, 4294901760
    %v5822 = vsub.f32 %v270, %v5821
    %v5823 = vand.u32 %v5822, 4294901760
    %v5824 = vsub.f32 %v5822, %v5823
    %v5825 = vand.u32 %v5824, 4294901760
    %5826 = vmatpush.xpose.msra.mxu0 %v5825
    %v5827 = vand.u32 %v266, 4294901760
    %v5828 = vsub.f32 %v266, %v5827
    %v5829 = vand.u32 %v5828, 4294901760
    %v5830 = vsub.f32 %v5828, %v5829
    %v5831 = vand.u32 %v5830, 4294901760
    %5832 = vmatpush.xpose.msra.mxu0 %v5831
    %v5833 = vand.u32 %v262, 4294901760
    %v5834 = vsub.f32 %v262, %v5833
    %v5835 = vand.u32 %v5834, 4294901760
    %v5836 = vsub.f32 %v5834, %v5835
    %v5837 = vand.u32 %v5836, 4294901760
    %5838 = vmatpush.xpose.msra.mxu0 %v5837
    %v5839 = vand.u32 %v258, 4294901760
    %v5840 = vsub.f32 %v258, %v5839
    %v5841 = vand.u32 %v5840, 4294901760
    %v5842 = vsub.f32 %v5840, %v5841
    %v5843 = vand.u32 %v5842, 4294901760
    %5844 = vmatpush.xpose.msra.mxu0 %v5843
    %v5845 = vand.u32 %v254, 4294901760
    %v5846 = vsub.f32 %v254, %v5845
    %v5847 = vand.u32 %v5846, 4294901760
    %v5848 = vsub.f32 %v5846, %v5847
    %v5849 = vand.u32 %v5848, 4294901760
    %5850 = vmatpush.xpose.msra.mxu0 %v5849
    %v5851 = vand.u32 %v594, 4294901760
    %5852 = vmatmul.f32.gmra.mxu0 %v5851
    %v5853 = vpop.f32.mrf.mxu0
    %v5854 = vadd.f32 %v5753, %v5853
    %5855 = vdwg.mxu0
    %v5856 = vand.u32 %v314, 4294901760
    %v5857 = vsub.f32 %v314, %v5856
    %5858 = vmatpush.xpose.msra.mxu0 %v5857
    %v5859 = vand.u32 %v310, 4294901760
    %v5860 = vsub.f32 %v310, %v5859
    %5861 = vmatpush.xpose.msra.mxu0 %v5860
    %v5862 = vand.u32 %v306, 4294901760
    %v5863 = vsub.f32 %v306, %v5862
    %5864 = vmatpush.xpose.msra.mxu0 %v5863
    %v5865 = vand.u32 %v302, 4294901760
    %v5866 = vsub.f32 %v302, %v5865
    %5867 = vmatpush.xpose.msra.mxu0 %v5866
    %v5868 = vand.u32 %v298, 4294901760
    %v5869 = vsub.f32 %v298, %v5868
    %5870 = vmatpush.xpose.msra.mxu0 %v5869
    %v5871 = vand.u32 %v294, 4294901760
    %v5872 = vsub.f32 %v294, %v5871
    %5873 = vmatpush.xpose.msra.mxu0 %v5872
    %v5874 = vand.u32 %v290, 4294901760
    %v5875 = vsub.f32 %v290, %v5874
    %5876 = vmatpush.xpose.msra.mxu0 %v5875
    %v5877 = vand.u32 %v286, 4294901760
    %v5878 = vsub.f32 %v286, %v5877
    %5879 = vmatpush.xpose.msra.mxu0 %v5878
    %v5880 = vand.u32 %v282, 4294901760
    %v5881 = vsub.f32 %v282, %v5880
    %5882 = vmatpush.xpose.msra.mxu0 %v5881
    %v5883 = vand.u32 %v278, 4294901760
    %v5884 = vsub.f32 %v278, %v5883
    %5885 = vmatpush.xpose.msra.mxu0 %v5884
    %v5886 = vand.u32 %v274, 4294901760
    %v5887 = vsub.f32 %v274, %v5886
    %5888 = vmatpush.xpose.msra.mxu0 %v5887
    %v5889 = vand.u32 %v270, 4294901760
    %v5890 = vsub.f32 %v270, %v5889
    %5891 = vmatpush.xpose.msra.mxu0 %v5890
    %v5892 = vand.u32 %v266, 4294901760
    %v5893 = vsub.f32 %v266, %v5892
    %5894 = vmatpush.xpose.msra.mxu0 %v5893
    %v5895 = vand.u32 %v262, 4294901760
    %v5896 = vsub.f32 %v262, %v5895
    %5897 = vmatpush.xpose.msra.mxu0 %v5896
    %v5898 = vand.u32 %v258, 4294901760
    %v5899 = vsub.f32 %v258, %v5898
    %5900 = vmatpush.xpose.msra.mxu0 %v5899
    %v5901 = vand.u32 %v254, 4294901760
    %v5902 = vsub.f32 %v254, %v5901
    %5903 = vmatpush.xpose.msra.mxu0 %v5902
    %v5904 = vand.u32 %v594, 4294901760
    %v5905 = vsub.f32 %v594, %v5904
    %5906 = vmatmul.f32.gmra.mxu0 %v5905
    %v5907 = vpop.f32.mrf.mxu0
    %v5908 = vadd.f32 %v5854, %v5907
    %5909 = vdwg.mxu0
    %v5910 = vand.u32 %v314, 4294901760
    %5911 = vmatpush.xpose.msra.mxu0 %v5910
    %v5912 = vand.u32 %v310, 4294901760
    %5913 = vmatpush.xpose.msra.mxu0 %v5912
    %v5914 = vand.u32 %v306, 4294901760
    %5915 = vmatpush.xpose.msra.mxu0 %v5914
    %v5916 = vand.u32 %v302, 4294901760
    %5917 = vmatpush.xpose.msra.mxu0 %v5916
    %v5918 = vand.u32 %v298, 4294901760
    %5919 = vmatpush.xpose.msra.mxu0 %v5918
    %v5920 = vand.u32 %v294, 4294901760
    %5921 = vmatpush.xpose.msra.mxu0 %v5920
    %v5922 = vand.u32 %v290, 4294901760
    %5923 = vmatpush.xpose.msra.mxu0 %v5922
    %v5924 = vand.u32 %v286, 4294901760
    %5925 = vmatpush.xpose.msra.mxu0 %v5924
    %v5926 = vand.u32 %v282, 4294901760
    %5927 = vmatpush.xpose.msra.mxu0 %v5926
    %v5928 = vand.u32 %v278, 4294901760
    %5929 = vmatpush.xpose.msra.mxu0 %v5928
    %v5930 = vand.u32 %v274, 4294901760
    %5931 = vmatpush.xpose.msra.mxu0 %v5930
    %v5932 = vand.u32 %v270, 4294901760
    %5933 = vmatpush.xpose.msra.mxu0 %v5932
    %v5934 = vand.u32 %v266, 4294901760
    %5935 = vmatpush.xpose.msra.mxu0 %v5934
    %v5936 = vand.u32 %v262, 4294901760
    %5937 = vmatpush.xpose.msra.mxu0 %v5936
    %v5938 = vand.u32 %v258, 4294901760
    %5939 = vmatpush.xpose.msra.mxu0 %v5938
    %v5940 = vand.u32 %v254, 4294901760
    %5941 = vmatpush.xpose.msra.mxu0 %v5940
    %v5942 = vand.u32 %v594, 4294901760
    %v5943 = vsub.f32 %v594, %v5942
    %v5944 = vand.u32 %v5943, 4294901760
    %5945 = vmatmul.f32.gmra.mxu0 %v5944
    %v5946 = vpop.f32.mrf.mxu0
    %v5947 = vadd.f32 %v5908, %v5946
    %5948 = vdwg.mxu0
    %v5949 = vand.u32 %v314, 4294901760
    %v5950 = vsub.f32 %v314, %v5949
    %v5951 = vand.u32 %v5950, 4294901760
    %5952 = vmatpush.xpose.msra.mxu0 %v5951
    %v5953 = vand.u32 %v310, 4294901760
    %v5954 = vsub.f32 %v310, %v5953
    %v5955 = vand.u32 %v5954, 4294901760
    %5956 = vmatpush.xpose.msra.mxu0 %v5955
    %v5957 = vand.u32 %v306, 4294901760
    %v5958 = vsub.f32 %v306, %v5957
    %v5959 = vand.u32 %v5958, 4294901760
    %5960 = vmatpush.xpose.msra.mxu0 %v5959
    %v5961 = vand.u32 %v302, 4294901760
    %v5962 = vsub.f32 %v302, %v5961
    %v5963 = vand.u32 %v5962, 4294901760
    %5964 = vmatpush.xpose.msra.mxu0 %v5963
    %v5965 = vand.u32 %v298, 4294901760
    %v5966 = vsub.f32 %v298, %v5965
    %v5967 = vand.u32 %v5966, 4294901760
    %5968 = vmatpush.xpose.msra.mxu0 %v5967
    %v5969 = vand.u32 %v294, 4294901760
    %v5970 = vsub.f32 %v294, %v5969
    %v5971 = vand.u32 %v5970, 4294901760
    %5972 = vmatpush.xpose.msra.mxu0 %v5971
    %v5973 = vand.u32 %v290, 4294901760
    %v5974 = vsub.f32 %v290, %v5973
    %v5975 = vand.u32 %v5974, 4294901760
    %5976 = vmatpush.xpose.msra.mxu0 %v5975
    %v5977 = vand.u32 %v286, 4294901760
    %v5978 = vsub.f32 %v286, %v5977
    %v5979 = vand.u32 %v5978, 4294901760
    %5980 = vmatpush.xpose.msra.mxu0 %v5979
    %v5981 = vand.u32 %v282, 4294901760
    %v5982 = vsub.f32 %v282, %v5981
    %v5983 = vand.u32 %v5982, 4294901760
    %5984 = vmatpush.xpose.msra.mxu0 %v5983
    %v5985 = vand.u32 %v278, 4294901760
    %v5986 = vsub.f32 %v278, %v5985
    %v5987 = vand.u32 %v5986, 4294901760
    %5988 = vmatpush.xpose.msra.mxu0 %v5987
    %v5989 = vand.u32 %v274, 4294901760
    %v5990 = vsub.f32 %v274, %v5989
    %v5991 = vand.u32 %v5990, 4294901760
    %5992 = vmatpush.xpose.msra.mxu0 %v5991
    %v5993 = vand.u32 %v270, 4294901760
    %v5994 = vsub.f32 %v270, %v5993
    %v5995 = vand.u32 %v5994, 4294901760
    %5996 = vmatpush.xpose.msra.mxu0 %v5995
    %v5997 = vand.u32 %v266, 4294901760
    %v5998 = vsub.f32 %v266, %v5997
    %v5999 = vand.u32 %v5998, 4294901760
    %6000 = vmatpush.xpose.msra.mxu0 %v5999
    %v6001 = vand.u32 %v262, 4294901760
    %v6002 = vsub.f32 %v262, %v6001
    %v6003 = vand.u32 %v6002, 4294901760
    %6004 = vmatpush.xpose.msra.mxu0 %v6003
    %v6005 = vand.u32 %v258, 4294901760
    %v6006 = vsub.f32 %v258, %v6005
    %v6007 = vand.u32 %v6006, 4294901760
    %6008 = vmatpush.xpose.msra.mxu0 %v6007
    %v6009 = vand.u32 %v254, 4294901760
    %v6010 = vsub.f32 %v254, %v6009
    %v6011 = vand.u32 %v6010, 4294901760
    %6012 = vmatpush.xpose.msra.mxu0 %v6011
    %v6013 = vand.u32 %v594, 4294901760
    %6014 = vmatmul.f32.gmra.mxu0 %v6013
    %v6015 = vpop.f32.mrf.mxu0
    %v6016 = vadd.f32 %v5947, %v6015
    %6017 = vdwg.mxu0
    %v6018 = vand.u32 %v314, 4294901760
    %6019 = vmatpush.xpose.msra.mxu0 %v6018
    %v6020 = vand.u32 %v310, 4294901760
    %6021 = vmatpush.xpose.msra.mxu0 %v6020
    %v6022 = vand.u32 %v306, 4294901760
    %6023 = vmatpush.xpose.msra.mxu0 %v6022
    %v6024 = vand.u32 %v302, 4294901760
    %6025 = vmatpush.xpose.msra.mxu0 %v6024
    %v6026 = vand.u32 %v298, 4294901760
    %6027 = vmatpush.xpose.msra.mxu0 %v6026
    %v6028 = vand.u32 %v294, 4294901760
    %6029 = vmatpush.xpose.msra.mxu0 %v6028
    %v6030 = vand.u32 %v290, 4294901760
    %6031 = vmatpush.xpose.msra.mxu0 %v6030
    %v6032 = vand.u32 %v286, 4294901760
    %6033 = vmatpush.xpose.msra.mxu0 %v6032
    %v6034 = vand.u32 %v282, 4294901760
    %6035 = vmatpush.xpose.msra.mxu0 %v6034
    %v6036 = vand.u32 %v278, 4294901760
    %6037 = vmatpush.xpose.msra.mxu0 %v6036
    %v6038 = vand.u32 %v274, 4294901760
    %6039 = vmatpush.xpose.msra.mxu0 %v6038
    %v6040 = vand.u32 %v270, 4294901760
    %6041 = vmatpush.xpose.msra.mxu0 %v6040
    %v6042 = vand.u32 %v266, 4294901760
    %6043 = vmatpush.xpose.msra.mxu0 %v6042
    %v6044 = vand.u32 %v262, 4294901760
    %6045 = vmatpush.xpose.msra.mxu0 %v6044
    %v6046 = vand.u32 %v258, 4294901760
    %6047 = vmatpush.xpose.msra.mxu0 %v6046
    %v6048 = vand.u32 %v254, 4294901760
    %6049 = vmatpush.xpose.msra.mxu0 %v6048
    %v6050 = vand.u32 %v594, 4294901760
    %6051 = vmatmul.f32.gmra.mxu0 %v6050
    %v6052 = vpop.f32.mrf.mxu0
    %v6053 = vadd.f32 %v6016, %v6052
    %6054 = vdwg.mxu0
    %v6055 = vand.u32 %v375, 4294901760
    %6056 = vmatpush.xpose.msra.mxu0 %v6055
    %v6057 = vand.u32 %v371, 4294901760
    %6058 = vmatpush.xpose.msra.mxu0 %v6057
    %v6059 = vand.u32 %v367, 4294901760
    %6060 = vmatpush.xpose.msra.mxu0 %v6059
    %v6061 = vand.u32 %v363, 4294901760
    %6062 = vmatpush.xpose.msra.mxu0 %v6061
    %v6063 = vand.u32 %v359, 4294901760
    %6064 = vmatpush.xpose.msra.mxu0 %v6063
    %v6065 = vand.u32 %v355, 4294901760
    %6066 = vmatpush.xpose.msra.mxu0 %v6065
    %v6067 = vand.u32 %v351, 4294901760
    %6068 = vmatpush.xpose.msra.mxu0 %v6067
    %v6069 = vand.u32 %v347, 4294901760
    %6070 = vmatpush.xpose.msra.mxu0 %v6069
    %v6071 = vand.u32 %v343, 4294901760
    %6072 = vmatpush.xpose.msra.mxu0 %v6071
    %v6073 = vand.u32 %v339, 4294901760
    %6074 = vmatpush.xpose.msra.mxu0 %v6073
    %v6075 = vand.u32 %v335, 4294901760
    %6076 = vmatpush.xpose.msra.mxu0 %v6075
    %v6077 = vand.u32 %v331, 4294901760
    %6078 = vmatpush.xpose.msra.mxu0 %v6077
    %v6079 = vand.u32 %v327, 4294901760
    %6080 = vmatpush.xpose.msra.mxu0 %v6079
    %v6081 = vand.u32 %v323, 4294901760
    %6082 = vmatpush.xpose.msra.mxu0 %v6081
    %v6083 = vand.u32 %v319, 4294901760
    %6084 = vmatpush.xpose.msra.mxu0 %v6083
    %v6085 = vand.u32 %v315, 4294901760
    %6086 = vmatpush.xpose.msra.mxu0 %v6085
    %v6087 = vand.u32 %v591, 4294901760
    %v6088 = vsub.f32 %v591, %v6087
    %v6089 = vand.u32 %v6088, 4294901760
    %v6090 = vsub.f32 %v6088, %v6089
    %v6091 = vand.u32 %v6090, 4294901760
    %6092 = vmatmul.f32.gmra.mxu0 %v6091
    %v6093 = vpop.f32.mrf.mxu0
    %v6094 = vadd.f32 %v577, %v6093
    %6095 = vdwg.mxu0
    %v6096 = vand.u32 %v375, 4294901760
    %v6097 = vsub.f32 %v375, %v6096
    %v6098 = vand.u32 %v6097, 4294901760
    %v6099 = vsub.f32 %v6097, %v6098
    %v6100 = vand.u32 %v6099, 4294901760
    %6101 = vmatpush.xpose.msra.mxu0 %v6100
    %v6102 = vand.u32 %v371, 4294901760
    %v6103 = vsub.f32 %v371, %v6102
    %v6104 = vand.u32 %v6103, 4294901760
    %v6105 = vsub.f32 %v6103, %v6104
    %v6106 = vand.u32 %v6105, 4294901760
    %6107 = vmatpush.xpose.msra.mxu0 %v6106
    %v6108 = vand.u32 %v367, 4294901760
    %v6109 = vsub.f32 %v367, %v6108
    %v6110 = vand.u32 %v6109, 4294901760
    %v6111 = vsub.f32 %v6109, %v6110
    %v6112 = vand.u32 %v6111, 4294901760
    %6113 = vmatpush.xpose.msra.mxu0 %v6112
    %v6114 = vand.u32 %v363, 4294901760
    %v6115 = vsub.f32 %v363, %v6114
    %v6116 = vand.u32 %v6115, 4294901760
    %v6117 = vsub.f32 %v6115, %v6116
    %v6118 = vand.u32 %v6117, 4294901760
    %6119 = vmatpush.xpose.msra.mxu0 %v6118
    %v6120 = vand.u32 %v359, 4294901760
    %v6121 = vsub.f32 %v359, %v6120
    %v6122 = vand.u32 %v6121, 4294901760
    %v6123 = vsub.f32 %v6121, %v6122
    %v6124 = vand.u32 %v6123, 4294901760
    %6125 = vmatpush.xpose.msra.mxu0 %v6124
    %v6126 = vand.u32 %v355, 4294901760
    %v6127 = vsub.f32 %v355, %v6126
    %v6128 = vand.u32 %v6127, 4294901760
    %v6129 = vsub.f32 %v6127, %v6128
    %v6130 = vand.u32 %v6129, 4294901760
    %6131 = vmatpush.xpose.msra.mxu0 %v6130
    %v6132 = vand.u32 %v351, 4294901760
    %v6133 = vsub.f32 %v351, %v6132
    %v6134 = vand.u32 %v6133, 4294901760
    %v6135 = vsub.f32 %v6133, %v6134
    %v6136 = vand.u32 %v6135, 4294901760
    %6137 = vmatpush.xpose.msra.mxu0 %v6136
    %v6138 = vand.u32 %v347, 4294901760
    %v6139 = vsub.f32 %v347, %v6138
    %v6140 = vand.u32 %v6139, 4294901760
    %v6141 = vsub.f32 %v6139, %v6140
    %v6142 = vand.u32 %v6141, 4294901760
    %6143 = vmatpush.xpose.msra.mxu0 %v6142
    %v6144 = vand.u32 %v343, 4294901760
    %v6145 = vsub.f32 %v343, %v6144
    %v6146 = vand.u32 %v6145, 4294901760
    %v6147 = vsub.f32 %v6145, %v6146
    %v6148 = vand.u32 %v6147, 4294901760
    %6149 = vmatpush.xpose.msra.mxu0 %v6148
    %v6150 = vand.u32 %v339, 4294901760
    %v6151 = vsub.f32 %v339, %v6150
    %v6152 = vand.u32 %v6151, 4294901760
    %v6153 = vsub.f32 %v6151, %v6152
    %v6154 = vand.u32 %v6153, 4294901760
    %6155 = vmatpush.xpose.msra.mxu0 %v6154
    %v6156 = vand.u32 %v335, 4294901760
    %v6157 = vsub.f32 %v335, %v6156
    %v6158 = vand.u32 %v6157, 4294901760
    %v6159 = vsub.f32 %v6157, %v6158
    %v6160 = vand.u32 %v6159, 4294901760
    %6161 = vmatpush.xpose.msra.mxu0 %v6160
    %v6162 = vand.u32 %v331, 4294901760
    %v6163 = vsub.f32 %v331, %v6162
    %v6164 = vand.u32 %v6163, 4294901760
    %v6165 = vsub.f32 %v6163, %v6164
    %v6166 = vand.u32 %v6165, 4294901760
    %6167 = vmatpush.xpose.msra.mxu0 %v6166
    %v6168 = vand.u32 %v327, 4294901760
    %v6169 = vsub.f32 %v327, %v6168
    %v6170 = vand.u32 %v6169, 4294901760
    %v6171 = vsub.f32 %v6169, %v6170
    %v6172 = vand.u32 %v6171, 4294901760
    %6173 = vmatpush.xpose.msra.mxu0 %v6172
    %v6174 = vand.u32 %v323, 4294901760
    %v6175 = vsub.f32 %v323, %v6174
    %v6176 = vand.u32 %v6175, 4294901760
    %v6177 = vsub.f32 %v6175, %v6176
    %v6178 = vand.u32 %v6177, 4294901760
    %6179 = vmatpush.xpose.msra.mxu0 %v6178
    %v6180 = vand.u32 %v319, 4294901760
    %v6181 = vsub.f32 %v319, %v6180
    %v6182 = vand.u32 %v6181, 4294901760
    %v6183 = vsub.f32 %v6181, %v6182
    %v6184 = vand.u32 %v6183, 4294901760
    %6185 = vmatpush.xpose.msra.mxu0 %v6184
    %v6186 = vand.u32 %v315, 4294901760
    %v6187 = vsub.f32 %v315, %v6186
    %v6188 = vand.u32 %v6187, 4294901760
    %v6189 = vsub.f32 %v6187, %v6188
    %v6190 = vand.u32 %v6189, 4294901760
    %6191 = vmatpush.xpose.msra.mxu0 %v6190
    %v6192 = vand.u32 %v591, 4294901760
    %6193 = vmatmul.f32.gmra.mxu0 %v6192
    %v6194 = vpop.f32.mrf.mxu0
    %v6195 = vadd.f32 %v6094, %v6194
    %6196 = vdwg.mxu0
    %v6197 = vand.u32 %v375, 4294901760
    %v6198 = vsub.f32 %v375, %v6197
    %6199 = vmatpush.xpose.msra.mxu0 %v6198
    %v6200 = vand.u32 %v371, 4294901760
    %v6201 = vsub.f32 %v371, %v6200
    %6202 = vmatpush.xpose.msra.mxu0 %v6201
    %v6203 = vand.u32 %v367, 4294901760
    %v6204 = vsub.f32 %v367, %v6203
    %6205 = vmatpush.xpose.msra.mxu0 %v6204
    %v6206 = vand.u32 %v363, 4294901760
    %v6207 = vsub.f32 %v363, %v6206
    %6208 = vmatpush.xpose.msra.mxu0 %v6207
    %v6209 = vand.u32 %v359, 4294901760
    %v6210 = vsub.f32 %v359, %v6209
    %6211 = vmatpush.xpose.msra.mxu0 %v6210
    %v6212 = vand.u32 %v355, 4294901760
    %v6213 = vsub.f32 %v355, %v6212
    %6214 = vmatpush.xpose.msra.mxu0 %v6213
    %v6215 = vand.u32 %v351, 4294901760
    %v6216 = vsub.f32 %v351, %v6215
    %6217 = vmatpush.xpose.msra.mxu0 %v6216
    %v6218 = vand.u32 %v347, 4294901760
    %v6219 = vsub.f32 %v347, %v6218
    %6220 = vmatpush.xpose.msra.mxu0 %v6219
    %v6221 = vand.u32 %v343, 4294901760
    %v6222 = vsub.f32 %v343, %v6221
    %6223 = vmatpush.xpose.msra.mxu0 %v6222
    %v6224 = vand.u32 %v339, 4294901760
    %v6225 = vsub.f32 %v339, %v6224
    %6226 = vmatpush.xpose.msra.mxu0 %v6225
    %v6227 = vand.u32 %v335, 4294901760
    %v6228 = vsub.f32 %v335, %v6227
    %6229 = vmatpush.xpose.msra.mxu0 %v6228
    %v6230 = vand.u32 %v331, 4294901760
    %v6231 = vsub.f32 %v331, %v6230
    %6232 = vmatpush.xpose.msra.mxu0 %v6231
    %v6233 = vand.u32 %v327, 4294901760
    %v6234 = vsub.f32 %v327, %v6233
    %6235 = vmatpush.xpose.msra.mxu0 %v6234
    %v6236 = vand.u32 %v323, 4294901760
    %v6237 = vsub.f32 %v323, %v6236
    %6238 = vmatpush.xpose.msra.mxu0 %v6237
    %v6239 = vand.u32 %v319, 4294901760
    %v6240 = vsub.f32 %v319, %v6239
    %6241 = vmatpush.xpose.msra.mxu0 %v6240
    %v6242 = vand.u32 %v315, 4294901760
    %v6243 = vsub.f32 %v315, %v6242
    %6244 = vmatpush.xpose.msra.mxu0 %v6243
    %v6245 = vand.u32 %v591, 4294901760
    %v6246 = vsub.f32 %v591, %v6245
    %6247 = vmatmul.f32.gmra.mxu0 %v6246
    %v6248 = vpop.f32.mrf.mxu0
    %v6249 = vadd.f32 %v6195, %v6248
    %6250 = vdwg.mxu0
    %v6251 = vand.u32 %v375, 4294901760
    %6252 = vmatpush.xpose.msra.mxu0 %v6251
    %v6253 = vand.u32 %v371, 4294901760
    %6254 = vmatpush.xpose.msra.mxu0 %v6253
    %v6255 = vand.u32 %v367, 4294901760
    %6256 = vmatpush.xpose.msra.mxu0 %v6255
    %v6257 = vand.u32 %v363, 4294901760
    %6258 = vmatpush.xpose.msra.mxu0 %v6257
    %v6259 = vand.u32 %v359, 4294901760
    %6260 = vmatpush.xpose.msra.mxu0 %v6259
    %v6261 = vand.u32 %v355, 4294901760
    %6262 = vmatpush.xpose.msra.mxu0 %v6261
    %v6263 = vand.u32 %v351, 4294901760
    %6264 = vmatpush.xpose.msra.mxu0 %v6263
    %v6265 = vand.u32 %v347, 4294901760
    %6266 = vmatpush.xpose.msra.mxu0 %v6265
    %v6267 = vand.u32 %v343, 4294901760
    %6268 = vmatpush.xpose.msra.mxu0 %v6267
    %v6269 = vand.u32 %v339, 4294901760
    %6270 = vmatpush.xpose.msra.mxu0 %v6269
    %v6271 = vand.u32 %v335, 4294901760
    %6272 = vmatpush.xpose.msra.mxu0 %v6271
    %v6273 = vand.u32 %v331, 4294901760
    %6274 = vmatpush.xpose.msra.mxu0 %v6273
    %v6275 = vand.u32 %v327, 4294901760
    %6276 = vmatpush.xpose.msra.mxu0 %v6275
    %v6277 = vand.u32 %v323, 4294901760
    %6278 = vmatpush.xpose.msra.mxu0 %v6277
    %v6279 = vand.u32 %v319, 4294901760
    %6280 = vmatpush.xpose.msra.mxu0 %v6279
    %v6281 = vand.u32 %v315, 4294901760
    %6282 = vmatpush.xpose.msra.mxu0 %v6281
    %v6283 = vand.u32 %v591, 4294901760
    %v6284 = vsub.f32 %v591, %v6283
    %v6285 = vand.u32 %v6284, 4294901760
    %6286 = vmatmul.f32.gmra.mxu0 %v6285
    %v6287 = vpop.f32.mrf.mxu0
    %v6288 = vadd.f32 %v6249, %v6287
    %6289 = vdwg.mxu0
    %v6290 = vand.u32 %v375, 4294901760
    %v6291 = vsub.f32 %v375, %v6290
    %v6292 = vand.u32 %v6291, 4294901760
    %6293 = vmatpush.xpose.msra.mxu0 %v6292
    %v6294 = vand.u32 %v371, 4294901760
    %v6295 = vsub.f32 %v371, %v6294
    %v6296 = vand.u32 %v6295, 4294901760
    %6297 = vmatpush.xpose.msra.mxu0 %v6296
    %v6298 = vand.u32 %v367, 4294901760
    %v6299 = vsub.f32 %v367, %v6298
    %v6300 = vand.u32 %v6299, 4294901760
    %6301 = vmatpush.xpose.msra.mxu0 %v6300
    %v6302 = vand.u32 %v363, 4294901760
    %v6303 = vsub.f32 %v363, %v6302
    %v6304 = vand.u32 %v6303, 4294901760
    %6305 = vmatpush.xpose.msra.mxu0 %v6304
    %v6306 = vand.u32 %v359, 4294901760
    %v6307 = vsub.f32 %v359, %v6306
    %v6308 = vand.u32 %v6307, 4294901760
    %6309 = vmatpush.xpose.msra.mxu0 %v6308
    %v6310 = vand.u32 %v355, 4294901760
    %v6311 = vsub.f32 %v355, %v6310
    %v6312 = vand.u32 %v6311, 4294901760
    %6313 = vmatpush.xpose.msra.mxu0 %v6312
    %v6314 = vand.u32 %v351, 4294901760
    %v6315 = vsub.f32 %v351, %v6314
    %v6316 = vand.u32 %v6315, 4294901760
    %6317 = vmatpush.xpose.msra.mxu0 %v6316
    %v6318 = vand.u32 %v347, 4294901760
    %v6319 = vsub.f32 %v347, %v6318
    %v6320 = vand.u32 %v6319, 4294901760
    %6321 = vmatpush.xpose.msra.mxu0 %v6320
    %v6322 = vand.u32 %v343, 4294901760
    %v6323 = vsub.f32 %v343, %v6322
    %v6324 = vand.u32 %v6323, 4294901760
    %6325 = vmatpush.xpose.msra.mxu0 %v6324
    %v6326 = vand.u32 %v339, 4294901760
    %v6327 = vsub.f32 %v339, %v6326
    %v6328 = vand.u32 %v6327, 4294901760
    %6329 = vmatpush.xpose.msra.mxu0 %v6328
    %v6330 = vand.u32 %v335, 4294901760
    %v6331 = vsub.f32 %v335, %v6330
    %v6332 = vand.u32 %v6331, 4294901760
    %6333 = vmatpush.xpose.msra.mxu0 %v6332
    %v6334 = vand.u32 %v331, 4294901760
    %v6335 = vsub.f32 %v331, %v6334
    %v6336 = vand.u32 %v6335, 4294901760
    %6337 = vmatpush.xpose.msra.mxu0 %v6336
    %v6338 = vand.u32 %v327, 4294901760
    %v6339 = vsub.f32 %v327, %v6338
    %v6340 = vand.u32 %v6339, 4294901760
    %6341 = vmatpush.xpose.msra.mxu0 %v6340
    %v6342 = vand.u32 %v323, 4294901760
    %v6343 = vsub.f32 %v323, %v6342
    %v6344 = vand.u32 %v6343, 4294901760
    %6345 = vmatpush.xpose.msra.mxu0 %v6344
    %v6346 = vand.u32 %v319, 4294901760
    %v6347 = vsub.f32 %v319, %v6346
    %v6348 = vand.u32 %v6347, 4294901760
    %6349 = vmatpush.xpose.msra.mxu0 %v6348
    %v6350 = vand.u32 %v315, 4294901760
    %v6351 = vsub.f32 %v315, %v6350
    %v6352 = vand.u32 %v6351, 4294901760
    %6353 = vmatpush.xpose.msra.mxu0 %v6352
    %v6354 = vand.u32 %v591, 4294901760
    %6355 = vmatmul.f32.gmra.mxu0 %v6354
    %v6356 = vpop.f32.mrf.mxu0
    %v6357 = vadd.f32 %v6288, %v6356
    %6358 = vdwg.mxu0
    %v6359 = vand.u32 %v375, 4294901760
    %6360 = vmatpush.xpose.msra.mxu0 %v6359
    %v6361 = vand.u32 %v371, 4294901760
    %6362 = vmatpush.xpose.msra.mxu0 %v6361
    %v6363 = vand.u32 %v367, 4294901760
    %6364 = vmatpush.xpose.msra.mxu0 %v6363
    %v6365 = vand.u32 %v363, 4294901760
    %6366 = vmatpush.xpose.msra.mxu0 %v6365
    %v6367 = vand.u32 %v359, 4294901760
    %6368 = vmatpush.xpose.msra.mxu0 %v6367
    %v6369 = vand.u32 %v355, 4294901760
    %6370 = vmatpush.xpose.msra.mxu0 %v6369
    %v6371 = vand.u32 %v351, 4294901760
    %6372 = vmatpush.xpose.msra.mxu0 %v6371
    %v6373 = vand.u32 %v347, 4294901760
    %6374 = vmatpush.xpose.msra.mxu0 %v6373
    %v6375 = vand.u32 %v343, 4294901760
    %6376 = vmatpush.xpose.msra.mxu0 %v6375
    %v6377 = vand.u32 %v339, 4294901760
    %6378 = vmatpush.xpose.msra.mxu0 %v6377
    %v6379 = vand.u32 %v335, 4294901760
    %6380 = vmatpush.xpose.msra.mxu0 %v6379
    %v6381 = vand.u32 %v331, 4294901760
    %6382 = vmatpush.xpose.msra.mxu0 %v6381
    %v6383 = vand.u32 %v327, 4294901760
    %6384 = vmatpush.xpose.msra.mxu0 %v6383
    %v6385 = vand.u32 %v323, 4294901760
    %6386 = vmatpush.xpose.msra.mxu0 %v6385
    %v6387 = vand.u32 %v319, 4294901760
    %6388 = vmatpush.xpose.msra.mxu0 %v6387
    %v6389 = vand.u32 %v315, 4294901760
    %6390 = vmatpush.xpose.msra.mxu0 %v6389
    %v6391 = vand.u32 %v591, 4294901760
    %6392 = vmatmul.f32.gmra.mxu0 %v6391
    %v6393 = vpop.f32.mrf.mxu0
    %v6394 = vadd.f32 %v6357, %v6393
    %6395 = vdwg.mxu0
    %v6396 = vand.u32 %v376, 4294901760
    %6397 = vmatpush.xpose.msra.mxu0 %v6396
    %v6398 = vand.u32 %v372, 4294901760
    %6399 = vmatpush.xpose.msra.mxu0 %v6398
    %v6400 = vand.u32 %v368, 4294901760
    %6401 = vmatpush.xpose.msra.mxu0 %v6400
    %v6402 = vand.u32 %v364, 4294901760
    %6403 = vmatpush.xpose.msra.mxu0 %v6402
    %v6404 = vand.u32 %v360, 4294901760
    %6405 = vmatpush.xpose.msra.mxu0 %v6404
    %v6406 = vand.u32 %v356, 4294901760
    %6407 = vmatpush.xpose.msra.mxu0 %v6406
    %v6408 = vand.u32 %v352, 4294901760
    %6409 = vmatpush.xpose.msra.mxu0 %v6408
    %v6410 = vand.u32 %v348, 4294901760
    %6411 = vmatpush.xpose.msra.mxu0 %v6410
    %v6412 = vand.u32 %v344, 4294901760
    %6413 = vmatpush.xpose.msra.mxu0 %v6412
    %v6414 = vand.u32 %v340, 4294901760
    %6415 = vmatpush.xpose.msra.mxu0 %v6414
    %v6416 = vand.u32 %v336, 4294901760
    %6417 = vmatpush.xpose.msra.mxu0 %v6416
    %v6418 = vand.u32 %v332, 4294901760
    %6419 = vmatpush.xpose.msra.mxu0 %v6418
    %v6420 = vand.u32 %v328, 4294901760
    %6421 = vmatpush.xpose.msra.mxu0 %v6420
    %v6422 = vand.u32 %v324, 4294901760
    %6423 = vmatpush.xpose.msra.mxu0 %v6422
    %v6424 = vand.u32 %v320, 4294901760
    %6425 = vmatpush.xpose.msra.mxu0 %v6424
    %v6426 = vand.u32 %v316, 4294901760
    %6427 = vmatpush.xpose.msra.mxu0 %v6426
    %v6428 = vand.u32 %v592, 4294901760
    %v6429 = vsub.f32 %v592, %v6428
    %v6430 = vand.u32 %v6429, 4294901760
    %v6431 = vsub.f32 %v6429, %v6430
    %v6432 = vand.u32 %v6431, 4294901760
    %6433 = vmatmul.f32.gmra.mxu0 %v6432
    %v6434 = vpop.f32.mrf.mxu0
    %v6435 = vadd.f32 %v6394, %v6434
    %6436 = vdwg.mxu0
    %v6437 = vand.u32 %v376, 4294901760
    %v6438 = vsub.f32 %v376, %v6437
    %v6439 = vand.u32 %v6438, 4294901760
    %v6440 = vsub.f32 %v6438, %v6439
    %v6441 = vand.u32 %v6440, 4294901760
    %6442 = vmatpush.xpose.msra.mxu0 %v6441
    %v6443 = vand.u32 %v372, 4294901760
    %v6444 = vsub.f32 %v372, %v6443
    %v6445 = vand.u32 %v6444, 4294901760
    %v6446 = vsub.f32 %v6444, %v6445
    %v6447 = vand.u32 %v6446, 4294901760
    %6448 = vmatpush.xpose.msra.mxu0 %v6447
    %v6449 = vand.u32 %v368, 4294901760
    %v6450 = vsub.f32 %v368, %v6449
    %v6451 = vand.u32 %v6450, 4294901760
    %v6452 = vsub.f32 %v6450, %v6451
    %v6453 = vand.u32 %v6452, 4294901760
    %6454 = vmatpush.xpose.msra.mxu0 %v6453
    %v6455 = vand.u32 %v364, 4294901760
    %v6456 = vsub.f32 %v364, %v6455
    %v6457 = vand.u32 %v6456, 4294901760
    %v6458 = vsub.f32 %v6456, %v6457
    %v6459 = vand.u32 %v6458, 4294901760
    %6460 = vmatpush.xpose.msra.mxu0 %v6459
    %v6461 = vand.u32 %v360, 4294901760
    %v6462 = vsub.f32 %v360, %v6461
    %v6463 = vand.u32 %v6462, 4294901760
    %v6464 = vsub.f32 %v6462, %v6463
    %v6465 = vand.u32 %v6464, 4294901760
    %6466 = vmatpush.xpose.msra.mxu0 %v6465
    %v6467 = vand.u32 %v356, 4294901760
    %v6468 = vsub.f32 %v356, %v6467
    %v6469 = vand.u32 %v6468, 4294901760
    %v6470 = vsub.f32 %v6468, %v6469
    %v6471 = vand.u32 %v6470, 4294901760
    %6472 = vmatpush.xpose.msra.mxu0 %v6471
    %v6473 = vand.u32 %v352, 4294901760
    %v6474 = vsub.f32 %v352, %v6473
    %v6475 = vand.u32 %v6474, 4294901760
    %v6476 = vsub.f32 %v6474, %v6475
    %v6477 = vand.u32 %v6476, 4294901760
    %6478 = vmatpush.xpose.msra.mxu0 %v6477
    %v6479 = vand.u32 %v348, 4294901760
    %v6480 = vsub.f32 %v348, %v6479
    %v6481 = vand.u32 %v6480, 4294901760
    %v6482 = vsub.f32 %v6480, %v6481
    %v6483 = vand.u32 %v6482, 4294901760
    %6484 = vmatpush.xpose.msra.mxu0 %v6483
    %v6485 = vand.u32 %v344, 4294901760
    %v6486 = vsub.f32 %v344, %v6485
    %v6487 = vand.u32 %v6486, 4294901760
    %v6488 = vsub.f32 %v6486, %v6487
    %v6489 = vand.u32 %v6488, 4294901760
    %6490 = vmatpush.xpose.msra.mxu0 %v6489
    %v6491 = vand.u32 %v340, 4294901760
    %v6492 = vsub.f32 %v340, %v6491
    %v6493 = vand.u32 %v6492, 4294901760
    %v6494 = vsub.f32 %v6492, %v6493
    %v6495 = vand.u32 %v6494, 4294901760
    %6496 = vmatpush.xpose.msra.mxu0 %v6495
    %v6497 = vand.u32 %v336, 4294901760
    %v6498 = vsub.f32 %v336, %v6497
    %v6499 = vand.u32 %v6498, 4294901760
    %v6500 = vsub.f32 %v6498, %v6499
    %v6501 = vand.u32 %v6500, 4294901760
    %6502 = vmatpush.xpose.msra.mxu0 %v6501
    %v6503 = vand.u32 %v332, 4294901760
    %v6504 = vsub.f32 %v332, %v6503
    %v6505 = vand.u32 %v6504, 4294901760
    %v6506 = vsub.f32 %v6504, %v6505
    %v6507 = vand.u32 %v6506, 4294901760
    %6508 = vmatpush.xpose.msra.mxu0 %v6507
    %v6509 = vand.u32 %v328, 4294901760
    %v6510 = vsub.f32 %v328, %v6509
    %v6511 = vand.u32 %v6510, 4294901760
    %v6512 = vsub.f32 %v6510, %v6511
    %v6513 = vand.u32 %v6512, 4294901760
    %6514 = vmatpush.xpose.msra.mxu0 %v6513
    %v6515 = vand.u32 %v324, 4294901760
    %v6516 = vsub.f32 %v324, %v6515
    %v6517 = vand.u32 %v6516, 4294901760
    %v6518 = vsub.f32 %v6516, %v6517
    %v6519 = vand.u32 %v6518, 4294901760
    %6520 = vmatpush.xpose.msra.mxu0 %v6519
    %v6521 = vand.u32 %v320, 4294901760
    %v6522 = vsub.f32 %v320, %v6521
    %v6523 = vand.u32 %v6522, 4294901760
    %v6524 = vsub.f32 %v6522, %v6523
    %v6525 = vand.u32 %v6524, 4294901760
    %6526 = vmatpush.xpose.msra.mxu0 %v6525
    %v6527 = vand.u32 %v316, 4294901760
    %v6528 = vsub.f32 %v316, %v6527
    %v6529 = vand.u32 %v6528, 4294901760
    %v6530 = vsub.f32 %v6528, %v6529
    %v6531 = vand.u32 %v6530, 4294901760
    %6532 = vmatpush.xpose.msra.mxu0 %v6531
    %v6533 = vand.u32 %v592, 4294901760
    %6534 = vmatmul.f32.gmra.mxu0 %v6533
    %v6535 = vpop.f32.mrf.mxu0
    %v6536 = vadd.f32 %v6435, %v6535
    %6537 = vdwg.mxu0
    %v6538 = vand.u32 %v376, 4294901760
    %v6539 = vsub.f32 %v376, %v6538
    %6540 = vmatpush.xpose.msra.mxu0 %v6539
    %v6541 = vand.u32 %v372, 4294901760
    %v6542 = vsub.f32 %v372, %v6541
    %6543 = vmatpush.xpose.msra.mxu0 %v6542
    %v6544 = vand.u32 %v368, 4294901760
    %v6545 = vsub.f32 %v368, %v6544
    %6546 = vmatpush.xpose.msra.mxu0 %v6545
    %v6547 = vand.u32 %v364, 4294901760
    %v6548 = vsub.f32 %v364, %v6547
    %6549 = vmatpush.xpose.msra.mxu0 %v6548
    %v6550 = vand.u32 %v360, 4294901760
    %v6551 = vsub.f32 %v360, %v6550
    %6552 = vmatpush.xpose.msra.mxu0 %v6551
    %v6553 = vand.u32 %v356, 4294901760
    %v6554 = vsub.f32 %v356, %v6553
    %6555 = vmatpush.xpose.msra.mxu0 %v6554
    %v6556 = vand.u32 %v352, 4294901760
    %v6557 = vsub.f32 %v352, %v6556
    %6558 = vmatpush.xpose.msra.mxu0 %v6557
    %v6559 = vand.u32 %v348, 4294901760
    %v6560 = vsub.f32 %v348, %v6559
    %6561 = vmatpush.xpose.msra.mxu0 %v6560
    %v6562 = vand.u32 %v344, 4294901760
    %v6563 = vsub.f32 %v344, %v6562
    %6564 = vmatpush.xpose.msra.mxu0 %v6563
    %v6565 = vand.u32 %v340, 4294901760
    %v6566 = vsub.f32 %v340, %v6565
    %6567 = vmatpush.xpose.msra.mxu0 %v6566
    %v6568 = vand.u32 %v336, 4294901760
    %v6569 = vsub.f32 %v336, %v6568
    %6570 = vmatpush.xpose.msra.mxu0 %v6569
    %v6571 = vand.u32 %v332, 4294901760
    %v6572 = vsub.f32 %v332, %v6571
    %6573 = vmatpush.xpose.msra.mxu0 %v6572
    %v6574 = vand.u32 %v328, 4294901760
    %v6575 = vsub.f32 %v328, %v6574
    %6576 = vmatpush.xpose.msra.mxu0 %v6575
    %v6577 = vand.u32 %v324, 4294901760
    %v6578 = vsub.f32 %v324, %v6577
    %6579 = vmatpush.xpose.msra.mxu0 %v6578
    %v6580 = vand.u32 %v320, 4294901760
    %v6581 = vsub.f32 %v320, %v6580
    %6582 = vmatpush.xpose.msra.mxu0 %v6581
    %v6583 = vand.u32 %v316, 4294901760
    %v6584 = vsub.f32 %v316, %v6583
    %6585 = vmatpush.xpose.msra.mxu0 %v6584
    %v6586 = vand.u32 %v592, 4294901760
    %v6587 = vsub.f32 %v592, %v6586
    %6588 = vmatmul.f32.gmra.mxu0 %v6587
    %v6589 = vpop.f32.mrf.mxu0
    %v6590 = vadd.f32 %v6536, %v6589
    %6591 = vdwg.mxu0
    %v6592 = vand.u32 %v376, 4294901760
    %6593 = vmatpush.xpose.msra.mxu0 %v6592
    %v6594 = vand.u32 %v372, 4294901760
    %6595 = vmatpush.xpose.msra.mxu0 %v6594
    %v6596 = vand.u32 %v368, 4294901760
    %6597 = vmatpush.xpose.msra.mxu0 %v6596
    %v6598 = vand.u32 %v364, 4294901760
    %6599 = vmatpush.xpose.msra.mxu0 %v6598
    %v6600 = vand.u32 %v360, 4294901760
    %6601 = vmatpush.xpose.msra.mxu0 %v6600
    %v6602 = vand.u32 %v356, 4294901760
    %6603 = vmatpush.xpose.msra.mxu0 %v6602
    %v6604 = vand.u32 %v352, 4294901760
    %6605 = vmatpush.xpose.msra.mxu0 %v6604
    %v6606 = vand.u32 %v348, 4294901760
    %6607 = vmatpush.xpose.msra.mxu0 %v6606
    %v6608 = vand.u32 %v344, 4294901760
    %6609 = vmatpush.xpose.msra.mxu0 %v6608
    %v6610 = vand.u32 %v340, 4294901760
    %6611 = vmatpush.xpose.msra.mxu0 %v6610
    %v6612 = vand.u32 %v336, 4294901760
    %6613 = vmatpush.xpose.msra.mxu0 %v6612
    %v6614 = vand.u32 %v332, 4294901760
    %6615 = vmatpush.xpose.msra.mxu0 %v6614
    %v6616 = vand.u32 %v328, 4294901760
    %6617 = vmatpush.xpose.msra.mxu0 %v6616
    %v6618 = vand.u32 %v324, 4294901760
    %6619 = vmatpush.xpose.msra.mxu0 %v6618
    %v6620 = vand.u32 %v320, 4294901760
    %6621 = vmatpush.xpose.msra.mxu0 %v6620
    %v6622 = vand.u32 %v316, 4294901760
    %6623 = vmatpush.xpose.msra.mxu0 %v6622
    %v6624 = vand.u32 %v592, 4294901760
    %v6625 = vsub.f32 %v592, %v6624
    %v6626 = vand.u32 %v6625, 4294901760
    %6627 = vmatmul.f32.gmra.mxu0 %v6626
    %v6628 = vpop.f32.mrf.mxu0
    %v6629 = vadd.f32 %v6590, %v6628
    %6630 = vdwg.mxu0
    %v6631 = vand.u32 %v376, 4294901760
    %v6632 = vsub.f32 %v376, %v6631
    %v6633 = vand.u32 %v6632, 4294901760
    %6634 = vmatpush.xpose.msra.mxu0 %v6633
    %v6635 = vand.u32 %v372, 4294901760
    %v6636 = vsub.f32 %v372, %v6635
    %v6637 = vand.u32 %v6636, 4294901760
    %6638 = vmatpush.xpose.msra.mxu0 %v6637
    %v6639 = vand.u32 %v368, 4294901760
    %v6640 = vsub.f32 %v368, %v6639
    %v6641 = vand.u32 %v6640, 4294901760
    %6642 = vmatpush.xpose.msra.mxu0 %v6641
    %v6643 = vand.u32 %v364, 4294901760
    %v6644 = vsub.f32 %v364, %v6643
    %v6645 = vand.u32 %v6644, 4294901760
    %6646 = vmatpush.xpose.msra.mxu0 %v6645
    %v6647 = vand.u32 %v360, 4294901760
    %v6648 = vsub.f32 %v360, %v6647
    %v6649 = vand.u32 %v6648, 4294901760
    %6650 = vmatpush.xpose.msra.mxu0 %v6649
    %v6651 = vand.u32 %v356, 4294901760
    %v6652 = vsub.f32 %v356, %v6651
    %v6653 = vand.u32 %v6652, 4294901760
    %6654 = vmatpush.xpose.msra.mxu0 %v6653
    %v6655 = vand.u32 %v352, 4294901760
    %v6656 = vsub.f32 %v352, %v6655
    %v6657 = vand.u32 %v6656, 4294901760
    %6658 = vmatpush.xpose.msra.mxu0 %v6657
    %v6659 = vand.u32 %v348, 4294901760
    %v6660 = vsub.f32 %v348, %v6659
    %v6661 = vand.u32 %v6660, 4294901760
    %6662 = vmatpush.xpose.msra.mxu0 %v6661
    %v6663 = vand.u32 %v344, 4294901760
    %v6664 = vsub.f32 %v344, %v6663
    %v6665 = vand.u32 %v6664, 4294901760
    %6666 = vmatpush.xpose.msra.mxu0 %v6665
    %v6667 = vand.u32 %v340, 4294901760
    %v6668 = vsub.f32 %v340, %v6667
    %v6669 = vand.u32 %v6668, 4294901760
    %6670 = vmatpush.xpose.msra.mxu0 %v6669
    %v6671 = vand.u32 %v336, 4294901760
    %v6672 = vsub.f32 %v336, %v6671
    %v6673 = vand.u32 %v6672, 4294901760
    %6674 = vmatpush.xpose.msra.mxu0 %v6673
    %v6675 = vand.u32 %v332, 4294901760
    %v6676 = vsub.f32 %v332, %v6675
    %v6677 = vand.u32 %v6676, 4294901760
    %6678 = vmatpush.xpose.msra.mxu0 %v6677
    %v6679 = vand.u32 %v328, 4294901760
    %v6680 = vsub.f32 %v328, %v6679
    %v6681 = vand.u32 %v6680, 4294901760
    %6682 = vmatpush.xpose.msra.mxu0 %v6681
    %v6683 = vand.u32 %v324, 4294901760
    %v6684 = vsub.f32 %v324, %v6683
    %v6685 = vand.u32 %v6684, 4294901760
    %6686 = vmatpush.xpose.msra.mxu0 %v6685
    %v6687 = vand.u32 %v320, 4294901760
    %v6688 = vsub.f32 %v320, %v6687
    %v6689 = vand.u32 %v6688, 4294901760
    %6690 = vmatpush.xpose.msra.mxu0 %v6689
    %v6691 = vand.u32 %v316, 4294901760
    %v6692 = vsub.f32 %v316, %v6691
    %v6693 = vand.u32 %v6692, 4294901760
    %6694 = vmatpush.xpose.msra.mxu0 %v6693
    %v6695 = vand.u32 %v592, 4294901760
    %6696 = vmatmul.f32.gmra.mxu0 %v6695
    %v6697 = vpop.f32.mrf.mxu0
    %v6698 = vadd.f32 %v6629, %v6697
    %6699 = vdwg.mxu0
    %v6700 = vand.u32 %v376, 4294901760
    %6701 = vmatpush.xpose.msra.mxu0 %v6700
    %v6702 = vand.u32 %v372, 4294901760
    %6703 = vmatpush.xpose.msra.mxu0 %v6702
    %v6704 = vand.u32 %v368, 4294901760
    %6705 = vmatpush.xpose.msra.mxu0 %v6704
    %v6706 = vand.u32 %v364, 4294901760
    %6707 = vmatpush.xpose.msra.mxu0 %v6706
    %v6708 = vand.u32 %v360, 4294901760
    %6709 = vmatpush.xpose.msra.mxu0 %v6708
    %v6710 = vand.u32 %v356, 4294901760
    %6711 = vmatpush.xpose.msra.mxu0 %v6710
    %v6712 = vand.u32 %v352, 4294901760
    %6713 = vmatpush.xpose.msra.mxu0 %v6712
    %v6714 = vand.u32 %v348, 4294901760
    %6715 = vmatpush.xpose.msra.mxu0 %v6714
    %v6716 = vand.u32 %v344, 4294901760
    %6717 = vmatpush.xpose.msra.mxu0 %v6716
    %v6718 = vand.u32 %v340, 4294901760
    %6719 = vmatpush.xpose.msra.mxu0 %v6718
    %v6720 = vand.u32 %v336, 4294901760
    %6721 = vmatpush.xpose.msra.mxu0 %v6720
    %v6722 = vand.u32 %v332, 4294901760
    %6723 = vmatpush.xpose.msra.mxu0 %v6722
    %v6724 = vand.u32 %v328, 4294901760
    %6725 = vmatpush.xpose.msra.mxu0 %v6724
    %v6726 = vand.u32 %v324, 4294901760
    %6727 = vmatpush.xpose.msra.mxu0 %v6726
    %v6728 = vand.u32 %v320, 4294901760
    %6729 = vmatpush.xpose.msra.mxu0 %v6728
    %v6730 = vand.u32 %v316, 4294901760
    %6731 = vmatpush.xpose.msra.mxu0 %v6730
    %v6732 = vand.u32 %v592, 4294901760
    %6733 = vmatmul.f32.gmra.mxu0 %v6732
    %v6734 = vpop.f32.mrf.mxu0
    %v6735 = vadd.f32 %v6698, %v6734
    %6736 = vdwg.mxu0
    %v6737 = vand.u32 %v377, 4294901760
    %6738 = vmatpush.xpose.msra.mxu0 %v6737
    %v6739 = vand.u32 %v373, 4294901760
    %6740 = vmatpush.xpose.msra.mxu0 %v6739
    %v6741 = vand.u32 %v369, 4294901760
    %6742 = vmatpush.xpose.msra.mxu0 %v6741
    %v6743 = vand.u32 %v365, 4294901760
    %6744 = vmatpush.xpose.msra.mxu0 %v6743
    %v6745 = vand.u32 %v361, 4294901760
    %6746 = vmatpush.xpose.msra.mxu0 %v6745
    %v6747 = vand.u32 %v357, 4294901760
    %6748 = vmatpush.xpose.msra.mxu0 %v6747
    %v6749 = vand.u32 %v353, 4294901760
    %6750 = vmatpush.xpose.msra.mxu0 %v6749
    %v6751 = vand.u32 %v349, 4294901760
    %6752 = vmatpush.xpose.msra.mxu0 %v6751
    %v6753 = vand.u32 %v345, 4294901760
    %6754 = vmatpush.xpose.msra.mxu0 %v6753
    %v6755 = vand.u32 %v341, 4294901760
    %6756 = vmatpush.xpose.msra.mxu0 %v6755
    %v6757 = vand.u32 %v337, 4294901760
    %6758 = vmatpush.xpose.msra.mxu0 %v6757
    %v6759 = vand.u32 %v333, 4294901760
    %6760 = vmatpush.xpose.msra.mxu0 %v6759
    %v6761 = vand.u32 %v329, 4294901760
    %6762 = vmatpush.xpose.msra.mxu0 %v6761
    %v6763 = vand.u32 %v325, 4294901760
    %6764 = vmatpush.xpose.msra.mxu0 %v6763
    %v6765 = vand.u32 %v321, 4294901760
    %6766 = vmatpush.xpose.msra.mxu0 %v6765
    %v6767 = vand.u32 %v317, 4294901760
    %6768 = vmatpush.xpose.msra.mxu0 %v6767
    %v6769 = vand.u32 %v593, 4294901760
    %v6770 = vsub.f32 %v593, %v6769
    %v6771 = vand.u32 %v6770, 4294901760
    %v6772 = vsub.f32 %v6770, %v6771
    %v6773 = vand.u32 %v6772, 4294901760
    %6774 = vmatmul.f32.gmra.mxu0 %v6773
    %v6775 = vpop.f32.mrf.mxu0
    %v6776 = vadd.f32 %v6735, %v6775
    %6777 = vdwg.mxu0
    %v6778 = vand.u32 %v377, 4294901760
    %v6779 = vsub.f32 %v377, %v6778
    %v6780 = vand.u32 %v6779, 4294901760
    %v6781 = vsub.f32 %v6779, %v6780
    %v6782 = vand.u32 %v6781, 4294901760
    %6783 = vmatpush.xpose.msra.mxu0 %v6782
    %v6784 = vand.u32 %v373, 4294901760
    %v6785 = vsub.f32 %v373, %v6784
    %v6786 = vand.u32 %v6785, 4294901760
    %v6787 = vsub.f32 %v6785, %v6786
    %v6788 = vand.u32 %v6787, 4294901760
    %6789 = vmatpush.xpose.msra.mxu0 %v6788
    %v6790 = vand.u32 %v369, 4294901760
    %v6791 = vsub.f32 %v369, %v6790
    %v6792 = vand.u32 %v6791, 4294901760
    %v6793 = vsub.f32 %v6791, %v6792
    %v6794 = vand.u32 %v6793, 4294901760
    %6795 = vmatpush.xpose.msra.mxu0 %v6794
    %v6796 = vand.u32 %v365, 4294901760
    %v6797 = vsub.f32 %v365, %v6796
    %v6798 = vand.u32 %v6797, 4294901760
    %v6799 = vsub.f32 %v6797, %v6798
    %v6800 = vand.u32 %v6799, 4294901760
    %6801 = vmatpush.xpose.msra.mxu0 %v6800
    %v6802 = vand.u32 %v361, 4294901760
    %v6803 = vsub.f32 %v361, %v6802
    %v6804 = vand.u32 %v6803, 4294901760
    %v6805 = vsub.f32 %v6803, %v6804
    %v6806 = vand.u32 %v6805, 4294901760
    %6807 = vmatpush.xpose.msra.mxu0 %v6806
    %v6808 = vand.u32 %v357, 4294901760
    %v6809 = vsub.f32 %v357, %v6808
    %v6810 = vand.u32 %v6809, 4294901760
    %v6811 = vsub.f32 %v6809, %v6810
    %v6812 = vand.u32 %v6811, 4294901760
    %6813 = vmatpush.xpose.msra.mxu0 %v6812
    %v6814 = vand.u32 %v353, 4294901760
    %v6815 = vsub.f32 %v353, %v6814
    %v6816 = vand.u32 %v6815, 4294901760
    %v6817 = vsub.f32 %v6815, %v6816
    %v6818 = vand.u32 %v6817, 4294901760
    %6819 = vmatpush.xpose.msra.mxu0 %v6818
    %v6820 = vand.u32 %v349, 4294901760
    %v6821 = vsub.f32 %v349, %v6820
    %v6822 = vand.u32 %v6821, 4294901760
    %v6823 = vsub.f32 %v6821, %v6822
    %v6824 = vand.u32 %v6823, 4294901760
    %6825 = vmatpush.xpose.msra.mxu0 %v6824
    %v6826 = vand.u32 %v345, 4294901760
    %v6827 = vsub.f32 %v345, %v6826
    %v6828 = vand.u32 %v6827, 4294901760
    %v6829 = vsub.f32 %v6827, %v6828
    %v6830 = vand.u32 %v6829, 4294901760
    %6831 = vmatpush.xpose.msra.mxu0 %v6830
    %v6832 = vand.u32 %v341, 4294901760
    %v6833 = vsub.f32 %v341, %v6832
    %v6834 = vand.u32 %v6833, 4294901760
    %v6835 = vsub.f32 %v6833, %v6834
    %v6836 = vand.u32 %v6835, 4294901760
    %6837 = vmatpush.xpose.msra.mxu0 %v6836
    %v6838 = vand.u32 %v337, 4294901760
    %v6839 = vsub.f32 %v337, %v6838
    %v6840 = vand.u32 %v6839, 4294901760
    %v6841 = vsub.f32 %v6839, %v6840
    %v6842 = vand.u32 %v6841, 4294901760
    %6843 = vmatpush.xpose.msra.mxu0 %v6842
    %v6844 = vand.u32 %v333, 4294901760
    %v6845 = vsub.f32 %v333, %v6844
    %v6846 = vand.u32 %v6845, 4294901760
    %v6847 = vsub.f32 %v6845, %v6846
    %v6848 = vand.u32 %v6847, 4294901760
    %6849 = vmatpush.xpose.msra.mxu0 %v6848
    %v6850 = vand.u32 %v329, 4294901760
    %v6851 = vsub.f32 %v329, %v6850
    %v6852 = vand.u32 %v6851, 4294901760
    %v6853 = vsub.f32 %v6851, %v6852
    %v6854 = vand.u32 %v6853, 4294901760
    %6855 = vmatpush.xpose.msra.mxu0 %v6854
    %v6856 = vand.u32 %v325, 4294901760
    %v6857 = vsub.f32 %v325, %v6856
    %v6858 = vand.u32 %v6857, 4294901760
    %v6859 = vsub.f32 %v6857, %v6858
    %v6860 = vand.u32 %v6859, 4294901760
    %6861 = vmatpush.xpose.msra.mxu0 %v6860
    %v6862 = vand.u32 %v321, 4294901760
    %v6863 = vsub.f32 %v321, %v6862
    %v6864 = vand.u32 %v6863, 4294901760
    %v6865 = vsub.f32 %v6863, %v6864
    %v6866 = vand.u32 %v6865, 4294901760
    %6867 = vmatpush.xpose.msra.mxu0 %v6866
    %v6868 = vand.u32 %v317, 4294901760
    %v6869 = vsub.f32 %v317, %v6868
    %v6870 = vand.u32 %v6869, 4294901760
    %v6871 = vsub.f32 %v6869, %v6870
    %v6872 = vand.u32 %v6871, 4294901760
    %6873 = vmatpush.xpose.msra.mxu0 %v6872
    %v6874 = vand.u32 %v593, 4294901760
    %6875 = vmatmul.f32.gmra.mxu0 %v6874
    %v6876 = vpop.f32.mrf.mxu0
    %v6877 = vadd.f32 %v6776, %v6876
    %6878 = vdwg.mxu0
    %v6879 = vand.u32 %v377, 4294901760
    %v6880 = vsub.f32 %v377, %v6879
    %6881 = vmatpush.xpose.msra.mxu0 %v6880
    %v6882 = vand.u32 %v373, 4294901760
    %v6883 = vsub.f32 %v373, %v6882
    %6884 = vmatpush.xpose.msra.mxu0 %v6883
    %v6885 = vand.u32 %v369, 4294901760
    %v6886 = vsub.f32 %v369, %v6885
    %6887 = vmatpush.xpose.msra.mxu0 %v6886
    %v6888 = vand.u32 %v365, 4294901760
    %v6889 = vsub.f32 %v365, %v6888
    %6890 = vmatpush.xpose.msra.mxu0 %v6889
    %v6891 = vand.u32 %v361, 4294901760
    %v6892 = vsub.f32 %v361, %v6891
    %6893 = vmatpush.xpose.msra.mxu0 %v6892
    %v6894 = vand.u32 %v357, 4294901760
    %v6895 = vsub.f32 %v357, %v6894
    %6896 = vmatpush.xpose.msra.mxu0 %v6895
    %v6897 = vand.u32 %v353, 4294901760
    %v6898 = vsub.f32 %v353, %v6897
    %6899 = vmatpush.xpose.msra.mxu0 %v6898
    %v6900 = vand.u32 %v349, 4294901760
    %v6901 = vsub.f32 %v349, %v6900
    %6902 = vmatpush.xpose.msra.mxu0 %v6901
    %v6903 = vand.u32 %v345, 4294901760
    %v6904 = vsub.f32 %v345, %v6903
    %6905 = vmatpush.xpose.msra.mxu0 %v6904
    %v6906 = vand.u32 %v341, 4294901760
    %v6907 = vsub.f32 %v341, %v6906
    %6908 = vmatpush.xpose.msra.mxu0 %v6907
    %v6909 = vand.u32 %v337, 4294901760
    %v6910 = vsub.f32 %v337, %v6909
    %6911 = vmatpush.xpose.msra.mxu0 %v6910
    %v6912 = vand.u32 %v333, 4294901760
    %v6913 = vsub.f32 %v333, %v6912
    %6914 = vmatpush.xpose.msra.mxu0 %v6913
    %v6915 = vand.u32 %v329, 4294901760
    %v6916 = vsub.f32 %v329, %v6915
    %6917 = vmatpush.xpose.msra.mxu0 %v6916
    %v6918 = vand.u32 %v325, 4294901760
    %v6919 = vsub.f32 %v325, %v6918
    %6920 = vmatpush.xpose.msra.mxu0 %v6919
    %v6921 = vand.u32 %v321, 4294901760
    %v6922 = vsub.f32 %v321, %v6921
    %6923 = vmatpush.xpose.msra.mxu0 %v6922
    %v6924 = vand.u32 %v317, 4294901760
    %v6925 = vsub.f32 %v317, %v6924
    %6926 = vmatpush.xpose.msra.mxu0 %v6925
    %v6927 = vand.u32 %v593, 4294901760
    %v6928 = vsub.f32 %v593, %v6927
    %6929 = vmatmul.f32.gmra.mxu0 %v6928
    %v6930 = vpop.f32.mrf.mxu0
    %v6931 = vadd.f32 %v6877, %v6930
    %6932 = vdwg.mxu0
    %v6933 = vand.u32 %v377, 4294901760
    %6934 = vmatpush.xpose.msra.mxu0 %v6933
    %v6935 = vand.u32 %v373, 4294901760
    %6936 = vmatpush.xpose.msra.mxu0 %v6935
    %v6937 = vand.u32 %v369, 4294901760
    %6938 = vmatpush.xpose.msra.mxu0 %v6937
    %v6939 = vand.u32 %v365, 4294901760
    %6940 = vmatpush.xpose.msra.mxu0 %v6939
    %v6941 = vand.u32 %v361, 4294901760
    %6942 = vmatpush.xpose.msra.mxu0 %v6941
    %v6943 = vand.u32 %v357, 4294901760
    %6944 = vmatpush.xpose.msra.mxu0 %v6943
    %v6945 = vand.u32 %v353, 4294901760
    %6946 = vmatpush.xpose.msra.mxu0 %v6945
    %v6947 = vand.u32 %v349, 4294901760
    %6948 = vmatpush.xpose.msra.mxu0 %v6947
    %v6949 = vand.u32 %v345, 4294901760
    %6950 = vmatpush.xpose.msra.mxu0 %v6949
    %v6951 = vand.u32 %v341, 4294901760
    %6952 = vmatpush.xpose.msra.mxu0 %v6951
    %v6953 = vand.u32 %v337, 4294901760
    %6954 = vmatpush.xpose.msra.mxu0 %v6953
    %v6955 = vand.u32 %v333, 4294901760
    %6956 = vmatpush.xpose.msra.mxu0 %v6955
    %v6957 = vand.u32 %v329, 4294901760
    %6958 = vmatpush.xpose.msra.mxu0 %v6957
    %v6959 = vand.u32 %v325, 4294901760
    %6960 = vmatpush.xpose.msra.mxu0 %v6959
    %v6961 = vand.u32 %v321, 4294901760
    %6962 = vmatpush.xpose.msra.mxu0 %v6961
    %v6963 = vand.u32 %v317, 4294901760
    %6964 = vmatpush.xpose.msra.mxu0 %v6963
    %v6965 = vand.u32 %v593, 4294901760
    %v6966 = vsub.f32 %v593, %v6965
    %v6967 = vand.u32 %v6966, 4294901760
    %6968 = vmatmul.f32.gmra.mxu0 %v6967
    %v6969 = vpop.f32.mrf.mxu0
    %v6970 = vadd.f32 %v6931, %v6969
    %6971 = vdwg.mxu0
    %v6972 = vand.u32 %v377, 4294901760
    %v6973 = vsub.f32 %v377, %v6972
    %v6974 = vand.u32 %v6973, 4294901760
    %6975 = vmatpush.xpose.msra.mxu0 %v6974
    %v6976 = vand.u32 %v373, 4294901760
    %v6977 = vsub.f32 %v373, %v6976
    %v6978 = vand.u32 %v6977, 4294901760
    %6979 = vmatpush.xpose.msra.mxu0 %v6978
    %v6980 = vand.u32 %v369, 4294901760
    %v6981 = vsub.f32 %v369, %v6980
    %v6982 = vand.u32 %v6981, 4294901760
    %6983 = vmatpush.xpose.msra.mxu0 %v6982
    %v6984 = vand.u32 %v365, 4294901760
    %v6985 = vsub.f32 %v365, %v6984
    %v6986 = vand.u32 %v6985, 4294901760
    %6987 = vmatpush.xpose.msra.mxu0 %v6986
    %v6988 = vand.u32 %v361, 4294901760
    %v6989 = vsub.f32 %v361, %v6988
    %v6990 = vand.u32 %v6989, 4294901760
    %6991 = vmatpush.xpose.msra.mxu0 %v6990
    %v6992 = vand.u32 %v357, 4294901760
    %v6993 = vsub.f32 %v357, %v6992
    %v6994 = vand.u32 %v6993, 4294901760
    %6995 = vmatpush.xpose.msra.mxu0 %v6994
    %v6996 = vand.u32 %v353, 4294901760
    %v6997 = vsub.f32 %v353, %v6996
    %v6998 = vand.u32 %v6997, 4294901760
    %6999 = vmatpush.xpose.msra.mxu0 %v6998
    %v7000 = vand.u32 %v349, 4294901760
    %v7001 = vsub.f32 %v349, %v7000
    %v7002 = vand.u32 %v7001, 4294901760
    %7003 = vmatpush.xpose.msra.mxu0 %v7002
    %v7004 = vand.u32 %v345, 4294901760
    %v7005 = vsub.f32 %v345, %v7004
    %v7006 = vand.u32 %v7005, 4294901760
    %7007 = vmatpush.xpose.msra.mxu0 %v7006
    %v7008 = vand.u32 %v341, 4294901760
    %v7009 = vsub.f32 %v341, %v7008
    %v7010 = vand.u32 %v7009, 4294901760
    %7011 = vmatpush.xpose.msra.mxu0 %v7010
    %v7012 = vand.u32 %v337, 4294901760
    %v7013 = vsub.f32 %v337, %v7012
    %v7014 = vand.u32 %v7013, 4294901760
    %7015 = vmatpush.xpose.msra.mxu0 %v7014
    %v7016 = vand.u32 %v333, 4294901760
    %v7017 = vsub.f32 %v333, %v7016
    %v7018 = vand.u32 %v7017, 4294901760
    %7019 = vmatpush.xpose.msra.mxu0 %v7018
    %v7020 = vand.u32 %v329, 4294901760
    %v7021 = vsub.f32 %v329, %v7020
    %v7022 = vand.u32 %v7021, 4294901760
    %7023 = vmatpush.xpose.msra.mxu0 %v7022
    %v7024 = vand.u32 %v325, 4294901760
    %v7025 = vsub.f32 %v325, %v7024
    %v7026 = vand.u32 %v7025, 4294901760
    %7027 = vmatpush.xpose.msra.mxu0 %v7026
    %v7028 = vand.u32 %v321, 4294901760
    %v7029 = vsub.f32 %v321, %v7028
    %v7030 = vand.u32 %v7029, 4294901760
    %7031 = vmatpush.xpose.msra.mxu0 %v7030
    %v7032 = vand.u32 %v317, 4294901760
    %v7033 = vsub.f32 %v317, %v7032
    %v7034 = vand.u32 %v7033, 4294901760
    %7035 = vmatpush.xpose.msra.mxu0 %v7034
    %v7036 = vand.u32 %v593, 4294901760
    %7037 = vmatmul.f32.gmra.mxu0 %v7036
    %v7038 = vpop.f32.mrf.mxu0
    %v7039 = vadd.f32 %v6970, %v7038
    %7040 = vdwg.mxu0
    %v7041 = vand.u32 %v377, 4294901760
    %7042 = vmatpush.xpose.msra.mxu0 %v7041
    %v7043 = vand.u32 %v373, 4294901760
    %7044 = vmatpush.xpose.msra.mxu0 %v7043
    %v7045 = vand.u32 %v369, 4294901760
    %7046 = vmatpush.xpose.msra.mxu0 %v7045
    %v7047 = vand.u32 %v365, 4294901760
    %7048 = vmatpush.xpose.msra.mxu0 %v7047
    %v7049 = vand.u32 %v361, 4294901760
    %7050 = vmatpush.xpose.msra.mxu0 %v7049
    %v7051 = vand.u32 %v357, 4294901760
    %7052 = vmatpush.xpose.msra.mxu0 %v7051
    %v7053 = vand.u32 %v353, 4294901760
    %7054 = vmatpush.xpose.msra.mxu0 %v7053
    %v7055 = vand.u32 %v349, 4294901760
    %7056 = vmatpush.xpose.msra.mxu0 %v7055
    %v7057 = vand.u32 %v345, 4294901760
    %7058 = vmatpush.xpose.msra.mxu0 %v7057
    %v7059 = vand.u32 %v341, 4294901760
    %7060 = vmatpush.xpose.msra.mxu0 %v7059
    %v7061 = vand.u32 %v337, 4294901760
    %7062 = vmatpush.xpose.msra.mxu0 %v7061
    %v7063 = vand.u32 %v333, 4294901760
    %7064 = vmatpush.xpose.msra.mxu0 %v7063
    %v7065 = vand.u32 %v329, 4294901760
    %7066 = vmatpush.xpose.msra.mxu0 %v7065
    %v7067 = vand.u32 %v325, 4294901760
    %7068 = vmatpush.xpose.msra.mxu0 %v7067
    %v7069 = vand.u32 %v321, 4294901760
    %7070 = vmatpush.xpose.msra.mxu0 %v7069
    %v7071 = vand.u32 %v317, 4294901760
    %7072 = vmatpush.xpose.msra.mxu0 %v7071
    %v7073 = vand.u32 %v593, 4294901760
    %7074 = vmatmul.f32.gmra.mxu0 %v7073
    %v7075 = vpop.f32.mrf.mxu0
    %v7076 = vadd.f32 %v7039, %v7075
    %7077 = vdwg.mxu0
    %v7078 = vand.u32 %v378, 4294901760
    %7079 = vmatpush.xpose.msra.mxu0 %v7078
    %v7080 = vand.u32 %v374, 4294901760
    %7081 = vmatpush.xpose.msra.mxu0 %v7080
    %v7082 = vand.u32 %v370, 4294901760
    %7083 = vmatpush.xpose.msra.mxu0 %v7082
    %v7084 = vand.u32 %v366, 4294901760
    %7085 = vmatpush.xpose.msra.mxu0 %v7084
    %v7086 = vand.u32 %v362, 4294901760
    %7087 = vmatpush.xpose.msra.mxu0 %v7086
    %v7088 = vand.u32 %v358, 4294901760
    %7089 = vmatpush.xpose.msra.mxu0 %v7088
    %v7090 = vand.u32 %v354, 4294901760
    %7091 = vmatpush.xpose.msra.mxu0 %v7090
    %v7092 = vand.u32 %v350, 4294901760
    %7093 = vmatpush.xpose.msra.mxu0 %v7092
    %v7094 = vand.u32 %v346, 4294901760
    %7095 = vmatpush.xpose.msra.mxu0 %v7094
    %v7096 = vand.u32 %v342, 4294901760
    %7097 = vmatpush.xpose.msra.mxu0 %v7096
    %v7098 = vand.u32 %v338, 4294901760
    %7099 = vmatpush.xpose.msra.mxu0 %v7098
    %v7100 = vand.u32 %v334, 4294901760
    %7101 = vmatpush.xpose.msra.mxu0 %v7100
    %v7102 = vand.u32 %v330, 4294901760
    %7103 = vmatpush.xpose.msra.mxu0 %v7102
    %v7104 = vand.u32 %v326, 4294901760
    %7105 = vmatpush.xpose.msra.mxu0 %v7104
    %v7106 = vand.u32 %v322, 4294901760
    %7107 = vmatpush.xpose.msra.mxu0 %v7106
    %v7108 = vand.u32 %v318, 4294901760
    %7109 = vmatpush.xpose.msra.mxu0 %v7108
    %v7110 = vand.u32 %v594, 4294901760
    %v7111 = vsub.f32 %v594, %v7110
    %v7112 = vand.u32 %v7111, 4294901760
    %v7113 = vsub.f32 %v7111, %v7112
    %v7114 = vand.u32 %v7113, 4294901760
    %7115 = vmatmul.f32.gmra.mxu0 %v7114
    %v7116 = vpop.f32.mrf.mxu0
    %v7117 = vadd.f32 %v7076, %v7116
    %7118 = vdwg.mxu0
    %v7119 = vand.u32 %v378, 4294901760
    %v7120 = vsub.f32 %v378, %v7119
    %v7121 = vand.u32 %v7120, 4294901760
    %v7122 = vsub.f32 %v7120, %v7121
    %v7123 = vand.u32 %v7122, 4294901760
    %7124 = vmatpush.xpose.msra.mxu0 %v7123
    %v7125 = vand.u32 %v374, 4294901760
    %v7126 = vsub.f32 %v374, %v7125
    %v7127 = vand.u32 %v7126, 4294901760
    %v7128 = vsub.f32 %v7126, %v7127
    %v7129 = vand.u32 %v7128, 4294901760
    %7130 = vmatpush.xpose.msra.mxu0 %v7129
    %v7131 = vand.u32 %v370, 4294901760
    %v7132 = vsub.f32 %v370, %v7131
    %v7133 = vand.u32 %v7132, 4294901760
    %v7134 = vsub.f32 %v7132, %v7133
    %v7135 = vand.u32 %v7134, 4294901760
    %7136 = vmatpush.xpose.msra.mxu0 %v7135
    %v7137 = vand.u32 %v366, 4294901760
    %v7138 = vsub.f32 %v366, %v7137
    %v7139 = vand.u32 %v7138, 4294901760
    %v7140 = vsub.f32 %v7138, %v7139
    %v7141 = vand.u32 %v7140, 4294901760
    %7142 = vmatpush.xpose.msra.mxu0 %v7141
    %v7143 = vand.u32 %v362, 4294901760
    %v7144 = vsub.f32 %v362, %v7143
    %v7145 = vand.u32 %v7144, 4294901760
    %v7146 = vsub.f32 %v7144, %v7145
    %v7147 = vand.u32 %v7146, 4294901760
    %7148 = vmatpush.xpose.msra.mxu0 %v7147
    %v7149 = vand.u32 %v358, 4294901760
    %v7150 = vsub.f32 %v358, %v7149
    %v7151 = vand.u32 %v7150, 4294901760
    %v7152 = vsub.f32 %v7150, %v7151
    %v7153 = vand.u32 %v7152, 4294901760
    %7154 = vmatpush.xpose.msra.mxu0 %v7153
    %v7155 = vand.u32 %v354, 4294901760
    %v7156 = vsub.f32 %v354, %v7155
    %v7157 = vand.u32 %v7156, 4294901760
    %v7158 = vsub.f32 %v7156, %v7157
    %v7159 = vand.u32 %v7158, 4294901760
    %7160 = vmatpush.xpose.msra.mxu0 %v7159
    %v7161 = vand.u32 %v350, 4294901760
    %v7162 = vsub.f32 %v350, %v7161
    %v7163 = vand.u32 %v7162, 4294901760
    %v7164 = vsub.f32 %v7162, %v7163
    %v7165 = vand.u32 %v7164, 4294901760
    %7166 = vmatpush.xpose.msra.mxu0 %v7165
    %v7167 = vand.u32 %v346, 4294901760
    %v7168 = vsub.f32 %v346, %v7167
    %v7169 = vand.u32 %v7168, 4294901760
    %v7170 = vsub.f32 %v7168, %v7169
    %v7171 = vand.u32 %v7170, 4294901760
    %7172 = vmatpush.xpose.msra.mxu0 %v7171
    %v7173 = vand.u32 %v342, 4294901760
    %v7174 = vsub.f32 %v342, %v7173
    %v7175 = vand.u32 %v7174, 4294901760
    %v7176 = vsub.f32 %v7174, %v7175
    %v7177 = vand.u32 %v7176, 4294901760
    %7178 = vmatpush.xpose.msra.mxu0 %v7177
    %v7179 = vand.u32 %v338, 4294901760
    %v7180 = vsub.f32 %v338, %v7179
    %v7181 = vand.u32 %v7180, 4294901760
    %v7182 = vsub.f32 %v7180, %v7181
    %v7183 = vand.u32 %v7182, 4294901760
    %7184 = vmatpush.xpose.msra.mxu0 %v7183
    %v7185 = vand.u32 %v334, 4294901760
    %v7186 = vsub.f32 %v334, %v7185
    %v7187 = vand.u32 %v7186, 4294901760
    %v7188 = vsub.f32 %v7186, %v7187
    %v7189 = vand.u32 %v7188, 4294901760
    %7190 = vmatpush.xpose.msra.mxu0 %v7189
    %v7191 = vand.u32 %v330, 4294901760
    %v7192 = vsub.f32 %v330, %v7191
    %v7193 = vand.u32 %v7192, 4294901760
    %v7194 = vsub.f32 %v7192, %v7193
    %v7195 = vand.u32 %v7194, 4294901760
    %7196 = vmatpush.xpose.msra.mxu0 %v7195
    %v7197 = vand.u32 %v326, 4294901760
    %v7198 = vsub.f32 %v326, %v7197
    %v7199 = vand.u32 %v7198, 4294901760
    %v7200 = vsub.f32 %v7198, %v7199
    %v7201 = vand.u32 %v7200, 4294901760
    %7202 = vmatpush.xpose.msra.mxu0 %v7201
    %v7203 = vand.u32 %v322, 4294901760
    %v7204 = vsub.f32 %v322, %v7203
    %v7205 = vand.u32 %v7204, 4294901760
    %v7206 = vsub.f32 %v7204, %v7205
    %v7207 = vand.u32 %v7206, 4294901760
    %7208 = vmatpush.xpose.msra.mxu0 %v7207
    %v7209 = vand.u32 %v318, 4294901760
    %v7210 = vsub.f32 %v318, %v7209
    %v7211 = vand.u32 %v7210, 4294901760
    %v7212 = vsub.f32 %v7210, %v7211
    %v7213 = vand.u32 %v7212, 4294901760
    %7214 = vmatpush.xpose.msra.mxu0 %v7213
    %v7215 = vand.u32 %v594, 4294901760
    %7216 = vmatmul.f32.gmra.mxu0 %v7215
    %v7217 = vpop.f32.mrf.mxu0
    %v7218 = vadd.f32 %v7117, %v7217
    %7219 = vdwg.mxu0
    %v7220 = vand.u32 %v378, 4294901760
    %v7221 = vsub.f32 %v378, %v7220
    %7222 = vmatpush.xpose.msra.mxu0 %v7221
    %v7223 = vand.u32 %v374, 4294901760
    %v7224 = vsub.f32 %v374, %v7223
    %7225 = vmatpush.xpose.msra.mxu0 %v7224
    %v7226 = vand.u32 %v370, 4294901760
    %v7227 = vsub.f32 %v370, %v7226
    %7228 = vmatpush.xpose.msra.mxu0 %v7227
    %v7229 = vand.u32 %v366, 4294901760
    %v7230 = vsub.f32 %v366, %v7229
    %7231 = vmatpush.xpose.msra.mxu0 %v7230
    %v7232 = vand.u32 %v362, 4294901760
    %v7233 = vsub.f32 %v362, %v7232
    %7234 = vmatpush.xpose.msra.mxu0 %v7233
    %v7235 = vand.u32 %v358, 4294901760
    %v7236 = vsub.f32 %v358, %v7235
    %7237 = vmatpush.xpose.msra.mxu0 %v7236
    %v7238 = vand.u32 %v354, 4294901760
    %v7239 = vsub.f32 %v354, %v7238
    %7240 = vmatpush.xpose.msra.mxu0 %v7239
    %v7241 = vand.u32 %v350, 4294901760
    %v7242 = vsub.f32 %v350, %v7241
    %7243 = vmatpush.xpose.msra.mxu0 %v7242
    %v7244 = vand.u32 %v346, 4294901760
    %v7245 = vsub.f32 %v346, %v7244
    %7246 = vmatpush.xpose.msra.mxu0 %v7245
    %v7247 = vand.u32 %v342, 4294901760
    %v7248 = vsub.f32 %v342, %v7247
    %7249 = vmatpush.xpose.msra.mxu0 %v7248
    %v7250 = vand.u32 %v338, 4294901760
    %v7251 = vsub.f32 %v338, %v7250
    %7252 = vmatpush.xpose.msra.mxu0 %v7251
    %v7253 = vand.u32 %v334, 4294901760
    %v7254 = vsub.f32 %v334, %v7253
    %7255 = vmatpush.xpose.msra.mxu0 %v7254
    %v7256 = vand.u32 %v330, 4294901760
    %v7257 = vsub.f32 %v330, %v7256
    %7258 = vmatpush.xpose.msra.mxu0 %v7257
    %v7259 = vand.u32 %v326, 4294901760
    %v7260 = vsub.f32 %v326, %v7259
    %7261 = vmatpush.xpose.msra.mxu0 %v7260
    %v7262 = vand.u32 %v322, 4294901760
    %v7263 = vsub.f32 %v322, %v7262
    %7264 = vmatpush.xpose.msra.mxu0 %v7263
    %v7265 = vand.u32 %v318, 4294901760
    %v7266 = vsub.f32 %v318, %v7265
    %7267 = vmatpush.xpose.msra.mxu0 %v7266
    %v7268 = vand.u32 %v594, 4294901760
    %v7269 = vsub.f32 %v594, %v7268
    %7270 = vmatmul.f32.gmra.mxu0 %v7269
    %v7271 = vpop.f32.mrf.mxu0
    %v7272 = vadd.f32 %v7218, %v7271
    %7273 = vdwg.mxu0
    %v7274 = vand.u32 %v378, 4294901760
    %7275 = vmatpush.xpose.msra.mxu0 %v7274
    %v7276 = vand.u32 %v374, 4294901760
    %7277 = vmatpush.xpose.msra.mxu0 %v7276
    %v7278 = vand.u32 %v370, 4294901760
    %7279 = vmatpush.xpose.msra.mxu0 %v7278
    %v7280 = vand.u32 %v366, 4294901760
    %7281 = vmatpush.xpose.msra.mxu0 %v7280
    %v7282 = vand.u32 %v362, 4294901760
    %7283 = vmatpush.xpose.msra.mxu0 %v7282
    %v7284 = vand.u32 %v358, 4294901760
    %7285 = vmatpush.xpose.msra.mxu0 %v7284
    %v7286 = vand.u32 %v354, 4294901760
    %7287 = vmatpush.xpose.msra.mxu0 %v7286
    %v7288 = vand.u32 %v350, 4294901760
    %7289 = vmatpush.xpose.msra.mxu0 %v7288
    %v7290 = vand.u32 %v346, 4294901760
    %7291 = vmatpush.xpose.msra.mxu0 %v7290
    %v7292 = vand.u32 %v342, 4294901760
    %7293 = vmatpush.xpose.msra.mxu0 %v7292
    %v7294 = vand.u32 %v338, 4294901760
    %7295 = vmatpush.xpose.msra.mxu0 %v7294
    %v7296 = vand.u32 %v334, 4294901760
    %7297 = vmatpush.xpose.msra.mxu0 %v7296
    %v7298 = vand.u32 %v330, 4294901760
    %7299 = vmatpush.xpose.msra.mxu0 %v7298
    %v7300 = vand.u32 %v326, 4294901760
    %7301 = vmatpush.xpose.msra.mxu0 %v7300
    %v7302 = vand.u32 %v322, 4294901760
    %7303 = vmatpush.xpose.msra.mxu0 %v7302
    %v7304 = vand.u32 %v318, 4294901760
    %7305 = vmatpush.xpose.msra.mxu0 %v7304
    %v7306 = vand.u32 %v594, 4294901760
    %v7307 = vsub.f32 %v594, %v7306
    %v7308 = vand.u32 %v7307, 4294901760
    %7309 = vmatmul.f32.gmra.mxu0 %v7308
    %v7310 = vpop.f32.mrf.mxu0
    %v7311 = vadd.f32 %v7272, %v7310
    %7312 = vdwg.mxu0
    %v7313 = vand.u32 %v378, 4294901760
    %v7314 = vsub.f32 %v378, %v7313
    %v7315 = vand.u32 %v7314, 4294901760
    %7316 = vmatpush.xpose.msra.mxu0 %v7315
    %v7317 = vand.u32 %v374, 4294901760
    %v7318 = vsub.f32 %v374, %v7317
    %v7319 = vand.u32 %v7318, 4294901760
    %7320 = vmatpush.xpose.msra.mxu0 %v7319
    %v7321 = vand.u32 %v370, 4294901760
    %v7322 = vsub.f32 %v370, %v7321
    %v7323 = vand.u32 %v7322, 4294901760
    %7324 = vmatpush.xpose.msra.mxu0 %v7323
    %v7325 = vand.u32 %v366, 4294901760
    %v7326 = vsub.f32 %v366, %v7325
    %v7327 = vand.u32 %v7326, 4294901760
    %7328 = vmatpush.xpose.msra.mxu0 %v7327
    %v7329 = vand.u32 %v362, 4294901760
    %v7330 = vsub.f32 %v362, %v7329
    %v7331 = vand.u32 %v7330, 4294901760
    %7332 = vmatpush.xpose.msra.mxu0 %v7331
    %v7333 = vand.u32 %v358, 4294901760
    %v7334 = vsub.f32 %v358, %v7333
    %v7335 = vand.u32 %v7334, 4294901760
    %7336 = vmatpush.xpose.msra.mxu0 %v7335
    %v7337 = vand.u32 %v354, 4294901760
    %v7338 = vsub.f32 %v354, %v7337
    %v7339 = vand.u32 %v7338, 4294901760
    %7340 = vmatpush.xpose.msra.mxu0 %v7339
    %v7341 = vand.u32 %v350, 4294901760
    %v7342 = vsub.f32 %v350, %v7341
    %v7343 = vand.u32 %v7342, 4294901760
    %7344 = vmatpush.xpose.msra.mxu0 %v7343
    %v7345 = vand.u32 %v346, 4294901760
    %v7346 = vsub.f32 %v346, %v7345
    %v7347 = vand.u32 %v7346, 4294901760
    %7348 = vmatpush.xpose.msra.mxu0 %v7347
    %v7349 = vand.u32 %v342, 4294901760
    %v7350 = vsub.f32 %v342, %v7349
    %v7351 = vand.u32 %v7350, 4294901760
    %7352 = vmatpush.xpose.msra.mxu0 %v7351
    %v7353 = vand.u32 %v338, 4294901760
    %v7354 = vsub.f32 %v338, %v7353
    %v7355 = vand.u32 %v7354, 4294901760
    %7356 = vmatpush.xpose.msra.mxu0 %v7355
    %v7357 = vand.u32 %v334, 4294901760
    %v7358 = vsub.f32 %v334, %v7357
    %v7359 = vand.u32 %v7358, 4294901760
    %7360 = vmatpush.xpose.msra.mxu0 %v7359
    %v7361 = vand.u32 %v330, 4294901760
    %v7362 = vsub.f32 %v330, %v7361
    %v7363 = vand.u32 %v7362, 4294901760
    %7364 = vmatpush.xpose.msra.mxu0 %v7363
    %v7365 = vand.u32 %v326, 4294901760
    %v7366 = vsub.f32 %v326, %v7365
    %v7367 = vand.u32 %v7366, 4294901760
    %7368 = vmatpush.xpose.msra.mxu0 %v7367
    %v7369 = vand.u32 %v322, 4294901760
    %v7370 = vsub.f32 %v322, %v7369
    %v7371 = vand.u32 %v7370, 4294901760
    %7372 = vmatpush.xpose.msra.mxu0 %v7371
    %v7373 = vand.u32 %v318, 4294901760
    %v7374 = vsub.f32 %v318, %v7373
    %v7375 = vand.u32 %v7374, 4294901760
    %7376 = vmatpush.xpose.msra.mxu0 %v7375
    %v7377 = vand.u32 %v594, 4294901760
    %7378 = vmatmul.f32.gmra.mxu0 %v7377
    %v7379 = vpop.f32.mrf.mxu0
    %v7380 = vadd.f32 %v7311, %v7379
    %7381 = vdwg.mxu0
    %v7382 = vand.u32 %v378, 4294901760
    %7383 = vmatpush.xpose.msra.mxu0 %v7382
    %v7384 = vand.u32 %v374, 4294901760
    %7385 = vmatpush.xpose.msra.mxu0 %v7384
    %v7386 = vand.u32 %v370, 4294901760
    %7387 = vmatpush.xpose.msra.mxu0 %v7386
    %v7388 = vand.u32 %v366, 4294901760
    %7389 = vmatpush.xpose.msra.mxu0 %v7388
    %v7390 = vand.u32 %v362, 4294901760
    %7391 = vmatpush.xpose.msra.mxu0 %v7390
    %v7392 = vand.u32 %v358, 4294901760
    %7393 = vmatpush.xpose.msra.mxu0 %v7392
    %v7394 = vand.u32 %v354, 4294901760
    %7395 = vmatpush.xpose.msra.mxu0 %v7394
    %v7396 = vand.u32 %v350, 4294901760
    %7397 = vmatpush.xpose.msra.mxu0 %v7396
    %v7398 = vand.u32 %v346, 4294901760
    %7399 = vmatpush.xpose.msra.mxu0 %v7398
    %v7400 = vand.u32 %v342, 4294901760
    %7401 = vmatpush.xpose.msra.mxu0 %v7400
    %v7402 = vand.u32 %v338, 4294901760
    %7403 = vmatpush.xpose.msra.mxu0 %v7402
    %v7404 = vand.u32 %v334, 4294901760
    %7405 = vmatpush.xpose.msra.mxu0 %v7404
    %v7406 = vand.u32 %v330, 4294901760
    %7407 = vmatpush.xpose.msra.mxu0 %v7406
    %v7408 = vand.u32 %v326, 4294901760
    %7409 = vmatpush.xpose.msra.mxu0 %v7408
    %v7410 = vand.u32 %v322, 4294901760
    %7411 = vmatpush.xpose.msra.mxu0 %v7410
    %v7412 = vand.u32 %v318, 4294901760
    %7413 = vmatpush.xpose.msra.mxu0 %v7412
    %v7414 = vand.u32 %v594, 4294901760
    %7415 = vmatmul.f32.gmra.mxu0 %v7414
    %v7416 = vpop.f32.mrf.mxu0
    %v7417 = vadd.f32 %v7380, %v7416
    %7418 = vdwg.mxu0
    %v7419 = vand.u32 %v439, 4294901760
    %7420 = vmatpush.xpose.msra.mxu0 %v7419
    %v7421 = vand.u32 %v435, 4294901760
    %7422 = vmatpush.xpose.msra.mxu0 %v7421
    %v7423 = vand.u32 %v431, 4294901760
    %7424 = vmatpush.xpose.msra.mxu0 %v7423
    %v7425 = vand.u32 %v427, 4294901760
    %7426 = vmatpush.xpose.msra.mxu0 %v7425
    %v7427 = vand.u32 %v423, 4294901760
    %7428 = vmatpush.xpose.msra.mxu0 %v7427
    %v7429 = vand.u32 %v419, 4294901760
    %7430 = vmatpush.xpose.msra.mxu0 %v7429
    %v7431 = vand.u32 %v415, 4294901760
    %7432 = vmatpush.xpose.msra.mxu0 %v7431
    %v7433 = vand.u32 %v411, 4294901760
    %7434 = vmatpush.xpose.msra.mxu0 %v7433
    %v7435 = vand.u32 %v407, 4294901760
    %7436 = vmatpush.xpose.msra.mxu0 %v7435
    %v7437 = vand.u32 %v403, 4294901760
    %7438 = vmatpush.xpose.msra.mxu0 %v7437
    %v7439 = vand.u32 %v399, 4294901760
    %7440 = vmatpush.xpose.msra.mxu0 %v7439
    %v7441 = vand.u32 %v395, 4294901760
    %7442 = vmatpush.xpose.msra.mxu0 %v7441
    %v7443 = vand.u32 %v391, 4294901760
    %7444 = vmatpush.xpose.msra.mxu0 %v7443
    %v7445 = vand.u32 %v387, 4294901760
    %7446 = vmatpush.xpose.msra.mxu0 %v7445
    %v7447 = vand.u32 %v383, 4294901760
    %7448 = vmatpush.xpose.msra.mxu0 %v7447
    %v7449 = vand.u32 %v379, 4294901760
    %7450 = vmatpush.xpose.msra.mxu0 %v7449
    %v7451 = vand.u32 %v591, 4294901760
    %v7452 = vsub.f32 %v591, %v7451
    %v7453 = vand.u32 %v7452, 4294901760
    %v7454 = vsub.f32 %v7452, %v7453
    %v7455 = vand.u32 %v7454, 4294901760
    %7456 = vmatmul.f32.gmra.mxu0 %v7455
    %v7457 = vpop.f32.mrf.mxu0
    %v7458 = vadd.f32 %v578, %v7457
    %7459 = vdwg.mxu0
    %v7460 = vand.u32 %v439, 4294901760
    %v7461 = vsub.f32 %v439, %v7460
    %v7462 = vand.u32 %v7461, 4294901760
    %v7463 = vsub.f32 %v7461, %v7462
    %v7464 = vand.u32 %v7463, 4294901760
    %7465 = vmatpush.xpose.msra.mxu0 %v7464
    %v7466 = vand.u32 %v435, 4294901760
    %v7467 = vsub.f32 %v435, %v7466
    %v7468 = vand.u32 %v7467, 4294901760
    %v7469 = vsub.f32 %v7467, %v7468
    %v7470 = vand.u32 %v7469, 4294901760
    %7471 = vmatpush.xpose.msra.mxu0 %v7470
    %v7472 = vand.u32 %v431, 4294901760
    %v7473 = vsub.f32 %v431, %v7472
    %v7474 = vand.u32 %v7473, 4294901760
    %v7475 = vsub.f32 %v7473, %v7474
    %v7476 = vand.u32 %v7475, 4294901760
    %7477 = vmatpush.xpose.msra.mxu0 %v7476
    %v7478 = vand.u32 %v427, 4294901760
    %v7479 = vsub.f32 %v427, %v7478
    %v7480 = vand.u32 %v7479, 4294901760
    %v7481 = vsub.f32 %v7479, %v7480
    %v7482 = vand.u32 %v7481, 4294901760
    %7483 = vmatpush.xpose.msra.mxu0 %v7482
    %v7484 = vand.u32 %v423, 4294901760
    %v7485 = vsub.f32 %v423, %v7484
    %v7486 = vand.u32 %v7485, 4294901760
    %v7487 = vsub.f32 %v7485, %v7486
    %v7488 = vand.u32 %v7487, 4294901760
    %7489 = vmatpush.xpose.msra.mxu0 %v7488
    %v7490 = vand.u32 %v419, 4294901760
    %v7491 = vsub.f32 %v419, %v7490
    %v7492 = vand.u32 %v7491, 4294901760
    %v7493 = vsub.f32 %v7491, %v7492
    %v7494 = vand.u32 %v7493, 4294901760
    %7495 = vmatpush.xpose.msra.mxu0 %v7494
    %v7496 = vand.u32 %v415, 4294901760
    %v7497 = vsub.f32 %v415, %v7496
    %v7498 = vand.u32 %v7497, 4294901760
    %v7499 = vsub.f32 %v7497, %v7498
    %v7500 = vand.u32 %v7499, 4294901760
    %7501 = vmatpush.xpose.msra.mxu0 %v7500
    %v7502 = vand.u32 %v411, 4294901760
    %v7503 = vsub.f32 %v411, %v7502
    %v7504 = vand.u32 %v7503, 4294901760
    %v7505 = vsub.f32 %v7503, %v7504
    %v7506 = vand.u32 %v7505, 4294901760
    %7507 = vmatpush.xpose.msra.mxu0 %v7506
    %v7508 = vand.u32 %v407, 4294901760
    %v7509 = vsub.f32 %v407, %v7508
    %v7510 = vand.u32 %v7509, 4294901760
    %v7511 = vsub.f32 %v7509, %v7510
    %v7512 = vand.u32 %v7511, 4294901760
    %7513 = vmatpush.xpose.msra.mxu0 %v7512
    %v7514 = vand.u32 %v403, 4294901760
    %v7515 = vsub.f32 %v403, %v7514
    %v7516 = vand.u32 %v7515, 4294901760
    %v7517 = vsub.f32 %v7515, %v7516
    %v7518 = vand.u32 %v7517, 4294901760
    %7519 = vmatpush.xpose.msra.mxu0 %v7518
    %v7520 = vand.u32 %v399, 4294901760
    %v7521 = vsub.f32 %v399, %v7520
    %v7522 = vand.u32 %v7521, 4294901760
    %v7523 = vsub.f32 %v7521, %v7522
    %v7524 = vand.u32 %v7523, 4294901760
    %7525 = vmatpush.xpose.msra.mxu0 %v7524
    %v7526 = vand.u32 %v395, 4294901760
    %v7527 = vsub.f32 %v395, %v7526
    %v7528 = vand.u32 %v7527, 4294901760
    %v7529 = vsub.f32 %v7527, %v7528
    %v7530 = vand.u32 %v7529, 4294901760
    %7531 = vmatpush.xpose.msra.mxu0 %v7530
    %v7532 = vand.u32 %v391, 4294901760
    %v7533 = vsub.f32 %v391, %v7532
    %v7534 = vand.u32 %v7533, 4294901760
    %v7535 = vsub.f32 %v7533, %v7534
    %v7536 = vand.u32 %v7535, 4294901760
    %7537 = vmatpush.xpose.msra.mxu0 %v7536
    %v7538 = vand.u32 %v387, 4294901760
    %v7539 = vsub.f32 %v387, %v7538
    %v7540 = vand.u32 %v7539, 4294901760
    %v7541 = vsub.f32 %v7539, %v7540
    %v7542 = vand.u32 %v7541, 4294901760
    %7543 = vmatpush.xpose.msra.mxu0 %v7542
    %v7544 = vand.u32 %v383, 4294901760
    %v7545 = vsub.f32 %v383, %v7544
    %v7546 = vand.u32 %v7545, 4294901760
    %v7547 = vsub.f32 %v7545, %v7546
    %v7548 = vand.u32 %v7547, 4294901760
    %7549 = vmatpush.xpose.msra.mxu0 %v7548
    %v7550 = vand.u32 %v379, 4294901760
    %v7551 = vsub.f32 %v379, %v7550
    %v7552 = vand.u32 %v7551, 4294901760
    %v7553 = vsub.f32 %v7551, %v7552
    %v7554 = vand.u32 %v7553, 4294901760
    %7555 = vmatpush.xpose.msra.mxu0 %v7554
    %v7556 = vand.u32 %v591, 4294901760
    %7557 = vmatmul.f32.gmra.mxu0 %v7556
    %v7558 = vpop.f32.mrf.mxu0
    %v7559 = vadd.f32 %v7458, %v7558
    %7560 = vdwg.mxu0
    %v7561 = vand.u32 %v439, 4294901760
    %v7562 = vsub.f32 %v439, %v7561
    %7563 = vmatpush.xpose.msra.mxu0 %v7562
    %v7564 = vand.u32 %v435, 4294901760
    %v7565 = vsub.f32 %v435, %v7564
    %7566 = vmatpush.xpose.msra.mxu0 %v7565
    %v7567 = vand.u32 %v431, 4294901760
    %v7568 = vsub.f32 %v431, %v7567
    %7569 = vmatpush.xpose.msra.mxu0 %v7568
    %v7570 = vand.u32 %v427, 4294901760
    %v7571 = vsub.f32 %v427, %v7570
    %7572 = vmatpush.xpose.msra.mxu0 %v7571
    %v7573 = vand.u32 %v423, 4294901760
    %v7574 = vsub.f32 %v423, %v7573
    %7575 = vmatpush.xpose.msra.mxu0 %v7574
    %v7576 = vand.u32 %v419, 4294901760
    %v7577 = vsub.f32 %v419, %v7576
    %7578 = vmatpush.xpose.msra.mxu0 %v7577
    %v7579 = vand.u32 %v415, 4294901760
    %v7580 = vsub.f32 %v415, %v7579
    %7581 = vmatpush.xpose.msra.mxu0 %v7580
    %v7582 = vand.u32 %v411, 4294901760
    %v7583 = vsub.f32 %v411, %v7582
    %7584 = vmatpush.xpose.msra.mxu0 %v7583
    %v7585 = vand.u32 %v407, 4294901760
    %v7586 = vsub.f32 %v407, %v7585
    %7587 = vmatpush.xpose.msra.mxu0 %v7586
    %v7588 = vand.u32 %v403, 4294901760
    %v7589 = vsub.f32 %v403, %v7588
    %7590 = vmatpush.xpose.msra.mxu0 %v7589
    %v7591 = vand.u32 %v399, 4294901760
    %v7592 = vsub.f32 %v399, %v7591
    %7593 = vmatpush.xpose.msra.mxu0 %v7592
    %v7594 = vand.u32 %v395, 4294901760
    %v7595 = vsub.f32 %v395, %v7594
    %7596 = vmatpush.xpose.msra.mxu0 %v7595
    %v7597 = vand.u32 %v391, 4294901760
    %v7598 = vsub.f32 %v391, %v7597
    %7599 = vmatpush.xpose.msra.mxu0 %v7598
    %v7600 = vand.u32 %v387, 4294901760
    %v7601 = vsub.f32 %v387, %v7600
    %7602 = vmatpush.xpose.msra.mxu0 %v7601
    %v7603 = vand.u32 %v383, 4294901760
    %v7604 = vsub.f32 %v383, %v7603
    %7605 = vmatpush.xpose.msra.mxu0 %v7604
    %v7606 = vand.u32 %v379, 4294901760
    %v7607 = vsub.f32 %v379, %v7606
    %7608 = vmatpush.xpose.msra.mxu0 %v7607
    %v7609 = vand.u32 %v591, 4294901760
    %v7610 = vsub.f32 %v591, %v7609
    %7611 = vmatmul.f32.gmra.mxu0 %v7610
    %v7612 = vpop.f32.mrf.mxu0
    %v7613 = vadd.f32 %v7559, %v7612
    %7614 = vdwg.mxu0
    %v7615 = vand.u32 %v439, 4294901760
    %7616 = vmatpush.xpose.msra.mxu0 %v7615
    %v7617 = vand.u32 %v435, 4294901760
    %7618 = vmatpush.xpose.msra.mxu0 %v7617
    %v7619 = vand.u32 %v431, 4294901760
    %7620 = vmatpush.xpose.msra.mxu0 %v7619
    %v7621 = vand.u32 %v427, 4294901760
    %7622 = vmatpush.xpose.msra.mxu0 %v7621
    %v7623 = vand.u32 %v423, 4294901760
    %7624 = vmatpush.xpose.msra.mxu0 %v7623
    %v7625 = vand.u32 %v419, 4294901760
    %7626 = vmatpush.xpose.msra.mxu0 %v7625
    %v7627 = vand.u32 %v415, 4294901760
    %7628 = vmatpush.xpose.msra.mxu0 %v7627
    %v7629 = vand.u32 %v411, 4294901760
    %7630 = vmatpush.xpose.msra.mxu0 %v7629
    %v7631 = vand.u32 %v407, 4294901760
    %7632 = vmatpush.xpose.msra.mxu0 %v7631
    %v7633 = vand.u32 %v403, 4294901760
    %7634 = vmatpush.xpose.msra.mxu0 %v7633
    %v7635 = vand.u32 %v399, 4294901760
    %7636 = vmatpush.xpose.msra.mxu0 %v7635
    %v7637 = vand.u32 %v395, 4294901760
    %7638 = vmatpush.xpose.msra.mxu0 %v7637
    %v7639 = vand.u32 %v391, 4294901760
    %7640 = vmatpush.xpose.msra.mxu0 %v7639
    %v7641 = vand.u32 %v387, 4294901760
    %7642 = vmatpush.xpose.msra.mxu0 %v7641
    %v7643 = vand.u32 %v383, 4294901760
    %7644 = vmatpush.xpose.msra.mxu0 %v7643
    %v7645 = vand.u32 %v379, 4294901760
    %7646 = vmatpush.xpose.msra.mxu0 %v7645
    %v7647 = vand.u32 %v591, 4294901760
    %v7648 = vsub.f32 %v591, %v7647
    %v7649 = vand.u32 %v7648, 4294901760
    %7650 = vmatmul.f32.gmra.mxu0 %v7649
    %v7651 = vpop.f32.mrf.mxu0
    %v7652 = vadd.f32 %v7613, %v7651
    %7653 = vdwg.mxu0
    %v7654 = vand.u32 %v439, 4294901760
    %v7655 = vsub.f32 %v439, %v7654
    %v7656 = vand.u32 %v7655, 4294901760
    %7657 = vmatpush.xpose.msra.mxu0 %v7656
    %v7658 = vand.u32 %v435, 4294901760
    %v7659 = vsub.f32 %v435, %v7658
    %v7660 = vand.u32 %v7659, 4294901760
    %7661 = vmatpush.xpose.msra.mxu0 %v7660
    %v7662 = vand.u32 %v431, 4294901760
    %v7663 = vsub.f32 %v431, %v7662
    %v7664 = vand.u32 %v7663, 4294901760
    %7665 = vmatpush.xpose.msra.mxu0 %v7664
    %v7666 = vand.u32 %v427, 4294901760
    %v7667 = vsub.f32 %v427, %v7666
    %v7668 = vand.u32 %v7667, 4294901760
    %7669 = vmatpush.xpose.msra.mxu0 %v7668
    %v7670 = vand.u32 %v423, 4294901760
    %v7671 = vsub.f32 %v423, %v7670
    %v7672 = vand.u32 %v7671, 4294901760
    %7673 = vmatpush.xpose.msra.mxu0 %v7672
    %v7674 = vand.u32 %v419, 4294901760
    %v7675 = vsub.f32 %v419, %v7674
    %v7676 = vand.u32 %v7675, 4294901760
    %7677 = vmatpush.xpose.msra.mxu0 %v7676
    %v7678 = vand.u32 %v415, 4294901760
    %v7679 = vsub.f32 %v415, %v7678
    %v7680 = vand.u32 %v7679, 4294901760
    %7681 = vmatpush.xpose.msra.mxu0 %v7680
    %v7682 = vand.u32 %v411, 4294901760
    %v7683 = vsub.f32 %v411, %v7682
    %v7684 = vand.u32 %v7683, 4294901760
    %7685 = vmatpush.xpose.msra.mxu0 %v7684
    %v7686 = vand.u32 %v407, 4294901760
    %v7687 = vsub.f32 %v407, %v7686
    %v7688 = vand.u32 %v7687, 4294901760
    %7689 = vmatpush.xpose.msra.mxu0 %v7688
    %v7690 = vand.u32 %v403, 4294901760
    %v7691 = vsub.f32 %v403, %v7690
    %v7692 = vand.u32 %v7691, 4294901760
    %7693 = vmatpush.xpose.msra.mxu0 %v7692
    %v7694 = vand.u32 %v399, 4294901760
    %v7695 = vsub.f32 %v399, %v7694
    %v7696 = vand.u32 %v7695, 4294901760
    %7697 = vmatpush.xpose.msra.mxu0 %v7696
    %v7698 = vand.u32 %v395, 4294901760
    %v7699 = vsub.f32 %v395, %v7698
    %v7700 = vand.u32 %v7699, 4294901760
    %7701 = vmatpush.xpose.msra.mxu0 %v7700
    %v7702 = vand.u32 %v391, 4294901760
    %v7703 = vsub.f32 %v391, %v7702
    %v7704 = vand.u32 %v7703, 4294901760
    %7705 = vmatpush.xpose.msra.mxu0 %v7704
    %v7706 = vand.u32 %v387, 4294901760
    %v7707 = vsub.f32 %v387, %v7706
    %v7708 = vand.u32 %v7707, 4294901760
    %7709 = vmatpush.xpose.msra.mxu0 %v7708
    %v7710 = vand.u32 %v383, 4294901760
    %v7711 = vsub.f32 %v383, %v7710
    %v7712 = vand.u32 %v7711, 4294901760
    %7713 = vmatpush.xpose.msra.mxu0 %v7712
    %v7714 = vand.u32 %v379, 4294901760
    %v7715 = vsub.f32 %v379, %v7714
    %v7716 = vand.u32 %v7715, 4294901760
    %7717 = vmatpush.xpose.msra.mxu0 %v7716
    %v7718 = vand.u32 %v591, 4294901760
    %7719 = vmatmul.f32.gmra.mxu0 %v7718
    %v7720 = vpop.f32.mrf.mxu0
    %v7721 = vadd.f32 %v7652, %v7720
    %7722 = vdwg.mxu0
    %v7723 = vand.u32 %v439, 4294901760
    %7724 = vmatpush.xpose.msra.mxu0 %v7723
    %v7725 = vand.u32 %v435, 4294901760
    %7726 = vmatpush.xpose.msra.mxu0 %v7725
    %v7727 = vand.u32 %v431, 4294901760
    %7728 = vmatpush.xpose.msra.mxu0 %v7727
    %v7729 = vand.u32 %v427, 4294901760
    %7730 = vmatpush.xpose.msra.mxu0 %v7729
    %v7731 = vand.u32 %v423, 4294901760
    %7732 = vmatpush.xpose.msra.mxu0 %v7731
    %v7733 = vand.u32 %v419, 4294901760
    %7734 = vmatpush.xpose.msra.mxu0 %v7733
    %v7735 = vand.u32 %v415, 4294901760
    %7736 = vmatpush.xpose.msra.mxu0 %v7735
    %v7737 = vand.u32 %v411, 4294901760
    %7738 = vmatpush.xpose.msra.mxu0 %v7737
    %v7739 = vand.u32 %v407, 4294901760
    %7740 = vmatpush.xpose.msra.mxu0 %v7739
    %v7741 = vand.u32 %v403, 4294901760
    %7742 = vmatpush.xpose.msra.mxu0 %v7741
    %v7743 = vand.u32 %v399, 4294901760
    %7744 = vmatpush.xpose.msra.mxu0 %v7743
    %v7745 = vand.u32 %v395, 4294901760
    %7746 = vmatpush.xpose.msra.mxu0 %v7745
    %v7747 = vand.u32 %v391, 4294901760
    %7748 = vmatpush.xpose.msra.mxu0 %v7747
    %v7749 = vand.u32 %v387, 4294901760
    %7750 = vmatpush.xpose.msra.mxu0 %v7749
    %v7751 = vand.u32 %v383, 4294901760
    %7752 = vmatpush.xpose.msra.mxu0 %v7751
    %v7753 = vand.u32 %v379, 4294901760
    %7754 = vmatpush.xpose.msra.mxu0 %v7753
    %v7755 = vand.u32 %v591, 4294901760
    %7756 = vmatmul.f32.gmra.mxu0 %v7755
    %v7757 = vpop.f32.mrf.mxu0
    %v7758 = vadd.f32 %v7721, %v7757
    %7759 = vdwg.mxu0
    %v7760 = vand.u32 %v440, 4294901760
    %7761 = vmatpush.xpose.msra.mxu0 %v7760
    %v7762 = vand.u32 %v436, 4294901760
    %7763 = vmatpush.xpose.msra.mxu0 %v7762
    %v7764 = vand.u32 %v432, 4294901760
    %7765 = vmatpush.xpose.msra.mxu0 %v7764
    %v7766 = vand.u32 %v428, 4294901760
    %7767 = vmatpush.xpose.msra.mxu0 %v7766
    %v7768 = vand.u32 %v424, 4294901760
    %7769 = vmatpush.xpose.msra.mxu0 %v7768
    %v7770 = vand.u32 %v420, 4294901760
    %7771 = vmatpush.xpose.msra.mxu0 %v7770
    %v7772 = vand.u32 %v416, 4294901760
    %7773 = vmatpush.xpose.msra.mxu0 %v7772
    %v7774 = vand.u32 %v412, 4294901760
    %7775 = vmatpush.xpose.msra.mxu0 %v7774
    %v7776 = vand.u32 %v408, 4294901760
    %7777 = vmatpush.xpose.msra.mxu0 %v7776
    %v7778 = vand.u32 %v404, 4294901760
    %7779 = vmatpush.xpose.msra.mxu0 %v7778
    %v7780 = vand.u32 %v400, 4294901760
    %7781 = vmatpush.xpose.msra.mxu0 %v7780
    %v7782 = vand.u32 %v396, 4294901760
    %7783 = vmatpush.xpose.msra.mxu0 %v7782
    %v7784 = vand.u32 %v392, 4294901760
    %7785 = vmatpush.xpose.msra.mxu0 %v7784
    %v7786 = vand.u32 %v388, 4294901760
    %7787 = vmatpush.xpose.msra.mxu0 %v7786
    %v7788 = vand.u32 %v384, 4294901760
    %7789 = vmatpush.xpose.msra.mxu0 %v7788
    %v7790 = vand.u32 %v380, 4294901760
    %7791 = vmatpush.xpose.msra.mxu0 %v7790
    %v7792 = vand.u32 %v592, 4294901760
    %v7793 = vsub.f32 %v592, %v7792
    %v7794 = vand.u32 %v7793, 4294901760
    %v7795 = vsub.f32 %v7793, %v7794
    %v7796 = vand.u32 %v7795, 4294901760
    %7797 = vmatmul.f32.gmra.mxu0 %v7796
    %v7798 = vpop.f32.mrf.mxu0
    %v7799 = vadd.f32 %v7758, %v7798
    %7800 = vdwg.mxu0
    %v7801 = vand.u32 %v440, 4294901760
    %v7802 = vsub.f32 %v440, %v7801
    %v7803 = vand.u32 %v7802, 4294901760
    %v7804 = vsub.f32 %v7802, %v7803
    %v7805 = vand.u32 %v7804, 4294901760
    %7806 = vmatpush.xpose.msra.mxu0 %v7805
    %v7807 = vand.u32 %v436, 4294901760
    %v7808 = vsub.f32 %v436, %v7807
    %v7809 = vand.u32 %v7808, 4294901760
    %v7810 = vsub.f32 %v7808, %v7809
    %v7811 = vand.u32 %v7810, 4294901760
    %7812 = vmatpush.xpose.msra.mxu0 %v7811
    %v7813 = vand.u32 %v432, 4294901760
    %v7814 = vsub.f32 %v432, %v7813
    %v7815 = vand.u32 %v7814, 4294901760
    %v7816 = vsub.f32 %v7814, %v7815
    %v7817 = vand.u32 %v7816, 4294901760
    %7818 = vmatpush.xpose.msra.mxu0 %v7817
    %v7819 = vand.u32 %v428, 4294901760
    %v7820 = vsub.f32 %v428, %v7819
    %v7821 = vand.u32 %v7820, 4294901760
    %v7822 = vsub.f32 %v7820, %v7821
    %v7823 = vand.u32 %v7822, 4294901760
    %7824 = vmatpush.xpose.msra.mxu0 %v7823
    %v7825 = vand.u32 %v424, 4294901760
    %v7826 = vsub.f32 %v424, %v7825
    %v7827 = vand.u32 %v7826, 4294901760
    %v7828 = vsub.f32 %v7826, %v7827
    %v7829 = vand.u32 %v7828, 4294901760
    %7830 = vmatpush.xpose.msra.mxu0 %v7829
    %v7831 = vand.u32 %v420, 4294901760
    %v7832 = vsub.f32 %v420, %v7831
    %v7833 = vand.u32 %v7832, 4294901760
    %v7834 = vsub.f32 %v7832, %v7833
    %v7835 = vand.u32 %v7834, 4294901760
    %7836 = vmatpush.xpose.msra.mxu0 %v7835
    %v7837 = vand.u32 %v416, 4294901760
    %v7838 = vsub.f32 %v416, %v7837
    %v7839 = vand.u32 %v7838, 4294901760
    %v7840 = vsub.f32 %v7838, %v7839
    %v7841 = vand.u32 %v7840, 4294901760
    %7842 = vmatpush.xpose.msra.mxu0 %v7841
    %v7843 = vand.u32 %v412, 4294901760
    %v7844 = vsub.f32 %v412, %v7843
    %v7845 = vand.u32 %v7844, 4294901760
    %v7846 = vsub.f32 %v7844, %v7845
    %v7847 = vand.u32 %v7846, 4294901760
    %7848 = vmatpush.xpose.msra.mxu0 %v7847
    %v7849 = vand.u32 %v408, 4294901760
    %v7850 = vsub.f32 %v408, %v7849
    %v7851 = vand.u32 %v7850, 4294901760
    %v7852 = vsub.f32 %v7850, %v7851
    %v7853 = vand.u32 %v7852, 4294901760
    %7854 = vmatpush.xpose.msra.mxu0 %v7853
    %v7855 = vand.u32 %v404, 4294901760
    %v7856 = vsub.f32 %v404, %v7855
    %v7857 = vand.u32 %v7856, 4294901760
    %v7858 = vsub.f32 %v7856, %v7857
    %v7859 = vand.u32 %v7858, 4294901760
    %7860 = vmatpush.xpose.msra.mxu0 %v7859
    %v7861 = vand.u32 %v400, 4294901760
    %v7862 = vsub.f32 %v400, %v7861
    %v7863 = vand.u32 %v7862, 4294901760
    %v7864 = vsub.f32 %v7862, %v7863
    %v7865 = vand.u32 %v7864, 4294901760
    %7866 = vmatpush.xpose.msra.mxu0 %v7865
    %v7867 = vand.u32 %v396, 4294901760
    %v7868 = vsub.f32 %v396, %v7867
    %v7869 = vand.u32 %v7868, 4294901760
    %v7870 = vsub.f32 %v7868, %v7869
    %v7871 = vand.u32 %v7870, 4294901760
    %7872 = vmatpush.xpose.msra.mxu0 %v7871
    %v7873 = vand.u32 %v392, 4294901760
    %v7874 = vsub.f32 %v392, %v7873
    %v7875 = vand.u32 %v7874, 4294901760
    %v7876 = vsub.f32 %v7874, %v7875
    %v7877 = vand.u32 %v7876, 4294901760
    %7878 = vmatpush.xpose.msra.mxu0 %v7877
    %v7879 = vand.u32 %v388, 4294901760
    %v7880 = vsub.f32 %v388, %v7879
    %v7881 = vand.u32 %v7880, 4294901760
    %v7882 = vsub.f32 %v7880, %v7881
    %v7883 = vand.u32 %v7882, 4294901760
    %7884 = vmatpush.xpose.msra.mxu0 %v7883
    %v7885 = vand.u32 %v384, 4294901760
    %v7886 = vsub.f32 %v384, %v7885
    %v7887 = vand.u32 %v7886, 4294901760
    %v7888 = vsub.f32 %v7886, %v7887
    %v7889 = vand.u32 %v7888, 4294901760
    %7890 = vmatpush.xpose.msra.mxu0 %v7889
    %v7891 = vand.u32 %v380, 4294901760
    %v7892 = vsub.f32 %v380, %v7891
    %v7893 = vand.u32 %v7892, 4294901760
    %v7894 = vsub.f32 %v7892, %v7893
    %v7895 = vand.u32 %v7894, 4294901760
    %7896 = vmatpush.xpose.msra.mxu0 %v7895
    %v7897 = vand.u32 %v592, 4294901760
    %7898 = vmatmul.f32.gmra.mxu0 %v7897
    %v7899 = vpop.f32.mrf.mxu0
    %v7900 = vadd.f32 %v7799, %v7899
    %7901 = vdwg.mxu0
    %v7902 = vand.u32 %v440, 4294901760
    %v7903 = vsub.f32 %v440, %v7902
    %7904 = vmatpush.xpose.msra.mxu0 %v7903
    %v7905 = vand.u32 %v436, 4294901760
    %v7906 = vsub.f32 %v436, %v7905
    %7907 = vmatpush.xpose.msra.mxu0 %v7906
    %v7908 = vand.u32 %v432, 4294901760
    %v7909 = vsub.f32 %v432, %v7908
    %7910 = vmatpush.xpose.msra.mxu0 %v7909
    %v7911 = vand.u32 %v428, 4294901760
    %v7912 = vsub.f32 %v428, %v7911
    %7913 = vmatpush.xpose.msra.mxu0 %v7912
    %v7914 = vand.u32 %v424, 4294901760
    %v7915 = vsub.f32 %v424, %v7914
    %7916 = vmatpush.xpose.msra.mxu0 %v7915
    %v7917 = vand.u32 %v420, 4294901760
    %v7918 = vsub.f32 %v420, %v7917
    %7919 = vmatpush.xpose.msra.mxu0 %v7918
    %v7920 = vand.u32 %v416, 4294901760
    %v7921 = vsub.f32 %v416, %v7920
    %7922 = vmatpush.xpose.msra.mxu0 %v7921
    %v7923 = vand.u32 %v412, 4294901760
    %v7924 = vsub.f32 %v412, %v7923
    %7925 = vmatpush.xpose.msra.mxu0 %v7924
    %v7926 = vand.u32 %v408, 4294901760
    %v7927 = vsub.f32 %v408, %v7926
    %7928 = vmatpush.xpose.msra.mxu0 %v7927
    %v7929 = vand.u32 %v404, 4294901760
    %v7930 = vsub.f32 %v404, %v7929
    %7931 = vmatpush.xpose.msra.mxu0 %v7930
    %v7932 = vand.u32 %v400, 4294901760
    %v7933 = vsub.f32 %v400, %v7932
    %7934 = vmatpush.xpose.msra.mxu0 %v7933
    %v7935 = vand.u32 %v396, 4294901760
    %v7936 = vsub.f32 %v396, %v7935
    %7937 = vmatpush.xpose.msra.mxu0 %v7936
    %v7938 = vand.u32 %v392, 4294901760
    %v7939 = vsub.f32 %v392, %v7938
    %7940 = vmatpush.xpose.msra.mxu0 %v7939
    %v7941 = vand.u32 %v388, 4294901760
    %v7942 = vsub.f32 %v388, %v7941
    %7943 = vmatpush.xpose.msra.mxu0 %v7942
    %v7944 = vand.u32 %v384, 4294901760
    %v7945 = vsub.f32 %v384, %v7944
    %7946 = vmatpush.xpose.msra.mxu0 %v7945
    %v7947 = vand.u32 %v380, 4294901760
    %v7948 = vsub.f32 %v380, %v7947
    %7949 = vmatpush.xpose.msra.mxu0 %v7948
    %v7950 = vand.u32 %v592, 4294901760
    %v7951 = vsub.f32 %v592, %v7950
    %7952 = vmatmul.f32.gmra.mxu0 %v7951
    %v7953 = vpop.f32.mrf.mxu0
    %v7954 = vadd.f32 %v7900, %v7953
    %7955 = vdwg.mxu0
    %v7956 = vand.u32 %v440, 4294901760
    %7957 = vmatpush.xpose.msra.mxu0 %v7956
    %v7958 = vand.u32 %v436, 4294901760
    %7959 = vmatpush.xpose.msra.mxu0 %v7958
    %v7960 = vand.u32 %v432, 4294901760
    %7961 = vmatpush.xpose.msra.mxu0 %v7960
    %v7962 = vand.u32 %v428, 4294901760
    %7963 = vmatpush.xpose.msra.mxu0 %v7962
    %v7964 = vand.u32 %v424, 4294901760
    %7965 = vmatpush.xpose.msra.mxu0 %v7964
    %v7966 = vand.u32 %v420, 4294901760
    %7967 = vmatpush.xpose.msra.mxu0 %v7966
    %v7968 = vand.u32 %v416, 4294901760
    %7969 = vmatpush.xpose.msra.mxu0 %v7968
    %v7970 = vand.u32 %v412, 4294901760
    %7971 = vmatpush.xpose.msra.mxu0 %v7970
    %v7972 = vand.u32 %v408, 4294901760
    %7973 = vmatpush.xpose.msra.mxu0 %v7972
    %v7974 = vand.u32 %v404, 4294901760
    %7975 = vmatpush.xpose.msra.mxu0 %v7974
    %v7976 = vand.u32 %v400, 4294901760
    %7977 = vmatpush.xpose.msra.mxu0 %v7976
    %v7978 = vand.u32 %v396, 4294901760
    %7979 = vmatpush.xpose.msra.mxu0 %v7978
    %v7980 = vand.u32 %v392, 4294901760
    %7981 = vmatpush.xpose.msra.mxu0 %v7980
    %v7982 = vand.u32 %v388, 4294901760
    %7983 = vmatpush.xpose.msra.mxu0 %v7982
    %v7984 = vand.u32 %v384, 4294901760
    %7985 = vmatpush.xpose.msra.mxu0 %v7984
    %v7986 = vand.u32 %v380, 4294901760
    %7987 = vmatpush.xpose.msra.mxu0 %v7986
    %v7988 = vand.u32 %v592, 4294901760
    %v7989 = vsub.f32 %v592, %v7988
    %v7990 = vand.u32 %v7989, 4294901760
    %7991 = vmatmul.f32.gmra.mxu0 %v7990
    %v7992 = vpop.f32.mrf.mxu0
    %v7993 = vadd.f32 %v7954, %v7992
    %7994 = vdwg.mxu0
    %v7995 = vand.u32 %v440, 4294901760
    %v7996 = vsub.f32 %v440, %v7995
    %v7997 = vand.u32 %v7996, 4294901760
    %7998 = vmatpush.xpose.msra.mxu0 %v7997
    %v7999 = vand.u32 %v436, 4294901760
    %v8000 = vsub.f32 %v436, %v7999
    %v8001 = vand.u32 %v8000, 4294901760
    %8002 = vmatpush.xpose.msra.mxu0 %v8001
    %v8003 = vand.u32 %v432, 4294901760
    %v8004 = vsub.f32 %v432, %v8003
    %v8005 = vand.u32 %v8004, 4294901760
    %8006 = vmatpush.xpose.msra.mxu0 %v8005
    %v8007 = vand.u32 %v428, 4294901760
    %v8008 = vsub.f32 %v428, %v8007
    %v8009 = vand.u32 %v8008, 4294901760
    %8010 = vmatpush.xpose.msra.mxu0 %v8009
    %v8011 = vand.u32 %v424, 4294901760
    %v8012 = vsub.f32 %v424, %v8011
    %v8013 = vand.u32 %v8012, 4294901760
    %8014 = vmatpush.xpose.msra.mxu0 %v8013
    %v8015 = vand.u32 %v420, 4294901760
    %v8016 = vsub.f32 %v420, %v8015
    %v8017 = vand.u32 %v8016, 4294901760
    %8018 = vmatpush.xpose.msra.mxu0 %v8017
    %v8019 = vand.u32 %v416, 4294901760
    %v8020 = vsub.f32 %v416, %v8019
    %v8021 = vand.u32 %v8020, 4294901760
    %8022 = vmatpush.xpose.msra.mxu0 %v8021
    %v8023 = vand.u32 %v412, 4294901760
    %v8024 = vsub.f32 %v412, %v8023
    %v8025 = vand.u32 %v8024, 4294901760
    %8026 = vmatpush.xpose.msra.mxu0 %v8025
    %v8027 = vand.u32 %v408, 4294901760
    %v8028 = vsub.f32 %v408, %v8027
    %v8029 = vand.u32 %v8028, 4294901760
    %8030 = vmatpush.xpose.msra.mxu0 %v8029
    %v8031 = vand.u32 %v404, 4294901760
    %v8032 = vsub.f32 %v404, %v8031
    %v8033 = vand.u32 %v8032, 4294901760
    %8034 = vmatpush.xpose.msra.mxu0 %v8033
    %v8035 = vand.u32 %v400, 4294901760
    %v8036 = vsub.f32 %v400, %v8035
    %v8037 = vand.u32 %v8036, 4294901760
    %8038 = vmatpush.xpose.msra.mxu0 %v8037
    %v8039 = vand.u32 %v396, 4294901760
    %v8040 = vsub.f32 %v396, %v8039
    %v8041 = vand.u32 %v8040, 4294901760
    %8042 = vmatpush.xpose.msra.mxu0 %v8041
    %v8043 = vand.u32 %v392, 4294901760
    %v8044 = vsub.f32 %v392, %v8043
    %v8045 = vand.u32 %v8044, 4294901760
    %8046 = vmatpush.xpose.msra.mxu0 %v8045
    %v8047 = vand.u32 %v388, 4294901760
    %v8048 = vsub.f32 %v388, %v8047
    %v8049 = vand.u32 %v8048, 4294901760
    %8050 = vmatpush.xpose.msra.mxu0 %v8049
    %v8051 = vand.u32 %v384, 4294901760
    %v8052 = vsub.f32 %v384, %v8051
    %v8053 = vand.u32 %v8052, 4294901760
    %8054 = vmatpush.xpose.msra.mxu0 %v8053
    %v8055 = vand.u32 %v380, 4294901760
    %v8056 = vsub.f32 %v380, %v8055
    %v8057 = vand.u32 %v8056, 4294901760
    %8058 = vmatpush.xpose.msra.mxu0 %v8057
    %v8059 = vand.u32 %v592, 4294901760
    %8060 = vmatmul.f32.gmra.mxu0 %v8059
    %v8061 = vpop.f32.mrf.mxu0
    %v8062 = vadd.f32 %v7993, %v8061
    %8063 = vdwg.mxu0
    %v8064 = vand.u32 %v440, 4294901760
    %8065 = vmatpush.xpose.msra.mxu0 %v8064
    %v8066 = vand.u32 %v436, 4294901760
    %8067 = vmatpush.xpose.msra.mxu0 %v8066
    %v8068 = vand.u32 %v432, 4294901760
    %8069 = vmatpush.xpose.msra.mxu0 %v8068
    %v8070 = vand.u32 %v428, 4294901760
    %8071 = vmatpush.xpose.msra.mxu0 %v8070
    %v8072 = vand.u32 %v424, 4294901760
    %8073 = vmatpush.xpose.msra.mxu0 %v8072
    %v8074 = vand.u32 %v420, 4294901760
    %8075 = vmatpush.xpose.msra.mxu0 %v8074
    %v8076 = vand.u32 %v416, 4294901760
    %8077 = vmatpush.xpose.msra.mxu0 %v8076
    %v8078 = vand.u32 %v412, 4294901760
    %8079 = vmatpush.xpose.msra.mxu0 %v8078
    %v8080 = vand.u32 %v408, 4294901760
    %8081 = vmatpush.xpose.msra.mxu0 %v8080
    %v8082 = vand.u32 %v404, 4294901760
    %8083 = vmatpush.xpose.msra.mxu0 %v8082
    %v8084 = vand.u32 %v400, 4294901760
    %8085 = vmatpush.xpose.msra.mxu0 %v8084
    %v8086 = vand.u32 %v396, 4294901760
    %8087 = vmatpush.xpose.msra.mxu0 %v8086
    %v8088 = vand.u32 %v392, 4294901760
    %8089 = vmatpush.xpose.msra.mxu0 %v8088
    %v8090 = vand.u32 %v388, 4294901760
    %8091 = vmatpush.xpose.msra.mxu0 %v8090
    %v8092 = vand.u32 %v384, 4294901760
    %8093 = vmatpush.xpose.msra.mxu0 %v8092
    %v8094 = vand.u32 %v380, 4294901760
    %8095 = vmatpush.xpose.msra.mxu0 %v8094
    %v8096 = vand.u32 %v592, 4294901760
    %8097 = vmatmul.f32.gmra.mxu0 %v8096
    %v8098 = vpop.f32.mrf.mxu0
    %v8099 = vadd.f32 %v8062, %v8098
    %8100 = vdwg.mxu0
    %v8101 = vand.u32 %v441, 4294901760
    %8102 = vmatpush.xpose.msra.mxu0 %v8101
    %v8103 = vand.u32 %v437, 4294901760
    %8104 = vmatpush.xpose.msra.mxu0 %v8103
    %v8105 = vand.u32 %v433, 4294901760
    %8106 = vmatpush.xpose.msra.mxu0 %v8105
    %v8107 = vand.u32 %v429, 4294901760
    %8108 = vmatpush.xpose.msra.mxu0 %v8107
    %v8109 = vand.u32 %v425, 4294901760
    %8110 = vmatpush.xpose.msra.mxu0 %v8109
    %v8111 = vand.u32 %v421, 4294901760
    %8112 = vmatpush.xpose.msra.mxu0 %v8111
    %v8113 = vand.u32 %v417, 4294901760
    %8114 = vmatpush.xpose.msra.mxu0 %v8113
    %v8115 = vand.u32 %v413, 4294901760
    %8116 = vmatpush.xpose.msra.mxu0 %v8115
    %v8117 = vand.u32 %v409, 4294901760
    %8118 = vmatpush.xpose.msra.mxu0 %v8117
    %v8119 = vand.u32 %v405, 4294901760
    %8120 = vmatpush.xpose.msra.mxu0 %v8119
    %v8121 = vand.u32 %v401, 4294901760
    %8122 = vmatpush.xpose.msra.mxu0 %v8121
    %v8123 = vand.u32 %v397, 4294901760
    %8124 = vmatpush.xpose.msra.mxu0 %v8123
    %v8125 = vand.u32 %v393, 4294901760
    %8126 = vmatpush.xpose.msra.mxu0 %v8125
    %v8127 = vand.u32 %v389, 4294901760
    %8128 = vmatpush.xpose.msra.mxu0 %v8127
    %v8129 = vand.u32 %v385, 4294901760
    %8130 = vmatpush.xpose.msra.mxu0 %v8129
    %v8131 = vand.u32 %v381, 4294901760
    %8132 = vmatpush.xpose.msra.mxu0 %v8131
    %v8133 = vand.u32 %v593, 4294901760
    %v8134 = vsub.f32 %v593, %v8133
    %v8135 = vand.u32 %v8134, 4294901760
    %v8136 = vsub.f32 %v8134, %v8135
    %v8137 = vand.u32 %v8136, 4294901760
    %8138 = vmatmul.f32.gmra.mxu0 %v8137
    %v8139 = vpop.f32.mrf.mxu0
    %v8140 = vadd.f32 %v8099, %v8139
    %8141 = vdwg.mxu0
    %v8142 = vand.u32 %v441, 4294901760
    %v8143 = vsub.f32 %v441, %v8142
    %v8144 = vand.u32 %v8143, 4294901760
    %v8145 = vsub.f32 %v8143, %v8144
    %v8146 = vand.u32 %v8145, 4294901760
    %8147 = vmatpush.xpose.msra.mxu0 %v8146
    %v8148 = vand.u32 %v437, 4294901760
    %v8149 = vsub.f32 %v437, %v8148
    %v8150 = vand.u32 %v8149, 4294901760
    %v8151 = vsub.f32 %v8149, %v8150
    %v8152 = vand.u32 %v8151, 4294901760
    %8153 = vmatpush.xpose.msra.mxu0 %v8152
    %v8154 = vand.u32 %v433, 4294901760
    %v8155 = vsub.f32 %v433, %v8154
    %v8156 = vand.u32 %v8155, 4294901760
    %v8157 = vsub.f32 %v8155, %v8156
    %v8158 = vand.u32 %v8157, 4294901760
    %8159 = vmatpush.xpose.msra.mxu0 %v8158
    %v8160 = vand.u32 %v429, 4294901760
    %v8161 = vsub.f32 %v429, %v8160
    %v8162 = vand.u32 %v8161, 4294901760
    %v8163 = vsub.f32 %v8161, %v8162
    %v8164 = vand.u32 %v8163, 4294901760
    %8165 = vmatpush.xpose.msra.mxu0 %v8164
    %v8166 = vand.u32 %v425, 4294901760
    %v8167 = vsub.f32 %v425, %v8166
    %v8168 = vand.u32 %v8167, 4294901760
    %v8169 = vsub.f32 %v8167, %v8168
    %v8170 = vand.u32 %v8169, 4294901760
    %8171 = vmatpush.xpose.msra.mxu0 %v8170
    %v8172 = vand.u32 %v421, 4294901760
    %v8173 = vsub.f32 %v421, %v8172
    %v8174 = vand.u32 %v8173, 4294901760
    %v8175 = vsub.f32 %v8173, %v8174
    %v8176 = vand.u32 %v8175, 4294901760
    %8177 = vmatpush.xpose.msra.mxu0 %v8176
    %v8178 = vand.u32 %v417, 4294901760
    %v8179 = vsub.f32 %v417, %v8178
    %v8180 = vand.u32 %v8179, 4294901760
    %v8181 = vsub.f32 %v8179, %v8180
    %v8182 = vand.u32 %v8181, 4294901760
    %8183 = vmatpush.xpose.msra.mxu0 %v8182
    %v8184 = vand.u32 %v413, 4294901760
    %v8185 = vsub.f32 %v413, %v8184
    %v8186 = vand.u32 %v8185, 4294901760
    %v8187 = vsub.f32 %v8185, %v8186
    %v8188 = vand.u32 %v8187, 4294901760
    %8189 = vmatpush.xpose.msra.mxu0 %v8188
    %v8190 = vand.u32 %v409, 4294901760
    %v8191 = vsub.f32 %v409, %v8190
    %v8192 = vand.u32 %v8191, 4294901760
    %v8193 = vsub.f32 %v8191, %v8192
    %v8194 = vand.u32 %v8193, 4294901760
    %8195 = vmatpush.xpose.msra.mxu0 %v8194
    %v8196 = vand.u32 %v405, 4294901760
    %v8197 = vsub.f32 %v405, %v8196
    %v8198 = vand.u32 %v8197, 4294901760
    %v8199 = vsub.f32 %v8197, %v8198
    %v8200 = vand.u32 %v8199, 4294901760
    %8201 = vmatpush.xpose.msra.mxu0 %v8200
    %v8202 = vand.u32 %v401, 4294901760
    %v8203 = vsub.f32 %v401, %v8202
    %v8204 = vand.u32 %v8203, 4294901760
    %v8205 = vsub.f32 %v8203, %v8204
    %v8206 = vand.u32 %v8205, 4294901760
    %8207 = vmatpush.xpose.msra.mxu0 %v8206
    %v8208 = vand.u32 %v397, 4294901760
    %v8209 = vsub.f32 %v397, %v8208
    %v8210 = vand.u32 %v8209, 4294901760
    %v8211 = vsub.f32 %v8209, %v8210
    %v8212 = vand.u32 %v8211, 4294901760
    %8213 = vmatpush.xpose.msra.mxu0 %v8212
    %v8214 = vand.u32 %v393, 4294901760
    %v8215 = vsub.f32 %v393, %v8214
    %v8216 = vand.u32 %v8215, 4294901760
    %v8217 = vsub.f32 %v8215, %v8216
    %v8218 = vand.u32 %v8217, 4294901760
    %8219 = vmatpush.xpose.msra.mxu0 %v8218
    %v8220 = vand.u32 %v389, 4294901760
    %v8221 = vsub.f32 %v389, %v8220
    %v8222 = vand.u32 %v8221, 4294901760
    %v8223 = vsub.f32 %v8221, %v8222
    %v8224 = vand.u32 %v8223, 4294901760
    %8225 = vmatpush.xpose.msra.mxu0 %v8224
    %v8226 = vand.u32 %v385, 4294901760
    %v8227 = vsub.f32 %v385, %v8226
    %v8228 = vand.u32 %v8227, 4294901760
    %v8229 = vsub.f32 %v8227, %v8228
    %v8230 = vand.u32 %v8229, 4294901760
    %8231 = vmatpush.xpose.msra.mxu0 %v8230
    %v8232 = vand.u32 %v381, 4294901760
    %v8233 = vsub.f32 %v381, %v8232
    %v8234 = vand.u32 %v8233, 4294901760
    %v8235 = vsub.f32 %v8233, %v8234
    %v8236 = vand.u32 %v8235, 4294901760
    %8237 = vmatpush.xpose.msra.mxu0 %v8236
    %v8238 = vand.u32 %v593, 4294901760
    %8239 = vmatmul.f32.gmra.mxu0 %v8238
    %v8240 = vpop.f32.mrf.mxu0
    %v8241 = vadd.f32 %v8140, %v8240
    %8242 = vdwg.mxu0
    %v8243 = vand.u32 %v441, 4294901760
    %v8244 = vsub.f32 %v441, %v8243
    %8245 = vmatpush.xpose.msra.mxu0 %v8244
    %v8246 = vand.u32 %v437, 4294901760
    %v8247 = vsub.f32 %v437, %v8246
    %8248 = vmatpush.xpose.msra.mxu0 %v8247
    %v8249 = vand.u32 %v433, 4294901760
    %v8250 = vsub.f32 %v433, %v8249
    %8251 = vmatpush.xpose.msra.mxu0 %v8250
    %v8252 = vand.u32 %v429, 4294901760
    %v8253 = vsub.f32 %v429, %v8252
    %8254 = vmatpush.xpose.msra.mxu0 %v8253
    %v8255 = vand.u32 %v425, 4294901760
    %v8256 = vsub.f32 %v425, %v8255
    %8257 = vmatpush.xpose.msra.mxu0 %v8256
    %v8258 = vand.u32 %v421, 4294901760
    %v8259 = vsub.f32 %v421, %v8258
    %8260 = vmatpush.xpose.msra.mxu0 %v8259
    %v8261 = vand.u32 %v417, 4294901760
    %v8262 = vsub.f32 %v417, %v8261
    %8263 = vmatpush.xpose.msra.mxu0 %v8262
    %v8264 = vand.u32 %v413, 4294901760
    %v8265 = vsub.f32 %v413, %v8264
    %8266 = vmatpush.xpose.msra.mxu0 %v8265
    %v8267 = vand.u32 %v409, 4294901760
    %v8268 = vsub.f32 %v409, %v8267
    %8269 = vmatpush.xpose.msra.mxu0 %v8268
    %v8270 = vand.u32 %v405, 4294901760
    %v8271 = vsub.f32 %v405, %v8270
    %8272 = vmatpush.xpose.msra.mxu0 %v8271
    %v8273 = vand.u32 %v401, 4294901760
    %v8274 = vsub.f32 %v401, %v8273
    %8275 = vmatpush.xpose.msra.mxu0 %v8274
    %v8276 = vand.u32 %v397, 4294901760
    %v8277 = vsub.f32 %v397, %v8276
    %8278 = vmatpush.xpose.msra.mxu0 %v8277
    %v8279 = vand.u32 %v393, 4294901760
    %v8280 = vsub.f32 %v393, %v8279
    %8281 = vmatpush.xpose.msra.mxu0 %v8280
    %v8282 = vand.u32 %v389, 4294901760
    %v8283 = vsub.f32 %v389, %v8282
    %8284 = vmatpush.xpose.msra.mxu0 %v8283
    %v8285 = vand.u32 %v385, 4294901760
    %v8286 = vsub.f32 %v385, %v8285
    %8287 = vmatpush.xpose.msra.mxu0 %v8286
    %v8288 = vand.u32 %v381, 4294901760
    %v8289 = vsub.f32 %v381, %v8288
    %8290 = vmatpush.xpose.msra.mxu0 %v8289
    %v8291 = vand.u32 %v593, 4294901760
    %v8292 = vsub.f32 %v593, %v8291
    %8293 = vmatmul.f32.gmra.mxu0 %v8292
    %v8294 = vpop.f32.mrf.mxu0
    %v8295 = vadd.f32 %v8241, %v8294
    %8296 = vdwg.mxu0
    %v8297 = vand.u32 %v441, 4294901760
    %8298 = vmatpush.xpose.msra.mxu0 %v8297
    %v8299 = vand.u32 %v437, 4294901760
    %8300 = vmatpush.xpose.msra.mxu0 %v8299
    %v8301 = vand.u32 %v433, 4294901760
    %8302 = vmatpush.xpose.msra.mxu0 %v8301
    %v8303 = vand.u32 %v429, 4294901760
    %8304 = vmatpush.xpose.msra.mxu0 %v8303
    %v8305 = vand.u32 %v425, 4294901760
    %8306 = vmatpush.xpose.msra.mxu0 %v8305
    %v8307 = vand.u32 %v421, 4294901760
    %8308 = vmatpush.xpose.msra.mxu0 %v8307
    %v8309 = vand.u32 %v417, 4294901760
    %8310 = vmatpush.xpose.msra.mxu0 %v8309
    %v8311 = vand.u32 %v413, 4294901760
    %8312 = vmatpush.xpose.msra.mxu0 %v8311
    %v8313 = vand.u32 %v409, 4294901760
    %8314 = vmatpush.xpose.msra.mxu0 %v8313
    %v8315 = vand.u32 %v405, 4294901760
    %8316 = vmatpush.xpose.msra.mxu0 %v8315
    %v8317 = vand.u32 %v401, 4294901760
    %8318 = vmatpush.xpose.msra.mxu0 %v8317
    %v8319 = vand.u32 %v397, 4294901760
    %8320 = vmatpush.xpose.msra.mxu0 %v8319
    %v8321 = vand.u32 %v393, 4294901760
    %8322 = vmatpush.xpose.msra.mxu0 %v8321
    %v8323 = vand.u32 %v389, 4294901760
    %8324 = vmatpush.xpose.msra.mxu0 %v8323
    %v8325 = vand.u32 %v385, 4294901760
    %8326 = vmatpush.xpose.msra.mxu0 %v8325
    %v8327 = vand.u32 %v381, 4294901760
    %8328 = vmatpush.xpose.msra.mxu0 %v8327
    %v8329 = vand.u32 %v593, 4294901760
    %v8330 = vsub.f32 %v593, %v8329
    %v8331 = vand.u32 %v8330, 4294901760
    %8332 = vmatmul.f32.gmra.mxu0 %v8331
    %v8333 = vpop.f32.mrf.mxu0
    %v8334 = vadd.f32 %v8295, %v8333
    %8335 = vdwg.mxu0
    %v8336 = vand.u32 %v441, 4294901760
    %v8337 = vsub.f32 %v441, %v8336
    %v8338 = vand.u32 %v8337, 4294901760
    %8339 = vmatpush.xpose.msra.mxu0 %v8338
    %v8340 = vand.u32 %v437, 4294901760
    %v8341 = vsub.f32 %v437, %v8340
    %v8342 = vand.u32 %v8341, 4294901760
    %8343 = vmatpush.xpose.msra.mxu0 %v8342
    %v8344 = vand.u32 %v433, 4294901760
    %v8345 = vsub.f32 %v433, %v8344
    %v8346 = vand.u32 %v8345, 4294901760
    %8347 = vmatpush.xpose.msra.mxu0 %v8346
    %v8348 = vand.u32 %v429, 4294901760
    %v8349 = vsub.f32 %v429, %v8348
    %v8350 = vand.u32 %v8349, 4294901760
    %8351 = vmatpush.xpose.msra.mxu0 %v8350
    %v8352 = vand.u32 %v425, 4294901760
    %v8353 = vsub.f32 %v425, %v8352
    %v8354 = vand.u32 %v8353, 4294901760
    %8355 = vmatpush.xpose.msra.mxu0 %v8354
    %v8356 = vand.u32 %v421, 4294901760
    %v8357 = vsub.f32 %v421, %v8356
    %v8358 = vand.u32 %v8357, 4294901760
    %8359 = vmatpush.xpose.msra.mxu0 %v8358
    %v8360 = vand.u32 %v417, 4294901760
    %v8361 = vsub.f32 %v417, %v8360
    %v8362 = vand.u32 %v8361, 4294901760
    %8363 = vmatpush.xpose.msra.mxu0 %v8362
    %v8364 = vand.u32 %v413, 4294901760
    %v8365 = vsub.f32 %v413, %v8364
    %v8366 = vand.u32 %v8365, 4294901760
    %8367 = vmatpush.xpose.msra.mxu0 %v8366
    %v8368 = vand.u32 %v409, 4294901760
    %v8369 = vsub.f32 %v409, %v8368
    %v8370 = vand.u32 %v8369, 4294901760
    %8371 = vmatpush.xpose.msra.mxu0 %v8370
    %v8372 = vand.u32 %v405, 4294901760
    %v8373 = vsub.f32 %v405, %v8372
    %v8374 = vand.u32 %v8373, 4294901760
    %8375 = vmatpush.xpose.msra.mxu0 %v8374
    %v8376 = vand.u32 %v401, 4294901760
    %v8377 = vsub.f32 %v401, %v8376
    %v8378 = vand.u32 %v8377, 4294901760
    %8379 = vmatpush.xpose.msra.mxu0 %v8378
    %v8380 = vand.u32 %v397, 4294901760
    %v8381 = vsub.f32 %v397, %v8380
    %v8382 = vand.u32 %v8381, 4294901760
    %8383 = vmatpush.xpose.msra.mxu0 %v8382
    %v8384 = vand.u32 %v393, 4294901760
    %v8385 = vsub.f32 %v393, %v8384
    %v8386 = vand.u32 %v8385, 4294901760
    %8387 = vmatpush.xpose.msra.mxu0 %v8386
    %v8388 = vand.u32 %v389, 4294901760
    %v8389 = vsub.f32 %v389, %v8388
    %v8390 = vand.u32 %v8389, 4294901760
    %8391 = vmatpush.xpose.msra.mxu0 %v8390
    %v8392 = vand.u32 %v385, 4294901760
    %v8393 = vsub.f32 %v385, %v8392
    %v8394 = vand.u32 %v8393, 4294901760
    %8395 = vmatpush.xpose.msra.mxu0 %v8394
    %v8396 = vand.u32 %v381, 4294901760
    %v8397 = vsub.f32 %v381, %v8396
    %v8398 = vand.u32 %v8397, 4294901760
    %8399 = vmatpush.xpose.msra.mxu0 %v8398
    %v8400 = vand.u32 %v593, 4294901760
    %8401 = vmatmul.f32.gmra.mxu0 %v8400
    %v8402 = vpop.f32.mrf.mxu0
    %v8403 = vadd.f32 %v8334, %v8402
    %8404 = vdwg.mxu0
    %v8405 = vand.u32 %v441, 4294901760
    %8406 = vmatpush.xpose.msra.mxu0 %v8405
    %v8407 = vand.u32 %v437, 4294901760
    %8408 = vmatpush.xpose.msra.mxu0 %v8407
    %v8409 = vand.u32 %v433, 4294901760
    %8410 = vmatpush.xpose.msra.mxu0 %v8409
    %v8411 = vand.u32 %v429, 4294901760
    %8412 = vmatpush.xpose.msra.mxu0 %v8411
    %v8413 = vand.u32 %v425, 4294901760
    %8414 = vmatpush.xpose.msra.mxu0 %v8413
    %v8415 = vand.u32 %v421, 4294901760
    %8416 = vmatpush.xpose.msra.mxu0 %v8415
    %v8417 = vand.u32 %v417, 4294901760
    %8418 = vmatpush.xpose.msra.mxu0 %v8417
    %v8419 = vand.u32 %v413, 4294901760
    %8420 = vmatpush.xpose.msra.mxu0 %v8419
    %v8421 = vand.u32 %v409, 4294901760
    %8422 = vmatpush.xpose.msra.mxu0 %v8421
    %v8423 = vand.u32 %v405, 4294901760
    %8424 = vmatpush.xpose.msra.mxu0 %v8423
    %v8425 = vand.u32 %v401, 4294901760
    %8426 = vmatpush.xpose.msra.mxu0 %v8425
    %v8427 = vand.u32 %v397, 4294901760
    %8428 = vmatpush.xpose.msra.mxu0 %v8427
    %v8429 = vand.u32 %v393, 4294901760
    %8430 = vmatpush.xpose.msra.mxu0 %v8429
    %v8431 = vand.u32 %v389, 4294901760
    %8432 = vmatpush.xpose.msra.mxu0 %v8431
    %v8433 = vand.u32 %v385, 4294901760
    %8434 = vmatpush.xpose.msra.mxu0 %v8433
    %v8435 = vand.u32 %v381, 4294901760
    %8436 = vmatpush.xpose.msra.mxu0 %v8435
    %v8437 = vand.u32 %v593, 4294901760
    %8438 = vmatmul.f32.gmra.mxu0 %v8437
    %v8439 = vpop.f32.mrf.mxu0
    %v8440 = vadd.f32 %v8403, %v8439
    %8441 = vdwg.mxu0
    %v8442 = vand.u32 %v442, 4294901760
    %8443 = vmatpush.xpose.msra.mxu0 %v8442
    %v8444 = vand.u32 %v438, 4294901760
    %8445 = vmatpush.xpose.msra.mxu0 %v8444
    %v8446 = vand.u32 %v434, 4294901760
    %8447 = vmatpush.xpose.msra.mxu0 %v8446
    %v8448 = vand.u32 %v430, 4294901760
    %8449 = vmatpush.xpose.msra.mxu0 %v8448
    %v8450 = vand.u32 %v426, 4294901760
    %8451 = vmatpush.xpose.msra.mxu0 %v8450
    %v8452 = vand.u32 %v422, 4294901760
    %8453 = vmatpush.xpose.msra.mxu0 %v8452
    %v8454 = vand.u32 %v418, 4294901760
    %8455 = vmatpush.xpose.msra.mxu0 %v8454
    %v8456 = vand.u32 %v414, 4294901760
    %8457 = vmatpush.xpose.msra.mxu0 %v8456
    %v8458 = vand.u32 %v410, 4294901760
    %8459 = vmatpush.xpose.msra.mxu0 %v8458
    %v8460 = vand.u32 %v406, 4294901760
    %8461 = vmatpush.xpose.msra.mxu0 %v8460
    %v8462 = vand.u32 %v402, 4294901760
    %8463 = vmatpush.xpose.msra.mxu0 %v8462
    %v8464 = vand.u32 %v398, 4294901760
    %8465 = vmatpush.xpose.msra.mxu0 %v8464
    %v8466 = vand.u32 %v394, 4294901760
    %8467 = vmatpush.xpose.msra.mxu0 %v8466
    %v8468 = vand.u32 %v390, 4294901760
    %8469 = vmatpush.xpose.msra.mxu0 %v8468
    %v8470 = vand.u32 %v386, 4294901760
    %8471 = vmatpush.xpose.msra.mxu0 %v8470
    %v8472 = vand.u32 %v382, 4294901760
    %8473 = vmatpush.xpose.msra.mxu0 %v8472
    %v8474 = vand.u32 %v594, 4294901760
    %v8475 = vsub.f32 %v594, %v8474
    %v8476 = vand.u32 %v8475, 4294901760
    %v8477 = vsub.f32 %v8475, %v8476
    %v8478 = vand.u32 %v8477, 4294901760
    %8479 = vmatmul.f32.gmra.mxu0 %v8478
    %v8480 = vpop.f32.mrf.mxu0
    %v8481 = vadd.f32 %v8440, %v8480
    %8482 = vdwg.mxu0
    %v8483 = vand.u32 %v442, 4294901760
    %v8484 = vsub.f32 %v442, %v8483
    %v8485 = vand.u32 %v8484, 4294901760
    %v8486 = vsub.f32 %v8484, %v8485
    %v8487 = vand.u32 %v8486, 4294901760
    %8488 = vmatpush.xpose.msra.mxu0 %v8487
    %v8489 = vand.u32 %v438, 4294901760
    %v8490 = vsub.f32 %v438, %v8489
    %v8491 = vand.u32 %v8490, 4294901760
    %v8492 = vsub.f32 %v8490, %v8491
    %v8493 = vand.u32 %v8492, 4294901760
    %8494 = vmatpush.xpose.msra.mxu0 %v8493
    %v8495 = vand.u32 %v434, 4294901760
    %v8496 = vsub.f32 %v434, %v8495
    %v8497 = vand.u32 %v8496, 4294901760
    %v8498 = vsub.f32 %v8496, %v8497
    %v8499 = vand.u32 %v8498, 4294901760
    %8500 = vmatpush.xpose.msra.mxu0 %v8499
    %v8501 = vand.u32 %v430, 4294901760
    %v8502 = vsub.f32 %v430, %v8501
    %v8503 = vand.u32 %v8502, 4294901760
    %v8504 = vsub.f32 %v8502, %v8503
    %v8505 = vand.u32 %v8504, 4294901760
    %8506 = vmatpush.xpose.msra.mxu0 %v8505
    %v8507 = vand.u32 %v426, 4294901760
    %v8508 = vsub.f32 %v426, %v8507
    %v8509 = vand.u32 %v8508, 4294901760
    %v8510 = vsub.f32 %v8508, %v8509
    %v8511 = vand.u32 %v8510, 4294901760
    %8512 = vmatpush.xpose.msra.mxu0 %v8511
    %v8513 = vand.u32 %v422, 4294901760
    %v8514 = vsub.f32 %v422, %v8513
    %v8515 = vand.u32 %v8514, 4294901760
    %v8516 = vsub.f32 %v8514, %v8515
    %v8517 = vand.u32 %v8516, 4294901760
    %8518 = vmatpush.xpose.msra.mxu0 %v8517
    %v8519 = vand.u32 %v418, 4294901760
    %v8520 = vsub.f32 %v418, %v8519
    %v8521 = vand.u32 %v8520, 4294901760
    %v8522 = vsub.f32 %v8520, %v8521
    %v8523 = vand.u32 %v8522, 4294901760
    %8524 = vmatpush.xpose.msra.mxu0 %v8523
    %v8525 = vand.u32 %v414, 4294901760
    %v8526 = vsub.f32 %v414, %v8525
    %v8527 = vand.u32 %v8526, 4294901760
    %v8528 = vsub.f32 %v8526, %v8527
    %v8529 = vand.u32 %v8528, 4294901760
    %8530 = vmatpush.xpose.msra.mxu0 %v8529
    %v8531 = vand.u32 %v410, 4294901760
    %v8532 = vsub.f32 %v410, %v8531
    %v8533 = vand.u32 %v8532, 4294901760
    %v8534 = vsub.f32 %v8532, %v8533
    %v8535 = vand.u32 %v8534, 4294901760
    %8536 = vmatpush.xpose.msra.mxu0 %v8535
    %v8537 = vand.u32 %v406, 4294901760
    %v8538 = vsub.f32 %v406, %v8537
    %v8539 = vand.u32 %v8538, 4294901760
    %v8540 = vsub.f32 %v8538, %v8539
    %v8541 = vand.u32 %v8540, 4294901760
    %8542 = vmatpush.xpose.msra.mxu0 %v8541
    %v8543 = vand.u32 %v402, 4294901760
    %v8544 = vsub.f32 %v402, %v8543
    %v8545 = vand.u32 %v8544, 4294901760
    %v8546 = vsub.f32 %v8544, %v8545
    %v8547 = vand.u32 %v8546, 4294901760
    %8548 = vmatpush.xpose.msra.mxu0 %v8547
    %v8549 = vand.u32 %v398, 4294901760
    %v8550 = vsub.f32 %v398, %v8549
    %v8551 = vand.u32 %v8550, 4294901760
    %v8552 = vsub.f32 %v8550, %v8551
    %v8553 = vand.u32 %v8552, 4294901760
    %8554 = vmatpush.xpose.msra.mxu0 %v8553
    %v8555 = vand.u32 %v394, 4294901760
    %v8556 = vsub.f32 %v394, %v8555
    %v8557 = vand.u32 %v8556, 4294901760
    %v8558 = vsub.f32 %v8556, %v8557
    %v8559 = vand.u32 %v8558, 4294901760
    %8560 = vmatpush.xpose.msra.mxu0 %v8559
    %v8561 = vand.u32 %v390, 4294901760
    %v8562 = vsub.f32 %v390, %v8561
    %v8563 = vand.u32 %v8562, 4294901760
    %v8564 = vsub.f32 %v8562, %v8563
    %v8565 = vand.u32 %v8564, 4294901760
    %8566 = vmatpush.xpose.msra.mxu0 %v8565
    %v8567 = vand.u32 %v386, 4294901760
    %v8568 = vsub.f32 %v386, %v8567
    %v8569 = vand.u32 %v8568, 4294901760
    %v8570 = vsub.f32 %v8568, %v8569
    %v8571 = vand.u32 %v8570, 4294901760
    %8572 = vmatpush.xpose.msra.mxu0 %v8571
    %v8573 = vand.u32 %v382, 4294901760
    %v8574 = vsub.f32 %v382, %v8573
    %v8575 = vand.u32 %v8574, 4294901760
    %v8576 = vsub.f32 %v8574, %v8575
    %v8577 = vand.u32 %v8576, 4294901760
    %8578 = vmatpush.xpose.msra.mxu0 %v8577
    %v8579 = vand.u32 %v594, 4294901760
    %8580 = vmatmul.f32.gmra.mxu0 %v8579
    %v8581 = vpop.f32.mrf.mxu0
    %v8582 = vadd.f32 %v8481, %v8581
    %8583 = vdwg.mxu0
    %v8584 = vand.u32 %v442, 4294901760
    %v8585 = vsub.f32 %v442, %v8584
    %8586 = vmatpush.xpose.msra.mxu0 %v8585
    %v8587 = vand.u32 %v438, 4294901760
    %v8588 = vsub.f32 %v438, %v8587
    %8589 = vmatpush.xpose.msra.mxu0 %v8588
    %v8590 = vand.u32 %v434, 4294901760
    %v8591 = vsub.f32 %v434, %v8590
    %8592 = vmatpush.xpose.msra.mxu0 %v8591
    %v8593 = vand.u32 %v430, 4294901760
    %v8594 = vsub.f32 %v430, %v8593
    %8595 = vmatpush.xpose.msra.mxu0 %v8594
    %v8596 = vand.u32 %v426, 4294901760
    %v8597 = vsub.f32 %v426, %v8596
    %8598 = vmatpush.xpose.msra.mxu0 %v8597
    %v8599 = vand.u32 %v422, 4294901760
    %v8600 = vsub.f32 %v422, %v8599
    %8601 = vmatpush.xpose.msra.mxu0 %v8600
    %v8602 = vand.u32 %v418, 4294901760
    %v8603 = vsub.f32 %v418, %v8602
    %8604 = vmatpush.xpose.msra.mxu0 %v8603
    %v8605 = vand.u32 %v414, 4294901760
    %v8606 = vsub.f32 %v414, %v8605
    %8607 = vmatpush.xpose.msra.mxu0 %v8606
    %v8608 = vand.u32 %v410, 4294901760
    %v8609 = vsub.f32 %v410, %v8608
    %8610 = vmatpush.xpose.msra.mxu0 %v8609
    %v8611 = vand.u32 %v406, 4294901760
    %v8612 = vsub.f32 %v406, %v8611
    %8613 = vmatpush.xpose.msra.mxu0 %v8612
    %v8614 = vand.u32 %v402, 4294901760
    %v8615 = vsub.f32 %v402, %v8614
    %8616 = vmatpush.xpose.msra.mxu0 %v8615
    %v8617 = vand.u32 %v398, 4294901760
    %v8618 = vsub.f32 %v398, %v8617
    %8619 = vmatpush.xpose.msra.mxu0 %v8618
    %v8620 = vand.u32 %v394, 4294901760
    %v8621 = vsub.f32 %v394, %v8620
    %8622 = vmatpush.xpose.msra.mxu0 %v8621
    %v8623 = vand.u32 %v390, 4294901760
    %v8624 = vsub.f32 %v390, %v8623
    %8625 = vmatpush.xpose.msra.mxu0 %v8624
    %v8626 = vand.u32 %v386, 4294901760
    %v8627 = vsub.f32 %v386, %v8626
    %8628 = vmatpush.xpose.msra.mxu0 %v8627
    %v8629 = vand.u32 %v382, 4294901760
    %v8630 = vsub.f32 %v382, %v8629
    %8631 = vmatpush.xpose.msra.mxu0 %v8630
    %v8632 = vand.u32 %v594, 4294901760
    %v8633 = vsub.f32 %v594, %v8632
    %8634 = vmatmul.f32.gmra.mxu0 %v8633
    %v8635 = vpop.f32.mrf.mxu0
    %v8636 = vadd.f32 %v8582, %v8635
    %8637 = vdwg.mxu0
    %v8638 = vand.u32 %v442, 4294901760
    %8639 = vmatpush.xpose.msra.mxu0 %v8638
    %v8640 = vand.u32 %v438, 4294901760
    %8641 = vmatpush.xpose.msra.mxu0 %v8640
    %v8642 = vand.u32 %v434, 4294901760
    %8643 = vmatpush.xpose.msra.mxu0 %v8642
    %v8644 = vand.u32 %v430, 4294901760
    %8645 = vmatpush.xpose.msra.mxu0 %v8644
    %v8646 = vand.u32 %v426, 4294901760
    %8647 = vmatpush.xpose.msra.mxu0 %v8646
    %v8648 = vand.u32 %v422, 4294901760
    %8649 = vmatpush.xpose.msra.mxu0 %v8648
    %v8650 = vand.u32 %v418, 4294901760
    %8651 = vmatpush.xpose.msra.mxu0 %v8650
    %v8652 = vand.u32 %v414, 4294901760
    %8653 = vmatpush.xpose.msra.mxu0 %v8652
    %v8654 = vand.u32 %v410, 4294901760
    %8655 = vmatpush.xpose.msra.mxu0 %v8654
    %v8656 = vand.u32 %v406, 4294901760
    %8657 = vmatpush.xpose.msra.mxu0 %v8656
    %v8658 = vand.u32 %v402, 4294901760
    %8659 = vmatpush.xpose.msra.mxu0 %v8658
    %v8660 = vand.u32 %v398, 4294901760
    %8661 = vmatpush.xpose.msra.mxu0 %v8660
    %v8662 = vand.u32 %v394, 4294901760
    %8663 = vmatpush.xpose.msra.mxu0 %v8662
    %v8664 = vand.u32 %v390, 4294901760
    %8665 = vmatpush.xpose.msra.mxu0 %v8664
    %v8666 = vand.u32 %v386, 4294901760
    %8667 = vmatpush.xpose.msra.mxu0 %v8666
    %v8668 = vand.u32 %v382, 4294901760
    %8669 = vmatpush.xpose.msra.mxu0 %v8668
    %v8670 = vand.u32 %v594, 4294901760
    %v8671 = vsub.f32 %v594, %v8670
    %v8672 = vand.u32 %v8671, 4294901760
    %8673 = vmatmul.f32.gmra.mxu0 %v8672
    %v8674 = vpop.f32.mrf.mxu0
    %v8675 = vadd.f32 %v8636, %v8674
    %8676 = vdwg.mxu0
    %v8677 = vand.u32 %v442, 4294901760
    %v8678 = vsub.f32 %v442, %v8677
    %v8679 = vand.u32 %v8678, 4294901760
    %8680 = vmatpush.xpose.msra.mxu0 %v8679
    %v8681 = vand.u32 %v438, 4294901760
    %v8682 = vsub.f32 %v438, %v8681
    %v8683 = vand.u32 %v8682, 4294901760
    %8684 = vmatpush.xpose.msra.mxu0 %v8683
    %v8685 = vand.u32 %v434, 4294901760
    %v8686 = vsub.f32 %v434, %v8685
    %v8687 = vand.u32 %v8686, 4294901760
    %8688 = vmatpush.xpose.msra.mxu0 %v8687
    %v8689 = vand.u32 %v430, 4294901760
    %v8690 = vsub.f32 %v430, %v8689
    %v8691 = vand.u32 %v8690, 4294901760
    %8692 = vmatpush.xpose.msra.mxu0 %v8691
    %v8693 = vand.u32 %v426, 4294901760
    %v8694 = vsub.f32 %v426, %v8693
    %v8695 = vand.u32 %v8694, 4294901760
    %8696 = vmatpush.xpose.msra.mxu0 %v8695
    %v8697 = vand.u32 %v422, 4294901760
    %v8698 = vsub.f32 %v422, %v8697
    %v8699 = vand.u32 %v8698, 4294901760
    %8700 = vmatpush.xpose.msra.mxu0 %v8699
    %v8701 = vand.u32 %v418, 4294901760
    %v8702 = vsub.f32 %v418, %v8701
    %v8703 = vand.u32 %v8702, 4294901760
    %8704 = vmatpush.xpose.msra.mxu0 %v8703
    %v8705 = vand.u32 %v414, 4294901760
    %v8706 = vsub.f32 %v414, %v8705
    %v8707 = vand.u32 %v8706, 4294901760
    %8708 = vmatpush.xpose.msra.mxu0 %v8707
    %v8709 = vand.u32 %v410, 4294901760
    %v8710 = vsub.f32 %v410, %v8709
    %v8711 = vand.u32 %v8710, 4294901760
    %8712 = vmatpush.xpose.msra.mxu0 %v8711
    %v8713 = vand.u32 %v406, 4294901760
    %v8714 = vsub.f32 %v406, %v8713
    %v8715 = vand.u32 %v8714, 4294901760
    %8716 = vmatpush.xpose.msra.mxu0 %v8715
    %v8717 = vand.u32 %v402, 4294901760
    %v8718 = vsub.f32 %v402, %v8717
    %v8719 = vand.u32 %v8718, 4294901760
    %8720 = vmatpush.xpose.msra.mxu0 %v8719
    %v8721 = vand.u32 %v398, 4294901760
    %v8722 = vsub.f32 %v398, %v8721
    %v8723 = vand.u32 %v8722, 4294901760
    %8724 = vmatpush.xpose.msra.mxu0 %v8723
    %v8725 = vand.u32 %v394, 4294901760
    %v8726 = vsub.f32 %v394, %v8725
    %v8727 = vand.u32 %v8726, 4294901760
    %8728 = vmatpush.xpose.msra.mxu0 %v8727
    %v8729 = vand.u32 %v390, 4294901760
    %v8730 = vsub.f32 %v390, %v8729
    %v8731 = vand.u32 %v8730, 4294901760
    %8732 = vmatpush.xpose.msra.mxu0 %v8731
    %v8733 = vand.u32 %v386, 4294901760
    %v8734 = vsub.f32 %v386, %v8733
    %v8735 = vand.u32 %v8734, 4294901760
    %8736 = vmatpush.xpose.msra.mxu0 %v8735
    %v8737 = vand.u32 %v382, 4294901760
    %v8738 = vsub.f32 %v382, %v8737
    %v8739 = vand.u32 %v8738, 4294901760
    %8740 = vmatpush.xpose.msra.mxu0 %v8739
    %v8741 = vand.u32 %v594, 4294901760
    %8742 = vmatmul.f32.gmra.mxu0 %v8741
    %v8743 = vpop.f32.mrf.mxu0
    %v8744 = vadd.f32 %v8675, %v8743
    %8745 = vdwg.mxu0
    %v8746 = vand.u32 %v442, 4294901760
    %8747 = vmatpush.xpose.msra.mxu0 %v8746
    %v8748 = vand.u32 %v438, 4294901760
    %8749 = vmatpush.xpose.msra.mxu0 %v8748
    %v8750 = vand.u32 %v434, 4294901760
    %8751 = vmatpush.xpose.msra.mxu0 %v8750
    %v8752 = vand.u32 %v430, 4294901760
    %8753 = vmatpush.xpose.msra.mxu0 %v8752
    %v8754 = vand.u32 %v426, 4294901760
    %8755 = vmatpush.xpose.msra.mxu0 %v8754
    %v8756 = vand.u32 %v422, 4294901760
    %8757 = vmatpush.xpose.msra.mxu0 %v8756
    %v8758 = vand.u32 %v418, 4294901760
    %8759 = vmatpush.xpose.msra.mxu0 %v8758
    %v8760 = vand.u32 %v414, 4294901760
    %8761 = vmatpush.xpose.msra.mxu0 %v8760
    %v8762 = vand.u32 %v410, 4294901760
    %8763 = vmatpush.xpose.msra.mxu0 %v8762
    %v8764 = vand.u32 %v406, 4294901760
    %8765 = vmatpush.xpose.msra.mxu0 %v8764
    %v8766 = vand.u32 %v402, 4294901760
    %8767 = vmatpush.xpose.msra.mxu0 %v8766
    %v8768 = vand.u32 %v398, 4294901760
    %8769 = vmatpush.xpose.msra.mxu0 %v8768
    %v8770 = vand.u32 %v394, 4294901760
    %8771 = vmatpush.xpose.msra.mxu0 %v8770
    %v8772 = vand.u32 %v390, 4294901760
    %8773 = vmatpush.xpose.msra.mxu0 %v8772
    %v8774 = vand.u32 %v386, 4294901760
    %8775 = vmatpush.xpose.msra.mxu0 %v8774
    %v8776 = vand.u32 %v382, 4294901760
    %8777 = vmatpush.xpose.msra.mxu0 %v8776
    %v8778 = vand.u32 %v594, 4294901760
    %8779 = vmatmul.f32.gmra.mxu0 %v8778
    %v8780 = vpop.f32.mrf.mxu0
    %v8781 = vadd.f32 %v8744, %v8780
    %8782 = vdwg.mxu0
    %v8783 = vand.u32 %v503, 4294901760
    %8784 = vmatpush.xpose.msra.mxu0 %v8783
    %v8785 = vand.u32 %v499, 4294901760
    %8786 = vmatpush.xpose.msra.mxu0 %v8785
    %v8787 = vand.u32 %v495, 4294901760
    %8788 = vmatpush.xpose.msra.mxu0 %v8787
    %v8789 = vand.u32 %v491, 4294901760
    %8790 = vmatpush.xpose.msra.mxu0 %v8789
    %v8791 = vand.u32 %v487, 4294901760
    %8792 = vmatpush.xpose.msra.mxu0 %v8791
    %v8793 = vand.u32 %v483, 4294901760
    %8794 = vmatpush.xpose.msra.mxu0 %v8793
    %v8795 = vand.u32 %v479, 4294901760
    %8796 = vmatpush.xpose.msra.mxu0 %v8795
    %v8797 = vand.u32 %v475, 4294901760
    %8798 = vmatpush.xpose.msra.mxu0 %v8797
    %v8799 = vand.u32 %v471, 4294901760
    %8800 = vmatpush.xpose.msra.mxu0 %v8799
    %v8801 = vand.u32 %v467, 4294901760
    %8802 = vmatpush.xpose.msra.mxu0 %v8801
    %v8803 = vand.u32 %v463, 4294901760
    %8804 = vmatpush.xpose.msra.mxu0 %v8803
    %v8805 = vand.u32 %v459, 4294901760
    %8806 = vmatpush.xpose.msra.mxu0 %v8805
    %v8807 = vand.u32 %v455, 4294901760
    %8808 = vmatpush.xpose.msra.mxu0 %v8807
    %v8809 = vand.u32 %v451, 4294901760
    %8810 = vmatpush.xpose.msra.mxu0 %v8809
    %v8811 = vand.u32 %v447, 4294901760
    %8812 = vmatpush.xpose.msra.mxu0 %v8811
    %v8813 = vand.u32 %v443, 4294901760
    %8814 = vmatpush.xpose.msra.mxu0 %v8813
    %v8815 = vand.u32 %v591, 4294901760
    %v8816 = vsub.f32 %v591, %v8815
    %v8817 = vand.u32 %v8816, 4294901760
    %v8818 = vsub.f32 %v8816, %v8817
    %v8819 = vand.u32 %v8818, 4294901760
    %8820 = vmatmul.f32.gmra.mxu0 %v8819
    %v8821 = vpop.f32.mrf.mxu0
    %v8822 = vadd.f32 %v579, %v8821
    %8823 = vdwg.mxu0
    %v8824 = vand.u32 %v503, 4294901760
    %v8825 = vsub.f32 %v503, %v8824
    %v8826 = vand.u32 %v8825, 4294901760
    %v8827 = vsub.f32 %v8825, %v8826
    %v8828 = vand.u32 %v8827, 4294901760
    %8829 = vmatpush.xpose.msra.mxu0 %v8828
    %v8830 = vand.u32 %v499, 4294901760
    %v8831 = vsub.f32 %v499, %v8830
    %v8832 = vand.u32 %v8831, 4294901760
    %v8833 = vsub.f32 %v8831, %v8832
    %v8834 = vand.u32 %v8833, 4294901760
    %8835 = vmatpush.xpose.msra.mxu0 %v8834
    %v8836 = vand.u32 %v495, 4294901760
    %v8837 = vsub.f32 %v495, %v8836
    %v8838 = vand.u32 %v8837, 4294901760
    %v8839 = vsub.f32 %v8837, %v8838
    %v8840 = vand.u32 %v8839, 4294901760
    %8841 = vmatpush.xpose.msra.mxu0 %v8840
    %v8842 = vand.u32 %v491, 4294901760
    %v8843 = vsub.f32 %v491, %v8842
    %v8844 = vand.u32 %v8843, 4294901760
    %v8845 = vsub.f32 %v8843, %v8844
    %v8846 = vand.u32 %v8845, 4294901760
    %8847 = vmatpush.xpose.msra.mxu0 %v8846
    %v8848 = vand.u32 %v487, 4294901760
    %v8849 = vsub.f32 %v487, %v8848
    %v8850 = vand.u32 %v8849, 4294901760
    %v8851 = vsub.f32 %v8849, %v8850
    %v8852 = vand.u32 %v8851, 4294901760
    %8853 = vmatpush.xpose.msra.mxu0 %v8852
    %v8854 = vand.u32 %v483, 4294901760
    %v8855 = vsub.f32 %v483, %v8854
    %v8856 = vand.u32 %v8855, 4294901760
    %v8857 = vsub.f32 %v8855, %v8856
    %v8858 = vand.u32 %v8857, 4294901760
    %8859 = vmatpush.xpose.msra.mxu0 %v8858
    %v8860 = vand.u32 %v479, 4294901760
    %v8861 = vsub.f32 %v479, %v8860
    %v8862 = vand.u32 %v8861, 4294901760
    %v8863 = vsub.f32 %v8861, %v8862
    %v8864 = vand.u32 %v8863, 4294901760
    %8865 = vmatpush.xpose.msra.mxu0 %v8864
    %v8866 = vand.u32 %v475, 4294901760
    %v8867 = vsub.f32 %v475, %v8866
    %v8868 = vand.u32 %v8867, 4294901760
    %v8869 = vsub.f32 %v8867, %v8868
    %v8870 = vand.u32 %v8869, 4294901760
    %8871 = vmatpush.xpose.msra.mxu0 %v8870
    %v8872 = vand.u32 %v471, 4294901760
    %v8873 = vsub.f32 %v471, %v8872
    %v8874 = vand.u32 %v8873, 4294901760
    %v8875 = vsub.f32 %v8873, %v8874
    %v8876 = vand.u32 %v8875, 4294901760
    %8877 = vmatpush.xpose.msra.mxu0 %v8876
    %v8878 = vand.u32 %v467, 4294901760
    %v8879 = vsub.f32 %v467, %v8878
    %v8880 = vand.u32 %v8879, 4294901760
    %v8881 = vsub.f32 %v8879, %v8880
    %v8882 = vand.u32 %v8881, 4294901760
    %8883 = vmatpush.xpose.msra.mxu0 %v8882
    %v8884 = vand.u32 %v463, 4294901760
    %v8885 = vsub.f32 %v463, %v8884
    %v8886 = vand.u32 %v8885, 4294901760
    %v8887 = vsub.f32 %v8885, %v8886
    %v8888 = vand.u32 %v8887, 4294901760
    %8889 = vmatpush.xpose.msra.mxu0 %v8888
    %v8890 = vand.u32 %v459, 4294901760
    %v8891 = vsub.f32 %v459, %v8890
    %v8892 = vand.u32 %v8891, 4294901760
    %v8893 = vsub.f32 %v8891, %v8892
    %v8894 = vand.u32 %v8893, 4294901760
    %8895 = vmatpush.xpose.msra.mxu0 %v8894
    %v8896 = vand.u32 %v455, 4294901760
    %v8897 = vsub.f32 %v455, %v8896
    %v8898 = vand.u32 %v8897, 4294901760
    %v8899 = vsub.f32 %v8897, %v8898
    %v8900 = vand.u32 %v8899, 4294901760
    %8901 = vmatpush.xpose.msra.mxu0 %v8900
    %v8902 = vand.u32 %v451, 4294901760
    %v8903 = vsub.f32 %v451, %v8902
    %v8904 = vand.u32 %v8903, 4294901760
    %v8905 = vsub.f32 %v8903, %v8904
    %v8906 = vand.u32 %v8905, 4294901760
    %8907 = vmatpush.xpose.msra.mxu0 %v8906
    %v8908 = vand.u32 %v447, 4294901760
    %v8909 = vsub.f32 %v447, %v8908
    %v8910 = vand.u32 %v8909, 4294901760
    %v8911 = vsub.f32 %v8909, %v8910
    %v8912 = vand.u32 %v8911, 4294901760
    %8913 = vmatpush.xpose.msra.mxu0 %v8912
    %v8914 = vand.u32 %v443, 4294901760
    %v8915 = vsub.f32 %v443, %v8914
    %v8916 = vand.u32 %v8915, 4294901760
    %v8917 = vsub.f32 %v8915, %v8916
    %v8918 = vand.u32 %v8917, 4294901760
    %8919 = vmatpush.xpose.msra.mxu0 %v8918
    %v8920 = vand.u32 %v591, 4294901760
    %8921 = vmatmul.f32.gmra.mxu0 %v8920
    %v8922 = vpop.f32.mrf.mxu0
    %v8923 = vadd.f32 %v8822, %v8922
    %8924 = vdwg.mxu0
    %v8925 = vand.u32 %v503, 4294901760
    %v8926 = vsub.f32 %v503, %v8925
    %8927 = vmatpush.xpose.msra.mxu0 %v8926
    %v8928 = vand.u32 %v499, 4294901760
    %v8929 = vsub.f32 %v499, %v8928
    %8930 = vmatpush.xpose.msra.mxu0 %v8929
    %v8931 = vand.u32 %v495, 4294901760
    %v8932 = vsub.f32 %v495, %v8931
    %8933 = vmatpush.xpose.msra.mxu0 %v8932
    %v8934 = vand.u32 %v491, 4294901760
    %v8935 = vsub.f32 %v491, %v8934
    %8936 = vmatpush.xpose.msra.mxu0 %v8935
    %v8937 = vand.u32 %v487, 4294901760
    %v8938 = vsub.f32 %v487, %v8937
    %8939 = vmatpush.xpose.msra.mxu0 %v8938
    %v8940 = vand.u32 %v483, 4294901760
    %v8941 = vsub.f32 %v483, %v8940
    %8942 = vmatpush.xpose.msra.mxu0 %v8941
    %v8943 = vand.u32 %v479, 4294901760
    %v8944 = vsub.f32 %v479, %v8943
    %8945 = vmatpush.xpose.msra.mxu0 %v8944
    %v8946 = vand.u32 %v475, 4294901760
    %v8947 = vsub.f32 %v475, %v8946
    %8948 = vmatpush.xpose.msra.mxu0 %v8947
    %v8949 = vand.u32 %v471, 4294901760
    %v8950 = vsub.f32 %v471, %v8949
    %8951 = vmatpush.xpose.msra.mxu0 %v8950
    %v8952 = vand.u32 %v467, 4294901760
    %v8953 = vsub.f32 %v467, %v8952
    %8954 = vmatpush.xpose.msra.mxu0 %v8953
    %v8955 = vand.u32 %v463, 4294901760
    %v8956 = vsub.f32 %v463, %v8955
    %8957 = vmatpush.xpose.msra.mxu0 %v8956
    %v8958 = vand.u32 %v459, 4294901760
    %v8959 = vsub.f32 %v459, %v8958
    %8960 = vmatpush.xpose.msra.mxu0 %v8959
    %v8961 = vand.u32 %v455, 4294901760
    %v8962 = vsub.f32 %v455, %v8961
    %8963 = vmatpush.xpose.msra.mxu0 %v8962
    %v8964 = vand.u32 %v451, 4294901760
    %v8965 = vsub.f32 %v451, %v8964
    %8966 = vmatpush.xpose.msra.mxu0 %v8965
    %v8967 = vand.u32 %v447, 4294901760
    %v8968 = vsub.f32 %v447, %v8967
    %8969 = vmatpush.xpose.msra.mxu0 %v8968
    %v8970 = vand.u32 %v443, 4294901760
    %v8971 = vsub.f32 %v443, %v8970
    %8972 = vmatpush.xpose.msra.mxu0 %v8971
    %v8973 = vand.u32 %v591, 4294901760
    %v8974 = vsub.f32 %v591, %v8973
    %8975 = vmatmul.f32.gmra.mxu0 %v8974
    %v8976 = vpop.f32.mrf.mxu0
    %v8977 = vadd.f32 %v8923, %v8976
    %8978 = vdwg.mxu0
    %v8979 = vand.u32 %v503, 4294901760
    %8980 = vmatpush.xpose.msra.mxu0 %v8979
    %v8981 = vand.u32 %v499, 4294901760
    %8982 = vmatpush.xpose.msra.mxu0 %v8981
    %v8983 = vand.u32 %v495, 4294901760
    %8984 = vmatpush.xpose.msra.mxu0 %v8983
    %v8985 = vand.u32 %v491, 4294901760
    %8986 = vmatpush.xpose.msra.mxu0 %v8985
    %v8987 = vand.u32 %v487, 4294901760
    %8988 = vmatpush.xpose.msra.mxu0 %v8987
    %v8989 = vand.u32 %v483, 4294901760
    %8990 = vmatpush.xpose.msra.mxu0 %v8989
    %v8991 = vand.u32 %v479, 4294901760
    %8992 = vmatpush.xpose.msra.mxu0 %v8991
    %v8993 = vand.u32 %v475, 4294901760
    %8994 = vmatpush.xpose.msra.mxu0 %v8993
    %v8995 = vand.u32 %v471, 4294901760
    %8996 = vmatpush.xpose.msra.mxu0 %v8995
    %v8997 = vand.u32 %v467, 4294901760
    %8998 = vmatpush.xpose.msra.mxu0 %v8997
    %v8999 = vand.u32 %v463, 4294901760
    %9000 = vmatpush.xpose.msra.mxu0 %v8999
    %v9001 = vand.u32 %v459, 4294901760
    %9002 = vmatpush.xpose.msra.mxu0 %v9001
    %v9003 = vand.u32 %v455, 4294901760
    %9004 = vmatpush.xpose.msra.mxu0 %v9003
    %v9005 = vand.u32 %v451, 4294901760
    %9006 = vmatpush.xpose.msra.mxu0 %v9005
    %v9007 = vand.u32 %v447, 4294901760
    %9008 = vmatpush.xpose.msra.mxu0 %v9007
    %v9009 = vand.u32 %v443, 4294901760
    %9010 = vmatpush.xpose.msra.mxu0 %v9009
    %v9011 = vand.u32 %v591, 4294901760
    %v9012 = vsub.f32 %v591, %v9011
    %v9013 = vand.u32 %v9012, 4294901760
    %9014 = vmatmul.f32.gmra.mxu0 %v9013
    %v9015 = vpop.f32.mrf.mxu0
    %v9016 = vadd.f32 %v8977, %v9015
    %9017 = vdwg.mxu0
    %v9018 = vand.u32 %v503, 4294901760
    %v9019 = vsub.f32 %v503, %v9018
    %v9020 = vand.u32 %v9019, 4294901760
    %9021 = vmatpush.xpose.msra.mxu0 %v9020
    %v9022 = vand.u32 %v499, 4294901760
    %v9023 = vsub.f32 %v499, %v9022
    %v9024 = vand.u32 %v9023, 4294901760
    %9025 = vmatpush.xpose.msra.mxu0 %v9024
    %v9026 = vand.u32 %v495, 4294901760
    %v9027 = vsub.f32 %v495, %v9026
    %v9028 = vand.u32 %v9027, 4294901760
    %9029 = vmatpush.xpose.msra.mxu0 %v9028
    %v9030 = vand.u32 %v491, 4294901760
    %v9031 = vsub.f32 %v491, %v9030
    %v9032 = vand.u32 %v9031, 4294901760
    %9033 = vmatpush.xpose.msra.mxu0 %v9032
    %v9034 = vand.u32 %v487, 4294901760
    %v9035 = vsub.f32 %v487, %v9034
    %v9036 = vand.u32 %v9035, 4294901760
    %9037 = vmatpush.xpose.msra.mxu0 %v9036
    %v9038 = vand.u32 %v483, 4294901760
    %v9039 = vsub.f32 %v483, %v9038
    %v9040 = vand.u32 %v9039, 4294901760
    %9041 = vmatpush.xpose.msra.mxu0 %v9040
    %v9042 = vand.u32 %v479, 4294901760
    %v9043 = vsub.f32 %v479, %v9042
    %v9044 = vand.u32 %v9043, 4294901760
    %9045 = vmatpush.xpose.msra.mxu0 %v9044
    %v9046 = vand.u32 %v475, 4294901760
    %v9047 = vsub.f32 %v475, %v9046
    %v9048 = vand.u32 %v9047, 4294901760
    %9049 = vmatpush.xpose.msra.mxu0 %v9048
    %v9050 = vand.u32 %v471, 4294901760
    %v9051 = vsub.f32 %v471, %v9050
    %v9052 = vand.u32 %v9051, 4294901760
    %9053 = vmatpush.xpose.msra.mxu0 %v9052
    %v9054 = vand.u32 %v467, 4294901760
    %v9055 = vsub.f32 %v467, %v9054
    %v9056 = vand.u32 %v9055, 4294901760
    %9057 = vmatpush.xpose.msra.mxu0 %v9056
    %v9058 = vand.u32 %v463, 4294901760
    %v9059 = vsub.f32 %v463, %v9058
    %v9060 = vand.u32 %v9059, 4294901760
    %9061 = vmatpush.xpose.msra.mxu0 %v9060
    %v9062 = vand.u32 %v459, 4294901760
    %v9063 = vsub.f32 %v459, %v9062
    %v9064 = vand.u32 %v9063, 4294901760
    %9065 = vmatpush.xpose.msra.mxu0 %v9064
    %v9066 = vand.u32 %v455, 4294901760
    %v9067 = vsub.f32 %v455, %v9066
    %v9068 = vand.u32 %v9067, 4294901760
    %9069 = vmatpush.xpose.msra.mxu0 %v9068
    %v9070 = vand.u32 %v451, 4294901760
    %v9071 = vsub.f32 %v451, %v9070
    %v9072 = vand.u32 %v9071, 4294901760
    %9073 = vmatpush.xpose.msra.mxu0 %v9072
    %v9074 = vand.u32 %v447, 4294901760
    %v9075 = vsub.f32 %v447, %v9074
    %v9076 = vand.u32 %v9075, 4294901760
    %9077 = vmatpush.xpose.msra.mxu0 %v9076
    %v9078 = vand.u32 %v443, 4294901760
    %v9079 = vsub.f32 %v443, %v9078
    %v9080 = vand.u32 %v9079, 4294901760
    %9081 = vmatpush.xpose.msra.mxu0 %v9080
    %v9082 = vand.u32 %v591, 4294901760
    %9083 = vmatmul.f32.gmra.mxu0 %v9082
    %v9084 = vpop.f32.mrf.mxu0
    %v9085 = vadd.f32 %v9016, %v9084
    %9086 = vdwg.mxu0
    %v9087 = vand.u32 %v503, 4294901760
    %9088 = vmatpush.xpose.msra.mxu0 %v9087
    %v9089 = vand.u32 %v499, 4294901760
    %9090 = vmatpush.xpose.msra.mxu0 %v9089
    %v9091 = vand.u32 %v495, 4294901760
    %9092 = vmatpush.xpose.msra.mxu0 %v9091
    %v9093 = vand.u32 %v491, 4294901760
    %9094 = vmatpush.xpose.msra.mxu0 %v9093
    %v9095 = vand.u32 %v487, 4294901760
    %9096 = vmatpush.xpose.msra.mxu0 %v9095
    %v9097 = vand.u32 %v483, 4294901760
    %9098 = vmatpush.xpose.msra.mxu0 %v9097
    %v9099 = vand.u32 %v479, 4294901760
    %9100 = vmatpush.xpose.msra.mxu0 %v9099
    %v9101 = vand.u32 %v475, 4294901760
    %9102 = vmatpush.xpose.msra.mxu0 %v9101
    %v9103 = vand.u32 %v471, 4294901760
    %9104 = vmatpush.xpose.msra.mxu0 %v9103
    %v9105 = vand.u32 %v467, 4294901760
    %9106 = vmatpush.xpose.msra.mxu0 %v9105
    %v9107 = vand.u32 %v463, 4294901760
    %9108 = vmatpush.xpose.msra.mxu0 %v9107
    %v9109 = vand.u32 %v459, 4294901760
    %9110 = vmatpush.xpose.msra.mxu0 %v9109
    %v9111 = vand.u32 %v455, 4294901760
    %9112 = vmatpush.xpose.msra.mxu0 %v9111
    %v9113 = vand.u32 %v451, 4294901760
    %9114 = vmatpush.xpose.msra.mxu0 %v9113
    %v9115 = vand.u32 %v447, 4294901760
    %9116 = vmatpush.xpose.msra.mxu0 %v9115
    %v9117 = vand.u32 %v443, 4294901760
    %9118 = vmatpush.xpose.msra.mxu0 %v9117
    %v9119 = vand.u32 %v591, 4294901760
    %9120 = vmatmul.f32.gmra.mxu0 %v9119
    %v9121 = vpop.f32.mrf.mxu0
    %v9122 = vadd.f32 %v9085, %v9121
    %9123 = vdwg.mxu0
    %v9124 = vand.u32 %v504, 4294901760
    %9125 = vmatpush.xpose.msra.mxu0 %v9124
    %v9126 = vand.u32 %v500, 4294901760
    %9127 = vmatpush.xpose.msra.mxu0 %v9126
    %v9128 = vand.u32 %v496, 4294901760
    %9129 = vmatpush.xpose.msra.mxu0 %v9128
    %v9130 = vand.u32 %v492, 4294901760
    %9131 = vmatpush.xpose.msra.mxu0 %v9130
    %v9132 = vand.u32 %v488, 4294901760
    %9133 = vmatpush.xpose.msra.mxu0 %v9132
    %v9134 = vand.u32 %v484, 4294901760
    %9135 = vmatpush.xpose.msra.mxu0 %v9134
    %v9136 = vand.u32 %v480, 4294901760
    %9137 = vmatpush.xpose.msra.mxu0 %v9136
    %v9138 = vand.u32 %v476, 4294901760
    %9139 = vmatpush.xpose.msra.mxu0 %v9138
    %v9140 = vand.u32 %v472, 4294901760
    %9141 = vmatpush.xpose.msra.mxu0 %v9140
    %v9142 = vand.u32 %v468, 4294901760
    %9143 = vmatpush.xpose.msra.mxu0 %v9142
    %v9144 = vand.u32 %v464, 4294901760
    %9145 = vmatpush.xpose.msra.mxu0 %v9144
    %v9146 = vand.u32 %v460, 4294901760
    %9147 = vmatpush.xpose.msra.mxu0 %v9146
    %v9148 = vand.u32 %v456, 4294901760
    %9149 = vmatpush.xpose.msra.mxu0 %v9148
    %v9150 = vand.u32 %v452, 4294901760
    %9151 = vmatpush.xpose.msra.mxu0 %v9150
    %v9152 = vand.u32 %v448, 4294901760
    %9153 = vmatpush.xpose.msra.mxu0 %v9152
    %v9154 = vand.u32 %v444, 4294901760
    %9155 = vmatpush.xpose.msra.mxu0 %v9154
    %v9156 = vand.u32 %v592, 4294901760
    %v9157 = vsub.f32 %v592, %v9156
    %v9158 = vand.u32 %v9157, 4294901760
    %v9159 = vsub.f32 %v9157, %v9158
    %v9160 = vand.u32 %v9159, 4294901760
    %9161 = vmatmul.f32.gmra.mxu0 %v9160
    %v9162 = vpop.f32.mrf.mxu0
    %v9163 = vadd.f32 %v9122, %v9162
    %9164 = vdwg.mxu0
    %v9165 = vand.u32 %v504, 4294901760
    %v9166 = vsub.f32 %v504, %v9165
    %v9167 = vand.u32 %v9166, 4294901760
    %v9168 = vsub.f32 %v9166, %v9167
    %v9169 = vand.u32 %v9168, 4294901760
    %9170 = vmatpush.xpose.msra.mxu0 %v9169
    %v9171 = vand.u32 %v500, 4294901760
    %v9172 = vsub.f32 %v500, %v9171
    %v9173 = vand.u32 %v9172, 4294901760
    %v9174 = vsub.f32 %v9172, %v9173
    %v9175 = vand.u32 %v9174, 4294901760
    %9176 = vmatpush.xpose.msra.mxu0 %v9175
    %v9177 = vand.u32 %v496, 4294901760
    %v9178 = vsub.f32 %v496, %v9177
    %v9179 = vand.u32 %v9178, 4294901760
    %v9180 = vsub.f32 %v9178, %v9179
    %v9181 = vand.u32 %v9180, 4294901760
    %9182 = vmatpush.xpose.msra.mxu0 %v9181
    %v9183 = vand.u32 %v492, 4294901760
    %v9184 = vsub.f32 %v492, %v9183
    %v9185 = vand.u32 %v9184, 4294901760
    %v9186 = vsub.f32 %v9184, %v9185
    %v9187 = vand.u32 %v9186, 4294901760
    %9188 = vmatpush.xpose.msra.mxu0 %v9187
    %v9189 = vand.u32 %v488, 4294901760
    %v9190 = vsub.f32 %v488, %v9189
    %v9191 = vand.u32 %v9190, 4294901760
    %v9192 = vsub.f32 %v9190, %v9191
    %v9193 = vand.u32 %v9192, 4294901760
    %9194 = vmatpush.xpose.msra.mxu0 %v9193
    %v9195 = vand.u32 %v484, 4294901760
    %v9196 = vsub.f32 %v484, %v9195
    %v9197 = vand.u32 %v9196, 4294901760
    %v9198 = vsub.f32 %v9196, %v9197
    %v9199 = vand.u32 %v9198, 4294901760
    %9200 = vmatpush.xpose.msra.mxu0 %v9199
    %v9201 = vand.u32 %v480, 4294901760
    %v9202 = vsub.f32 %v480, %v9201
    %v9203 = vand.u32 %v9202, 4294901760
    %v9204 = vsub.f32 %v9202, %v9203
    %v9205 = vand.u32 %v9204, 4294901760
    %9206 = vmatpush.xpose.msra.mxu0 %v9205
    %v9207 = vand.u32 %v476, 4294901760
    %v9208 = vsub.f32 %v476, %v9207
    %v9209 = vand.u32 %v9208, 4294901760
    %v9210 = vsub.f32 %v9208, %v9209
    %v9211 = vand.u32 %v9210, 4294901760
    %9212 = vmatpush.xpose.msra.mxu0 %v9211
    %v9213 = vand.u32 %v472, 4294901760
    %v9214 = vsub.f32 %v472, %v9213
    %v9215 = vand.u32 %v9214, 4294901760
    %v9216 = vsub.f32 %v9214, %v9215
    %v9217 = vand.u32 %v9216, 4294901760
    %9218 = vmatpush.xpose.msra.mxu0 %v9217
    %v9219 = vand.u32 %v468, 4294901760
    %v9220 = vsub.f32 %v468, %v9219
    %v9221 = vand.u32 %v9220, 4294901760
    %v9222 = vsub.f32 %v9220, %v9221
    %v9223 = vand.u32 %v9222, 4294901760
    %9224 = vmatpush.xpose.msra.mxu0 %v9223
    %v9225 = vand.u32 %v464, 4294901760
    %v9226 = vsub.f32 %v464, %v9225
    %v9227 = vand.u32 %v9226, 4294901760
    %v9228 = vsub.f32 %v9226, %v9227
    %v9229 = vand.u32 %v9228, 4294901760
    %9230 = vmatpush.xpose.msra.mxu0 %v9229
    %v9231 = vand.u32 %v460, 4294901760
    %v9232 = vsub.f32 %v460, %v9231
    %v9233 = vand.u32 %v9232, 4294901760
    %v9234 = vsub.f32 %v9232, %v9233
    %v9235 = vand.u32 %v9234, 4294901760
    %9236 = vmatpush.xpose.msra.mxu0 %v9235
    %v9237 = vand.u32 %v456, 4294901760
    %v9238 = vsub.f32 %v456, %v9237
    %v9239 = vand.u32 %v9238, 4294901760
    %v9240 = vsub.f32 %v9238, %v9239
    %v9241 = vand.u32 %v9240, 4294901760
    %9242 = vmatpush.xpose.msra.mxu0 %v9241
    %v9243 = vand.u32 %v452, 4294901760
    %v9244 = vsub.f32 %v452, %v9243
    %v9245 = vand.u32 %v9244, 4294901760
    %v9246 = vsub.f32 %v9244, %v9245
    %v9247 = vand.u32 %v9246, 4294901760
    %9248 = vmatpush.xpose.msra.mxu0 %v9247
    %v9249 = vand.u32 %v448, 4294901760
    %v9250 = vsub.f32 %v448, %v9249
    %v9251 = vand.u32 %v9250, 4294901760
    %v9252 = vsub.f32 %v9250, %v9251
    %v9253 = vand.u32 %v9252, 4294901760
    %9254 = vmatpush.xpose.msra.mxu0 %v9253
    %v9255 = vand.u32 %v444, 4294901760
    %v9256 = vsub.f32 %v444, %v9255
    %v9257 = vand.u32 %v9256, 4294901760
    %v9258 = vsub.f32 %v9256, %v9257
    %v9259 = vand.u32 %v9258, 4294901760
    %9260 = vmatpush.xpose.msra.mxu0 %v9259
    %v9261 = vand.u32 %v592, 4294901760
    %9262 = vmatmul.f32.gmra.mxu0 %v9261
    %v9263 = vpop.f32.mrf.mxu0
    %v9264 = vadd.f32 %v9163, %v9263
    %9265 = vdwg.mxu0
    %v9266 = vand.u32 %v504, 4294901760
    %v9267 = vsub.f32 %v504, %v9266
    %9268 = vmatpush.xpose.msra.mxu0 %v9267
    %v9269 = vand.u32 %v500, 4294901760
    %v9270 = vsub.f32 %v500, %v9269
    %9271 = vmatpush.xpose.msra.mxu0 %v9270
    %v9272 = vand.u32 %v496, 4294901760
    %v9273 = vsub.f32 %v496, %v9272
    %9274 = vmatpush.xpose.msra.mxu0 %v9273
    %v9275 = vand.u32 %v492, 4294901760
    %v9276 = vsub.f32 %v492, %v9275
    %9277 = vmatpush.xpose.msra.mxu0 %v9276
    %v9278 = vand.u32 %v488, 4294901760
    %v9279 = vsub.f32 %v488, %v9278
    %9280 = vmatpush.xpose.msra.mxu0 %v9279
    %v9281 = vand.u32 %v484, 4294901760
    %v9282 = vsub.f32 %v484, %v9281
    %9283 = vmatpush.xpose.msra.mxu0 %v9282
    %v9284 = vand.u32 %v480, 4294901760
    %v9285 = vsub.f32 %v480, %v9284
    %9286 = vmatpush.xpose.msra.mxu0 %v9285
    %v9287 = vand.u32 %v476, 4294901760
    %v9288 = vsub.f32 %v476, %v9287
    %9289 = vmatpush.xpose.msra.mxu0 %v9288
    %v9290 = vand.u32 %v472, 4294901760
    %v9291 = vsub.f32 %v472, %v9290
    %9292 = vmatpush.xpose.msra.mxu0 %v9291
    %v9293 = vand.u32 %v468, 4294901760
    %v9294 = vsub.f32 %v468, %v9293
    %9295 = vmatpush.xpose.msra.mxu0 %v9294
    %v9296 = vand.u32 %v464, 4294901760
    %v9297 = vsub.f32 %v464, %v9296
    %9298 = vmatpush.xpose.msra.mxu0 %v9297
    %v9299 = vand.u32 %v460, 4294901760
    %v9300 = vsub.f32 %v460, %v9299
    %9301 = vmatpush.xpose.msra.mxu0 %v9300
    %v9302 = vand.u32 %v456, 4294901760
    %v9303 = vsub.f32 %v456, %v9302
    %9304 = vmatpush.xpose.msra.mxu0 %v9303
    %v9305 = vand.u32 %v452, 4294901760
    %v9306 = vsub.f32 %v452, %v9305
    %9307 = vmatpush.xpose.msra.mxu0 %v9306
    %v9308 = vand.u32 %v448, 4294901760
    %v9309 = vsub.f32 %v448, %v9308
    %9310 = vmatpush.xpose.msra.mxu0 %v9309
    %v9311 = vand.u32 %v444, 4294901760
    %v9312 = vsub.f32 %v444, %v9311
    %9313 = vmatpush.xpose.msra.mxu0 %v9312
    %v9314 = vand.u32 %v592, 4294901760
    %v9315 = vsub.f32 %v592, %v9314
    %9316 = vmatmul.f32.gmra.mxu0 %v9315
    %v9317 = vpop.f32.mrf.mxu0
    %v9318 = vadd.f32 %v9264, %v9317
    %9319 = vdwg.mxu0
    %v9320 = vand.u32 %v504, 4294901760
    %9321 = vmatpush.xpose.msra.mxu0 %v9320
    %v9322 = vand.u32 %v500, 4294901760
    %9323 = vmatpush.xpose.msra.mxu0 %v9322
    %v9324 = vand.u32 %v496, 4294901760
    %9325 = vmatpush.xpose.msra.mxu0 %v9324
    %v9326 = vand.u32 %v492, 4294901760
    %9327 = vmatpush.xpose.msra.mxu0 %v9326
    %v9328 = vand.u32 %v488, 4294901760
    %9329 = vmatpush.xpose.msra.mxu0 %v9328
    %v9330 = vand.u32 %v484, 4294901760
    %9331 = vmatpush.xpose.msra.mxu0 %v9330
    %v9332 = vand.u32 %v480, 4294901760
    %9333 = vmatpush.xpose.msra.mxu0 %v9332
    %v9334 = vand.u32 %v476, 4294901760
    %9335 = vmatpush.xpose.msra.mxu0 %v9334
    %v9336 = vand.u32 %v472, 4294901760
    %9337 = vmatpush.xpose.msra.mxu0 %v9336
    %v9338 = vand.u32 %v468, 4294901760
    %9339 = vmatpush.xpose.msra.mxu0 %v9338
    %v9340 = vand.u32 %v464, 4294901760
    %9341 = vmatpush.xpose.msra.mxu0 %v9340
    %v9342 = vand.u32 %v460, 4294901760
    %9343 = vmatpush.xpose.msra.mxu0 %v9342
    %v9344 = vand.u32 %v456, 4294901760
    %9345 = vmatpush.xpose.msra.mxu0 %v9344
    %v9346 = vand.u32 %v452, 4294901760
    %9347 = vmatpush.xpose.msra.mxu0 %v9346
    %v9348 = vand.u32 %v448, 4294901760
    %9349 = vmatpush.xpose.msra.mxu0 %v9348
    %v9350 = vand.u32 %v444, 4294901760
    %9351 = vmatpush.xpose.msra.mxu0 %v9350
    %v9352 = vand.u32 %v592, 4294901760
    %v9353 = vsub.f32 %v592, %v9352
    %v9354 = vand.u32 %v9353, 4294901760
    %9355 = vmatmul.f32.gmra.mxu0 %v9354
    %v9356 = vpop.f32.mrf.mxu0
    %v9357 = vadd.f32 %v9318, %v9356
    %9358 = vdwg.mxu0
    %v9359 = vand.u32 %v504, 4294901760
    %v9360 = vsub.f32 %v504, %v9359
    %v9361 = vand.u32 %v9360, 4294901760
    %9362 = vmatpush.xpose.msra.mxu0 %v9361
    %v9363 = vand.u32 %v500, 4294901760
    %v9364 = vsub.f32 %v500, %v9363
    %v9365 = vand.u32 %v9364, 4294901760
    %9366 = vmatpush.xpose.msra.mxu0 %v9365
    %v9367 = vand.u32 %v496, 4294901760
    %v9368 = vsub.f32 %v496, %v9367
    %v9369 = vand.u32 %v9368, 4294901760
    %9370 = vmatpush.xpose.msra.mxu0 %v9369
    %v9371 = vand.u32 %v492, 4294901760
    %v9372 = vsub.f32 %v492, %v9371
    %v9373 = vand.u32 %v9372, 4294901760
    %9374 = vmatpush.xpose.msra.mxu0 %v9373
    %v9375 = vand.u32 %v488, 4294901760
    %v9376 = vsub.f32 %v488, %v9375
    %v9377 = vand.u32 %v9376, 4294901760
    %9378 = vmatpush.xpose.msra.mxu0 %v9377
    %v9379 = vand.u32 %v484, 4294901760
    %v9380 = vsub.f32 %v484, %v9379
    %v9381 = vand.u32 %v9380, 4294901760
    %9382 = vmatpush.xpose.msra.mxu0 %v9381
    %v9383 = vand.u32 %v480, 4294901760
    %v9384 = vsub.f32 %v480, %v9383
    %v9385 = vand.u32 %v9384, 4294901760
    %9386 = vmatpush.xpose.msra.mxu0 %v9385
    %v9387 = vand.u32 %v476, 4294901760
    %v9388 = vsub.f32 %v476, %v9387
    %v9389 = vand.u32 %v9388, 4294901760
    %9390 = vmatpush.xpose.msra.mxu0 %v9389
    %v9391 = vand.u32 %v472, 4294901760
    %v9392 = vsub.f32 %v472, %v9391
    %v9393 = vand.u32 %v9392, 4294901760
    %9394 = vmatpush.xpose.msra.mxu0 %v9393
    %v9395 = vand.u32 %v468, 4294901760
    %v9396 = vsub.f32 %v468, %v9395
    %v9397 = vand.u32 %v9396, 4294901760
    %9398 = vmatpush.xpose.msra.mxu0 %v9397
    %v9399 = vand.u32 %v464, 4294901760
    %v9400 = vsub.f32 %v464, %v9399
    %v9401 = vand.u32 %v9400, 4294901760
    %9402 = vmatpush.xpose.msra.mxu0 %v9401
    %v9403 = vand.u32 %v460, 4294901760
    %v9404 = vsub.f32 %v460, %v9403
    %v9405 = vand.u32 %v9404, 4294901760
    %9406 = vmatpush.xpose.msra.mxu0 %v9405
    %v9407 = vand.u32 %v456, 4294901760
    %v9408 = vsub.f32 %v456, %v9407
    %v9409 = vand.u32 %v9408, 4294901760
    %9410 = vmatpush.xpose.msra.mxu0 %v9409
    %v9411 = vand.u32 %v452, 4294901760
    %v9412 = vsub.f32 %v452, %v9411
    %v9413 = vand.u32 %v9412, 4294901760
    %9414 = vmatpush.xpose.msra.mxu0 %v9413
    %v9415 = vand.u32 %v448, 4294901760
    %v9416 = vsub.f32 %v448, %v9415
    %v9417 = vand.u32 %v9416, 4294901760
    %9418 = vmatpush.xpose.msra.mxu0 %v9417
    %v9419 = vand.u32 %v444, 4294901760
    %v9420 = vsub.f32 %v444, %v9419
    %v9421 = vand.u32 %v9420, 4294901760
    %9422 = vmatpush.xpose.msra.mxu0 %v9421
    %v9423 = vand.u32 %v592, 4294901760
    %9424 = vmatmul.f32.gmra.mxu0 %v9423
    %v9425 = vpop.f32.mrf.mxu0
    %v9426 = vadd.f32 %v9357, %v9425
    %9427 = vdwg.mxu0
    %v9428 = vand.u32 %v504, 4294901760
    %9429 = vmatpush.xpose.msra.mxu0 %v9428
    %v9430 = vand.u32 %v500, 4294901760
    %9431 = vmatpush.xpose.msra.mxu0 %v9430
    %v9432 = vand.u32 %v496, 4294901760
    %9433 = vmatpush.xpose.msra.mxu0 %v9432
    %v9434 = vand.u32 %v492, 4294901760
    %9435 = vmatpush.xpose.msra.mxu0 %v9434
    %v9436 = vand.u32 %v488, 4294901760
    %9437 = vmatpush.xpose.msra.mxu0 %v9436
    %v9438 = vand.u32 %v484, 4294901760
    %9439 = vmatpush.xpose.msra.mxu0 %v9438
    %v9440 = vand.u32 %v480, 4294901760
    %9441 = vmatpush.xpose.msra.mxu0 %v9440
    %v9442 = vand.u32 %v476, 4294901760
    %9443 = vmatpush.xpose.msra.mxu0 %v9442
    %v9444 = vand.u32 %v472, 4294901760
    %9445 = vmatpush.xpose.msra.mxu0 %v9444
    %v9446 = vand.u32 %v468, 4294901760
    %9447 = vmatpush.xpose.msra.mxu0 %v9446
    %v9448 = vand.u32 %v464, 4294901760
    %9449 = vmatpush.xpose.msra.mxu0 %v9448
    %v9450 = vand.u32 %v460, 4294901760
    %9451 = vmatpush.xpose.msra.mxu0 %v9450
    %v9452 = vand.u32 %v456, 4294901760
    %9453 = vmatpush.xpose.msra.mxu0 %v9452
    %v9454 = vand.u32 %v452, 4294901760
    %9455 = vmatpush.xpose.msra.mxu0 %v9454
    %v9456 = vand.u32 %v448, 4294901760
    %9457 = vmatpush.xpose.msra.mxu0 %v9456
    %v9458 = vand.u32 %v444, 4294901760
    %9459 = vmatpush.xpose.msra.mxu0 %v9458
    %v9460 = vand.u32 %v592, 4294901760
    %9461 = vmatmul.f32.gmra.mxu0 %v9460
    %v9462 = vpop.f32.mrf.mxu0
    %v9463 = vadd.f32 %v9426, %v9462
    %9464 = vdwg.mxu0
    %v9465 = vand.u32 %v505, 4294901760
    %9466 = vmatpush.xpose.msra.mxu0 %v9465
    %v9467 = vand.u32 %v501, 4294901760
    %9468 = vmatpush.xpose.msra.mxu0 %v9467
    %v9469 = vand.u32 %v497, 4294901760
    %9470 = vmatpush.xpose.msra.mxu0 %v9469
    %v9471 = vand.u32 %v493, 4294901760
    %9472 = vmatpush.xpose.msra.mxu0 %v9471
    %v9473 = vand.u32 %v489, 4294901760
    %9474 = vmatpush.xpose.msra.mxu0 %v9473
    %v9475 = vand.u32 %v485, 4294901760
    %9476 = vmatpush.xpose.msra.mxu0 %v9475
    %v9477 = vand.u32 %v481, 4294901760
    %9478 = vmatpush.xpose.msra.mxu0 %v9477
    %v9479 = vand.u32 %v477, 4294901760
    %9480 = vmatpush.xpose.msra.mxu0 %v9479
    %v9481 = vand.u32 %v473, 4294901760
    %9482 = vmatpush.xpose.msra.mxu0 %v9481
    %v9483 = vand.u32 %v469, 4294901760
    %9484 = vmatpush.xpose.msra.mxu0 %v9483
    %v9485 = vand.u32 %v465, 4294901760
    %9486 = vmatpush.xpose.msra.mxu0 %v9485
    %v9487 = vand.u32 %v461, 4294901760
    %9488 = vmatpush.xpose.msra.mxu0 %v9487
    %v9489 = vand.u32 %v457, 4294901760
    %9490 = vmatpush.xpose.msra.mxu0 %v9489
    %v9491 = vand.u32 %v453, 4294901760
    %9492 = vmatpush.xpose.msra.mxu0 %v9491
    %v9493 = vand.u32 %v449, 4294901760
    %9494 = vmatpush.xpose.msra.mxu0 %v9493
    %v9495 = vand.u32 %v445, 4294901760
    %9496 = vmatpush.xpose.msra.mxu0 %v9495
    %v9497 = vand.u32 %v593, 4294901760
    %v9498 = vsub.f32 %v593, %v9497
    %v9499 = vand.u32 %v9498, 4294901760
    %v9500 = vsub.f32 %v9498, %v9499
    %v9501 = vand.u32 %v9500, 4294901760
    %9502 = vmatmul.f32.gmra.mxu0 %v9501
    %v9503 = vpop.f32.mrf.mxu0
    %v9504 = vadd.f32 %v9463, %v9503
    %9505 = vdwg.mxu0
    %v9506 = vand.u32 %v505, 4294901760
    %v9507 = vsub.f32 %v505, %v9506
    %v9508 = vand.u32 %v9507, 4294901760
    %v9509 = vsub.f32 %v9507, %v9508
    %v9510 = vand.u32 %v9509, 4294901760
    %9511 = vmatpush.xpose.msra.mxu0 %v9510
    %v9512 = vand.u32 %v501, 4294901760
    %v9513 = vsub.f32 %v501, %v9512
    %v9514 = vand.u32 %v9513, 4294901760
    %v9515 = vsub.f32 %v9513, %v9514
    %v9516 = vand.u32 %v9515, 4294901760
    %9517 = vmatpush.xpose.msra.mxu0 %v9516
    %v9518 = vand.u32 %v497, 4294901760
    %v9519 = vsub.f32 %v497, %v9518
    %v9520 = vand.u32 %v9519, 4294901760
    %v9521 = vsub.f32 %v9519, %v9520
    %v9522 = vand.u32 %v9521, 4294901760
    %9523 = vmatpush.xpose.msra.mxu0 %v9522
    %v9524 = vand.u32 %v493, 4294901760
    %v9525 = vsub.f32 %v493, %v9524
    %v9526 = vand.u32 %v9525, 4294901760
    %v9527 = vsub.f32 %v9525, %v9526
    %v9528 = vand.u32 %v9527, 4294901760
    %9529 = vmatpush.xpose.msra.mxu0 %v9528
    %v9530 = vand.u32 %v489, 4294901760
    %v9531 = vsub.f32 %v489, %v9530
    %v9532 = vand.u32 %v9531, 4294901760
    %v9533 = vsub.f32 %v9531, %v9532
    %v9534 = vand.u32 %v9533, 4294901760
    %9535 = vmatpush.xpose.msra.mxu0 %v9534
    %v9536 = vand.u32 %v485, 4294901760
    %v9537 = vsub.f32 %v485, %v9536
    %v9538 = vand.u32 %v9537, 4294901760
    %v9539 = vsub.f32 %v9537, %v9538
    %v9540 = vand.u32 %v9539, 4294901760
    %9541 = vmatpush.xpose.msra.mxu0 %v9540
    %v9542 = vand.u32 %v481, 4294901760
    %v9543 = vsub.f32 %v481, %v9542
    %v9544 = vand.u32 %v9543, 4294901760
    %v9545 = vsub.f32 %v9543, %v9544
    %v9546 = vand.u32 %v9545, 4294901760
    %9547 = vmatpush.xpose.msra.mxu0 %v9546
    %v9548 = vand.u32 %v477, 4294901760
    %v9549 = vsub.f32 %v477, %v9548
    %v9550 = vand.u32 %v9549, 4294901760
    %v9551 = vsub.f32 %v9549, %v9550
    %v9552 = vand.u32 %v9551, 4294901760
    %9553 = vmatpush.xpose.msra.mxu0 %v9552
    %v9554 = vand.u32 %v473, 4294901760
    %v9555 = vsub.f32 %v473, %v9554
    %v9556 = vand.u32 %v9555, 4294901760
    %v9557 = vsub.f32 %v9555, %v9556
    %v9558 = vand.u32 %v9557, 4294901760
    %9559 = vmatpush.xpose.msra.mxu0 %v9558
    %v9560 = vand.u32 %v469, 4294901760
    %v9561 = vsub.f32 %v469, %v9560
    %v9562 = vand.u32 %v9561, 4294901760
    %v9563 = vsub.f32 %v9561, %v9562
    %v9564 = vand.u32 %v9563, 4294901760
    %9565 = vmatpush.xpose.msra.mxu0 %v9564
    %v9566 = vand.u32 %v465, 4294901760
    %v9567 = vsub.f32 %v465, %v9566
    %v9568 = vand.u32 %v9567, 4294901760
    %v9569 = vsub.f32 %v9567, %v9568
    %v9570 = vand.u32 %v9569, 4294901760
    %9571 = vmatpush.xpose.msra.mxu0 %v9570
    %v9572 = vand.u32 %v461, 4294901760
    %v9573 = vsub.f32 %v461, %v9572
    %v9574 = vand.u32 %v9573, 4294901760
    %v9575 = vsub.f32 %v9573, %v9574
    %v9576 = vand.u32 %v9575, 4294901760
    %9577 = vmatpush.xpose.msra.mxu0 %v9576
    %v9578 = vand.u32 %v457, 4294901760
    %v9579 = vsub.f32 %v457, %v9578
    %v9580 = vand.u32 %v9579, 4294901760
    %v9581 = vsub.f32 %v9579, %v9580
    %v9582 = vand.u32 %v9581, 4294901760
    %9583 = vmatpush.xpose.msra.mxu0 %v9582
    %v9584 = vand.u32 %v453, 4294901760
    %v9585 = vsub.f32 %v453, %v9584
    %v9586 = vand.u32 %v9585, 4294901760
    %v9587 = vsub.f32 %v9585, %v9586
    %v9588 = vand.u32 %v9587, 4294901760
    %9589 = vmatpush.xpose.msra.mxu0 %v9588
    %v9590 = vand.u32 %v449, 4294901760
    %v9591 = vsub.f32 %v449, %v9590
    %v9592 = vand.u32 %v9591, 4294901760
    %v9593 = vsub.f32 %v9591, %v9592
    %v9594 = vand.u32 %v9593, 4294901760
    %9595 = vmatpush.xpose.msra.mxu0 %v9594
    %v9596 = vand.u32 %v445, 4294901760
    %v9597 = vsub.f32 %v445, %v9596
    %v9598 = vand.u32 %v9597, 4294901760
    %v9599 = vsub.f32 %v9597, %v9598
    %v9600 = vand.u32 %v9599, 4294901760
    %9601 = vmatpush.xpose.msra.mxu0 %v9600
    %v9602 = vand.u32 %v593, 4294901760
    %9603 = vmatmul.f32.gmra.mxu0 %v9602
    %v9604 = vpop.f32.mrf.mxu0
    %v9605 = vadd.f32 %v9504, %v9604
    %9606 = vdwg.mxu0
    %v9607 = vand.u32 %v505, 4294901760
    %v9608 = vsub.f32 %v505, %v9607
    %9609 = vmatpush.xpose.msra.mxu0 %v9608
    %v9610 = vand.u32 %v501, 4294901760
    %v9611 = vsub.f32 %v501, %v9610
    %9612 = vmatpush.xpose.msra.mxu0 %v9611
    %v9613 = vand.u32 %v497, 4294901760
    %v9614 = vsub.f32 %v497, %v9613
    %9615 = vmatpush.xpose.msra.mxu0 %v9614
    %v9616 = vand.u32 %v493, 4294901760
    %v9617 = vsub.f32 %v493, %v9616
    %9618 = vmatpush.xpose.msra.mxu0 %v9617
    %v9619 = vand.u32 %v489, 4294901760
    %v9620 = vsub.f32 %v489, %v9619
    %9621 = vmatpush.xpose.msra.mxu0 %v9620
    %v9622 = vand.u32 %v485, 4294901760
    %v9623 = vsub.f32 %v485, %v9622
    %9624 = vmatpush.xpose.msra.mxu0 %v9623
    %v9625 = vand.u32 %v481, 4294901760
    %v9626 = vsub.f32 %v481, %v9625
    %9627 = vmatpush.xpose.msra.mxu0 %v9626
    %v9628 = vand.u32 %v477, 4294901760
    %v9629 = vsub.f32 %v477, %v9628
    %9630 = vmatpush.xpose.msra.mxu0 %v9629
    %v9631 = vand.u32 %v473, 4294901760
    %v9632 = vsub.f32 %v473, %v9631
    %9633 = vmatpush.xpose.msra.mxu0 %v9632
    %v9634 = vand.u32 %v469, 4294901760
    %v9635 = vsub.f32 %v469, %v9634
    %9636 = vmatpush.xpose.msra.mxu0 %v9635
    %v9637 = vand.u32 %v465, 4294901760
    %v9638 = vsub.f32 %v465, %v9637
    %9639 = vmatpush.xpose.msra.mxu0 %v9638
    %v9640 = vand.u32 %v461, 4294901760
    %v9641 = vsub.f32 %v461, %v9640
    %9642 = vmatpush.xpose.msra.mxu0 %v9641
    %v9643 = vand.u32 %v457, 4294901760
    %v9644 = vsub.f32 %v457, %v9643
    %9645 = vmatpush.xpose.msra.mxu0 %v9644
    %v9646 = vand.u32 %v453, 4294901760
    %v9647 = vsub.f32 %v453, %v9646
    %9648 = vmatpush.xpose.msra.mxu0 %v9647
    %v9649 = vand.u32 %v449, 4294901760
    %v9650 = vsub.f32 %v449, %v9649
    %9651 = vmatpush.xpose.msra.mxu0 %v9650
    %v9652 = vand.u32 %v445, 4294901760
    %v9653 = vsub.f32 %v445, %v9652
    %9654 = vmatpush.xpose.msra.mxu0 %v9653
    %v9655 = vand.u32 %v593, 4294901760
    %v9656 = vsub.f32 %v593, %v9655
    %9657 = vmatmul.f32.gmra.mxu0 %v9656
    %v9658 = vpop.f32.mrf.mxu0
    %v9659 = vadd.f32 %v9605, %v9658
    %9660 = vdwg.mxu0
    %v9661 = vand.u32 %v505, 4294901760
    %9662 = vmatpush.xpose.msra.mxu0 %v9661
    %v9663 = vand.u32 %v501, 4294901760
    %9664 = vmatpush.xpose.msra.mxu0 %v9663
    %v9665 = vand.u32 %v497, 4294901760
    %9666 = vmatpush.xpose.msra.mxu0 %v9665
    %v9667 = vand.u32 %v493, 4294901760
    %9668 = vmatpush.xpose.msra.mxu0 %v9667
    %v9669 = vand.u32 %v489, 4294901760
    %9670 = vmatpush.xpose.msra.mxu0 %v9669
    %v9671 = vand.u32 %v485, 4294901760
    %9672 = vmatpush.xpose.msra.mxu0 %v9671
    %v9673 = vand.u32 %v481, 4294901760
    %9674 = vmatpush.xpose.msra.mxu0 %v9673
    %v9675 = vand.u32 %v477, 4294901760
    %9676 = vmatpush.xpose.msra.mxu0 %v9675
    %v9677 = vand.u32 %v473, 4294901760
    %9678 = vmatpush.xpose.msra.mxu0 %v9677
    %v9679 = vand.u32 %v469, 4294901760
    %9680 = vmatpush.xpose.msra.mxu0 %v9679
    %v9681 = vand.u32 %v465, 4294901760
    %9682 = vmatpush.xpose.msra.mxu0 %v9681
    %v9683 = vand.u32 %v461, 4294901760
    %9684 = vmatpush.xpose.msra.mxu0 %v9683
    %v9685 = vand.u32 %v457, 4294901760
    %9686 = vmatpush.xpose.msra.mxu0 %v9685
    %v9687 = vand.u32 %v453, 4294901760
    %9688 = vmatpush.xpose.msra.mxu0 %v9687
    %v9689 = vand.u32 %v449, 4294901760
    %9690 = vmatpush.xpose.msra.mxu0 %v9689
    %v9691 = vand.u32 %v445, 4294901760
    %9692 = vmatpush.xpose.msra.mxu0 %v9691
    %v9693 = vand.u32 %v593, 4294901760
    %v9694 = vsub.f32 %v593, %v9693
    %v9695 = vand.u32 %v9694, 4294901760
    %9696 = vmatmul.f32.gmra.mxu0 %v9695
    %v9697 = vpop.f32.mrf.mxu0
    %v9698 = vadd.f32 %v9659, %v9697
    %9699 = vdwg.mxu0
    %v9700 = vand.u32 %v505, 4294901760
    %v9701 = vsub.f32 %v505, %v9700
    %v9702 = vand.u32 %v9701, 4294901760
    %9703 = vmatpush.xpose.msra.mxu0 %v9702
    %v9704 = vand.u32 %v501, 4294901760
    %v9705 = vsub.f32 %v501, %v9704
    %v9706 = vand.u32 %v9705, 4294901760
    %9707 = vmatpush.xpose.msra.mxu0 %v9706
    %v9708 = vand.u32 %v497, 4294901760
    %v9709 = vsub.f32 %v497, %v9708
    %v9710 = vand.u32 %v9709, 4294901760
    %9711 = vmatpush.xpose.msra.mxu0 %v9710
    %v9712 = vand.u32 %v493, 4294901760
    %v9713 = vsub.f32 %v493, %v9712
    %v9714 = vand.u32 %v9713, 4294901760
    %9715 = vmatpush.xpose.msra.mxu0 %v9714
    %v9716 = vand.u32 %v489, 4294901760
    %v9717 = vsub.f32 %v489, %v9716
    %v9718 = vand.u32 %v9717, 4294901760
    %9719 = vmatpush.xpose.msra.mxu0 %v9718
    %v9720 = vand.u32 %v485, 4294901760
    %v9721 = vsub.f32 %v485, %v9720
    %v9722 = vand.u32 %v9721, 4294901760
    %9723 = vmatpush.xpose.msra.mxu0 %v9722
    %v9724 = vand.u32 %v481, 4294901760
    %v9725 = vsub.f32 %v481, %v9724
    %v9726 = vand.u32 %v9725, 4294901760
    %9727 = vmatpush.xpose.msra.mxu0 %v9726
    %v9728 = vand.u32 %v477, 4294901760
    %v9729 = vsub.f32 %v477, %v9728
    %v9730 = vand.u32 %v9729, 4294901760
    %9731 = vmatpush.xpose.msra.mxu0 %v9730
    %v9732 = vand.u32 %v473, 4294901760
    %v9733 = vsub.f32 %v473, %v9732
    %v9734 = vand.u32 %v9733, 4294901760
    %9735 = vmatpush.xpose.msra.mxu0 %v9734
    %v9736 = vand.u32 %v469, 4294901760
    %v9737 = vsub.f32 %v469, %v9736
    %v9738 = vand.u32 %v9737, 4294901760
    %9739 = vmatpush.xpose.msra.mxu0 %v9738
    %v9740 = vand.u32 %v465, 4294901760
    %v9741 = vsub.f32 %v465, %v9740
    %v9742 = vand.u32 %v9741, 4294901760
    %9743 = vmatpush.xpose.msra.mxu0 %v9742
    %v9744 = vand.u32 %v461, 4294901760
    %v9745 = vsub.f32 %v461, %v9744
    %v9746 = vand.u32 %v9745, 4294901760
    %9747 = vmatpush.xpose.msra.mxu0 %v9746
    %v9748 = vand.u32 %v457, 4294901760
    %v9749 = vsub.f32 %v457, %v9748
    %v9750 = vand.u32 %v9749, 4294901760
    %9751 = vmatpush.xpose.msra.mxu0 %v9750
    %v9752 = vand.u32 %v453, 4294901760
    %v9753 = vsub.f32 %v453, %v9752
    %v9754 = vand.u32 %v9753, 4294901760
    %9755 = vmatpush.xpose.msra.mxu0 %v9754
    %v9756 = vand.u32 %v449, 4294901760
    %v9757 = vsub.f32 %v449, %v9756
    %v9758 = vand.u32 %v9757, 4294901760
    %9759 = vmatpush.xpose.msra.mxu0 %v9758
    %v9760 = vand.u32 %v445, 4294901760
    %v9761 = vsub.f32 %v445, %v9760
    %v9762 = vand.u32 %v9761, 4294901760
    %9763 = vmatpush.xpose.msra.mxu0 %v9762
    %v9764 = vand.u32 %v593, 4294901760
    %9765 = vmatmul.f32.gmra.mxu0 %v9764
    %v9766 = vpop.f32.mrf.mxu0
    %v9767 = vadd.f32 %v9698, %v9766
    %9768 = vdwg.mxu0
    %v9769 = vand.u32 %v505, 4294901760
    %9770 = vmatpush.xpose.msra.mxu0 %v9769
    %v9771 = vand.u32 %v501, 4294901760
    %9772 = vmatpush.xpose.msra.mxu0 %v9771
    %v9773 = vand.u32 %v497, 4294901760
    %9774 = vmatpush.xpose.msra.mxu0 %v9773
    %v9775 = vand.u32 %v493, 4294901760
    %9776 = vmatpush.xpose.msra.mxu0 %v9775
    %v9777 = vand.u32 %v489, 4294901760
    %9778 = vmatpush.xpose.msra.mxu0 %v9777
    %v9779 = vand.u32 %v485, 4294901760
    %9780 = vmatpush.xpose.msra.mxu0 %v9779
    %v9781 = vand.u32 %v481, 4294901760
    %9782 = vmatpush.xpose.msra.mxu0 %v9781
    %v9783 = vand.u32 %v477, 4294901760
    %9784 = vmatpush.xpose.msra.mxu0 %v9783
    %v9785 = vand.u32 %v473, 4294901760
    %9786 = vmatpush.xpose.msra.mxu0 %v9785
    %v9787 = vand.u32 %v469, 4294901760
    %9788 = vmatpush.xpose.msra.mxu0 %v9787
    %v9789 = vand.u32 %v465, 4294901760
    %9790 = vmatpush.xpose.msra.mxu0 %v9789
    %v9791 = vand.u32 %v461, 4294901760
    %9792 = vmatpush.xpose.msra.mxu0 %v9791
    %v9793 = vand.u32 %v457, 4294901760
    %9794 = vmatpush.xpose.msra.mxu0 %v9793
    %v9795 = vand.u32 %v453, 4294901760
    %9796 = vmatpush.xpose.msra.mxu0 %v9795
    %v9797 = vand.u32 %v449, 4294901760
    %9798 = vmatpush.xpose.msra.mxu0 %v9797
    %v9799 = vand.u32 %v445, 4294901760
    %9800 = vmatpush.xpose.msra.mxu0 %v9799
    %v9801 = vand.u32 %v593, 4294901760
    %9802 = vmatmul.f32.gmra.mxu0 %v9801
    %v9803 = vpop.f32.mrf.mxu0
    %v9804 = vadd.f32 %v9767, %v9803
    %9805 = vdwg.mxu0
    %v9806 = vand.u32 %v506, 4294901760
    %9807 = vmatpush.xpose.msra.mxu0 %v9806
    %v9808 = vand.u32 %v502, 4294901760
    %9809 = vmatpush.xpose.msra.mxu0 %v9808
    %v9810 = vand.u32 %v498, 4294901760
    %9811 = vmatpush.xpose.msra.mxu0 %v9810
    %v9812 = vand.u32 %v494, 4294901760
    %9813 = vmatpush.xpose.msra.mxu0 %v9812
    %v9814 = vand.u32 %v490, 4294901760
    %9815 = vmatpush.xpose.msra.mxu0 %v9814
    %v9816 = vand.u32 %v486, 4294901760
    %9817 = vmatpush.xpose.msra.mxu0 %v9816
    %v9818 = vand.u32 %v482, 4294901760
    %9819 = vmatpush.xpose.msra.mxu0 %v9818
    %v9820 = vand.u32 %v478, 4294901760
    %9821 = vmatpush.xpose.msra.mxu0 %v9820
    %v9822 = vand.u32 %v474, 4294901760
    %9823 = vmatpush.xpose.msra.mxu0 %v9822
    %v9824 = vand.u32 %v470, 4294901760
    %9825 = vmatpush.xpose.msra.mxu0 %v9824
    %v9826 = vand.u32 %v466, 4294901760
    %9827 = vmatpush.xpose.msra.mxu0 %v9826
    %v9828 = vand.u32 %v462, 4294901760
    %9829 = vmatpush.xpose.msra.mxu0 %v9828
    %v9830 = vand.u32 %v458, 4294901760
    %9831 = vmatpush.xpose.msra.mxu0 %v9830
    %v9832 = vand.u32 %v454, 4294901760
    %9833 = vmatpush.xpose.msra.mxu0 %v9832
    %v9834 = vand.u32 %v450, 4294901760
    %9835 = vmatpush.xpose.msra.mxu0 %v9834
    %v9836 = vand.u32 %v446, 4294901760
    %9837 = vmatpush.xpose.msra.mxu0 %v9836
    %v9838 = vand.u32 %v594, 4294901760
    %v9839 = vsub.f32 %v594, %v9838
    %v9840 = vand.u32 %v9839, 4294901760
    %v9841 = vsub.f32 %v9839, %v9840
    %v9842 = vand.u32 %v9841, 4294901760
    %9843 = vmatmul.f32.gmra.mxu0 %v9842
    %v9844 = vpop.f32.mrf.mxu0
    %v9845 = vadd.f32 %v9804, %v9844
    %9846 = vdwg.mxu0
    %v9847 = vand.u32 %v506, 4294901760
    %v9848 = vsub.f32 %v506, %v9847
    %v9849 = vand.u32 %v9848, 4294901760
    %v9850 = vsub.f32 %v9848, %v9849
    %v9851 = vand.u32 %v9850, 4294901760
    %9852 = vmatpush.xpose.msra.mxu0 %v9851
    %v9853 = vand.u32 %v502, 4294901760
    %v9854 = vsub.f32 %v502, %v9853
    %v9855 = vand.u32 %v9854, 4294901760
    %v9856 = vsub.f32 %v9854, %v9855
    %v9857 = vand.u32 %v9856, 4294901760
    %9858 = vmatpush.xpose.msra.mxu0 %v9857
    %v9859 = vand.u32 %v498, 4294901760
    %v9860 = vsub.f32 %v498, %v9859
    %v9861 = vand.u32 %v9860, 4294901760
    %v9862 = vsub.f32 %v9860, %v9861
    %v9863 = vand.u32 %v9862, 4294901760
    %9864 = vmatpush.xpose.msra.mxu0 %v9863
    %v9865 = vand.u32 %v494, 4294901760
    %v9866 = vsub.f32 %v494, %v9865
    %v9867 = vand.u32 %v9866, 4294901760
    %v9868 = vsub.f32 %v9866, %v9867
    %v9869 = vand.u32 %v9868, 4294901760
    %9870 = vmatpush.xpose.msra.mxu0 %v9869
    %v9871 = vand.u32 %v490, 4294901760
    %v9872 = vsub.f32 %v490, %v9871
    %v9873 = vand.u32 %v9872, 4294901760
    %v9874 = vsub.f32 %v9872, %v9873
    %v9875 = vand.u32 %v9874, 4294901760
    %9876 = vmatpush.xpose.msra.mxu0 %v9875
    %v9877 = vand.u32 %v486, 4294901760
    %v9878 = vsub.f32 %v486, %v9877
    %v9879 = vand.u32 %v9878, 4294901760
    %v9880 = vsub.f32 %v9878, %v9879
    %v9881 = vand.u32 %v9880, 4294901760
    %9882 = vmatpush.xpose.msra.mxu0 %v9881
    %v9883 = vand.u32 %v482, 4294901760
    %v9884 = vsub.f32 %v482, %v9883
    %v9885 = vand.u32 %v9884, 4294901760
    %v9886 = vsub.f32 %v9884, %v9885
    %v9887 = vand.u32 %v9886, 4294901760
    %9888 = vmatpush.xpose.msra.mxu0 %v9887
    %v9889 = vand.u32 %v478, 4294901760
    %v9890 = vsub.f32 %v478, %v9889
    %v9891 = vand.u32 %v9890, 4294901760
    %v9892 = vsub.f32 %v9890, %v9891
    %v9893 = vand.u32 %v9892, 4294901760
    %9894 = vmatpush.xpose.msra.mxu0 %v9893
    %v9895 = vand.u32 %v474, 4294901760
    %v9896 = vsub.f32 %v474, %v9895
    %v9897 = vand.u32 %v9896, 4294901760
    %v9898 = vsub.f32 %v9896, %v9897
    %v9899 = vand.u32 %v9898, 4294901760
    %9900 = vmatpush.xpose.msra.mxu0 %v9899
    %v9901 = vand.u32 %v470, 4294901760
    %v9902 = vsub.f32 %v470, %v9901
    %v9903 = vand.u32 %v9902, 4294901760
    %v9904 = vsub.f32 %v9902, %v9903
    %v9905 = vand.u32 %v9904, 4294901760
    %9906 = vmatpush.xpose.msra.mxu0 %v9905
    %v9907 = vand.u32 %v466, 4294901760
    %v9908 = vsub.f32 %v466, %v9907
    %v9909 = vand.u32 %v9908, 4294901760
    %v9910 = vsub.f32 %v9908, %v9909
    %v9911 = vand.u32 %v9910, 4294901760
    %9912 = vmatpush.xpose.msra.mxu0 %v9911
    %v9913 = vand.u32 %v462, 4294901760
    %v9914 = vsub.f32 %v462, %v9913
    %v9915 = vand.u32 %v9914, 4294901760
    %v9916 = vsub.f32 %v9914, %v9915
    %v9917 = vand.u32 %v9916, 4294901760
    %9918 = vmatpush.xpose.msra.mxu0 %v9917
    %v9919 = vand.u32 %v458, 4294901760
    %v9920 = vsub.f32 %v458, %v9919
    %v9921 = vand.u32 %v9920, 4294901760
    %v9922 = vsub.f32 %v9920, %v9921
    %v9923 = vand.u32 %v9922, 4294901760
    %9924 = vmatpush.xpose.msra.mxu0 %v9923
    %v9925 = vand.u32 %v454, 4294901760
    %v9926 = vsub.f32 %v454, %v9925
    %v9927 = vand.u32 %v9926, 4294901760
    %v9928 = vsub.f32 %v9926, %v9927
    %v9929 = vand.u32 %v9928, 4294901760
    %9930 = vmatpush.xpose.msra.mxu0 %v9929
    %v9931 = vand.u32 %v450, 4294901760
    %v9932 = vsub.f32 %v450, %v9931
    %v9933 = vand.u32 %v9932, 4294901760
    %v9934 = vsub.f32 %v9932, %v9933
    %v9935 = vand.u32 %v9934, 4294901760
    %9936 = vmatpush.xpose.msra.mxu0 %v9935
    %v9937 = vand.u32 %v446, 4294901760
    %v9938 = vsub.f32 %v446, %v9937
    %v9939 = vand.u32 %v9938, 4294901760
    %v9940 = vsub.f32 %v9938, %v9939
    %v9941 = vand.u32 %v9940, 4294901760
    %9942 = vmatpush.xpose.msra.mxu0 %v9941
    %v9943 = vand.u32 %v594, 4294901760
    %9944 = vmatmul.f32.gmra.mxu0 %v9943
    %v9945 = vpop.f32.mrf.mxu0
    %v9946 = vadd.f32 %v9845, %v9945
    %9947 = vdwg.mxu0
    %v9948 = vand.u32 %v506, 4294901760
    %v9949 = vsub.f32 %v506, %v9948
    %9950 = vmatpush.xpose.msra.mxu0 %v9949
    %v9951 = vand.u32 %v502, 4294901760
    %v9952 = vsub.f32 %v502, %v9951
    %9953 = vmatpush.xpose.msra.mxu0 %v9952
    %v9954 = vand.u32 %v498, 4294901760
    %v9955 = vsub.f32 %v498, %v9954
    %9956 = vmatpush.xpose.msra.mxu0 %v9955
    %v9957 = vand.u32 %v494, 4294901760
    %v9958 = vsub.f32 %v494, %v9957
    %9959 = vmatpush.xpose.msra.mxu0 %v9958
    %v9960 = vand.u32 %v490, 4294901760
    %v9961 = vsub.f32 %v490, %v9960
    %9962 = vmatpush.xpose.msra.mxu0 %v9961
    %v9963 = vand.u32 %v486, 4294901760
    %v9964 = vsub.f32 %v486, %v9963
    %9965 = vmatpush.xpose.msra.mxu0 %v9964
    %v9966 = vand.u32 %v482, 4294901760
    %v9967 = vsub.f32 %v482, %v9966
    %9968 = vmatpush.xpose.msra.mxu0 %v9967
    %v9969 = vand.u32 %v478, 4294901760
    %v9970 = vsub.f32 %v478, %v9969
    %9971 = vmatpush.xpose.msra.mxu0 %v9970
    %v9972 = vand.u32 %v474, 4294901760
    %v9973 = vsub.f32 %v474, %v9972
    %9974 = vmatpush.xpose.msra.mxu0 %v9973
    %v9975 = vand.u32 %v470, 4294901760
    %v9976 = vsub.f32 %v470, %v9975
    %9977 = vmatpush.xpose.msra.mxu0 %v9976
    %v9978 = vand.u32 %v466, 4294901760
    %v9979 = vsub.f32 %v466, %v9978
    %9980 = vmatpush.xpose.msra.mxu0 %v9979
    %v9981 = vand.u32 %v462, 4294901760
    %v9982 = vsub.f32 %v462, %v9981
    %9983 = vmatpush.xpose.msra.mxu0 %v9982
    %v9984 = vand.u32 %v458, 4294901760
    %v9985 = vsub.f32 %v458, %v9984
    %9986 = vmatpush.xpose.msra.mxu0 %v9985
    %v9987 = vand.u32 %v454, 4294901760
    %v9988 = vsub.f32 %v454, %v9987
    %9989 = vmatpush.xpose.msra.mxu0 %v9988
    %v9990 = vand.u32 %v450, 4294901760
    %v9991 = vsub.f32 %v450, %v9990
    %9992 = vmatpush.xpose.msra.mxu0 %v9991
    %v9993 = vand.u32 %v446, 4294901760
    %v9994 = vsub.f32 %v446, %v9993
    %9995 = vmatpush.xpose.msra.mxu0 %v9994
    %v9996 = vand.u32 %v594, 4294901760
    %v9997 = vsub.f32 %v594, %v9996
    %9998 = vmatmul.f32.gmra.mxu0 %v9997
    %v9999 = vpop.f32.mrf.mxu0
    %v10000 = vadd.f32 %v9946, %v9999
    %10001 = vdwg.mxu0
    %v10002 = vand.u32 %v506, 4294901760
    %10003 = vmatpush.xpose.msra.mxu0 %v10002
    %v10004 = vand.u32 %v502, 4294901760
    %10005 = vmatpush.xpose.msra.mxu0 %v10004
    %v10006 = vand.u32 %v498, 4294901760
    %10007 = vmatpush.xpose.msra.mxu0 %v10006
    %v10008 = vand.u32 %v494, 4294901760
    %10009 = vmatpush.xpose.msra.mxu0 %v10008
    %v10010 = vand.u32 %v490, 4294901760
    %10011 = vmatpush.xpose.msra.mxu0 %v10010
    %v10012 = vand.u32 %v486, 4294901760
    %10013 = vmatpush.xpose.msra.mxu0 %v10012
    %v10014 = vand.u32 %v482, 4294901760
    %10015 = vmatpush.xpose.msra.mxu0 %v10014
    %v10016 = vand.u32 %v478, 4294901760
    %10017 = vmatpush.xpose.msra.mxu0 %v10016
    %v10018 = vand.u32 %v474, 4294901760
    %10019 = vmatpush.xpose.msra.mxu0 %v10018
    %v10020 = vand.u32 %v470, 4294901760
    %10021 = vmatpush.xpose.msra.mxu0 %v10020
    %v10022 = vand.u32 %v466, 4294901760
    %10023 = vmatpush.xpose.msra.mxu0 %v10022
    %v10024 = vand.u32 %v462, 4294901760
    %10025 = vmatpush.xpose.msra.mxu0 %v10024
    %v10026 = vand.u32 %v458, 4294901760
    %10027 = vmatpush.xpose.msra.mxu0 %v10026
    %v10028 = vand.u32 %v454, 4294901760
    %10029 = vmatpush.xpose.msra.mxu0 %v10028
    %v10030 = vand.u32 %v450, 4294901760
    %10031 = vmatpush.xpose.msra.mxu0 %v10030
    %v10032 = vand.u32 %v446, 4294901760
    %10033 = vmatpush.xpose.msra.mxu0 %v10032
    %v10034 = vand.u32 %v594, 4294901760
    %v10035 = vsub.f32 %v594, %v10034
    %v10036 = vand.u32 %v10035, 4294901760
    %10037 = vmatmul.f32.gmra.mxu0 %v10036
    %v10038 = vpop.f32.mrf.mxu0
    %v10039 = vadd.f32 %v10000, %v10038
    %10040 = vdwg.mxu0
    %v10041 = vand.u32 %v506, 4294901760
    %v10042 = vsub.f32 %v506, %v10041
    %v10043 = vand.u32 %v10042, 4294901760
    %10044 = vmatpush.xpose.msra.mxu0 %v10043
    %v10045 = vand.u32 %v502, 4294901760
    %v10046 = vsub.f32 %v502, %v10045
    %v10047 = vand.u32 %v10046, 4294901760
    %10048 = vmatpush.xpose.msra.mxu0 %v10047
    %v10049 = vand.u32 %v498, 4294901760
    %v10050 = vsub.f32 %v498, %v10049
    %v10051 = vand.u32 %v10050, 4294901760
    %10052 = vmatpush.xpose.msra.mxu0 %v10051
    %v10053 = vand.u32 %v494, 4294901760
    %v10054 = vsub.f32 %v494, %v10053
    %v10055 = vand.u32 %v10054, 4294901760
    %10056 = vmatpush.xpose.msra.mxu0 %v10055
    %v10057 = vand.u32 %v490, 4294901760
    %v10058 = vsub.f32 %v490, %v10057
    %v10059 = vand.u32 %v10058, 4294901760
    %10060 = vmatpush.xpose.msra.mxu0 %v10059
    %v10061 = vand.u32 %v486, 4294901760
    %v10062 = vsub.f32 %v486, %v10061
    %v10063 = vand.u32 %v10062, 4294901760
    %10064 = vmatpush.xpose.msra.mxu0 %v10063
    %v10065 = vand.u32 %v482, 4294901760
    %v10066 = vsub.f32 %v482, %v10065
    %v10067 = vand.u32 %v10066, 4294901760
    %10068 = vmatpush.xpose.msra.mxu0 %v10067
    %v10069 = vand.u32 %v478, 4294901760
    %v10070 = vsub.f32 %v478, %v10069
    %v10071 = vand.u32 %v10070, 4294901760
    %10072 = vmatpush.xpose.msra.mxu0 %v10071
    %v10073 = vand.u32 %v474, 4294901760
    %v10074 = vsub.f32 %v474, %v10073
    %v10075 = vand.u32 %v10074, 4294901760
    %10076 = vmatpush.xpose.msra.mxu0 %v10075
    %v10077 = vand.u32 %v470, 4294901760
    %v10078 = vsub.f32 %v470, %v10077
    %v10079 = vand.u32 %v10078, 4294901760
    %10080 = vmatpush.xpose.msra.mxu0 %v10079
    %v10081 = vand.u32 %v466, 4294901760
    %v10082 = vsub.f32 %v466, %v10081
    %v10083 = vand.u32 %v10082, 4294901760
    %10084 = vmatpush.xpose.msra.mxu0 %v10083
    %v10085 = vand.u32 %v462, 4294901760
    %v10086 = vsub.f32 %v462, %v10085
    %v10087 = vand.u32 %v10086, 4294901760
    %10088 = vmatpush.xpose.msra.mxu0 %v10087
    %v10089 = vand.u32 %v458, 4294901760
    %v10090 = vsub.f32 %v458, %v10089
    %v10091 = vand.u32 %v10090, 4294901760
    %10092 = vmatpush.xpose.msra.mxu0 %v10091
    %v10093 = vand.u32 %v454, 4294901760
    %v10094 = vsub.f32 %v454, %v10093
    %v10095 = vand.u32 %v10094, 4294901760
    %10096 = vmatpush.xpose.msra.mxu0 %v10095
    %v10097 = vand.u32 %v450, 4294901760
    %v10098 = vsub.f32 %v450, %v10097
    %v10099 = vand.u32 %v10098, 4294901760
    %10100 = vmatpush.xpose.msra.mxu0 %v10099
    %v10101 = vand.u32 %v446, 4294901760
    %v10102 = vsub.f32 %v446, %v10101
    %v10103 = vand.u32 %v10102, 4294901760
    %10104 = vmatpush.xpose.msra.mxu0 %v10103
    %v10105 = vand.u32 %v594, 4294901760
    %10106 = vmatmul.f32.gmra.mxu0 %v10105
    %v10107 = vpop.f32.mrf.mxu0
    %v10108 = vadd.f32 %v10039, %v10107
    %10109 = vdwg.mxu0
    %v10110 = vand.u32 %v506, 4294901760
    %10111 = vmatpush.xpose.msra.mxu0 %v10110
    %v10112 = vand.u32 %v502, 4294901760
    %10113 = vmatpush.xpose.msra.mxu0 %v10112
    %v10114 = vand.u32 %v498, 4294901760
    %10115 = vmatpush.xpose.msra.mxu0 %v10114
    %v10116 = vand.u32 %v494, 4294901760
    %10117 = vmatpush.xpose.msra.mxu0 %v10116
    %v10118 = vand.u32 %v490, 4294901760
    %10119 = vmatpush.xpose.msra.mxu0 %v10118
    %v10120 = vand.u32 %v486, 4294901760
    %10121 = vmatpush.xpose.msra.mxu0 %v10120
    %v10122 = vand.u32 %v482, 4294901760
    %10123 = vmatpush.xpose.msra.mxu0 %v10122
    %v10124 = vand.u32 %v478, 4294901760
    %10125 = vmatpush.xpose.msra.mxu0 %v10124
    %v10126 = vand.u32 %v474, 4294901760
    %10127 = vmatpush.xpose.msra.mxu0 %v10126
    %v10128 = vand.u32 %v470, 4294901760
    %10129 = vmatpush.xpose.msra.mxu0 %v10128
    %v10130 = vand.u32 %v466, 4294901760
    %10131 = vmatpush.xpose.msra.mxu0 %v10130
    %v10132 = vand.u32 %v462, 4294901760
    %10133 = vmatpush.xpose.msra.mxu0 %v10132
    %v10134 = vand.u32 %v458, 4294901760
    %10135 = vmatpush.xpose.msra.mxu0 %v10134
    %v10136 = vand.u32 %v454, 4294901760
    %10137 = vmatpush.xpose.msra.mxu0 %v10136
    %v10138 = vand.u32 %v450, 4294901760
    %10139 = vmatpush.xpose.msra.mxu0 %v10138
    %v10140 = vand.u32 %v446, 4294901760
    %10141 = vmatpush.xpose.msra.mxu0 %v10140
    %v10142 = vand.u32 %v594, 4294901760
    %10143 = vmatmul.f32.gmra.mxu0 %v10142
    %v10144 = vpop.f32.mrf.mxu0
    %v10145 = vadd.f32 %v10108, %v10144
    %10146 = vdwg.mxu0
    %v10147 = vand.u32 %v567, 4294901760
    %10148 = vmatpush.xpose.msra.mxu0 %v10147
    %v10149 = vand.u32 %v563, 4294901760
    %10150 = vmatpush.xpose.msra.mxu0 %v10149
    %v10151 = vand.u32 %v559, 4294901760
    %10152 = vmatpush.xpose.msra.mxu0 %v10151
    %v10153 = vand.u32 %v555, 4294901760
    %10154 = vmatpush.xpose.msra.mxu0 %v10153
    %v10155 = vand.u32 %v551, 4294901760
    %10156 = vmatpush.xpose.msra.mxu0 %v10155
    %v10157 = vand.u32 %v547, 4294901760
    %10158 = vmatpush.xpose.msra.mxu0 %v10157
    %v10159 = vand.u32 %v543, 4294901760
    %10160 = vmatpush.xpose.msra.mxu0 %v10159
    %v10161 = vand.u32 %v539, 4294901760
    %10162 = vmatpush.xpose.msra.mxu0 %v10161
    %v10163 = vand.u32 %v535, 4294901760
    %10164 = vmatpush.xpose.msra.mxu0 %v10163
    %v10165 = vand.u32 %v531, 4294901760
    %10166 = vmatpush.xpose.msra.mxu0 %v10165
    %v10167 = vand.u32 %v527, 4294901760
    %10168 = vmatpush.xpose.msra.mxu0 %v10167
    %v10169 = vand.u32 %v523, 4294901760
    %10170 = vmatpush.xpose.msra.mxu0 %v10169
    %v10171 = vand.u32 %v519, 4294901760
    %10172 = vmatpush.xpose.msra.mxu0 %v10171
    %v10173 = vand.u32 %v515, 4294901760
    %10174 = vmatpush.xpose.msra.mxu0 %v10173
    %v10175 = vand.u32 %v511, 4294901760
    %10176 = vmatpush.xpose.msra.mxu0 %v10175
    %v10177 = vand.u32 %v507, 4294901760
    %10178 = vmatpush.xpose.msra.mxu0 %v10177
    %v10179 = vand.u32 %v591, 4294901760
    %v10180 = vsub.f32 %v591, %v10179
    %v10181 = vand.u32 %v10180, 4294901760
    %v10182 = vsub.f32 %v10180, %v10181
    %v10183 = vand.u32 %v10182, 4294901760
    %10184 = vmatmul.f32.gmra.mxu0 %v10183
    %v10185 = vpop.f32.mrf.mxu0
    %v10186 = vadd.f32 %v580, %v10185
    %10187 = vdwg.mxu0
    %v10188 = vand.u32 %v567, 4294901760
    %v10189 = vsub.f32 %v567, %v10188
    %v10190 = vand.u32 %v10189, 4294901760
    %v10191 = vsub.f32 %v10189, %v10190
    %v10192 = vand.u32 %v10191, 4294901760
    %10193 = vmatpush.xpose.msra.mxu0 %v10192
    %v10194 = vand.u32 %v563, 4294901760
    %v10195 = vsub.f32 %v563, %v10194
    %v10196 = vand.u32 %v10195, 4294901760
    %v10197 = vsub.f32 %v10195, %v10196
    %v10198 = vand.u32 %v10197, 4294901760
    %10199 = vmatpush.xpose.msra.mxu0 %v10198
    %v10200 = vand.u32 %v559, 4294901760
    %v10201 = vsub.f32 %v559, %v10200
    %v10202 = vand.u32 %v10201, 4294901760
    %v10203 = vsub.f32 %v10201, %v10202
    %v10204 = vand.u32 %v10203, 4294901760
    %10205 = vmatpush.xpose.msra.mxu0 %v10204
    %v10206 = vand.u32 %v555, 4294901760
    %v10207 = vsub.f32 %v555, %v10206
    %v10208 = vand.u32 %v10207, 4294901760
    %v10209 = vsub.f32 %v10207, %v10208
    %v10210 = vand.u32 %v10209, 4294901760
    %10211 = vmatpush.xpose.msra.mxu0 %v10210
    %v10212 = vand.u32 %v551, 4294901760
    %v10213 = vsub.f32 %v551, %v10212
    %v10214 = vand.u32 %v10213, 4294901760
    %v10215 = vsub.f32 %v10213, %v10214
    %v10216 = vand.u32 %v10215, 4294901760
    %10217 = vmatpush.xpose.msra.mxu0 %v10216
    %v10218 = vand.u32 %v547, 4294901760
    %v10219 = vsub.f32 %v547, %v10218
    %v10220 = vand.u32 %v10219, 4294901760
    %v10221 = vsub.f32 %v10219, %v10220
    %v10222 = vand.u32 %v10221, 4294901760
    %10223 = vmatpush.xpose.msra.mxu0 %v10222
    %v10224 = vand.u32 %v543, 4294901760
    %v10225 = vsub.f32 %v543, %v10224
    %v10226 = vand.u32 %v10225, 4294901760
    %v10227 = vsub.f32 %v10225, %v10226
    %v10228 = vand.u32 %v10227, 4294901760
    %10229 = vmatpush.xpose.msra.mxu0 %v10228
    %v10230 = vand.u32 %v539, 4294901760
    %v10231 = vsub.f32 %v539, %v10230
    %v10232 = vand.u32 %v10231, 4294901760
    %v10233 = vsub.f32 %v10231, %v10232
    %v10234 = vand.u32 %v10233, 4294901760
    %10235 = vmatpush.xpose.msra.mxu0 %v10234
    %v10236 = vand.u32 %v535, 4294901760
    %v10237 = vsub.f32 %v535, %v10236
    %v10238 = vand.u32 %v10237, 4294901760
    %v10239 = vsub.f32 %v10237, %v10238
    %v10240 = vand.u32 %v10239, 4294901760
    %10241 = vmatpush.xpose.msra.mxu0 %v10240
    %v10242 = vand.u32 %v531, 4294901760
    %v10243 = vsub.f32 %v531, %v10242
    %v10244 = vand.u32 %v10243, 4294901760
    %v10245 = vsub.f32 %v10243, %v10244
    %v10246 = vand.u32 %v10245, 4294901760
    %10247 = vmatpush.xpose.msra.mxu0 %v10246
    %v10248 = vand.u32 %v527, 4294901760
    %v10249 = vsub.f32 %v527, %v10248
    %v10250 = vand.u32 %v10249, 4294901760
    %v10251 = vsub.f32 %v10249, %v10250
    %v10252 = vand.u32 %v10251, 4294901760
    %10253 = vmatpush.xpose.msra.mxu0 %v10252
    %v10254 = vand.u32 %v523, 4294901760
    %v10255 = vsub.f32 %v523, %v10254
    %v10256 = vand.u32 %v10255, 4294901760
    %v10257 = vsub.f32 %v10255, %v10256
    %v10258 = vand.u32 %v10257, 4294901760
    %10259 = vmatpush.xpose.msra.mxu0 %v10258
    %v10260 = vand.u32 %v519, 4294901760
    %v10261 = vsub.f32 %v519, %v10260
    %v10262 = vand.u32 %v10261, 4294901760
    %v10263 = vsub.f32 %v10261, %v10262
    %v10264 = vand.u32 %v10263, 4294901760
    %10265 = vmatpush.xpose.msra.mxu0 %v10264
    %v10266 = vand.u32 %v515, 4294901760
    %v10267 = vsub.f32 %v515, %v10266
    %v10268 = vand.u32 %v10267, 4294901760
    %v10269 = vsub.f32 %v10267, %v10268
    %v10270 = vand.u32 %v10269, 4294901760
    %10271 = vmatpush.xpose.msra.mxu0 %v10270
    %v10272 = vand.u32 %v511, 4294901760
    %v10273 = vsub.f32 %v511, %v10272
    %v10274 = vand.u32 %v10273, 4294901760
    %v10275 = vsub.f32 %v10273, %v10274
    %v10276 = vand.u32 %v10275, 4294901760
    %10277 = vmatpush.xpose.msra.mxu0 %v10276
    %v10278 = vand.u32 %v507, 4294901760
    %v10279 = vsub.f32 %v507, %v10278
    %v10280 = vand.u32 %v10279, 4294901760
    %v10281 = vsub.f32 %v10279, %v10280
    %v10282 = vand.u32 %v10281, 4294901760
    %10283 = vmatpush.xpose.msra.mxu0 %v10282
    %v10284 = vand.u32 %v591, 4294901760
    %10285 = vmatmul.f32.gmra.mxu0 %v10284
    %v10286 = vpop.f32.mrf.mxu0
    %v10287 = vadd.f32 %v10186, %v10286
    %10288 = vdwg.mxu0
    %v10289 = vand.u32 %v567, 4294901760
    %v10290 = vsub.f32 %v567, %v10289
    %10291 = vmatpush.xpose.msra.mxu0 %v10290
    %v10292 = vand.u32 %v563, 4294901760
    %v10293 = vsub.f32 %v563, %v10292
    %10294 = vmatpush.xpose.msra.mxu0 %v10293
    %v10295 = vand.u32 %v559, 4294901760
    %v10296 = vsub.f32 %v559, %v10295
    %10297 = vmatpush.xpose.msra.mxu0 %v10296
    %v10298 = vand.u32 %v555, 4294901760
    %v10299 = vsub.f32 %v555, %v10298
    %10300 = vmatpush.xpose.msra.mxu0 %v10299
    %v10301 = vand.u32 %v551, 4294901760
    %v10302 = vsub.f32 %v551, %v10301
    %10303 = vmatpush.xpose.msra.mxu0 %v10302
    %v10304 = vand.u32 %v547, 4294901760
    %v10305 = vsub.f32 %v547, %v10304
    %10306 = vmatpush.xpose.msra.mxu0 %v10305
    %v10307 = vand.u32 %v543, 4294901760
    %v10308 = vsub.f32 %v543, %v10307
    %10309 = vmatpush.xpose.msra.mxu0 %v10308
    %v10310 = vand.u32 %v539, 4294901760
    %v10311 = vsub.f32 %v539, %v10310
    %10312 = vmatpush.xpose.msra.mxu0 %v10311
    %v10313 = vand.u32 %v535, 4294901760
    %v10314 = vsub.f32 %v535, %v10313
    %10315 = vmatpush.xpose.msra.mxu0 %v10314
    %v10316 = vand.u32 %v531, 4294901760
    %v10317 = vsub.f32 %v531, %v10316
    %10318 = vmatpush.xpose.msra.mxu0 %v10317
    %v10319 = vand.u32 %v527, 4294901760
    %v10320 = vsub.f32 %v527, %v10319
    %10321 = vmatpush.xpose.msra.mxu0 %v10320
    %v10322 = vand.u32 %v523, 4294901760
    %v10323 = vsub.f32 %v523, %v10322
    %10324 = vmatpush.xpose.msra.mxu0 %v10323
    %v10325 = vand.u32 %v519, 4294901760
    %v10326 = vsub.f32 %v519, %v10325
    %10327 = vmatpush.xpose.msra.mxu0 %v10326
    %v10328 = vand.u32 %v515, 4294901760
    %v10329 = vsub.f32 %v515, %v10328
    %10330 = vmatpush.xpose.msra.mxu0 %v10329
    %v10331 = vand.u32 %v511, 4294901760
    %v10332 = vsub.f32 %v511, %v10331
    %10333 = vmatpush.xpose.msra.mxu0 %v10332
    %v10334 = vand.u32 %v507, 4294901760
    %v10335 = vsub.f32 %v507, %v10334
    %10336 = vmatpush.xpose.msra.mxu0 %v10335
    %v10337 = vand.u32 %v591, 4294901760
    %v10338 = vsub.f32 %v591, %v10337
    %10339 = vmatmul.f32.gmra.mxu0 %v10338
    %v10340 = vpop.f32.mrf.mxu0
    %v10341 = vadd.f32 %v10287, %v10340
    %10342 = vdwg.mxu0
    %v10343 = vand.u32 %v567, 4294901760
    %10344 = vmatpush.xpose.msra.mxu0 %v10343
    %v10345 = vand.u32 %v563, 4294901760
    %10346 = vmatpush.xpose.msra.mxu0 %v10345
    %v10347 = vand.u32 %v559, 4294901760
    %10348 = vmatpush.xpose.msra.mxu0 %v10347
    %v10349 = vand.u32 %v555, 4294901760
    %10350 = vmatpush.xpose.msra.mxu0 %v10349
    %v10351 = vand.u32 %v551, 4294901760
    %10352 = vmatpush.xpose.msra.mxu0 %v10351
    %v10353 = vand.u32 %v547, 4294901760
    %10354 = vmatpush.xpose.msra.mxu0 %v10353
    %v10355 = vand.u32 %v543, 4294901760
    %10356 = vmatpush.xpose.msra.mxu0 %v10355
    %v10357 = vand.u32 %v539, 4294901760
    %10358 = vmatpush.xpose.msra.mxu0 %v10357
    %v10359 = vand.u32 %v535, 4294901760
    %10360 = vmatpush.xpose.msra.mxu0 %v10359
    %v10361 = vand.u32 %v531, 4294901760
    %10362 = vmatpush.xpose.msra.mxu0 %v10361
    %v10363 = vand.u32 %v527, 4294901760
    %10364 = vmatpush.xpose.msra.mxu0 %v10363
    %v10365 = vand.u32 %v523, 4294901760
    %10366 = vmatpush.xpose.msra.mxu0 %v10365
    %v10367 = vand.u32 %v519, 4294901760
    %10368 = vmatpush.xpose.msra.mxu0 %v10367
    %v10369 = vand.u32 %v515, 4294901760
    %10370 = vmatpush.xpose.msra.mxu0 %v10369
    %v10371 = vand.u32 %v511, 4294901760
    %10372 = vmatpush.xpose.msra.mxu0 %v10371
    %v10373 = vand.u32 %v507, 4294901760
    %10374 = vmatpush.xpose.msra.mxu0 %v10373
    %v10375 = vand.u32 %v591, 4294901760
    %v10376 = vsub.f32 %v591, %v10375
    %v10377 = vand.u32 %v10376, 4294901760
    %10378 = vmatmul.f32.gmra.mxu0 %v10377
    %v10379 = vpop.f32.mrf.mxu0
    %v10380 = vadd.f32 %v10341, %v10379
    %10381 = vdwg.mxu0
    %v10382 = vand.u32 %v567, 4294901760
    %v10383 = vsub.f32 %v567, %v10382
    %v10384 = vand.u32 %v10383, 4294901760
    %10385 = vmatpush.xpose.msra.mxu0 %v10384
    %v10386 = vand.u32 %v563, 4294901760
    %v10387 = vsub.f32 %v563, %v10386
    %v10388 = vand.u32 %v10387, 4294901760
    %10389 = vmatpush.xpose.msra.mxu0 %v10388
    %v10390 = vand.u32 %v559, 4294901760
    %v10391 = vsub.f32 %v559, %v10390
    %v10392 = vand.u32 %v10391, 4294901760
    %10393 = vmatpush.xpose.msra.mxu0 %v10392
    %v10394 = vand.u32 %v555, 4294901760
    %v10395 = vsub.f32 %v555, %v10394
    %v10396 = vand.u32 %v10395, 4294901760
    %10397 = vmatpush.xpose.msra.mxu0 %v10396
    %v10398 = vand.u32 %v551, 4294901760
    %v10399 = vsub.f32 %v551, %v10398
    %v10400 = vand.u32 %v10399, 4294901760
    %10401 = vmatpush.xpose.msra.mxu0 %v10400
    %v10402 = vand.u32 %v547, 4294901760
    %v10403 = vsub.f32 %v547, %v10402
    %v10404 = vand.u32 %v10403, 4294901760
    %10405 = vmatpush.xpose.msra.mxu0 %v10404
    %v10406 = vand.u32 %v543, 4294901760
    %v10407 = vsub.f32 %v543, %v10406
    %v10408 = vand.u32 %v10407, 4294901760
    %10409 = vmatpush.xpose.msra.mxu0 %v10408
    %v10410 = vand.u32 %v539, 4294901760
    %v10411 = vsub.f32 %v539, %v10410
    %v10412 = vand.u32 %v10411, 4294901760
    %10413 = vmatpush.xpose.msra.mxu0 %v10412
    %v10414 = vand.u32 %v535, 4294901760
    %v10415 = vsub.f32 %v535, %v10414
    %v10416 = vand.u32 %v10415, 4294901760
    %10417 = vmatpush.xpose.msra.mxu0 %v10416
    %v10418 = vand.u32 %v531, 4294901760
    %v10419 = vsub.f32 %v531, %v10418
    %v10420 = vand.u32 %v10419, 4294901760
    %10421 = vmatpush.xpose.msra.mxu0 %v10420
    %v10422 = vand.u32 %v527, 4294901760
    %v10423 = vsub.f32 %v527, %v10422
    %v10424 = vand.u32 %v10423, 4294901760
    %10425 = vmatpush.xpose.msra.mxu0 %v10424
    %v10426 = vand.u32 %v523, 4294901760
    %v10427 = vsub.f32 %v523, %v10426
    %v10428 = vand.u32 %v10427, 4294901760
    %10429 = vmatpush.xpose.msra.mxu0 %v10428
    %v10430 = vand.u32 %v519, 4294901760
    %v10431 = vsub.f32 %v519, %v10430
    %v10432 = vand.u32 %v10431, 4294901760
    %10433 = vmatpush.xpose.msra.mxu0 %v10432
    %v10434 = vand.u32 %v515, 4294901760
    %v10435 = vsub.f32 %v515, %v10434
    %v10436 = vand.u32 %v10435, 4294901760
    %10437 = vmatpush.xpose.msra.mxu0 %v10436
    %v10438 = vand.u32 %v511, 4294901760
    %v10439 = vsub.f32 %v511, %v10438
    %v10440 = vand.u32 %v10439, 4294901760
    %10441 = vmatpush.xpose.msra.mxu0 %v10440
    %v10442 = vand.u32 %v507, 4294901760
    %v10443 = vsub.f32 %v507, %v10442
    %v10444 = vand.u32 %v10443, 4294901760
    %10445 = vmatpush.xpose.msra.mxu0 %v10444
    %v10446 = vand.u32 %v591, 4294901760
    %10447 = vmatmul.f32.gmra.mxu0 %v10446
    %v10448 = vpop.f32.mrf.mxu0
    %v10449 = vadd.f32 %v10380, %v10448
    %10450 = vdwg.mxu0
    %v10451 = vand.u32 %v567, 4294901760
    %10452 = vmatpush.xpose.msra.mxu0 %v10451
    %v10453 = vand.u32 %v563, 4294901760
    %10454 = vmatpush.xpose.msra.mxu0 %v10453
    %v10455 = vand.u32 %v559, 4294901760
    %10456 = vmatpush.xpose.msra.mxu0 %v10455
    %v10457 = vand.u32 %v555, 4294901760
    %10458 = vmatpush.xpose.msra.mxu0 %v10457
    %v10459 = vand.u32 %v551, 4294901760
    %10460 = vmatpush.xpose.msra.mxu0 %v10459
    %v10461 = vand.u32 %v547, 4294901760
    %10462 = vmatpush.xpose.msra.mxu0 %v10461
    %v10463 = vand.u32 %v543, 4294901760
    %10464 = vmatpush.xpose.msra.mxu0 %v10463
    %v10465 = vand.u32 %v539, 4294901760
    %10466 = vmatpush.xpose.msra.mxu0 %v10465
    %v10467 = vand.u32 %v535, 4294901760
    %10468 = vmatpush.xpose.msra.mxu0 %v10467
    %v10469 = vand.u32 %v531, 4294901760
    %10470 = vmatpush.xpose.msra.mxu0 %v10469
    %v10471 = vand.u32 %v527, 4294901760
    %10472 = vmatpush.xpose.msra.mxu0 %v10471
    %v10473 = vand.u32 %v523, 4294901760
    %10474 = vmatpush.xpose.msra.mxu0 %v10473
    %v10475 = vand.u32 %v519, 4294901760
    %10476 = vmatpush.xpose.msra.mxu0 %v10475
    %v10477 = vand.u32 %v515, 4294901760
    %10478 = vmatpush.xpose.msra.mxu0 %v10477
    %v10479 = vand.u32 %v511, 4294901760
    %10480 = vmatpush.xpose.msra.mxu0 %v10479
    %v10481 = vand.u32 %v507, 4294901760
    %10482 = vmatpush.xpose.msra.mxu0 %v10481
    %v10483 = vand.u32 %v591, 4294901760
    %10484 = vmatmul.f32.gmra.mxu0 %v10483
    %v10485 = vpop.f32.mrf.mxu0
    %v10486 = vadd.f32 %v10449, %v10485
    %10487 = vdwg.mxu0
    %v10488 = vand.u32 %v568, 4294901760
    %10489 = vmatpush.xpose.msra.mxu0 %v10488
    %v10490 = vand.u32 %v564, 4294901760
    %10491 = vmatpush.xpose.msra.mxu0 %v10490
    %v10492 = vand.u32 %v560, 4294901760
    %10493 = vmatpush.xpose.msra.mxu0 %v10492
    %v10494 = vand.u32 %v556, 4294901760
    %10495 = vmatpush.xpose.msra.mxu0 %v10494
    %v10496 = vand.u32 %v552, 4294901760
    %10497 = vmatpush.xpose.msra.mxu0 %v10496
    %v10498 = vand.u32 %v548, 4294901760
    %10499 = vmatpush.xpose.msra.mxu0 %v10498
    %v10500 = vand.u32 %v544, 4294901760
    %10501 = vmatpush.xpose.msra.mxu0 %v10500
    %v10502 = vand.u32 %v540, 4294901760
    %10503 = vmatpush.xpose.msra.mxu0 %v10502
    %v10504 = vand.u32 %v536, 4294901760
    %10505 = vmatpush.xpose.msra.mxu0 %v10504
    %v10506 = vand.u32 %v532, 4294901760
    %10507 = vmatpush.xpose.msra.mxu0 %v10506
    %v10508 = vand.u32 %v528, 4294901760
    %10509 = vmatpush.xpose.msra.mxu0 %v10508
    %v10510 = vand.u32 %v524, 4294901760
    %10511 = vmatpush.xpose.msra.mxu0 %v10510
    %v10512 = vand.u32 %v520, 4294901760
    %10513 = vmatpush.xpose.msra.mxu0 %v10512
    %v10514 = vand.u32 %v516, 4294901760
    %10515 = vmatpush.xpose.msra.mxu0 %v10514
    %v10516 = vand.u32 %v512, 4294901760
    %10517 = vmatpush.xpose.msra.mxu0 %v10516
    %v10518 = vand.u32 %v508, 4294901760
    %10519 = vmatpush.xpose.msra.mxu0 %v10518
    %v10520 = vand.u32 %v592, 4294901760
    %v10521 = vsub.f32 %v592, %v10520
    %v10522 = vand.u32 %v10521, 4294901760
    %v10523 = vsub.f32 %v10521, %v10522
    %v10524 = vand.u32 %v10523, 4294901760
    %10525 = vmatmul.f32.gmra.mxu0 %v10524
    %v10526 = vpop.f32.mrf.mxu0
    %v10527 = vadd.f32 %v10486, %v10526
    %10528 = vdwg.mxu0
    %v10529 = vand.u32 %v568, 4294901760
    %v10530 = vsub.f32 %v568, %v10529
    %v10531 = vand.u32 %v10530, 4294901760
    %v10532 = vsub.f32 %v10530, %v10531
    %v10533 = vand.u32 %v10532, 4294901760
    %10534 = vmatpush.xpose.msra.mxu0 %v10533
    %v10535 = vand.u32 %v564, 4294901760
    %v10536 = vsub.f32 %v564, %v10535
    %v10537 = vand.u32 %v10536, 4294901760
    %v10538 = vsub.f32 %v10536, %v10537
    %v10539 = vand.u32 %v10538, 4294901760
    %10540 = vmatpush.xpose.msra.mxu0 %v10539
    %v10541 = vand.u32 %v560, 4294901760
    %v10542 = vsub.f32 %v560, %v10541
    %v10543 = vand.u32 %v10542, 4294901760
    %v10544 = vsub.f32 %v10542, %v10543
    %v10545 = vand.u32 %v10544, 4294901760
    %10546 = vmatpush.xpose.msra.mxu0 %v10545
    %v10547 = vand.u32 %v556, 4294901760
    %v10548 = vsub.f32 %v556, %v10547
    %v10549 = vand.u32 %v10548, 4294901760
    %v10550 = vsub.f32 %v10548, %v10549
    %v10551 = vand.u32 %v10550, 4294901760
    %10552 = vmatpush.xpose.msra.mxu0 %v10551
    %v10553 = vand.u32 %v552, 4294901760
    %v10554 = vsub.f32 %v552, %v10553
    %v10555 = vand.u32 %v10554, 4294901760
    %v10556 = vsub.f32 %v10554, %v10555
    %v10557 = vand.u32 %v10556, 4294901760
    %10558 = vmatpush.xpose.msra.mxu0 %v10557
    %v10559 = vand.u32 %v548, 4294901760
    %v10560 = vsub.f32 %v548, %v10559
    %v10561 = vand.u32 %v10560, 4294901760
    %v10562 = vsub.f32 %v10560, %v10561
    %v10563 = vand.u32 %v10562, 4294901760
    %10564 = vmatpush.xpose.msra.mxu0 %v10563
    %v10565 = vand.u32 %v544, 4294901760
    %v10566 = vsub.f32 %v544, %v10565
    %v10567 = vand.u32 %v10566, 4294901760
    %v10568 = vsub.f32 %v10566, %v10567
    %v10569 = vand.u32 %v10568, 4294901760
    %10570 = vmatpush.xpose.msra.mxu0 %v10569
    %v10571 = vand.u32 %v540, 4294901760
    %v10572 = vsub.f32 %v540, %v10571
    %v10573 = vand.u32 %v10572, 4294901760
    %v10574 = vsub.f32 %v10572, %v10573
    %v10575 = vand.u32 %v10574, 4294901760
    %10576 = vmatpush.xpose.msra.mxu0 %v10575
    %v10577 = vand.u32 %v536, 4294901760
    %v10578 = vsub.f32 %v536, %v10577
    %v10579 = vand.u32 %v10578, 4294901760
    %v10580 = vsub.f32 %v10578, %v10579
    %v10581 = vand.u32 %v10580, 4294901760
    %10582 = vmatpush.xpose.msra.mxu0 %v10581
    %v10583 = vand.u32 %v532, 4294901760
    %v10584 = vsub.f32 %v532, %v10583
    %v10585 = vand.u32 %v10584, 4294901760
    %v10586 = vsub.f32 %v10584, %v10585
    %v10587 = vand.u32 %v10586, 4294901760
    %10588 = vmatpush.xpose.msra.mxu0 %v10587
    %v10589 = vand.u32 %v528, 4294901760
    %v10590 = vsub.f32 %v528, %v10589
    %v10591 = vand.u32 %v10590, 4294901760
    %v10592 = vsub.f32 %v10590, %v10591
    %v10593 = vand.u32 %v10592, 4294901760
    %10594 = vmatpush.xpose.msra.mxu0 %v10593
    %v10595 = vand.u32 %v524, 4294901760
    %v10596 = vsub.f32 %v524, %v10595
    %v10597 = vand.u32 %v10596, 4294901760
    %v10598 = vsub.f32 %v10596, %v10597
    %v10599 = vand.u32 %v10598, 4294901760
    %10600 = vmatpush.xpose.msra.mxu0 %v10599
    %v10601 = vand.u32 %v520, 4294901760
    %v10602 = vsub.f32 %v520, %v10601
    %v10603 = vand.u32 %v10602, 4294901760
    %v10604 = vsub.f32 %v10602, %v10603
    %v10605 = vand.u32 %v10604, 4294901760
    %10606 = vmatpush.xpose.msra.mxu0 %v10605
    %v10607 = vand.u32 %v516, 4294901760
    %v10608 = vsub.f32 %v516, %v10607
    %v10609 = vand.u32 %v10608, 4294901760
    %v10610 = vsub.f32 %v10608, %v10609
    %v10611 = vand.u32 %v10610, 4294901760
    %10612 = vmatpush.xpose.msra.mxu0 %v10611
    %v10613 = vand.u32 %v512, 4294901760
    %v10614 = vsub.f32 %v512, %v10613
    %v10615 = vand.u32 %v10614, 4294901760
    %v10616 = vsub.f32 %v10614, %v10615
    %v10617 = vand.u32 %v10616, 4294901760
    %10618 = vmatpush.xpose.msra.mxu0 %v10617
    %v10619 = vand.u32 %v508, 4294901760
    %v10620 = vsub.f32 %v508, %v10619
    %v10621 = vand.u32 %v10620, 4294901760
    %v10622 = vsub.f32 %v10620, %v10621
    %v10623 = vand.u32 %v10622, 4294901760
    %10624 = vmatpush.xpose.msra.mxu0 %v10623
    %v10625 = vand.u32 %v592, 4294901760
    %10626 = vmatmul.f32.gmra.mxu0 %v10625
    %v10627 = vpop.f32.mrf.mxu0
    %v10628 = vadd.f32 %v10527, %v10627
    %10629 = vdwg.mxu0
    %v10630 = vand.u32 %v568, 4294901760
    %v10631 = vsub.f32 %v568, %v10630
    %10632 = vmatpush.xpose.msra.mxu0 %v10631
    %v10633 = vand.u32 %v564, 4294901760
    %v10634 = vsub.f32 %v564, %v10633
    %10635 = vmatpush.xpose.msra.mxu0 %v10634
    %v10636 = vand.u32 %v560, 4294901760
    %v10637 = vsub.f32 %v560, %v10636
    %10638 = vmatpush.xpose.msra.mxu0 %v10637
    %v10639 = vand.u32 %v556, 4294901760
    %v10640 = vsub.f32 %v556, %v10639
    %10641 = vmatpush.xpose.msra.mxu0 %v10640
    %v10642 = vand.u32 %v552, 4294901760
    %v10643 = vsub.f32 %v552, %v10642
    %10644 = vmatpush.xpose.msra.mxu0 %v10643
    %v10645 = vand.u32 %v548, 4294901760
    %v10646 = vsub.f32 %v548, %v10645
    %10647 = vmatpush.xpose.msra.mxu0 %v10646
    %v10648 = vand.u32 %v544, 4294901760
    %v10649 = vsub.f32 %v544, %v10648
    %10650 = vmatpush.xpose.msra.mxu0 %v10649
    %v10651 = vand.u32 %v540, 4294901760
    %v10652 = vsub.f32 %v540, %v10651
    %10653 = vmatpush.xpose.msra.mxu0 %v10652
    %v10654 = vand.u32 %v536, 4294901760
    %v10655 = vsub.f32 %v536, %v10654
    %10656 = vmatpush.xpose.msra.mxu0 %v10655
    %v10657 = vand.u32 %v532, 4294901760
    %v10658 = vsub.f32 %v532, %v10657
    %10659 = vmatpush.xpose.msra.mxu0 %v10658
    %v10660 = vand.u32 %v528, 4294901760
    %v10661 = vsub.f32 %v528, %v10660
    %10662 = vmatpush.xpose.msra.mxu0 %v10661
    %v10663 = vand.u32 %v524, 4294901760
    %v10664 = vsub.f32 %v524, %v10663
    %10665 = vmatpush.xpose.msra.mxu0 %v10664
    %v10666 = vand.u32 %v520, 4294901760
    %v10667 = vsub.f32 %v520, %v10666
    %10668 = vmatpush.xpose.msra.mxu0 %v10667
    %v10669 = vand.u32 %v516, 4294901760
    %v10670 = vsub.f32 %v516, %v10669
    %10671 = vmatpush.xpose.msra.mxu0 %v10670
    %v10672 = vand.u32 %v512, 4294901760
    %v10673 = vsub.f32 %v512, %v10672
    %10674 = vmatpush.xpose.msra.mxu0 %v10673
    %v10675 = vand.u32 %v508, 4294901760
    %v10676 = vsub.f32 %v508, %v10675
    %10677 = vmatpush.xpose.msra.mxu0 %v10676
    %v10678 = vand.u32 %v592, 4294901760
    %v10679 = vsub.f32 %v592, %v10678
    %10680 = vmatmul.f32.gmra.mxu0 %v10679
    %v10681 = vpop.f32.mrf.mxu0
    %v10682 = vadd.f32 %v10628, %v10681
    %10683 = vdwg.mxu0
    %v10684 = vand.u32 %v568, 4294901760
    %10685 = vmatpush.xpose.msra.mxu0 %v10684
    %v10686 = vand.u32 %v564, 4294901760
    %10687 = vmatpush.xpose.msra.mxu0 %v10686
    %v10688 = vand.u32 %v560, 4294901760
    %10689 = vmatpush.xpose.msra.mxu0 %v10688
    %v10690 = vand.u32 %v556, 4294901760
    %10691 = vmatpush.xpose.msra.mxu0 %v10690
    %v10692 = vand.u32 %v552, 4294901760
    %10693 = vmatpush.xpose.msra.mxu0 %v10692
    %v10694 = vand.u32 %v548, 4294901760
    %10695 = vmatpush.xpose.msra.mxu0 %v10694
    %v10696 = vand.u32 %v544, 4294901760
    %10697 = vmatpush.xpose.msra.mxu0 %v10696
    %v10698 = vand.u32 %v540, 4294901760
    %10699 = vmatpush.xpose.msra.mxu0 %v10698
    %v10700 = vand.u32 %v536, 4294901760
    %10701 = vmatpush.xpose.msra.mxu0 %v10700
    %v10702 = vand.u32 %v532, 4294901760
    %10703 = vmatpush.xpose.msra.mxu0 %v10702
    %v10704 = vand.u32 %v528, 4294901760
    %10705 = vmatpush.xpose.msra.mxu0 %v10704
    %v10706 = vand.u32 %v524, 4294901760
    %10707 = vmatpush.xpose.msra.mxu0 %v10706
    %v10708 = vand.u32 %v520, 4294901760
    %10709 = vmatpush.xpose.msra.mxu0 %v10708
    %v10710 = vand.u32 %v516, 4294901760
    %10711 = vmatpush.xpose.msra.mxu0 %v10710
    %v10712 = vand.u32 %v512, 4294901760
    %10713 = vmatpush.xpose.msra.mxu0 %v10712
    %v10714 = vand.u32 %v508, 4294901760
    %10715 = vmatpush.xpose.msra.mxu0 %v10714
    %v10716 = vand.u32 %v592, 4294901760
    %v10717 = vsub.f32 %v592, %v10716
    %v10718 = vand.u32 %v10717, 4294901760
    %10719 = vmatmul.f32.gmra.mxu0 %v10718
    %v10720 = vpop.f32.mrf.mxu0
    %v10721 = vadd.f32 %v10682, %v10720
    %10722 = vdwg.mxu0
    %v10723 = vand.u32 %v568, 4294901760
    %v10724 = vsub.f32 %v568, %v10723
    %v10725 = vand.u32 %v10724, 4294901760
    %10726 = vmatpush.xpose.msra.mxu0 %v10725
    %v10727 = vand.u32 %v564, 4294901760
    %v10728 = vsub.f32 %v564, %v10727
    %v10729 = vand.u32 %v10728, 4294901760
    %10730 = vmatpush.xpose.msra.mxu0 %v10729
    %v10731 = vand.u32 %v560, 4294901760
    %v10732 = vsub.f32 %v560, %v10731
    %v10733 = vand.u32 %v10732, 4294901760
    %10734 = vmatpush.xpose.msra.mxu0 %v10733
    %v10735 = vand.u32 %v556, 4294901760
    %v10736 = vsub.f32 %v556, %v10735
    %v10737 = vand.u32 %v10736, 4294901760
    %10738 = vmatpush.xpose.msra.mxu0 %v10737
    %v10739 = vand.u32 %v552, 4294901760
    %v10740 = vsub.f32 %v552, %v10739
    %v10741 = vand.u32 %v10740, 4294901760
    %10742 = vmatpush.xpose.msra.mxu0 %v10741
    %v10743 = vand.u32 %v548, 4294901760
    %v10744 = vsub.f32 %v548, %v10743
    %v10745 = vand.u32 %v10744, 4294901760
    %10746 = vmatpush.xpose.msra.mxu0 %v10745
    %v10747 = vand.u32 %v544, 4294901760
    %v10748 = vsub.f32 %v544, %v10747
    %v10749 = vand.u32 %v10748, 4294901760
    %10750 = vmatpush.xpose.msra.mxu0 %v10749
    %v10751 = vand.u32 %v540, 4294901760
    %v10752 = vsub.f32 %v540, %v10751
    %v10753 = vand.u32 %v10752, 4294901760
    %10754 = vmatpush.xpose.msra.mxu0 %v10753
    %v10755 = vand.u32 %v536, 4294901760
    %v10756 = vsub.f32 %v536, %v10755
    %v10757 = vand.u32 %v10756, 4294901760
    %10758 = vmatpush.xpose.msra.mxu0 %v10757
    %v10759 = vand.u32 %v532, 4294901760
    %v10760 = vsub.f32 %v532, %v10759
    %v10761 = vand.u32 %v10760, 4294901760
    %10762 = vmatpush.xpose.msra.mxu0 %v10761
    %v10763 = vand.u32 %v528, 4294901760
    %v10764 = vsub.f32 %v528, %v10763
    %v10765 = vand.u32 %v10764, 4294901760
    %10766 = vmatpush.xpose.msra.mxu0 %v10765
    %v10767 = vand.u32 %v524, 4294901760
    %v10768 = vsub.f32 %v524, %v10767
    %v10769 = vand.u32 %v10768, 4294901760
    %10770 = vmatpush.xpose.msra.mxu0 %v10769
    %v10771 = vand.u32 %v520, 4294901760
    %v10772 = vsub.f32 %v520, %v10771
    %v10773 = vand.u32 %v10772, 4294901760
    %10774 = vmatpush.xpose.msra.mxu0 %v10773
    %v10775 = vand.u32 %v516, 4294901760
    %v10776 = vsub.f32 %v516, %v10775
    %v10777 = vand.u32 %v10776, 4294901760
    %10778 = vmatpush.xpose.msra.mxu0 %v10777
    %v10779 = vand.u32 %v512, 4294901760
    %v10780 = vsub.f32 %v512, %v10779
    %v10781 = vand.u32 %v10780, 4294901760
    %10782 = vmatpush.xpose.msra.mxu0 %v10781
    %v10783 = vand.u32 %v508, 4294901760
    %v10784 = vsub.f32 %v508, %v10783
    %v10785 = vand.u32 %v10784, 4294901760
    %10786 = vmatpush.xpose.msra.mxu0 %v10785
    %v10787 = vand.u32 %v592, 4294901760
    %10788 = vmatmul.f32.gmra.mxu0 %v10787
    %v10789 = vpop.f32.mrf.mxu0
    %v10790 = vadd.f32 %v10721, %v10789
    %10791 = vdwg.mxu0
    %v10792 = vand.u32 %v568, 4294901760
    %10793 = vmatpush.xpose.msra.mxu0 %v10792
    %v10794 = vand.u32 %v564, 4294901760
    %10795 = vmatpush.xpose.msra.mxu0 %v10794
    %v10796 = vand.u32 %v560, 4294901760
    %10797 = vmatpush.xpose.msra.mxu0 %v10796
    %v10798 = vand.u32 %v556, 4294901760
    %10799 = vmatpush.xpose.msra.mxu0 %v10798
    %v10800 = vand.u32 %v552, 4294901760
    %10801 = vmatpush.xpose.msra.mxu0 %v10800
    %v10802 = vand.u32 %v548, 4294901760
    %10803 = vmatpush.xpose.msra.mxu0 %v10802
    %v10804 = vand.u32 %v544, 4294901760
    %10805 = vmatpush.xpose.msra.mxu0 %v10804
    %v10806 = vand.u32 %v540, 4294901760
    %10807 = vmatpush.xpose.msra.mxu0 %v10806
    %v10808 = vand.u32 %v536, 4294901760
    %10809 = vmatpush.xpose.msra.mxu0 %v10808
    %v10810 = vand.u32 %v532, 4294901760
    %10811 = vmatpush.xpose.msra.mxu0 %v10810
    %v10812 = vand.u32 %v528, 4294901760
    %10813 = vmatpush.xpose.msra.mxu0 %v10812
    %v10814 = vand.u32 %v524, 4294901760
    %10815 = vmatpush.xpose.msra.mxu0 %v10814
    %v10816 = vand.u32 %v520, 4294901760
    %10817 = vmatpush.xpose.msra.mxu0 %v10816
    %v10818 = vand.u32 %v516, 4294901760
    %10819 = vmatpush.xpose.msra.mxu0 %v10818
    %v10820 = vand.u32 %v512, 4294901760
    %10821 = vmatpush.xpose.msra.mxu0 %v10820
    %v10822 = vand.u32 %v508, 4294901760
    %10823 = vmatpush.xpose.msra.mxu0 %v10822
    %v10824 = vand.u32 %v592, 4294901760
    %10825 = vmatmul.f32.gmra.mxu0 %v10824
    %v10826 = vpop.f32.mrf.mxu0
    %v10827 = vadd.f32 %v10790, %v10826
    %10828 = vdwg.mxu0
    %v10829 = vand.u32 %v569, 4294901760
    %10830 = vmatpush.xpose.msra.mxu0 %v10829
    %v10831 = vand.u32 %v565, 4294901760
    %10832 = vmatpush.xpose.msra.mxu0 %v10831
    %v10833 = vand.u32 %v561, 4294901760
    %10834 = vmatpush.xpose.msra.mxu0 %v10833
    %v10835 = vand.u32 %v557, 4294901760
    %10836 = vmatpush.xpose.msra.mxu0 %v10835
    %v10837 = vand.u32 %v553, 4294901760
    %10838 = vmatpush.xpose.msra.mxu0 %v10837
    %v10839 = vand.u32 %v549, 4294901760
    %10840 = vmatpush.xpose.msra.mxu0 %v10839
    %v10841 = vand.u32 %v545, 4294901760
    %10842 = vmatpush.xpose.msra.mxu0 %v10841
    %v10843 = vand.u32 %v541, 4294901760
    %10844 = vmatpush.xpose.msra.mxu0 %v10843
    %v10845 = vand.u32 %v537, 4294901760
    %10846 = vmatpush.xpose.msra.mxu0 %v10845
    %v10847 = vand.u32 %v533, 4294901760
    %10848 = vmatpush.xpose.msra.mxu0 %v10847
    %v10849 = vand.u32 %v529, 4294901760
    %10850 = vmatpush.xpose.msra.mxu0 %v10849
    %v10851 = vand.u32 %v525, 4294901760
    %10852 = vmatpush.xpose.msra.mxu0 %v10851
    %v10853 = vand.u32 %v521, 4294901760
    %10854 = vmatpush.xpose.msra.mxu0 %v10853
    %v10855 = vand.u32 %v517, 4294901760
    %10856 = vmatpush.xpose.msra.mxu0 %v10855
    %v10857 = vand.u32 %v513, 4294901760
    %10858 = vmatpush.xpose.msra.mxu0 %v10857
    %v10859 = vand.u32 %v509, 4294901760
    %10860 = vmatpush.xpose.msra.mxu0 %v10859
    %v10861 = vand.u32 %v593, 4294901760
    %v10862 = vsub.f32 %v593, %v10861
    %v10863 = vand.u32 %v10862, 4294901760
    %v10864 = vsub.f32 %v10862, %v10863
    %v10865 = vand.u32 %v10864, 4294901760
    %10866 = vmatmul.f32.gmra.mxu0 %v10865
    %v10867 = vpop.f32.mrf.mxu0
    %v10868 = vadd.f32 %v10827, %v10867
    %10869 = vdwg.mxu0
    %v10870 = vand.u32 %v569, 4294901760
    %v10871 = vsub.f32 %v569, %v10870
    %v10872 = vand.u32 %v10871, 4294901760
    %v10873 = vsub.f32 %v10871, %v10872
    %v10874 = vand.u32 %v10873, 4294901760
    %10875 = vmatpush.xpose.msra.mxu0 %v10874
    %v10876 = vand.u32 %v565, 4294901760
    %v10877 = vsub.f32 %v565, %v10876
    %v10878 = vand.u32 %v10877, 4294901760
    %v10879 = vsub.f32 %v10877, %v10878
    %v10880 = vand.u32 %v10879, 4294901760
    %10881 = vmatpush.xpose.msra.mxu0 %v10880
    %v10882 = vand.u32 %v561, 4294901760
    %v10883 = vsub.f32 %v561, %v10882
    %v10884 = vand.u32 %v10883, 4294901760
    %v10885 = vsub.f32 %v10883, %v10884
    %v10886 = vand.u32 %v10885, 4294901760
    %10887 = vmatpush.xpose.msra.mxu0 %v10886
    %v10888 = vand.u32 %v557, 4294901760
    %v10889 = vsub.f32 %v557, %v10888
    %v10890 = vand.u32 %v10889, 4294901760
    %v10891 = vsub.f32 %v10889, %v10890
    %v10892 = vand.u32 %v10891, 4294901760
    %10893 = vmatpush.xpose.msra.mxu0 %v10892
    %v10894 = vand.u32 %v553, 4294901760
    %v10895 = vsub.f32 %v553, %v10894
    %v10896 = vand.u32 %v10895, 4294901760
    %v10897 = vsub.f32 %v10895, %v10896
    %v10898 = vand.u32 %v10897, 4294901760
    %10899 = vmatpush.xpose.msra.mxu0 %v10898
    %v10900 = vand.u32 %v549, 4294901760
    %v10901 = vsub.f32 %v549, %v10900
    %v10902 = vand.u32 %v10901, 4294901760
    %v10903 = vsub.f32 %v10901, %v10902
    %v10904 = vand.u32 %v10903, 4294901760
    %10905 = vmatpush.xpose.msra.mxu0 %v10904
    %v10906 = vand.u32 %v545, 4294901760
    %v10907 = vsub.f32 %v545, %v10906
    %v10908 = vand.u32 %v10907, 4294901760
    %v10909 = vsub.f32 %v10907, %v10908
    %v10910 = vand.u32 %v10909, 4294901760
    %10911 = vmatpush.xpose.msra.mxu0 %v10910
    %v10912 = vand.u32 %v541, 4294901760
    %v10913 = vsub.f32 %v541, %v10912
    %v10914 = vand.u32 %v10913, 4294901760
    %v10915 = vsub.f32 %v10913, %v10914
    %v10916 = vand.u32 %v10915, 4294901760
    %10917 = vmatpush.xpose.msra.mxu0 %v10916
    %v10918 = vand.u32 %v537, 4294901760
    %v10919 = vsub.f32 %v537, %v10918
    %v10920 = vand.u32 %v10919, 4294901760
    %v10921 = vsub.f32 %v10919, %v10920
    %v10922 = vand.u32 %v10921, 4294901760
    %10923 = vmatpush.xpose.msra.mxu0 %v10922
    %v10924 = vand.u32 %v533, 4294901760
    %v10925 = vsub.f32 %v533, %v10924
    %v10926 = vand.u32 %v10925, 4294901760
    %v10927 = vsub.f32 %v10925, %v10926
    %v10928 = vand.u32 %v10927, 4294901760
    %10929 = vmatpush.xpose.msra.mxu0 %v10928
    %v10930 = vand.u32 %v529, 4294901760
    %v10931 = vsub.f32 %v529, %v10930
    %v10932 = vand.u32 %v10931, 4294901760
    %v10933 = vsub.f32 %v10931, %v10932
    %v10934 = vand.u32 %v10933, 4294901760
    %10935 = vmatpush.xpose.msra.mxu0 %v10934
    %v10936 = vand.u32 %v525, 4294901760
    %v10937 = vsub.f32 %v525, %v10936
    %v10938 = vand.u32 %v10937, 4294901760
    %v10939 = vsub.f32 %v10937, %v10938
    %v10940 = vand.u32 %v10939, 4294901760
    %10941 = vmatpush.xpose.msra.mxu0 %v10940
    %v10942 = vand.u32 %v521, 4294901760
    %v10943 = vsub.f32 %v521, %v10942
    %v10944 = vand.u32 %v10943, 4294901760
    %v10945 = vsub.f32 %v10943, %v10944
    %v10946 = vand.u32 %v10945, 4294901760
    %10947 = vmatpush.xpose.msra.mxu0 %v10946
    %v10948 = vand.u32 %v517, 4294901760
    %v10949 = vsub.f32 %v517, %v10948
    %v10950 = vand.u32 %v10949, 4294901760
    %v10951 = vsub.f32 %v10949, %v10950
    %v10952 = vand.u32 %v10951, 4294901760
    %10953 = vmatpush.xpose.msra.mxu0 %v10952
    %v10954 = vand.u32 %v513, 4294901760
    %v10955 = vsub.f32 %v513, %v10954
    %v10956 = vand.u32 %v10955, 4294901760
    %v10957 = vsub.f32 %v10955, %v10956
    %v10958 = vand.u32 %v10957, 4294901760
    %10959 = vmatpush.xpose.msra.mxu0 %v10958
    %v10960 = vand.u32 %v509, 4294901760
    %v10961 = vsub.f32 %v509, %v10960
    %v10962 = vand.u32 %v10961, 4294901760
    %v10963 = vsub.f32 %v10961, %v10962
    %v10964 = vand.u32 %v10963, 4294901760
    %10965 = vmatpush.xpose.msra.mxu0 %v10964
    %v10966 = vand.u32 %v593, 4294901760
    %10967 = vmatmul.f32.gmra.mxu0 %v10966
    %v10968 = vpop.f32.mrf.mxu0
    %v10969 = vadd.f32 %v10868, %v10968
    %10970 = vdwg.mxu0
    %v10971 = vand.u32 %v569, 4294901760
    %v10972 = vsub.f32 %v569, %v10971
    %10973 = vmatpush.xpose.msra.mxu0 %v10972
    %v10974 = vand.u32 %v565, 4294901760
    %v10975 = vsub.f32 %v565, %v10974
    %10976 = vmatpush.xpose.msra.mxu0 %v10975
    %v10977 = vand.u32 %v561, 4294901760
    %v10978 = vsub.f32 %v561, %v10977
    %10979 = vmatpush.xpose.msra.mxu0 %v10978
    %v10980 = vand.u32 %v557, 4294901760
    %v10981 = vsub.f32 %v557, %v10980
    %10982 = vmatpush.xpose.msra.mxu0 %v10981
    %v10983 = vand.u32 %v553, 4294901760
    %v10984 = vsub.f32 %v553, %v10983
    %10985 = vmatpush.xpose.msra.mxu0 %v10984
    %v10986 = vand.u32 %v549, 4294901760
    %v10987 = vsub.f32 %v549, %v10986
    %10988 = vmatpush.xpose.msra.mxu0 %v10987
    %v10989 = vand.u32 %v545, 4294901760
    %v10990 = vsub.f32 %v545, %v10989
    %10991 = vmatpush.xpose.msra.mxu0 %v10990
    %v10992 = vand.u32 %v541, 4294901760
    %v10993 = vsub.f32 %v541, %v10992
    %10994 = vmatpush.xpose.msra.mxu0 %v10993
    %v10995 = vand.u32 %v537, 4294901760
    %v10996 = vsub.f32 %v537, %v10995
    %10997 = vmatpush.xpose.msra.mxu0 %v10996
    %v10998 = vand.u32 %v533, 4294901760
    %v10999 = vsub.f32 %v533, %v10998
    %11000 = vmatpush.xpose.msra.mxu0 %v10999
    %v11001 = vand.u32 %v529, 4294901760
    %v11002 = vsub.f32 %v529, %v11001
    %11003 = vmatpush.xpose.msra.mxu0 %v11002
    %v11004 = vand.u32 %v525, 4294901760
    %v11005 = vsub.f32 %v525, %v11004
    %11006 = vmatpush.xpose.msra.mxu0 %v11005
    %v11007 = vand.u32 %v521, 4294901760
    %v11008 = vsub.f32 %v521, %v11007
    %11009 = vmatpush.xpose.msra.mxu0 %v11008
    %v11010 = vand.u32 %v517, 4294901760
    %v11011 = vsub.f32 %v517, %v11010
    %11012 = vmatpush.xpose.msra.mxu0 %v11011
    %v11013 = vand.u32 %v513, 4294901760
    %v11014 = vsub.f32 %v513, %v11013
    %11015 = vmatpush.xpose.msra.mxu0 %v11014
    %v11016 = vand.u32 %v509, 4294901760
    %v11017 = vsub.f32 %v509, %v11016
    %11018 = vmatpush.xpose.msra.mxu0 %v11017
    %v11019 = vand.u32 %v593, 4294901760
    %v11020 = vsub.f32 %v593, %v11019
    %11021 = vmatmul.f32.gmra.mxu0 %v11020
    %v11022 = vpop.f32.mrf.mxu0
    %v11023 = vadd.f32 %v10969, %v11022
    %11024 = vdwg.mxu0
    %v11025 = vand.u32 %v569, 4294901760
    %11026 = vmatpush.xpose.msra.mxu0 %v11025
    %v11027 = vand.u32 %v565, 4294901760
    %11028 = vmatpush.xpose.msra.mxu0 %v11027
    %v11029 = vand.u32 %v561, 4294901760
    %11030 = vmatpush.xpose.msra.mxu0 %v11029
    %v11031 = vand.u32 %v557, 4294901760
    %11032 = vmatpush.xpose.msra.mxu0 %v11031
    %v11033 = vand.u32 %v553, 4294901760
    %11034 = vmatpush.xpose.msra.mxu0 %v11033
    %v11035 = vand.u32 %v549, 4294901760
    %11036 = vmatpush.xpose.msra.mxu0 %v11035
    %v11037 = vand.u32 %v545, 4294901760
    %11038 = vmatpush.xpose.msra.mxu0 %v11037
    %v11039 = vand.u32 %v541, 4294901760
    %11040 = vmatpush.xpose.msra.mxu0 %v11039
    %v11041 = vand.u32 %v537, 4294901760
    %11042 = vmatpush.xpose.msra.mxu0 %v11041
    %v11043 = vand.u32 %v533, 4294901760
    %11044 = vmatpush.xpose.msra.mxu0 %v11043
    %v11045 = vand.u32 %v529, 4294901760
    %11046 = vmatpush.xpose.msra.mxu0 %v11045
    %v11047 = vand.u32 %v525, 4294901760
    %11048 = vmatpush.xpose.msra.mxu0 %v11047
    %v11049 = vand.u32 %v521, 4294901760
    %11050 = vmatpush.xpose.msra.mxu0 %v11049
    %v11051 = vand.u32 %v517, 4294901760
    %11052 = vmatpush.xpose.msra.mxu0 %v11051
    %v11053 = vand.u32 %v513, 4294901760
    %11054 = vmatpush.xpose.msra.mxu0 %v11053
    %v11055 = vand.u32 %v509, 4294901760
    %11056 = vmatpush.xpose.msra.mxu0 %v11055
    %v11057 = vand.u32 %v593, 4294901760
    %v11058 = vsub.f32 %v593, %v11057
    %v11059 = vand.u32 %v11058, 4294901760
    %11060 = vmatmul.f32.gmra.mxu0 %v11059
    %v11061 = vpop.f32.mrf.mxu0
    %v11062 = vadd.f32 %v11023, %v11061
    %11063 = vdwg.mxu0
    %v11064 = vand.u32 %v569, 4294901760
    %v11065 = vsub.f32 %v569, %v11064
    %v11066 = vand.u32 %v11065, 4294901760
    %11067 = vmatpush.xpose.msra.mxu0 %v11066
    %v11068 = vand.u32 %v565, 4294901760
    %v11069 = vsub.f32 %v565, %v11068
    %v11070 = vand.u32 %v11069, 4294901760
    %11071 = vmatpush.xpose.msra.mxu0 %v11070
    %v11072 = vand.u32 %v561, 4294901760
    %v11073 = vsub.f32 %v561, %v11072
    %v11074 = vand.u32 %v11073, 4294901760
    %11075 = vmatpush.xpose.msra.mxu0 %v11074
    %v11076 = vand.u32 %v557, 4294901760
    %v11077 = vsub.f32 %v557, %v11076
    %v11078 = vand.u32 %v11077, 4294901760
    %11079 = vmatpush.xpose.msra.mxu0 %v11078
    %v11080 = vand.u32 %v553, 4294901760
    %v11081 = vsub.f32 %v553, %v11080
    %v11082 = vand.u32 %v11081, 4294901760
    %11083 = vmatpush.xpose.msra.mxu0 %v11082
    %v11084 = vand.u32 %v549, 4294901760
    %v11085 = vsub.f32 %v549, %v11084
    %v11086 = vand.u32 %v11085, 4294901760
    %11087 = vmatpush.xpose.msra.mxu0 %v11086
    %v11088 = vand.u32 %v545, 4294901760
    %v11089 = vsub.f32 %v545, %v11088
    %v11090 = vand.u32 %v11089, 4294901760
    %11091 = vmatpush.xpose.msra.mxu0 %v11090
    %v11092 = vand.u32 %v541, 4294901760
    %v11093 = vsub.f32 %v541, %v11092
    %v11094 = vand.u32 %v11093, 4294901760
    %11095 = vmatpush.xpose.msra.mxu0 %v11094
    %v11096 = vand.u32 %v537, 4294901760
    %v11097 = vsub.f32 %v537, %v11096
    %v11098 = vand.u32 %v11097, 4294901760
    %11099 = vmatpush.xpose.msra.mxu0 %v11098
    %v11100 = vand.u32 %v533, 4294901760
    %v11101 = vsub.f32 %v533, %v11100
    %v11102 = vand.u32 %v11101, 4294901760
    %11103 = vmatpush.xpose.msra.mxu0 %v11102
    %v11104 = vand.u32 %v529, 4294901760
    %v11105 = vsub.f32 %v529, %v11104
    %v11106 = vand.u32 %v11105, 4294901760
    %11107 = vmatpush.xpose.msra.mxu0 %v11106
    %v11108 = vand.u32 %v525, 4294901760
    %v11109 = vsub.f32 %v525, %v11108
    %v11110 = vand.u32 %v11109, 4294901760
    %11111 = vmatpush.xpose.msra.mxu0 %v11110
    %v11112 = vand.u32 %v521, 4294901760
    %v11113 = vsub.f32 %v521, %v11112
    %v11114 = vand.u32 %v11113, 4294901760
    %11115 = vmatpush.xpose.msra.mxu0 %v11114
    %v11116 = vand.u32 %v517, 4294901760
    %v11117 = vsub.f32 %v517, %v11116
    %v11118 = vand.u32 %v11117, 4294901760
    %11119 = vmatpush.xpose.msra.mxu0 %v11118
    %v11120 = vand.u32 %v513, 4294901760
    %v11121 = vsub.f32 %v513, %v11120
    %v11122 = vand.u32 %v11121, 4294901760
    %11123 = vmatpush.xpose.msra.mxu0 %v11122
    %v11124 = vand.u32 %v509, 4294901760
    %v11125 = vsub.f32 %v509, %v11124
    %v11126 = vand.u32 %v11125, 4294901760
    %11127 = vmatpush.xpose.msra.mxu0 %v11126
    %v11128 = vand.u32 %v593, 4294901760
    %11129 = vmatmul.f32.gmra.mxu0 %v11128
    %v11130 = vpop.f32.mrf.mxu0
    %v11131 = vadd.f32 %v11062, %v11130
    %11132 = vdwg.mxu0
    %v11133 = vand.u32 %v569, 4294901760
    %11134 = vmatpush.xpose.msra.mxu0 %v11133
    %v11135 = vand.u32 %v565, 4294901760
    %11136 = vmatpush.xpose.msra.mxu0 %v11135
    %v11137 = vand.u32 %v561, 4294901760
    %11138 = vmatpush.xpose.msra.mxu0 %v11137
    %v11139 = vand.u32 %v557, 4294901760
    %11140 = vmatpush.xpose.msra.mxu0 %v11139
    %v11141 = vand.u32 %v553, 4294901760
    %11142 = vmatpush.xpose.msra.mxu0 %v11141
    %v11143 = vand.u32 %v549, 4294901760
    %11144 = vmatpush.xpose.msra.mxu0 %v11143
    %v11145 = vand.u32 %v545, 4294901760
    %11146 = vmatpush.xpose.msra.mxu0 %v11145
    %v11147 = vand.u32 %v541, 4294901760
    %11148 = vmatpush.xpose.msra.mxu0 %v11147
    %v11149 = vand.u32 %v537, 4294901760
    %11150 = vmatpush.xpose.msra.mxu0 %v11149
    %v11151 = vand.u32 %v533, 4294901760
    %11152 = vmatpush.xpose.msra.mxu0 %v11151
    %v11153 = vand.u32 %v529, 4294901760
    %11154 = vmatpush.xpose.msra.mxu0 %v11153
    %v11155 = vand.u32 %v525, 4294901760
    %11156 = vmatpush.xpose.msra.mxu0 %v11155
    %v11157 = vand.u32 %v521, 4294901760
    %11158 = vmatpush.xpose.msra.mxu0 %v11157
    %v11159 = vand.u32 %v517, 4294901760
    %11160 = vmatpush.xpose.msra.mxu0 %v11159
    %v11161 = vand.u32 %v513, 4294901760
    %11162 = vmatpush.xpose.msra.mxu0 %v11161
    %v11163 = vand.u32 %v509, 4294901760
    %11164 = vmatpush.xpose.msra.mxu0 %v11163
    %v11165 = vand.u32 %v593, 4294901760
    %11166 = vmatmul.f32.gmra.mxu0 %v11165
    %v11167 = vpop.f32.mrf.mxu0
    %v11168 = vadd.f32 %v11131, %v11167
    %11169 = vdwg.mxu0
    %v11170 = vand.u32 %v570, 4294901760
    %11171 = vmatpush.xpose.msra.mxu0 %v11170
    %v11172 = vand.u32 %v566, 4294901760
    %11173 = vmatpush.xpose.msra.mxu0 %v11172
    %v11174 = vand.u32 %v562, 4294901760
    %11175 = vmatpush.xpose.msra.mxu0 %v11174
    %v11176 = vand.u32 %v558, 4294901760
    %11177 = vmatpush.xpose.msra.mxu0 %v11176
    %v11178 = vand.u32 %v554, 4294901760
    %11179 = vmatpush.xpose.msra.mxu0 %v11178
    %v11180 = vand.u32 %v550, 4294901760
    %11181 = vmatpush.xpose.msra.mxu0 %v11180
    %v11182 = vand.u32 %v546, 4294901760
    %11183 = vmatpush.xpose.msra.mxu0 %v11182
    %v11184 = vand.u32 %v542, 4294901760
    %11185 = vmatpush.xpose.msra.mxu0 %v11184
    %v11186 = vand.u32 %v538, 4294901760
    %11187 = vmatpush.xpose.msra.mxu0 %v11186
    %v11188 = vand.u32 %v534, 4294901760
    %11189 = vmatpush.xpose.msra.mxu0 %v11188
    %v11190 = vand.u32 %v530, 4294901760
    %11191 = vmatpush.xpose.msra.mxu0 %v11190
    %v11192 = vand.u32 %v526, 4294901760
    %11193 = vmatpush.xpose.msra.mxu0 %v11192
    %v11194 = vand.u32 %v522, 4294901760
    %11195 = vmatpush.xpose.msra.mxu0 %v11194
    %v11196 = vand.u32 %v518, 4294901760
    %11197 = vmatpush.xpose.msra.mxu0 %v11196
    %v11198 = vand.u32 %v514, 4294901760
    %11199 = vmatpush.xpose.msra.mxu0 %v11198
    %v11200 = vand.u32 %v510, 4294901760
    %11201 = vmatpush.xpose.msra.mxu0 %v11200
    %v11202 = vand.u32 %v594, 4294901760
    %v11203 = vsub.f32 %v594, %v11202
    %v11204 = vand.u32 %v11203, 4294901760
    %v11205 = vsub.f32 %v11203, %v11204
    %v11206 = vand.u32 %v11205, 4294901760
    %11207 = vmatmul.f32.gmra.mxu0 %v11206
    %v11208 = vpop.f32.mrf.mxu0
    %v11209 = vadd.f32 %v11168, %v11208
    %11210 = vdwg.mxu0
    %v11211 = vand.u32 %v570, 4294901760
    %v11212 = vsub.f32 %v570, %v11211
    %v11213 = vand.u32 %v11212, 4294901760
    %v11214 = vsub.f32 %v11212, %v11213
    %v11215 = vand.u32 %v11214, 4294901760
    %11216 = vmatpush.xpose.msra.mxu0 %v11215
    %v11217 = vand.u32 %v566, 4294901760
    %v11218 = vsub.f32 %v566, %v11217
    %v11219 = vand.u32 %v11218, 4294901760
    %v11220 = vsub.f32 %v11218, %v11219
    %v11221 = vand.u32 %v11220, 4294901760
    %11222 = vmatpush.xpose.msra.mxu0 %v11221
    %v11223 = vand.u32 %v562, 4294901760
    %v11224 = vsub.f32 %v562, %v11223
    %v11225 = vand.u32 %v11224, 4294901760
    %v11226 = vsub.f32 %v11224, %v11225
    %v11227 = vand.u32 %v11226, 4294901760
    %11228 = vmatpush.xpose.msra.mxu0 %v11227
    %v11229 = vand.u32 %v558, 4294901760
    %v11230 = vsub.f32 %v558, %v11229
    %v11231 = vand.u32 %v11230, 4294901760
    %v11232 = vsub.f32 %v11230, %v11231
    %v11233 = vand.u32 %v11232, 4294901760
    %11234 = vmatpush.xpose.msra.mxu0 %v11233
    %v11235 = vand.u32 %v554, 4294901760
    %v11236 = vsub.f32 %v554, %v11235
    %v11237 = vand.u32 %v11236, 4294901760
    %v11238 = vsub.f32 %v11236, %v11237
    %v11239 = vand.u32 %v11238, 4294901760
    %11240 = vmatpush.xpose.msra.mxu0 %v11239
    %v11241 = vand.u32 %v550, 4294901760
    %v11242 = vsub.f32 %v550, %v11241
    %v11243 = vand.u32 %v11242, 4294901760
    %v11244 = vsub.f32 %v11242, %v11243
    %v11245 = vand.u32 %v11244, 4294901760
    %11246 = vmatpush.xpose.msra.mxu0 %v11245
    %v11247 = vand.u32 %v546, 4294901760
    %v11248 = vsub.f32 %v546, %v11247
    %v11249 = vand.u32 %v11248, 4294901760
    %v11250 = vsub.f32 %v11248, %v11249
    %v11251 = vand.u32 %v11250, 4294901760
    %11252 = vmatpush.xpose.msra.mxu0 %v11251
    %v11253 = vand.u32 %v542, 4294901760
    %v11254 = vsub.f32 %v542, %v11253
    %v11255 = vand.u32 %v11254, 4294901760
    %v11256 = vsub.f32 %v11254, %v11255
    %v11257 = vand.u32 %v11256, 4294901760
    %11258 = vmatpush.xpose.msra.mxu0 %v11257
    %v11259 = vand.u32 %v538, 4294901760
    %v11260 = vsub.f32 %v538, %v11259
    %v11261 = vand.u32 %v11260, 4294901760
    %v11262 = vsub.f32 %v11260, %v11261
    %v11263 = vand.u32 %v11262, 4294901760
    %11264 = vmatpush.xpose.msra.mxu0 %v11263
    %v11265 = vand.u32 %v534, 4294901760
    %v11266 = vsub.f32 %v534, %v11265
    %v11267 = vand.u32 %v11266, 4294901760
    %v11268 = vsub.f32 %v11266, %v11267
    %v11269 = vand.u32 %v11268, 4294901760
    %11270 = vmatpush.xpose.msra.mxu0 %v11269
    %v11271 = vand.u32 %v530, 4294901760
    %v11272 = vsub.f32 %v530, %v11271
    %v11273 = vand.u32 %v11272, 4294901760
    %v11274 = vsub.f32 %v11272, %v11273
    %v11275 = vand.u32 %v11274, 4294901760
    %11276 = vmatpush.xpose.msra.mxu0 %v11275
    %v11277 = vand.u32 %v526, 4294901760
    %v11278 = vsub.f32 %v526, %v11277
    %v11279 = vand.u32 %v11278, 4294901760
    %v11280 = vsub.f32 %v11278, %v11279
    %v11281 = vand.u32 %v11280, 4294901760
    %11282 = vmatpush.xpose.msra.mxu0 %v11281
    %v11283 = vand.u32 %v522, 4294901760
    %v11284 = vsub.f32 %v522, %v11283
    %v11285 = vand.u32 %v11284, 4294901760
    %v11286 = vsub.f32 %v11284, %v11285
    %v11287 = vand.u32 %v11286, 4294901760
    %11288 = vmatpush.xpose.msra.mxu0 %v11287
    %v11289 = vand.u32 %v518, 4294901760
    %v11290 = vsub.f32 %v518, %v11289
    %v11291 = vand.u32 %v11290, 4294901760
    %v11292 = vsub.f32 %v11290, %v11291
    %v11293 = vand.u32 %v11292, 4294901760
    %11294 = vmatpush.xpose.msra.mxu0 %v11293
    %v11295 = vand.u32 %v514, 4294901760
    %v11296 = vsub.f32 %v514, %v11295
    %v11297 = vand.u32 %v11296, 4294901760
    %v11298 = vsub.f32 %v11296, %v11297
    %v11299 = vand.u32 %v11298, 4294901760
    %11300 = vmatpush.xpose.msra.mxu0 %v11299
    %v11301 = vand.u32 %v510, 4294901760
    %v11302 = vsub.f32 %v510, %v11301
    %v11303 = vand.u32 %v11302, 4294901760
    %v11304 = vsub.f32 %v11302, %v11303
    %v11305 = vand.u32 %v11304, 4294901760
    %11306 = vmatpush.xpose.msra.mxu0 %v11305
    %v11307 = vand.u32 %v594, 4294901760
    %11308 = vmatmul.f32.gmra.mxu0 %v11307
    %v11309 = vpop.f32.mrf.mxu0
    %v11310 = vadd.f32 %v11209, %v11309
    %11311 = vdwg.mxu0
    %v11312 = vand.u32 %v570, 4294901760
    %v11313 = vsub.f32 %v570, %v11312
    %11314 = vmatpush.xpose.msra.mxu0 %v11313
    %v11315 = vand.u32 %v566, 4294901760
    %v11316 = vsub.f32 %v566, %v11315
    %11317 = vmatpush.xpose.msra.mxu0 %v11316
    %v11318 = vand.u32 %v562, 4294901760
    %v11319 = vsub.f32 %v562, %v11318
    %11320 = vmatpush.xpose.msra.mxu0 %v11319
    %v11321 = vand.u32 %v558, 4294901760
    %v11322 = vsub.f32 %v558, %v11321
    %11323 = vmatpush.xpose.msra.mxu0 %v11322
    %v11324 = vand.u32 %v554, 4294901760
    %v11325 = vsub.f32 %v554, %v11324
    %11326 = vmatpush.xpose.msra.mxu0 %v11325
    %v11327 = vand.u32 %v550, 4294901760
    %v11328 = vsub.f32 %v550, %v11327
    %11329 = vmatpush.xpose.msra.mxu0 %v11328
    %v11330 = vand.u32 %v546, 4294901760
    %v11331 = vsub.f32 %v546, %v11330
    %11332 = vmatpush.xpose.msra.mxu0 %v11331
    %v11333 = vand.u32 %v542, 4294901760
    %v11334 = vsub.f32 %v542, %v11333
    %11335 = vmatpush.xpose.msra.mxu0 %v11334
    %v11336 = vand.u32 %v538, 4294901760
    %v11337 = vsub.f32 %v538, %v11336
    %11338 = vmatpush.xpose.msra.mxu0 %v11337
    %v11339 = vand.u32 %v534, 4294901760
    %v11340 = vsub.f32 %v534, %v11339
    %11341 = vmatpush.xpose.msra.mxu0 %v11340
    %v11342 = vand.u32 %v530, 4294901760
    %v11343 = vsub.f32 %v530, %v11342
    %11344 = vmatpush.xpose.msra.mxu0 %v11343
    %v11345 = vand.u32 %v526, 4294901760
    %v11346 = vsub.f32 %v526, %v11345
    %11347 = vmatpush.xpose.msra.mxu0 %v11346
    %v11348 = vand.u32 %v522, 4294901760
    %v11349 = vsub.f32 %v522, %v11348
    %11350 = vmatpush.xpose.msra.mxu0 %v11349
    %v11351 = vand.u32 %v518, 4294901760
    %v11352 = vsub.f32 %v518, %v11351
    %11353 = vmatpush.xpose.msra.mxu0 %v11352
    %v11354 = vand.u32 %v514, 4294901760
    %v11355 = vsub.f32 %v514, %v11354
    %11356 = vmatpush.xpose.msra.mxu0 %v11355
    %v11357 = vand.u32 %v510, 4294901760
    %v11358 = vsub.f32 %v510, %v11357
    %11359 = vmatpush.xpose.msra.mxu0 %v11358
    %v11360 = vand.u32 %v594, 4294901760
    %v11361 = vsub.f32 %v594, %v11360
    %11362 = vmatmul.f32.gmra.mxu0 %v11361
    %v11363 = vpop.f32.mrf.mxu0
    %v11364 = vadd.f32 %v11310, %v11363
    %11365 = vdwg.mxu0
    %v11366 = vand.u32 %v570, 4294901760
    %11367 = vmatpush.xpose.msra.mxu0 %v11366
    %v11368 = vand.u32 %v566, 4294901760
    %11369 = vmatpush.xpose.msra.mxu0 %v11368
    %v11370 = vand.u32 %v562, 4294901760
    %11371 = vmatpush.xpose.msra.mxu0 %v11370
    %v11372 = vand.u32 %v558, 4294901760
    %11373 = vmatpush.xpose.msra.mxu0 %v11372
    %v11374 = vand.u32 %v554, 4294901760
    %11375 = vmatpush.xpose.msra.mxu0 %v11374
    %v11376 = vand.u32 %v550, 4294901760
    %11377 = vmatpush.xpose.msra.mxu0 %v11376
    %v11378 = vand.u32 %v546, 4294901760
    %11379 = vmatpush.xpose.msra.mxu0 %v11378
    %v11380 = vand.u32 %v542, 4294901760
    %11381 = vmatpush.xpose.msra.mxu0 %v11380
    %v11382 = vand.u32 %v538, 4294901760
    %11383 = vmatpush.xpose.msra.mxu0 %v11382
    %v11384 = vand.u32 %v534, 4294901760
    %11385 = vmatpush.xpose.msra.mxu0 %v11384
    %v11386 = vand.u32 %v530, 4294901760
    %11387 = vmatpush.xpose.msra.mxu0 %v11386
    %v11388 = vand.u32 %v526, 4294901760
    %11389 = vmatpush.xpose.msra.mxu0 %v11388
    %v11390 = vand.u32 %v522, 4294901760
    %11391 = vmatpush.xpose.msra.mxu0 %v11390
    %v11392 = vand.u32 %v518, 4294901760
    %11393 = vmatpush.xpose.msra.mxu0 %v11392
    %v11394 = vand.u32 %v514, 4294901760
    %11395 = vmatpush.xpose.msra.mxu0 %v11394
    %v11396 = vand.u32 %v510, 4294901760
    %11397 = vmatpush.xpose.msra.mxu0 %v11396
    %v11398 = vand.u32 %v594, 4294901760
    %v11399 = vsub.f32 %v594, %v11398
    %v11400 = vand.u32 %v11399, 4294901760
    %11401 = vmatmul.f32.gmra.mxu0 %v11400
    %v11402 = vpop.f32.mrf.mxu0
    %v11403 = vadd.f32 %v11364, %v11402
    %11404 = vdwg.mxu0
    %v11405 = vand.u32 %v570, 4294901760
    %v11406 = vsub.f32 %v570, %v11405
    %v11407 = vand.u32 %v11406, 4294901760
    %11408 = vmatpush.xpose.msra.mxu0 %v11407
    %v11409 = vand.u32 %v566, 4294901760
    %v11410 = vsub.f32 %v566, %v11409
    %v11411 = vand.u32 %v11410, 4294901760
    %11412 = vmatpush.xpose.msra.mxu0 %v11411
    %v11413 = vand.u32 %v562, 4294901760
    %v11414 = vsub.f32 %v562, %v11413
    %v11415 = vand.u32 %v11414, 4294901760
    %11416 = vmatpush.xpose.msra.mxu0 %v11415
    %v11417 = vand.u32 %v558, 4294901760
    %v11418 = vsub.f32 %v558, %v11417
    %v11419 = vand.u32 %v11418, 4294901760
    %11420 = vmatpush.xpose.msra.mxu0 %v11419
    %v11421 = vand.u32 %v554, 4294901760
    %v11422 = vsub.f32 %v554, %v11421
    %v11423 = vand.u32 %v11422, 4294901760
    %11424 = vmatpush.xpose.msra.mxu0 %v11423
    %v11425 = vand.u32 %v550, 4294901760
    %v11426 = vsub.f32 %v550, %v11425
    %v11427 = vand.u32 %v11426, 4294901760
    %11428 = vmatpush.xpose.msra.mxu0 %v11427
    %v11429 = vand.u32 %v546, 4294901760
    %v11430 = vsub.f32 %v546, %v11429
    %v11431 = vand.u32 %v11430, 4294901760
    %11432 = vmatpush.xpose.msra.mxu0 %v11431
    %v11433 = vand.u32 %v542, 4294901760
    %v11434 = vsub.f32 %v542, %v11433
    %v11435 = vand.u32 %v11434, 4294901760
    %11436 = vmatpush.xpose.msra.mxu0 %v11435
    %v11437 = vand.u32 %v538, 4294901760
    %v11438 = vsub.f32 %v538, %v11437
    %v11439 = vand.u32 %v11438, 4294901760
    %11440 = vmatpush.xpose.msra.mxu0 %v11439
    %v11441 = vand.u32 %v534, 4294901760
    %v11442 = vsub.f32 %v534, %v11441
    %v11443 = vand.u32 %v11442, 4294901760
    %11444 = vmatpush.xpose.msra.mxu0 %v11443
    %v11445 = vand.u32 %v530, 4294901760
    %v11446 = vsub.f32 %v530, %v11445
    %v11447 = vand.u32 %v11446, 4294901760
    %11448 = vmatpush.xpose.msra.mxu0 %v11447
    %v11449 = vand.u32 %v526, 4294901760
    %v11450 = vsub.f32 %v526, %v11449
    %v11451 = vand.u32 %v11450, 4294901760
    %11452 = vmatpush.xpose.msra.mxu0 %v11451
    %v11453 = vand.u32 %v522, 4294901760
    %v11454 = vsub.f32 %v522, %v11453
    %v11455 = vand.u32 %v11454, 4294901760
    %11456 = vmatpush.xpose.msra.mxu0 %v11455
    %v11457 = vand.u32 %v518, 4294901760
    %v11458 = vsub.f32 %v518, %v11457
    %v11459 = vand.u32 %v11458, 4294901760
    %11460 = vmatpush.xpose.msra.mxu0 %v11459
    %v11461 = vand.u32 %v514, 4294901760
    %v11462 = vsub.f32 %v514, %v11461
    %v11463 = vand.u32 %v11462, 4294901760
    %11464 = vmatpush.xpose.msra.mxu0 %v11463
    %v11465 = vand.u32 %v510, 4294901760
    %v11466 = vsub.f32 %v510, %v11465
    %v11467 = vand.u32 %v11466, 4294901760
    %11468 = vmatpush.xpose.msra.mxu0 %v11467
    %v11469 = vand.u32 %v594, 4294901760
    %11470 = vmatmul.f32.gmra.mxu0 %v11469
    %v11471 = vpop.f32.mrf.mxu0
    %v11472 = vadd.f32 %v11403, %v11471
    %11473 = vdwg.mxu0
    %v11474 = vand.u32 %v570, 4294901760
    %11475 = vmatpush.xpose.msra.mxu0 %v11474
    %v11476 = vand.u32 %v566, 4294901760
    %11477 = vmatpush.xpose.msra.mxu0 %v11476
    %v11478 = vand.u32 %v562, 4294901760
    %11479 = vmatpush.xpose.msra.mxu0 %v11478
    %v11480 = vand.u32 %v558, 4294901760
    %11481 = vmatpush.xpose.msra.mxu0 %v11480
    %v11482 = vand.u32 %v554, 4294901760
    %11483 = vmatpush.xpose.msra.mxu0 %v11482
    %v11484 = vand.u32 %v550, 4294901760
    %11485 = vmatpush.xpose.msra.mxu0 %v11484
    %v11486 = vand.u32 %v546, 4294901760
    %11487 = vmatpush.xpose.msra.mxu0 %v11486
    %v11488 = vand.u32 %v542, 4294901760
    %11489 = vmatpush.xpose.msra.mxu0 %v11488
    %v11490 = vand.u32 %v538, 4294901760
    %11491 = vmatpush.xpose.msra.mxu0 %v11490
    %v11492 = vand.u32 %v534, 4294901760
    %11493 = vmatpush.xpose.msra.mxu0 %v11492
    %v11494 = vand.u32 %v530, 4294901760
    %11495 = vmatpush.xpose.msra.mxu0 %v11494
    %v11496 = vand.u32 %v526, 4294901760
    %11497 = vmatpush.xpose.msra.mxu0 %v11496
    %v11498 = vand.u32 %v522, 4294901760
    %11499 = vmatpush.xpose.msra.mxu0 %v11498
    %v11500 = vand.u32 %v518, 4294901760
    %11501 = vmatpush.xpose.msra.mxu0 %v11500
    %v11502 = vand.u32 %v514, 4294901760
    %11503 = vmatpush.xpose.msra.mxu0 %v11502
    %v11504 = vand.u32 %v510, 4294901760
    %11505 = vmatpush.xpose.msra.mxu0 %v11504
    %v11506 = vand.u32 %v594, 4294901760
    %11507 = vmatmul.f32.gmra.mxu0 %v11506
    %v11508 = vpop.f32.mrf.mxu0
    %v11509 = vadd.f32 %v11472, %v11508
    %11510 = vdwg.mxu0
    %v11519 = vrot.slane %v3325, 6
    %v11520 = vrot.slane %v4689, 4
    %v11521 = vrot.slane %v6053, 2
    %v11522 = vrot.slane %v8781, 6
    %v11523 = vrot.slane %v10145, 4
    %v11524 = vrot.slane %v11509, 2
    %vm11525 = vcmask 1041408
    %v11526 = vsel %vm11525, %v1961, %v11519
    %vm11527 = vcmask 1045508
    %v11528 = vsel %vm11527, %v11520, %v11521
    %vm11529 = vcmask 1043456
    %v11530 = vsel %vm11529, %v11526, %v11528
    %v11531 = vsel %vm11525, %v7417, %v11522
    %v11532 = vsel %vm11527, %v11523, %v11524
    %v11533 = vsel %vm11529, %v11531, %v11532
    %11536 = vst [vmem:[#allocation8] sm:$0xff] %v11530
    %11537 = vst [vmem:[#allocation8 + $0x8] sm:$0xff] %v11533
    // Predicated region
    $region26: #{inverse_log_gabor_forward.1} parent=1 // pred_check
      _
    $region27: #{inverse_log_gabor_forward.1} parent=1 // pred_check_branch
      %11539 = sbr.rel (0) target = $region29
    $region28: #{inverse_log_gabor_forward.1} parent=1 // pred_region
      %11541 = vsyncadd [#allocation4], 0
      %s11543 = sshll.u32 [#allocation8], 4
      %s11544 = int_to_ptr.vmem [resolvable:$true] %s11543
      %s11545 = sshll.u32 %s3, 4
      %s11546 = int_to_ptr.hbm [resolvable:$true] %s11545
      %11548 = dma.vmem_to_hbm [thread:$0]  %s11544, 256, %s11546, [#allocation4]
    $region29: #{inverse_log_gabor_forward.1} parent=1 // pred_fallthru
      _
    // Predicated region
    $region30: #{inverse_log_gabor_forward.1} parent=1 // pred_check
      _
    $region31: #{inverse_log_gabor_forward.1} parent=1 // pred_check_branch
      %11550 = sbr.rel (0) target = $region33
    $region32: #{inverse_log_gabor_forward.1} parent=1 // pred_region
      %11552 = dma.done [#allocation4], 256
    $region33: #{inverse_log_gabor_forward.1} parent=1 // pred_fallthru
      _
    %11553 = vsyncpa [#allocation3], 1
    %11554 = vsyncpa [#allocation6], 1
    %11555 = vsyncpa [#allocation4], 1

</llo_original>
